<compile_context>
chip_gen: v7x
topology: tpu7x:2x2x1
jax: 0.10.0
libtpu: 0.0.40
codegen_flags: <defaults>
</compile_context>

<pallas_src>
import functools
import math

import jax
import jax.numpy as jnp
from jax.experimental import pallas as pl
from jax.experimental.pallas import tpu as pltpu


def _round_up(x, m):
    return ((x + m - 1) // m) * m


# ----------------------------- Pallas kernels ------------------------------


def _matmul_bias_kernel(a_ref, w_ref, b_ref, o_ref, acc_ref, *, apply_lrelu):
    """Tiled GEMM tile: acc += a @ w; on last K step: out = acc + b (+LeakyReLU)."""
    @pl.when(pl.program_id(2) == 0)
    def _():
        acc_ref[...] = jnp.zeros_like(acc_ref)

    acc_ref[...] += jnp.dot(a_ref[...], w_ref[...],
                            preferred_element_type=jnp.float32)

    @pl.when(pl.program_id(2) == pl.num_programs(2) - 1)
    def _():
        acc = acc_ref[...] + b_ref[...]           # (tm, tn) + (1, tn)
        if apply_lrelu:
            acc = jnp.maximum(acc, 0.2 * acc)     # LeakyReLU(0.2)
        o_ref[...] = acc.astype(o_ref.dtype)


def _conv_s1_kernel(a_ref, w_ref, b_ref, o_ref, *, wp, m_out, apply_lrelu):
    """Implicit-GEMM 4x4 stride-1 conv on one padded image slab.

    a_ref: (1, Hp*Wp, Cin)  whole padded image, flattened row-major over (Hp, Wp)
    w_ref: (16, Cin, tn)    weights per kernel tap, tap index = di*4 + dj
    b_ref: (1, tn)
    o_ref: (1, m_out, tn)   output on the (Ho, Wp) grid (cropped to Wo outside)
    """
    acc = jnp.zeros((m_out, o_ref.shape[2]), jnp.float32)
    for r in range(16):                        # unrolled over the 4x4 taps
        off = (r // 4) * wp + (r % 4)          # flat offset of tap (di, dj)
        acc = acc + jnp.dot(a_ref[0, off:off + m_out, :], w_ref[r],
                            preferred_element_type=jnp.float32)
    acc = acc + b_ref[...]
    if apply_lrelu:
        acc = jnp.maximum(acc, 0.2 * acc)
    o_ref[0] = acc.astype(o_ref.dtype)


def _instance_norm_lrelu_kernel(x_ref, o_ref, *, eps, inv_hw):
    """InstanceNorm2d(affine=False) + LeakyReLU(0.2) on a (1, H*W, Ct) block.

    Channels live on the lane axis; per-(n, c) stats are a single-pass
    sum / sum-of-squares sublane reduction over H*W; stores are lane-dense.
    """
    x = x_ref[...].astype(jnp.float32)
    mean = jnp.sum(x, axis=1, keepdims=True) * inv_hw
    msq = jnp.sum(x * x, axis=1, keepdims=True) * inv_hw
    var = jnp.maximum(msq - mean * mean, 0.0)       # biased variance, like PyTorch
    y = (x - mean) * jax.lax.rsqrt(var + eps)
    y = jnp.maximum(y, 0.2 * y)
    o_ref[...] = y.astype(o_ref.dtype)


# ----------------------------- GEMM wrapper ---------------------------------


def _matmul_bias(a_bf16, w_bf16, bias_f32, *, apply_lrelu, out_dtype):
    """out[:m, :n] = a @ w + bias, with optional fused LeakyReLU(0.2)."""
    m, k = a_bf16.shape
    _, n = w_bf16.shape

    np128 = _round_up(n, 128)
    tn = 256 if np128 % 256 == 0 else 128       # fill 256-wide MXU when possible
    np_ = _round_up(n, tn)
    kp = _round_up(k, 128)
    tk = math.gcd(kp, 2048)                     # 128..2048, always divides kp
    tm = min(512, _round_up(m, 16))
    if np_ // tn == 1 and m >= 512:
        tm = 256                                # >=2 M blocks for v7x's two cores
    mp = _round_up(m, tm)

    a_p = jnp.pad(a_bf16, ((0, mp - m), (0, kp - k)))
    w_p = jnp.pad(w_bf16, ((0, kp - k), (0, np_ - n)))
    b_p = jnp.pad(bias_f32.reshape(1, n).astype(jnp.float32),
                  ((0, 0), (0, np_ - n)))

    out_bytes = jnp.dtype(out_dtype).itemsize
    grid = (mp // tm, np_ // tn, kp // tk)
    cost = pl.CostEstimate(
        flops=2 * mp * np_ * kp,
        transcendentals=0,
        bytes_accessed=a_p.size * 2 + w_p.size * 2 + mp * np_ * out_bytes,
    )

    # TODO(synk): sweep pipeline_mode=pl.Buffered(3) on the A/W specs for the
    # mem-bound early layers (only 1-2 K steps).
    out = pl.pallas_call(
        functools.partial(_matmul_bias_kernel, apply_lrelu=apply_lrelu),
        out_shape=jax.ShapeDtypeStruct((mp, np_), out_dtype),
        grid_spec=pltpu.PrefetchScalarGridSpec(
            num_scalar_prefetch=0,
            grid=grid,
            in_specs=[
                pl.BlockSpec((tm, tk), lambda i, j, kk: (i, kk)),
                pl.BlockSpec((tk, tn), lambda i, j, kk: (kk, j)),
                pl.BlockSpec((1, tn), lambda i, j, kk: (0, j)),
            ],
            out_specs=pl.BlockSpec((tm, tn), lambda i, j, kk: (i, j)),
            scratch_shapes=[pltpu.VMEM((tm, tn), jnp.float32)],
        ),
        compiler_params=pltpu.CompilerParams(
            dimension_semantics=("parallel", "parallel", "arbitrary"),
            vmem_limit_bytes=48 * 1024 * 1024,
        ),
        cost_estimate=cost,
    )(a_p, w_p, b_p)
    return out[:m, :n]


# ------------------------- stride-2 conv (im2col) ---------------------------


def _im2col(x_nhwc, k, stride, pad):
    """Extract conv patches. Returns ((N*Ho*Wo, k*k*Cin), Ho, Wo)."""
    x = jnp.pad(x_nhwc, ((0, 0), (pad, pad), (pad, pad), (0, 0)))
    n, h, w, c = x.shape
    ho = (h - k) // stride + 1
    wo = (w - k) // stride + 1
    patches = []
    for di in range(k):
        for dj in range(k):
            patches.append(
                x[:, di: di + ho * stride: stride, dj: dj + wo * stride: stride, :]
            )
    cols = jnp.stack(patches, axis=3)  # (N, Ho, Wo, k*k, Cin), kernel-pos = di*k+dj
    return cols.reshape(n * ho * wo, k * k * c), ho, wo


def conv2d_s2_im2col(x_nhwc, w_oihw, bias, *, apply_lrelu, out_dtype):
    """Stride-2 Conv2d via (4x) im2col + tiled Pallas GEMM."""
    c_out, c_in, kh, kw = w_oihw.shape
    # TODO(synk): replace the remaining 4x im2col for stride-2 convs with a
    # space-to-depth (2x2 -> channels) reformulation feeding the implicit-GEMM
    # path, removing the last activation duplication through HBM.
    cols, ho, wo = _im2col(x_nhwc.astype(jnp.bfloat16), kh, 2, 1)
    # (kh, kw, Cin, Cout) flattened to match im2col column ordering (di, dj, c).
    w_mat = jnp.transpose(w_oihw, (2, 3, 1, 0)).reshape(kh * kw * c_in, c_out)
    out = _matmul_bias(cols, w_mat.astype(jnp.bfloat16), bias,
                       apply_lrelu=apply_lrelu, out_dtype=out_dtype)
    n = x_nhwc.shape[0]
    return out.reshape(n, ho, wo, c_out)


# ----------------------- stride-1 conv (implicit GEMM) ----------------------


def conv2d_s1(x_nhwc, w_oihw, bias, *, apply_lrelu, out_dtype):
    """4x4 stride-1 pad-1 Conv2d as an implicit GEMM (no materialized im2col)."""
    c_out, c_in, kh, kw = w_oihw.shape
    assert (kh, kw) == (4, 4)
    n, h, w, _ = x_nhwc.shape
    ho, wo = h - 1, w - 1                      # output spatial (k=4, s=1, p=1)
    wp = w + 2                                 # padded width
    hp = h + 3                                 # 1 top + 2 bottom rows (tap overrun)
    x_pad = jnp.pad(x_nhwc.astype(jnp.bfloat16), ((0, 0), (1, 2), (1, 1), (0, 0)))
    a = x_pad.reshape(n, hp * wp, c_in)        # flat slab per image
    m_out = ho * wp                            # output rows on the (Ho, Wp) grid

    cout_p = _round_up(c_out, 128)
    tn = 256 if cout_p % 256 == 0 else 128
    w_taps = jnp.transpose(w_oihw, (2, 3, 1, 0)).reshape(16, c_in, c_out)
    w_taps = jnp.pad(w_taps.astype(jnp.bfloat16),
                     ((0, 0), (0, 0), (0, cout_p - c_out)))
    b_p = jnp.pad(bias.astype(jnp.float32).reshape(1, c_out),
                  ((0, 0), (0, cout_p - c_out)))

    out_bytes = jnp.dtype(out_dtype).itemsize
    grid = (cout_p // tn, n)   # weights (largest operand) stay resident across batch
    cost = pl.CostEstimate(
        flops=2 * n * m_out * 16 * c_in * cout_p,
        transcendentals=0,
        bytes_accessed=a.size * 2 + w_taps.size * 2 + n * m_out * cout_p * out_bytes,
    )
    # TODO(synk): add an M (output-row) tile axis for very large spatial inputs
    # so the per-image slab / accumulator do not have to fit VMEM in one piece.
    out = pl.pallas_call(
        functools.partial(_conv_s1_kernel, wp=wp, m_out=m_out,
                          apply_lrelu=apply_lrelu),
        out_shape=jax.ShapeDtypeStruct((n, m_out, cout_p), out_dtype),
        grid_spec=pltpu.PrefetchScalarGridSpec(
            num_scalar_prefetch=0,
            grid=grid,
            in_specs=[
                pl.BlockSpec((1, hp * wp, c_in), lambda j, i: (i, 0, 0)),
                pl.BlockSpec((16, c_in, tn), lambda j, i: (0, 0, j)),
                pl.BlockSpec((1, tn), lambda j, i: (0, j)),
            ],
            out_specs=pl.BlockSpec((1, m_out, tn), lambda j, i: (i, 0, j)),
        ),
        compiler_params=pltpu.CompilerParams(
            dimension_semantics=("parallel", "parallel"),
            vmem_limit_bytes=48 * 1024 * 1024,
        ),
        cost_estimate=cost,
    )(a, w_taps, b_p)
    # Crop the 3 garbage columns per row and the channel padding.
    return out.reshape(n, ho, wp, cout_p)[:, :, :wo, :c_out]


def conv2d(x_nhwc, w_oihw, bias, *, stride, apply_lrelu, out_dtype):
    if stride == 1:
        return conv2d_s1(x_nhwc, w_oihw, bias,
                         apply_lrelu=apply_lrelu, out_dtype=out_dtype)
    return conv2d_s2_im2col(x_nhwc, w_oihw, bias,
                            apply_lrelu=apply_lrelu, out_dtype=out_dtype)


# ------------------------------ InstanceNorm --------------------------------


def instance_norm_lrelu(x_nhwc, *, eps=1e-5, out_dtype=jnp.bfloat16):
    """InstanceNorm2d(affine=False) + LeakyReLU(0.2), transpose-free (C on lanes)."""
    n, h, w, c = x_nhwc.shape
    hw = h * w
    x3 = x_nhwc.reshape(n, hw, c)
    c_tile = c if c < 128 else 128
    assert c % c_tile == 0
    grid = (n, c // c_tile)
    # TODO(synk): tile the H*W axis (grid-accumulated sum/sumsq) for very large
    # spatial inputs so the block fits v7x's 64 MiB VMEM with full pipelining.
    y = pl.pallas_call(
        functools.partial(_instance_norm_lrelu_kernel, eps=eps, inv_hw=1.0 / hw),
        out_shape=jax.ShapeDtypeStruct((n, hw, c), out_dtype),
        grid_spec=pltpu.PrefetchScalarGridSpec(
            num_scalar_prefetch=0,
            grid=grid,
            in_specs=[pl.BlockSpec((1, hw, c_tile), lambda i, j: (i, 0, j))],
            out_specs=pl.BlockSpec((1, hw, c_tile), lambda i, j: (i, 0, j)),
        ),
        compiler_params=pltpu.CompilerParams(
            dimension_semantics=("parallel", "parallel"),
            vmem_limit_bytes=48 * 1024 * 1024,
        ),
    )(x3)
    return y.reshape(n, h, w, c)


# ----------------------------- Discriminator -------------------------------


def init_params(key, input_nc, ndf=64, n_layers=3):
    """Deterministic parameter init matching nn.Conv2d shapes in the module."""
    params = []

    def conv_param(key, c_out, c_in, k):
        kw_, kb_ = jax.random.split(key)
        scale = 1.0 / jnp.sqrt(c_in * k * k)
        w = jax.random.normal(kw_, (c_out, c_in, k, k), jnp.float32) * scale
        b = jax.random.normal(kb_, (c_out,), jnp.float32) * scale
        return w, b

    keys = jax.random.split(key, n_layers + 2)
    k = 4
    params.append(conv_param(keys[0], ndf, input_nc, k))        # layer 0, stride 2
    nf_mult = 1
    for n in range(1, n_layers):
        nf_mult_prev, nf_mult = nf_mult, min(2 ** n, 8)
        params.append(conv_param(keys[n], ndf * nf_mult, ndf * nf_mult_prev, k))
    nf_mult_prev, nf_mult = nf_mult, min(2 ** n_layers, 8)
    params.append(conv_param(keys[n_layers], ndf * nf_mult, ndf * nf_mult_prev, k))
    params.append(conv_param(keys[n_layers + 1], 1, ndf * nf_mult, k))  # final
    return params


def nlayer_discriminator_forward(x_nchw, params, n_layers=3):
    """Forward pass. Input/output are NCHW to match PyTorch semantics."""
    x = jnp.transpose(x_nchw, (0, 2, 3, 1)).astype(jnp.float32)  # -> NHWC

    # layer 0: Conv(s=2) + LeakyReLU (no norm), bias always present
    w, b = params[0]
    x = conv2d(x, w, b, stride=2, apply_lrelu=True, out_dtype=jnp.bfloat16)

    # layers 1 .. n_layers-1: Conv(s=2, bias) + InstanceNorm + LeakyReLU
    for n in range(1, n_layers):
        w, b = params[n]
        x = conv2d(x, w, b, stride=2, apply_lrelu=False, out_dtype=jnp.bfloat16)
        x = instance_norm_lrelu(x)

    # layer n_layers: Conv(s=1, bias) + InstanceNorm + LeakyReLU (implicit GEMM)
    w, b = params[n_layers]
    x = conv2d(x, w, b, stride=1, apply_lrelu=False, out_dtype=jnp.bfloat16)
    x = instance_norm_lrelu(x)

    # final: Conv(s=1) -> 1 channel, no activation (implicit GEMM at Cout=128,
    # sliced back to 1 channel); emitted in f32.
    w, b = params[n_layers + 1]
    x = conv2d(x, w, b, stride=1, apply_lrelu=False, out_dtype=jnp.float32)

    return jnp.transpose(x, (0, 3, 1, 2))  # -> NCHW


# ----------------------------------- main -----------------------------------

if __name__ == "__main__":
    key = jax.random.PRNGKey(0)
    k_in, k_par = jax.random.split(key)

    # Small shapes: batch=2, input_nc=4, spatial=32 (min spatial for this arch),
    # ndf=8, n_layers=3  -> output (2, 1, 2, 2)
    batch, input_nc, spatial = 2, 4, 32
    ndf, n_layers = 8, 3

    x = jax.random.normal(k_in, (batch, input_nc, spatial, spatial), jnp.float32)
    params = init_params(k_par, input_nc, ndf=ndf, n_layers=n_layers)

    fwd = jax.jit(functools.partial(nlayer_discriminator_forward, n_layers=n_layers))
    out = fwd(x, params)
    jax.block_until_ready(out)

    assert out.shape == (batch, 1, 2, 2), out.shape
    print("KERNEL_OK")
</pallas_src>

<mosaic_0001>
module attributes {stable_mosaic.version = 11 : i64} {
  func.func @_matmul_bias_kernel(%arg0: i32, %arg1: i32, %arg2: i32, %arg3: memref<256x128xbf16, #tpu.memory_space<vmem>>, %arg4: memref<128x128xbf16, #tpu.memory_space<vmem>>, %arg5: memref<1x128xf32, #tpu.memory_space<vmem>>, %arg6: memref<256x128xbf16, #tpu.memory_space<vmem>>, %arg7: memref<256x128xf32, #tpu.memory_space<vmem>>) attributes {dimension_semantics = [#tpu.dimension_semantics<parallel>, #tpu.dimension_semantics<parallel>, #tpu.dimension_semantics<arbitrary>], iteration_bounds = array<i64: 2, 1, 1>, scalar_prefetch = 0 : i64, scratch_operands = 1 : i64, tpu.core_type = #tpu.core_type<tc>, window_params = [{transform_indices = @transform_0, window_bounds = array<i64: 256, 128>}, {transform_indices = @transform_1, window_bounds = array<i64: 128, 128>}, {transform_indices = @transform_2, window_bounds = array<i64: 1, 128>}, {transform_indices = @transform_3, window_bounds = array<i64: 256, 128>}]} {
    %c0_i32 = arith.constant 0 : i32
    %0 = arith.cmpi eq, %arg2, %c0_i32 : i32
    %1 = arith.extui %0 : i1 to i32
    %c0_i32_0 = arith.constant 0 : i32
    %2 = arith.cmpi ne, %1, %c0_i32_0 : i32
    scf.if %2 {
      %cst_10 = arith.constant 0.000000e+00 : f32
      %12 = vector.broadcast %cst_10 : f32 to vector<256x128xf32>
      %c0_11 = arith.constant 0 : index
      %c0_12 = arith.constant 0 : index
      %13 = vector.load %arg7[%c0_11, %c0_12] : memref<256x128xf32, #tpu.memory_space<vmem>>, vector<256x128xf32>
      tpu.vector_store %arg7[%c0_11, %c0_12], %12 {strides = array<i32>} : memref<256x128xf32, #tpu.memory_space<vmem>>, vector<256x128xf32>,
    } else {
    }
    %c0 = arith.constant 0 : index
    %c0_1 = arith.constant 0 : index
    %3 = vector.load %arg7[%c0, %c0_1] : memref<256x128xf32, #tpu.memory_space<vmem>>, vector<256x128xf32>
    %c0_2 = arith.constant 0 : index
    %c0_3 = arith.constant 0 : index
    %4 = vector.load %arg3[%c0_2, %c0_3] : memref<256x128xbf16, #tpu.memory_space<vmem>>, vector<256x128xbf16>
    %c0_4 = arith.constant 0 : index
    %c0_5 = arith.constant 0 : index
    %5 = vector.load %arg4[%c0_4, %c0_5] : memref<128x128xbf16, #tpu.memory_space<vmem>>, vector<128x128xbf16>
    %cst = arith.constant dense<0.000000e+00> : vector<256x128xf32>
    %6 = tpu.matmul %4, %5, %cst {dimension_numbers = #tpu.dot_dimension_numbers<[1], [0], [0], [1], [0, 0, 1, 1], [], []>} : vector<256x128xbf16>, vector<128x128xbf16>, vector<256x128xf32> -> vector<256x128xf32>
    %7 = arith.addf %3, %6 : vector<256x128xf32>
    %c0_6 = arith.constant 0 : index
    %c0_7 = arith.constant 0 : index
    %8 = vector.load %arg7[%c0_6, %c0_7] : memref<256x128xf32, #tpu.memory_space<vmem>>, vector<256x128xf32>
    tpu.vector_store %arg7[%c0_6, %c0_7], %7 {strides = array<i32>} : memref<256x128xf32, #tpu.memory_space<vmem>>, vector<256x128xf32>,
    %c0_i32_8 = arith.constant 0 : i32
    %9 = arith.cmpi eq, %arg2, %c0_i32_8 : i32
    %10 = arith.extui %9 : i1 to i32
    %c0_i32_9 = arith.constant 0 : i32
    %11 = arith.cmpi ne, %10, %c0_i32_9 : i32
    scf.if %11 {
      %c0_10 = arith.constant 0 : index
      %c0_11 = arith.constant 0 : index
      %12 = vector.load %arg7[%c0_10, %c0_11] : memref<256x128xf32, #tpu.memory_space<vmem>>, vector<256x128xf32>
      %c0_12 = arith.constant 0 : index
      %c0_13 = arith.constant 0 : index
      %13 = vector.load %arg5[%c0_12, %c0_13] : memref<1x128xf32, #tpu.memory_space<vmem>>, vector<1x128xf32>
      %14 = vector.broadcast %13 : vector<1x128xf32> to vector<256x128xf32>
      %15 = arith.addf %12, %14 : vector<256x128xf32>
      %cst_14 = arith.constant 2.000000e-01 : f32
      %16 = vector.broadcast %cst_14 : f32 to vector<256x128xf32>
      %17 = arith.mulf %16, %15 : vector<256x128xf32>
      %18 = arith.maximumf %15, %17 : vector<256x128xf32>
      %19 = arith.truncf %18 : vector<256x128xf32> to vector<256x128xbf16>
      %c0_15 = arith.constant 0 : index
      %c0_16 = arith.constant 0 : index
      %20 = vector.load %arg6[%c0_15, %c0_16] : memref<256x128xbf16, #tpu.memory_space<vmem>>, vector<256x128xbf16>
      tpu.vector_store %arg6[%c0_15, %c0_16], %19 {strides = array<i32>} : memref<256x128xbf16, #tpu.memory_space<vmem>>, vector<256x128xbf16>,
    } else {
    }
    return
  }
  func.func @transform_0(%arg0: i32, %arg1: i32, %arg2: i32) -> (i32, i32) {
    %c0_i32 = arith.constant 0 : i32
    return %arg0, %arg2 : i32, i32
  }
  func.func @transform_1(%arg0: i32, %arg1: i32, %arg2: i32) -> (i32, i32) {
    %c0_i32 = arith.constant 0 : i32
    return %arg2, %arg1 : i32, i32
  }
  func.func @transform_2(%arg0: i32, %arg1: i32, %arg2: i32) -> (i32, i32) {
    %c0_i32 = arith.constant 0 : i32
    %c0_i32_0 = arith.constant 0 : i32
    return %c0_i32, %arg1 : i32, i32
  }
  func.func @transform_3(%arg0: i32, %arg1: i32, %arg2: i32) -> (i32, i32) {
    %c0_i32 = arith.constant 0 : i32
    return %arg0, %arg1 : i32, i32
  }
}

module attributes {stable_mosaic.version = 11 : i64} {
  func.func @_matmul_bias_kernel(%arg0: i32, %arg1: i32, %arg2: i32, %arg3: memref<128x128xbf16, #tpu.memory_space<vmem>>, %arg4: memref<128x128xbf16, #tpu.memory_space<vmem>>, %arg5: memref<1x128xf32, #tpu.memory_space<vmem>>, %arg6: memref<128x128xbf16, #tpu.memory_space<vmem>>, %arg7: memref<128x128xf32, #tpu.memory_space<vmem>>) attributes {dimension_semantics = [#tpu.dimension_semantics<parallel>, #tpu.dimension_semantics<parallel>, #tpu.dimension_semantics<arbitrary>], iteration_bounds = array<i64: 1, 1, 1>, scalar_prefetch = 0 : i64, scratch_operands = 1 : i64, tpu.core_type = #tpu.core_type<tc>, window_params = [{transform_indices = @transform_0, window_bounds = array<i64: 128, 128>}, {transform_indices = @transform_1, window_bounds = array<i64: 128, 128>}, {transform_indices = @transform_2, window_bounds = array<i64: 1, 128>}, {transform_indices = @transform_3, window_bounds = array<i64: 128, 128>}]} {
    %c0_i32 = arith.constant 0 : i32
    %0 = arith.cmpi eq, %arg2, %c0_i32 : i32
    %1 = arith.extui %0 : i1 to i32
    %c0_i32_0 = arith.constant 0 : i32
    %2 = arith.cmpi ne, %1, %c0_i32_0 : i32
    scf.if %2 {
      %cst_10 = arith.constant 0.000000e+00 : f32
      %12 = vector.broadcast %cst_10 : f32 to vector<128x128xf32>
      %c0_11 = arith.constant 0 : index
      %c0_12 = arith.constant 0 : index
      %13 = vector.load %arg7[%c0_11, %c0_12] : memref<128x128xf32, #tpu.memory_space<vmem>>, vector<128x128xf32>
      tpu.vector_store %arg7[%c0_11, %c0_12], %12 {strides = array<i32>} : memref<128x128xf32, #tpu.memory_space<vmem>>, vector<128x128xf32>,
    } else {
    }
    %c0 = arith.constant 0 : index
    %c0_1 = arith.constant 0 : index
    %3 = vector.load %arg7[%c0, %c0_1] : memref<128x128xf32, #tpu.memory_space<vmem>>, vector<128x128xf32>
    %c0_2 = arith.constant 0 : index
    %c0_3 = arith.constant 0 : index
    %4 = vector.load %arg3[%c0_2, %c0_3] : memref<128x128xbf16, #tpu.memory_space<vmem>>, vector<128x128xbf16>
    %c0_4 = arith.constant 0 : index
    %c0_5 = arith.constant 0 : index
    %5 = vector.load %arg4[%c0_4, %c0_5] : memref<128x128xbf16, #tpu.memory_space<vmem>>, vector<128x128xbf16>
    %cst = arith.constant dense<0.000000e+00> : vector<128x128xf32>
    %6 = tpu.matmul %4, %5, %cst {dimension_numbers = #tpu.dot_dimension_numbers<[1], [0], [0], [1], [0, 0, 1, 1], [], []>} : vector<128x128xbf16>, vector<128x128xbf16>, vector<128x128xf32> -> vector<128x128xf32>
    %7 = arith.addf %3, %6 : vector<128x128xf32>
    %c0_6 = arith.constant 0 : index
    %c0_7 = arith.constant 0 : index
    %8 = vector.load %arg7[%c0_6, %c0_7] : memref<128x128xf32, #tpu.memory_space<vmem>>, vector<128x128xf32>
    tpu.vector_store %arg7[%c0_6, %c0_7], %7 {strides = array<i32>} : memref<128x128xf32, #tpu.memory_space<vmem>>, vector<128x128xf32>,
    %c0_i32_8 = arith.constant 0 : i32
    %9 = arith.cmpi eq, %arg2, %c0_i32_8 : i32
    %10 = arith.extui %9 : i1 to i32
    %c0_i32_9 = arith.constant 0 : i32
    %11 = arith.cmpi ne, %10, %c0_i32_9 : i32
    scf.if %11 {
      %c0_10 = arith.constant 0 : index
      %c0_11 = arith.constant 0 : index
      %12 = vector.load %arg7[%c0_10, %c0_11] : memref<128x128xf32, #tpu.memory_space<vmem>>, vector<128x128xf32>
      %c0_12 = arith.constant 0 : index
      %c0_13 = arith.constant 0 : index
      %13 = vector.load %arg5[%c0_12, %c0_13] : memref<1x128xf32, #tpu.memory_space<vmem>>, vector<1x128xf32>
      %14 = vector.broadcast %13 : vector<1x128xf32> to vector<128x128xf32>
      %15 = arith.addf %12, %14 : vector<128x128xf32>
      %16 = arith.truncf %15 : vector<128x128xf32> to vector<128x128xbf16>
      %c0_14 = arith.constant 0 : index
      %c0_15 = arith.constant 0 : index
      %17 = vector.load %arg6[%c0_14, %c0_15] : memref<128x128xbf16, #tpu.memory_space<vmem>>, vector<128x128xbf16>
      tpu.vector_store %arg6[%c0_14, %c0_15], %16 {strides = array<i32>} : memref<128x128xbf16, #tpu.memory_space<vmem>>, vector<128x128xbf16>,
    } else {
    }
    return
  }
  func.func @transform_0(%arg0: i32, %arg1: i32, %arg2: i32) -> (i32, i32) {
    %c0_i32 = arith.constant 0 : i32
    return %arg0, %arg2 : i32, i32
  }
  func.func @transform_1(%arg0: i32, %arg1: i32, %arg2: i32) -> (i32, i32) {
    %c0_i32 = arith.constant 0 : i32
    return %arg2, %arg1 : i32, i32
  }
  func.func @transform_2(%arg0: i32, %arg1: i32, %arg2: i32) -> (i32, i32) {
    %c0_i32 = arith.constant 0 : i32
    %c0_i32_0 = arith.constant 0 : i32
    return %c0_i32, %arg1 : i32, i32
  }
  func.func @transform_3(%arg0: i32, %arg1: i32, %arg2: i32) -> (i32, i32) {
    %c0_i32 = arith.constant 0 : i32
    return %arg0, %arg1 : i32, i32
  }
}

module attributes {stable_mosaic.version = 11 : i64} {
  func.func @_instance_norm_lrelu_kernel(%arg0: i32, %arg1: i32, %arg2: memref<1x64x16xbf16, #tpu.memory_space<vmem>>, %arg3: memref<1x64x16xbf16, #tpu.memory_space<vmem>>) attributes {dimension_semantics = [#tpu.dimension_semantics<parallel>, #tpu.dimension_semantics<parallel>], iteration_bounds = array<i64: 2, 1>, scalar_prefetch = 0 : i64, scratch_operands = 0 : i64, tpu.core_type = #tpu.core_type<tc>, window_params = [{transform_indices = @transform_0, window_bounds = array<i64: 1, 64, 16>}, {transform_indices = @transform_1, window_bounds = array<i64: 1, 64, 16>}]} {
    %c0 = arith.constant 0 : index
    %c0_0 = arith.constant 0 : index
    %c0_1 = arith.constant 0 : index
    %0 = vector.load %arg2[%c0, %c0_0, %c0_1] : memref<1x64x16xbf16, #tpu.memory_space<vmem>>, vector<1x64x16xbf16>
    %1 = arith.extf %0 : vector<1x64x16xbf16> to vector<1x64x16xf32>
    %cst = arith.constant dense<0.000000e+00> : vector<1x16xf32>
    %2 = vector.multi_reduction <add>, %1, %cst [1] : vector<1x64x16xf32> to vector<1x16xf32>
    %3 = vector.shape_cast %2 : vector<1x16xf32> to vector<1x1x16xf32>
    %cst_2 = arith.constant 1.562500e-02 : f32
    %4 = vector.broadcast %cst_2 : f32 to vector<1x1x16xf32>
    %5 = arith.mulf %3, %4 : vector<1x1x16xf32>
    %6 = arith.mulf %1, %1 : vector<1x64x16xf32>
    %cst_3 = arith.constant dense<0.000000e+00> : vector<1x16xf32>
    %7 = vector.multi_reduction <add>, %6, %cst_3 [1] : vector<1x64x16xf32> to vector<1x16xf32>
    %8 = vector.shape_cast %7 : vector<1x16xf32> to vector<1x1x16xf32>
    %cst_4 = arith.constant 1.562500e-02 : f32
    %9 = vector.broadcast %cst_4 : f32 to vector<1x1x16xf32>
    %10 = arith.mulf %8, %9 : vector<1x1x16xf32>
    %11 = arith.mulf %5, %5 : vector<1x1x16xf32>
    %12 = arith.subf %10, %11 : vector<1x1x16xf32>
    %cst_5 = arith.constant 0.000000e+00 : f32
    %13 = vector.broadcast %cst_5 : f32 to vector<1x1x16xf32>
    %14 = arith.maximumf %12, %13 : vector<1x1x16xf32>
    %15 = vector.broadcast %5 : vector<1x1x16xf32> to vector<1x64x16xf32>
    %16 = arith.subf %1, %15 : vector<1x64x16xf32>
    %cst_6 = arith.constant 9.99999974E-6 : f32
    %17 = vector.broadcast %cst_6 : f32 to vector<1x1x16xf32>
    %18 = arith.addf %14, %17 : vector<1x1x16xf32>
    %19 = math.rsqrt %18 : vector<1x1x16xf32>
    %20 = vector.broadcast %19 : vector<1x1x16xf32> to vector<1x64x16xf32>
    %21 = arith.mulf %16, %20 : vector<1x64x16xf32>
    %cst_7 = arith.constant 2.000000e-01 : f32
    %22 = vector.broadcast %cst_7 : f32 to vector<1x64x16xf32>
    %23 = arith.mulf %22, %21 : vector<1x64x16xf32>
    %24 = arith.maximumf %21, %23 : vector<1x64x16xf32>
    %25 = arith.truncf %24 : vector<1x64x16xf32> to vector<1x64x16xbf16>
    %c0_8 = arith.constant 0 : index
    %c0_9 = arith.constant 0 : index
    %c0_10 = arith.constant 0 : index
    %26 = vector.load %arg3[%c0_8, %c0_9, %c0_10] : memref<1x64x16xbf16, #tpu.memory_space<vmem>>, vector<1x64x16xbf16>
    tpu.vector_store %arg3[%c0_8, %c0_9, %c0_10], %25 {strides = array<i32>} : memref<1x64x16xbf16, #tpu.memory_space<vmem>>, vector<1x64x16xbf16>,
    return
  }
  func.func @transform_0(%arg0: i32, %arg1: i32) -> (i32, i32, i32) {
    %c0_i32 = arith.constant 0 : i32
    %c0_i32_0 = arith.constant 0 : i32
    return %arg0, %c0_i32, %arg1 : i32, i32, i32
  }
  func.func @transform_1(%arg0: i32, %arg1: i32) -> (i32, i32, i32) {
    %c0_i32 = arith.constant 0 : i32
    %c0_i32_0 = arith.constant 0 : i32
    return %arg0, %c0_i32, %arg1 : i32, i32, i32
  }
}

module attributes {stable_mosaic.version = 11 : i64} {
  func.func @_matmul_bias_kernel(%arg0: i32, %arg1: i32, %arg2: i32, %arg3: memref<32x256xbf16, #tpu.memory_space<vmem>>, %arg4: memref<256x128xbf16, #tpu.memory_space<vmem>>, %arg5: memref<1x128xf32, #tpu.memory_space<vmem>>, %arg6: memref<32x128xbf16, #tpu.memory_space<vmem>>, %arg7: memref<32x128xf32, #tpu.memory_space<vmem>>) attributes {dimension_semantics = [#tpu.dimension_semantics<parallel>, #tpu.dimension_semantics<parallel>, #tpu.dimension_semantics<arbitrary>], iteration_bounds = array<i64: 1, 1, 1>, scalar_prefetch = 0 : i64, scratch_operands = 1 : i64, tpu.core_type = #tpu.core_type<tc>, window_params = [{transform_indices = @transform_0, window_bounds = array<i64: 32, 256>}, {transform_indices = @transform_1, window_bounds = array<i64: 256, 128>}, {transform_indices = @transform_2, window_bounds = array<i64: 1, 128>}, {transform_indices = @transform_3, window_bounds = array<i64: 32, 128>}]} {
    %c0_i32 = arith.constant 0 : i32
    %0 = arith.cmpi eq, %arg2, %c0_i32 : i32
    %1 = arith.extui %0 : i1 to i32
    %c0_i32_0 = arith.constant 0 : i32
    %2 = arith.cmpi ne, %1, %c0_i32_0 : i32
    scf.if %2 {
      %cst_10 = arith.constant 0.000000e+00 : f32
      %12 = vector.broadcast %cst_10 : f32 to vector<32x128xf32>
      %c0_11 = arith.constant 0 : index
      %c0_12 = arith.constant 0 : index
      %13 = vector.load %arg7[%c0_11, %c0_12] : memref<32x128xf32, #tpu.memory_space<vmem>>, vector<32x128xf32>
      tpu.vector_store %arg7[%c0_11, %c0_12], %12 {strides = array<i32>} : memref<32x128xf32, #tpu.memory_space<vmem>>, vector<32x128xf32>,
    } else {
    }
    %c0 = arith.constant 0 : index
    %c0_1 = arith.constant 0 : index
    %3 = vector.load %arg7[%c0, %c0_1] : memref<32x128xf32, #tpu.memory_space<vmem>>, vector<32x128xf32>
    %c0_2 = arith.constant 0 : index
    %c0_3 = arith.constant 0 : index
    %4 = vector.load %arg3[%c0_2, %c0_3] : memref<32x256xbf16, #tpu.memory_space<vmem>>, vector<32x256xbf16>
    %c0_4 = arith.constant 0 : index
    %c0_5 = arith.constant 0 : index
    %5 = vector.load %arg4[%c0_4, %c0_5] : memref<256x128xbf16, #tpu.memory_space<vmem>>, vector<256x128xbf16>
    %cst = arith.constant dense<0.000000e+00> : vector<32x128xf32>
    %6 = tpu.matmul %4, %5, %cst {dimension_numbers = #tpu.dot_dimension_numbers<[1], [0], [0], [1], [0, 0, 1, 1], [], []>} : vector<32x256xbf16>, vector<256x128xbf16>, vector<32x128xf32> -> vector<32x128xf32>
    %7 = arith.addf %3, %6 : vector<32x128xf32>
    %c0_6 = arith.constant 0 : index
    %c0_7 = arith.constant 0 : index
    %8 = vector.load %arg7[%c0_6, %c0_7] : memref<32x128xf32, #tpu.memory_space<vmem>>, vector<32x128xf32>
    tpu.vector_store %arg7[%c0_6, %c0_7], %7 {strides = array<i32>} : memref<32x128xf32, #tpu.memory_space<vmem>>, vector<32x128xf32>,
    %c0_i32_8 = arith.constant 0 : i32
    %9 = arith.cmpi eq, %arg2, %c0_i32_8 : i32
    %10 = arith.extui %9 : i1 to i32
    %c0_i32_9 = arith.constant 0 : i32
    %11 = arith.cmpi ne, %10, %c0_i32_9 : i32
    scf.if %11 {
      %c0_10 = arith.constant 0 : index
      %c0_11 = arith.constant 0 : index
      %12 = vector.load %arg7[%c0_10, %c0_11] : memref<32x128xf32, #tpu.memory_space<vmem>>, vector<32x128xf32>
      %c0_12 = arith.constant 0 : index
      %c0_13 = arith.constant 0 : index
      %13 = vector.load %arg5[%c0_12, %c0_13] : memref<1x128xf32, #tpu.memory_space<vmem>>, vector<1x128xf32>
      %14 = vector.broadcast %13 : vector<1x128xf32> to vector<32x128xf32>
      %15 = arith.addf %12, %14 : vector<32x128xf32>
      %16 = arith.truncf %15 : vector<32x128xf32> to vector<32x128xbf16>
      %c0_14 = arith.constant 0 : index
      %c0_15 = arith.constant 0 : index
      %17 = vector.load %arg6[%c0_14, %c0_15] : memref<32x128xbf16, #tpu.memory_space<vmem>>, vector<32x128xbf16>
      tpu.vector_store %arg6[%c0_14, %c0_15], %16 {strides = array<i32>} : memref<32x128xbf16, #tpu.memory_space<vmem>>, vector<32x128xbf16>,
    } else {
    }
    return
  }
  func.func @transform_0(%arg0: i32, %arg1: i32, %arg2: i32) -> (i32, i32) {
    %c0_i32 = arith.constant 0 : i32
    return %arg0, %arg2 : i32, i32
  }
  func.func @transform_1(%arg0: i32, %arg1: i32, %arg2: i32) -> (i32, i32) {
    %c0_i32 = arith.constant 0 : i32
    return %arg2, %arg1 : i32, i32
  }
  func.func @transform_2(%arg0: i32, %arg1: i32, %arg2: i32) -> (i32, i32) {
    %c0_i32 = arith.constant 0 : i32
    %c0_i32_0 = arith.constant 0 : i32
    return %c0_i32, %arg1 : i32, i32
  }
  func.func @transform_3(%arg0: i32, %arg1: i32, %arg2: i32) -> (i32, i32) {
    %c0_i32 = arith.constant 0 : i32
    return %arg0, %arg1 : i32, i32
  }
}

module attributes {stable_mosaic.version = 11 : i64} {
  func.func @_instance_norm_lrelu_kernel(%arg0: i32, %arg1: i32, %arg2: memref<1x16x32xbf16, #tpu.memory_space<vmem>>, %arg3: memref<1x16x32xbf16, #tpu.memory_space<vmem>>) attributes {dimension_semantics = [#tpu.dimension_semantics<parallel>, #tpu.dimension_semantics<parallel>], iteration_bounds = array<i64: 2, 1>, scalar_prefetch = 0 : i64, scratch_operands = 0 : i64, tpu.core_type = #tpu.core_type<tc>, window_params = [{transform_indices = @transform_0, window_bounds = array<i64: 1, 16, 32>}, {transform_indices = @transform_1, window_bounds = array<i64: 1, 16, 32>}]} {
    %c0 = arith.constant 0 : index
    %c0_0 = arith.constant 0 : index
    %c0_1 = arith.constant 0 : index
    %0 = vector.load %arg2[%c0, %c0_0, %c0_1] : memref<1x16x32xbf16, #tpu.memory_space<vmem>>, vector<1x16x32xbf16>
    %1 = arith.extf %0 : vector<1x16x32xbf16> to vector<1x16x32xf32>
    %cst = arith.constant dense<0.000000e+00> : vector<1x32xf32>
    %2 = vector.multi_reduction <add>, %1, %cst [1] : vector<1x16x32xf32> to vector<1x32xf32>
    %3 = vector.shape_cast %2 : vector<1x32xf32> to vector<1x1x32xf32>
    %cst_2 = arith.constant 6.250000e-02 : f32
    %4 = vector.broadcast %cst_2 : f32 to vector<1x1x32xf32>
    %5 = arith.mulf %3, %4 : vector<1x1x32xf32>
    %6 = arith.mulf %1, %1 : vector<1x16x32xf32>
    %cst_3 = arith.constant dense<0.000000e+00> : vector<1x32xf32>
    %7 = vector.multi_reduction <add>, %6, %cst_3 [1] : vector<1x16x32xf32> to vector<1x32xf32>
    %8 = vector.shape_cast %7 : vector<1x32xf32> to vector<1x1x32xf32>
    %cst_4 = arith.constant 6.250000e-02 : f32
    %9 = vector.broadcast %cst_4 : f32 to vector<1x1x32xf32>
    %10 = arith.mulf %8, %9 : vector<1x1x32xf32>
    %11 = arith.mulf %5, %5 : vector<1x1x32xf32>
    %12 = arith.subf %10, %11 : vector<1x1x32xf32>
    %cst_5 = arith.constant 0.000000e+00 : f32
    %13 = vector.broadcast %cst_5 : f32 to vector<1x1x32xf32>
    %14 = arith.maximumf %12, %13 : vector<1x1x32xf32>
    %15 = vector.broadcast %5 : vector<1x1x32xf32> to vector<1x16x32xf32>
    %16 = arith.subf %1, %15 : vector<1x16x32xf32>
    %cst_6 = arith.constant 9.99999974E-6 : f32
    %17 = vector.broadcast %cst_6 : f32 to vector<1x1x32xf32>
    %18 = arith.addf %14, %17 : vector<1x1x32xf32>
    %19 = math.rsqrt %18 : vector<1x1x32xf32>
    %20 = vector.broadcast %19 : vector<1x1x32xf32> to vector<1x16x32xf32>
    %21 = arith.mulf %16, %20 : vector<1x16x32xf32>
    %cst_7 = arith.constant 2.000000e-01 : f32
    %22 = vector.broadcast %cst_7 : f32 to vector<1x16x32xf32>
    %23 = arith.mulf %22, %21 : vector<1x16x32xf32>
    %24 = arith.maximumf %21, %23 : vector<1x16x32xf32>
    %25 = arith.truncf %24 : vector<1x16x32xf32> to vector<1x16x32xbf16>
    %c0_8 = arith.constant 0 : index
    %c0_9 = arith.constant 0 : index
    %c0_10 = arith.constant 0 : index
    %26 = vector.load %arg3[%c0_8, %c0_9, %c0_10] : memref<1x16x32xbf16, #tpu.memory_space<vmem>>, vector<1x16x32xbf16>
    tpu.vector_store %arg3[%c0_8, %c0_9, %c0_10], %25 {strides = array<i32>} : memref<1x16x32xbf16, #tpu.memory_space<vmem>>, vector<1x16x32xbf16>,
    return
  }
  func.func @transform_0(%arg0: i32, %arg1: i32) -> (i32, i32, i32) {
    %c0_i32 = arith.constant 0 : i32
    %c0_i32_0 = arith.constant 0 : i32
    return %arg0, %c0_i32, %arg1 : i32, i32, i32
  }
  func.func @transform_1(%arg0: i32, %arg1: i32) -> (i32, i32, i32) {
    %c0_i32 = arith.constant 0 : i32
    %c0_i32_0 = arith.constant 0 : i32
    return %arg0, %c0_i32, %arg1 : i32, i32, i32
  }
}

module attributes {stable_mosaic.version = 11 : i64} {
  func.func @_instance_norm_lrelu_kernel(%arg0: i32, %arg1: i32, %arg2: memref<1x9x64xbf16, #tpu.memory_space<vmem>>, %arg3: memref<1x9x64xbf16, #tpu.memory_space<vmem>>) attributes {dimension_semantics = [#tpu.dimension_semantics<parallel>, #tpu.dimension_semantics<parallel>], iteration_bounds = array<i64: 2, 1>, scalar_prefetch = 0 : i64, scratch_operands = 0 : i64, tpu.core_type = #tpu.core_type<tc>, window_params = [{transform_indices = @transform_0, window_bounds = array<i64: 1, 9, 64>}, {transform_indices = @transform_1, window_bounds = array<i64: 1, 9, 64>}]} {
    %c0 = arith.constant 0 : index
    %c0_0 = arith.constant 0 : index
    %c0_1 = arith.constant 0 : index
    %0 = vector.load %arg2[%c0, %c0_0, %c0_1] : memref<1x9x64xbf16, #tpu.memory_space<vmem>>, vector<1x9x64xbf16>
    %1 = arith.extf %0 : vector<1x9x64xbf16> to vector<1x9x64xf32>
    %cst = arith.constant dense<0.000000e+00> : vector<1x64xf32>
    %2 = vector.multi_reduction <add>, %1, %cst [1] : vector<1x9x64xf32> to vector<1x64xf32>
    %3 = vector.shape_cast %2 : vector<1x64xf32> to vector<1x1x64xf32>
    %cst_2 = arith.constant 0.111111112 : f32
    %4 = vector.broadcast %cst_2 : f32 to vector<1x1x64xf32>
    %5 = arith.mulf %3, %4 : vector<1x1x64xf32>
    %6 = arith.mulf %1, %1 : vector<1x9x64xf32>
    %cst_3 = arith.constant dense<0.000000e+00> : vector<1x64xf32>
    %7 = vector.multi_reduction <add>, %6, %cst_3 [1] : vector<1x9x64xf32> to vector<1x64xf32>
    %8 = vector.shape_cast %7 : vector<1x64xf32> to vector<1x1x64xf32>
    %cst_4 = arith.constant 0.111111112 : f32
    %9 = vector.broadcast %cst_4 : f32 to vector<1x1x64xf32>
    %10 = arith.mulf %8, %9 : vector<1x1x64xf32>
    %11 = arith.mulf %5, %5 : vector<1x1x64xf32>
    %12 = arith.subf %10, %11 : vector<1x1x64xf32>
    %cst_5 = arith.constant 0.000000e+00 : f32
    %13 = vector.broadcast %cst_5 : f32 to vector<1x1x64xf32>
    %14 = arith.maximumf %12, %13 : vector<1x1x64xf32>
    %15 = vector.broadcast %5 : vector<1x1x64xf32> to vector<1x9x64xf32>
    %16 = arith.subf %1, %15 : vector<1x9x64xf32>
    %cst_6 = arith.constant 9.99999974E-6 : f32
    %17 = vector.broadcast %cst_6 : f32 to vector<1x1x64xf32>
    %18 = arith.addf %14, %17 : vector<1x1x64xf32>
    %19 = math.rsqrt %18 : vector<1x1x64xf32>
    %20 = vector.broadcast %19 : vector<1x1x64xf32> to vector<1x9x64xf32>
    %21 = arith.mulf %16, %20 : vector<1x9x64xf32>
    %cst_7 = arith.constant 2.000000e-01 : f32
    %22 = vector.broadcast %cst_7 : f32 to vector<1x9x64xf32>
    %23 = arith.mulf %22, %21 : vector<1x9x64xf32>
    %24 = arith.maximumf %21, %23 : vector<1x9x64xf32>
    %25 = arith.truncf %24 : vector<1x9x64xf32> to vector<1x9x64xbf16>
    %c0_8 = arith.constant 0 : index
    %c0_9 = arith.constant 0 : index
    %c0_10 = arith.constant 0 : index
    %26 = vector.load %arg3[%c0_8, %c0_9, %c0_10] : memref<1x9x64xbf16, #tpu.memory_space<vmem>>, vector<1x9x64xbf16>
    tpu.vector_store %arg3[%c0_8, %c0_9, %c0_10], %25 {strides = array<i32>} : memref<1x9x64xbf16, #tpu.memory_space<vmem>>, vector<1x9x64xbf16>,
    return
  }
  func.func @transform_0(%arg0: i32, %arg1: i32) -> (i32, i32, i32) {
    %c0_i32 = arith.constant 0 : i32
    %c0_i32_0 = arith.constant 0 : i32
    return %arg0, %c0_i32, %arg1 : i32, i32, i32
  }
  func.func @transform_1(%arg0: i32, %arg1: i32) -> (i32, i32, i32) {
    %c0_i32 = arith.constant 0 : i32
    %c0_i32_0 = arith.constant 0 : i32
    return %arg0, %c0_i32, %arg1 : i32, i32, i32
  }
}

module attributes {stable_mosaic.version = 11 : i64} {
  func.func @_conv_s1_kernel(%arg0: i32, %arg1: i32, %arg2: memref<1x42x32xbf16, #tpu.memory_space<vmem>>, %arg3: memref<16x32x128xbf16, #tpu.memory_space<vmem>>, %arg4: memref<1x128xf32, #tpu.memory_space<vmem>>, %arg5: memref<1x18x128xbf16, #tpu.memory_space<vmem>>) attributes {dimension_semantics = [#tpu.dimension_semantics<parallel>, #tpu.dimension_semantics<parallel>], iteration_bounds = array<i64: 1, 2>, scalar_prefetch = 0 : i64, scratch_operands = 0 : i64, tpu.core_type = #tpu.core_type<tc>, window_params = [{transform_indices = @transform_0, window_bounds = array<i64: 1, 42, 32>}, {transform_indices = @transform_1, window_bounds = array<i64: 16, 32, 128>}, {transform_indices = @transform_2, window_bounds = array<i64: 1, 128>}, {transform_indices = @transform_3, window_bounds = array<i64: 1, 18, 128>}]} {
    %cst = arith.constant 0.000000e+00 : f32
    %0 = vector.broadcast %cst : f32 to vector<18x128xf32>
    %c0 = arith.constant 0 : index
    %c0_0 = arith.constant 0 : index
    %c0_1 = arith.constant 0 : index
    %1 = vector.load %arg2[%c0, %c0_0, %c0_1] : memref<1x42x32xbf16, #tpu.memory_space<vmem>>, vector<1x18x32xbf16>
    %2 = vector.shape_cast %1 : vector<1x18x32xbf16> to vector<18x32xbf16>
    %c0_2 = arith.constant 0 : index
    %c0_3 = arith.constant 0 : index
    %c0_4 = arith.constant 0 : index
    %3 = vector.load %arg3[%c0_2, %c0_3, %c0_4] : memref<16x32x128xbf16, #tpu.memory_space<vmem>>, vector<1x32x128xbf16>
    %4 = vector.shape_cast %3 : vector<1x32x128xbf16> to vector<32x128xbf16>
    %cst_5 = arith.constant dense<0.000000e+00> : vector<18x128xf32>
    %5 = tpu.matmul %2, %4, %cst_5 {dimension_numbers = #tpu.dot_dimension_numbers<[1], [0], [0], [1], [0, 0, 1, 1], [], []>} : vector<18x32xbf16>, vector<32x128xbf16>, vector<18x128xf32> -> vector<18x128xf32>
    %6 = arith.addf %0, %5 : vector<18x128xf32>
    %c0_6 = arith.constant 0 : index
    %c1 = arith.constant 1 : index
    %c0_7 = arith.constant 0 : index
    %7 = vector.load %arg2[%c0_6, %c1, %c0_7] : memref<1x42x32xbf16, #tpu.memory_space<vmem>>, vector<1x18x32xbf16>
    %8 = vector.shape_cast %7 : vector<1x18x32xbf16> to vector<18x32xbf16>
    %c1_8 = arith.constant 1 : index
    %c0_9 = arith.constant 0 : index
    %c0_10 = arith.constant 0 : index
    %9 = vector.load %arg3[%c1_8, %c0_9, %c0_10] : memref<16x32x128xbf16, #tpu.memory_space<vmem>>, vector<1x32x128xbf16>
    %10 = vector.shape_cast %9 : vector<1x32x128xbf16> to vector<32x128xbf16>
    %cst_11 = arith.constant dense<0.000000e+00> : vector<18x128xf32>
    %11 = tpu.matmul %8, %10, %cst_11 {dimension_numbers = #tpu.dot_dimension_numbers<[1], [0], [0], [1], [0, 0, 1, 1], [], []>} : vector<18x32xbf16>, vector<32x128xbf16>, vector<18x128xf32> -> vector<18x128xf32>
    %12 = arith.addf %6, %11 : vector<18x128xf32>
    %c0_12 = arith.constant 0 : index
    %c2 = arith.constant 2 : index
    %c0_13 = arith.constant 0 : index
    %13 = vector.load %arg2[%c0_12, %c2, %c0_13] : memref<1x42x32xbf16, #tpu.memory_space<vmem>>, vector<1x18x32xbf16>
    %14 = vector.shape_cast %13 : vector<1x18x32xbf16> to vector<18x32xbf16>
    %c2_14 = arith.constant 2 : index
    %c0_15 = arith.constant 0 : index
    %c0_16 = arith.constant 0 : index
    %15 = vector.load %arg3[%c2_14, %c0_15, %c0_16] : memref<16x32x128xbf16, #tpu.memory_space<vmem>>, vector<1x32x128xbf16>
    %16 = vector.shape_cast %15 : vector<1x32x128xbf16> to vector<32x128xbf16>
    %cst_17 = arith.constant dense<0.000000e+00> : vector<18x128xf32>
    %17 = tpu.matmul %14, %16, %cst_17 {dimension_numbers = #tpu.dot_dimension_numbers<[1], [0], [0], [1], [0, 0, 1, 1], [], []>} : vector<18x32xbf16>, vector<32x128xbf16>, vector<18x128xf32> -> vector<18x128xf32>
    %18 = arith.addf %12, %17 : vector<18x128xf32>
    %c0_18 = arith.constant 0 : index
    %c3 = arith.constant 3 : index
    %c0_19 = arith.constant 0 : index
    %19 = vector.load %arg2[%c0_18, %c3, %c0_19] : memref<1x42x32xbf16, #tpu.memory_space<vmem>>, vector<1x18x32xbf16>
    %20 = vector.shape_cast %19 : vector<1x18x32xbf16> to vector<18x32xbf16>
    %c3_20 = arith.constant 3 : index
    %c0_21 = arith.constant 0 : index
    %c0_22 = arith.constant 0 : index
    %21 = vector.load %arg3[%c3_20, %c0_21, %c0_22] : memref<16x32x128xbf16, #tpu.memory_space<vmem>>, vector<1x32x128xbf16>
    %22 = vector.shape_cast %21 : vector<1x32x128xbf16> to vector<32x128xbf16>
    %cst_23 = arith.constant dense<0.000000e+00> : vector<18x128xf32>
    %23 = tpu.matmul %20, %22, %cst_23 {dimension_numbers = #tpu.dot_dimension_numbers<[1], [0], [0], [1], [0, 0, 1, 1], [], []>} : vector<18x32xbf16>, vector<32x128xbf16>, vector<18x128xf32> -> vector<18x128xf32>
    %24 = arith.addf %18, %23 : vector<18x128xf32>
    %c0_24 = arith.constant 0 : index
    %c6 = arith.constant 6 : index
    %c0_25 = arith.constant 0 : index
    %25 = vector.load %arg2[%c0_24, %c6, %c0_25] : memref<1x42x32xbf16, #tpu.memory_space<vmem>>, vector<1x18x32xbf16>
    %26 = vector.shape_cast %25 : vector<1x18x32xbf16> to vector<18x32xbf16>
    %c4 = arith.constant 4 : index
    %c0_26 = arith.constant 0 : index
    %c0_27 = arith.constant 0 : index
    %27 = vector.load %arg3[%c4, %c0_26, %c0_27] : memref<16x32x128xbf16, #tpu.memory_space<vmem>>, vector<1x32x128xbf16>
    %28 = vector.shape_cast %27 : vector<1x32x128xbf16> to vector<32x128xbf16>
    %cst_28 = arith.constant dense<0.000000e+00> : vector<18x128xf32>
    %29 = tpu.matmul %26, %28, %cst_28 {dimension_numbers = #tpu.dot_dimension_numbers<[1], [0], [0], [1], [0, 0, 1, 1], [], []>} : vector<18x32xbf16>, vector<32x128xbf16>, vector<18x128xf32> -> vector<18x128xf32>
    %30 = arith.addf %24, %29 : vector<18x128xf32>
    %c0_29 = arith.constant 0 : index
    %c7 = arith.constant 7 : index
    %c0_30 = arith.constant 0 : index
    %31 = vector.load %arg2[%c0_29, %c7, %c0_30] : memref<1x42x32xbf16, #tpu.memory_space<vmem>>, vector<1x18x32xbf16>
    %32 = vector.shape_cast %31 : vector<1x18x32xbf16> to vector<18x32xbf16>
    %c5 = arith.constant 5 : index
    %c0_31 = arith.constant 0 : index
    %c0_32 = arith.constant 0 : index
    %33 = vector.load %arg3[%c5, %c0_31, %c0_32] : memref<16x32x128xbf16, #tpu.memory_space<vmem>>, vector<1x32x128xbf16>
    %34 = vector.shape_cast %33 : vector<1x32x128xbf16> to vector<32x128xbf16>
    %cst_33 = arith.constant dense<0.000000e+00> : vector<18x128xf32>
    %35 = tpu.matmul %32, %34, %cst_33 {dimension_numbers = #tpu.dot_dimension_numbers<[1], [0], [0], [1], [0, 0, 1, 1], [], []>} : vector<18x32xbf16>, vector<32x128xbf16>, vector<18x128xf32> -> vector<18x128xf32>
    %36 = arith.addf %30, %35 : vector<18x128xf32>
    %c0_34 = arith.constant 0 : index
    %c8 = arith.constant 8 : index
    %c0_35 = arith.constant 0 : index
    %37 = vector.load %arg2[%c0_34, %c8, %c0_35] : memref<1x42x32xbf16, #tpu.memory_space<vmem>>, vector<1x18x32xbf16>
    %38 = vector.shape_cast %37 : vector<1x18x32xbf16> to vector<18x32xbf16>
    %c6_36 = arith.constant 6 : index
    %c0_37 = arith.constant 0 : index
    %c0_38 = arith.constant 0 : index
    %39 = vector.load %arg3[%c6_36, %c0_37, %c0_38] : memref<16x32x128xbf16, #tpu.memory_space<vmem>>, vector<1x32x128xbf16>
    %40 = vector.shape_cast %39 : vector<1x32x128xbf16> to vector<32x128xbf16>
    %cst_39 = arith.constant dense<0.000000e+00> : vector<18x128xf32>
    %41 = tpu.matmul %38, %40, %cst_39 {dimension_numbers = #tpu.dot_dimension_numbers<[1], [0], [0], [1], [0, 0, 1, 1], [], []>} : vector<18x32xbf16>, vector<32x128xbf16>, vector<18x128xf32> -> vector<18x128xf32>
    %42 = arith.addf %36, %41 : vector<18x128xf32>
    %c0_40 = arith.constant 0 : index
    %c9 = arith.constant 9 : index
    %c0_41 = arith.constant 0 : index
    %43 = vector.load %arg2[%c0_40, %c9, %c0_41] : memref<1x42x32xbf16, #tpu.memory_space<vmem>>, vector<1x18x32xbf16>
    %44 = vector.shape_cast %43 : vector<1x18x32xbf16> to vector<18x32xbf16>
    %c7_42 = arith.constant 7 : index
    %c0_43 = arith.constant 0 : index
    %c0_44 = arith.constant 0 : index
    %45 = vector.load %arg3[%c7_42, %c0_43, %c0_44] : memref<16x32x128xbf16, #tpu.memory_space<vmem>>, vector<1x32x128xbf16>
    %46 = vector.shape_cast %45 : vector<1x32x128xbf16> to vector<32x128xbf16>
    %cst_45 = arith.constant dense<0.000000e+00> : vector<18x128xf32>
    %47 = tpu.matmul %44, %46, %cst_45 {dimension_numbers = #tpu.dot_dimension_numbers<[1], [0], [0], [1], [0, 0, 1, 1], [], []>} : vector<18x32xbf16>, vector<32x128xbf16>, vector<18x128xf32> -> vector<18x128xf32>
    %48 = arith.addf %42, %47 : vector<18x128xf32>
    %c0_46 = arith.constant 0 : index
    %c12 = arith.constant 12 : index
    %c0_47 = arith.constant 0 : index
    %49 = vector.load %arg2[%c0_46, %c12, %c0_47] : memref<1x42x32xbf16, #tpu.memory_space<vmem>>, vector<1x18x32xbf16>
    %50 = vector.shape_cast %49 : vector<1x18x32xbf16> to vector<18x32xbf16>
    %c8_48 = arith.constant 8 : index
    %c0_49 = arith.constant 0 : index
    %c0_50 = arith.constant 0 : index
    %51 = vector.load %arg3[%c8_48, %c0_49, %c0_50] : memref<16x32x128xbf16, #tpu.memory_space<vmem>>, vector<1x32x128xbf16>
    %52 = vector.shape_cast %51 : vector<1x32x128xbf16> to vector<32x128xbf16>
    %cst_51 = arith.constant dense<0.000000e+00> : vector<18x128xf32>
    %53 = tpu.matmul %50, %52, %cst_51 {dimension_numbers = #tpu.dot_dimension_numbers<[1], [0], [0], [1], [0, 0, 1, 1], [], []>} : vector<18x32xbf16>, vector<32x128xbf16>, vector<18x128xf32> -> vector<18x128xf32>
    %54 = arith.addf %48, %53 : vector<18x128xf32>
    %c0_52 = arith.constant 0 : index
    %c13 = arith.constant 13 : index
    %c0_53 = arith.constant 0 : index
    %55 = vector.load %arg2[%c0_52, %c13, %c0_53] : memref<1x42x32xbf16, #tpu.memory_space<vmem>>, vector<1x18x32xbf16>
    %56 = vector.shape_cast %55 : vector<1x18x32xbf16> to vector<18x32xbf16>
    %c9_54 = arith.constant 9 : index
    %c0_55 = arith.constant 0 : index
    %c0_56 = arith.constant 0 : index
    %57 = vector.load %arg3[%c9_54, %c0_55, %c0_56] : memref<16x32x128xbf16, #tpu.memory_space<vmem>>, vector<1x32x128xbf16>
    %58 = vector.shape_cast %57 : vector<1x32x128xbf16> to vector<32x128xbf16>
    %cst_57 = arith.constant dense<0.000000e+00> : vector<18x128xf32>
    %59 = tpu.matmul %56, %58, %cst_57 {dimension_numbers = #tpu.dot_dimension_numbers<[1], [0], [0], [1], [0, 0, 1, 1], [], []>} : vector<18x32xbf16>, vector<32x128xbf16>, vector<18x128xf32> -> vector<18x128xf32>
    %60 = arith.addf %54, %59 : vector<18x128xf32>
    %c0_58 = arith.constant 0 : index
    %c14 = arith.constant 14 : index
    %c0_59 = arith.constant 0 : index
    %61 = vector.load %arg2[%c0_58, %c14, %c0_59] : memref<1x42x32xbf16, #tpu.memory_space<vmem>>, vector<1x18x32xbf16>
    %62 = vector.shape_cast %61 : vector<1x18x32xbf16> to vector<18x32xbf16>
    %c10 = arith.constant 10 : index
    %c0_60 = arith.constant 0 : index
    %c0_61 = arith.constant 0 : index
    %63 = vector.load %arg3[%c10, %c0_60, %c0_61] : memref<16x32x128xbf16, #tpu.memory_space<vmem>>, vector<1x32x128xbf16>
    %64 = vector.shape_cast %63 : vector<1x32x128xbf16> to vector<32x128xbf16>
    %cst_62 = arith.constant dense<0.000000e+00> : vector<18x128xf32>
    %65 = tpu.matmul %62, %64, %cst_62 {dimension_numbers = #tpu.dot_dimension_numbers<[1], [0], [0], [1], [0, 0, 1, 1], [], []>} : vector<18x32xbf16>, vector<32x128xbf16>, vector<18x128xf32> -> vector<18x128xf32>
    %66 = arith.addf %60, %65 : vector<18x128xf32>
    %c0_63 = arith.constant 0 : index
    %c15 = arith.constant 15 : index
    %c0_64 = arith.constant 0 : index
    %67 = vector.load %arg2[%c0_63, %c15, %c0_64] : memref<1x42x32xbf16, #tpu.memory_space<vmem>>, vector<1x18x32xbf16>
    %68 = vector.shape_cast %67 : vector<1x18x32xbf16> to vector<18x32xbf16>
    %c11 = arith.constant 11 : index
    %c0_65 = arith.constant 0 : index
    %c0_66 = arith.constant 0 : index
    %69 = vector.load %arg3[%c11, %c0_65, %c0_66] : memref<16x32x128xbf16, #tpu.memory_space<vmem>>, vector<1x32x128xbf16>
    %70 = vector.shape_cast %69 : vector<1x32x128xbf16> to vector<32x128xbf16>
    %cst_67 = arith.constant dense<0.000000e+00> : vector<18x128xf32>
    %71 = tpu.matmul %68, %70, %cst_67 {dimension_numbers = #tpu.dot_dimension_numbers<[1], [0], [0], [1], [0, 0, 1, 1], [], []>} : vector<18x32xbf16>, vector<32x128xbf16>, vector<18x128xf32> -> vector<18x128xf32>
    %72 = arith.addf %66, %71 : vector<18x128xf32>
    %c0_68 = arith.constant 0 : index
    %c18 = arith.constant 18 : index
    %c0_69 = arith.constant 0 : index
    %73 = vector.load %arg2[%c0_68, %c18, %c0_69] : memref<1x42x32xbf16, #tpu.memory_space<vmem>>, vector<1x18x32xbf16>
    %74 = vector.shape_cast %73 : vector<1x18x32xbf16> to vector<18x32xbf16>
    %c12_70 = arith.constant 12 : index
    %c0_71 = arith.constant 0 : index
    %c0_72 = arith.constant 0 : index
    %75 = vector.load %arg3[%c12_70, %c0_71, %c0_72] : memref<16x32x128xbf16, #tpu.memory_space<vmem>>, vector<1x32x128xbf16>
    %76 = vector.shape_cast %75 : vector<1x32x128xbf16> to vector<32x128xbf16>
    %cst_73 = arith.constant dense<0.000000e+00> : vector<18x128xf32>
    %77 = tpu.matmul %74, %76, %cst_73 {dimension_numbers = #tpu.dot_dimension_numbers<[1], [0], [0], [1], [0, 0, 1, 1], [], []>} : vector<18x32xbf16>, vector<32x128xbf16>, vector<18x128xf32> -> vector<18x128xf32>
    %78 = arith.addf %72, %77 : vector<18x128xf32>
    %c0_74 = arith.constant 0 : index
    %c19 = arith.constant 19 : index
    %c0_75 = arith.constant 0 : index
    %79 = vector.load %arg2[%c0_74, %c19, %c0_75] : memref<1x42x32xbf16, #tpu.memory_space<vmem>>, vector<1x18x32xbf16>
    %80 = vector.shape_cast %79 : vector<1x18x32xbf16> to vector<18x32xbf16>
    %c13_76 = arith.constant 13 : index
    %c0_77 = arith.constant 0 : index
    %c0_78 = arith.constant 0 : index
    %81 = vector.load %arg3[%c13_76, %c0_77, %c0_78] : memref<16x32x128xbf16, #tpu.memory_space<vmem>>, vector<1x32x128xbf16>
    %82 = vector.shape_cast %81 : vector<1x32x128xbf16> to vector<32x128xbf16>
    %cst_79 = arith.constant dense<0.000000e+00> : vector<18x128xf32>
    %83 = tpu.matmul %80, %82, %cst_79 {dimension_numbers = #tpu.dot_dimension_numbers<[1], [0], [0], [1], [0, 0, 1, 1], [], []>} : vector<18x32xbf16>, vector<32x128xbf16>, vector<18x128xf32> -> vector<18x128xf32>
    %84 = arith.addf %78, %83 : vector<18x128xf32>
    %c0_80 = arith.constant 0 : index
    %c20 = arith.constant 20 : index
    %c0_81 = arith.constant 0 : index
    %85 = vector.load %arg2[%c0_80, %c20, %c0_81] : memref<1x42x32xbf16, #tpu.memory_space<vmem>>, vector<1x18x32xbf16>
    %86 = vector.shape_cast %85 : vector<1x18x32xbf16> to vector<18x32xbf16>
    %c14_82 = arith.constant 14 : index
    %c0_83 = arith.constant 0 : index
    %c0_84 = arith.constant 0 : index
    %87 = vector.load %arg3[%c14_82, %c0_83, %c0_84] : memref<16x32x128xbf16, #tpu.memory_space<vmem>>, vector<1x32x128xbf16>
    %88 = vector.shape_cast %87 : vector<1x32x128xbf16> to vector<32x128xbf16>
    %cst_85 = arith.constant dense<0.000000e+00> : vector<18x128xf32>
    %89 = tpu.matmul %86, %88, %cst_85 {dimension_numbers = #tpu.dot_dimension_numbers<[1], [0], [0], [1], [0, 0, 1, 1], [], []>} : vector<18x32xbf16>, vector<32x128xbf16>, vector<18x128xf32> -> vector<18x128xf32>
    %90 = arith.addf %84, %89 : vector<18x128xf32>
    %c0_86 = arith.constant 0 : index
    %c21 = arith.constant 21 : index
    %c0_87 = arith.constant 0 : index
    %91 = vector.load %arg2[%c0_86, %c21, %c0_87] : memref<1x42x32xbf16, #tpu.memory_space<vmem>>, vector<1x18x32xbf16>
    %92 = vector.shape_cast %91 : vector<1x18x32xbf16> to vector<18x32xbf16>
    %c15_88 = arith.constant 15 : index
    %c0_89 = arith.constant 0 : index
    %c0_90 = arith.constant 0 : index
    %93 = vector.load %arg3[%c15_88, %c0_89, %c0_90] : memref<16x32x128xbf16, #tpu.memory_space<vmem>>, vector<1x32x128xbf16>
    %94 = vector.shape_cast %93 : vector<1x32x128xbf16> to vector<32x128xbf16>
    %cst_91 = arith.constant dense<0.000000e+00> : vector<18x128xf32>
    %95 = tpu.matmul %92, %94, %cst_91 {dimension_numbers = #tpu.dot_dimension_numbers<[1], [0], [0], [1], [0, 0, 1, 1], [], []>} : vector<18x32xbf16>, vector<32x128xbf16>, vector<18x128xf32> -> vector<18x128xf32>
    %96 = arith.addf %90, %95 : vector<18x128xf32>
    %c0_92 = arith.constant 0 : index
    %c0_93 = arith.constant 0 : index
    %97 = vector.load %arg4[%c0_92, %c0_93] : memref<1x128xf32, #tpu.memory_space<vmem>>, vector<1x128xf32>
    %98 = vector.broadcast %97 : vector<1x128xf32> to vector<18x128xf32>
    %99 = arith.addf %96, %98 : vector<18x128xf32>
    %100 = arith.truncf %99 : vector<18x128xf32> to vector<18x128xbf16>
    %c0_94 = arith.constant 0 : index
    %c0_95 = arith.constant 0 : index
    %c0_96 = arith.constant 0 : index
    %101 = vector.load %arg5[%c0_94, %c0_95, %c0_96] : memref<1x18x128xbf16, #tpu.memory_space<vmem>>, vector<1x18x128xbf16>
    %102 = vector.shape_cast %101 : vector<1x18x128xbf16> to vector<18x128xbf16>
    %103 = vector.shape_cast %100 : vector<18x128xbf16> to vector<1x18x128xbf16>
    tpu.vector_store %arg5[%c0_94, %c0_95, %c0_96], %103 {strides = array<i32>} : memref<1x18x128xbf16, #tpu.memory_space<vmem>>, vector<1x18x128xbf16>,
    return
  }
  func.func @transform_0(%arg0: i32, %arg1: i32) -> (i32, i32, i32) {
    %c0_i32 = arith.constant 0 : i32
    %c0_i32_0 = arith.constant 0 : i32
    %c0_i32_1 = arith.constant 0 : i32
    return %arg1, %c0_i32, %c0_i32_0 : i32, i32, i32
  }
  func.func @transform_1(%arg0: i32, %arg1: i32) -> (i32, i32, i32) {
    %c0_i32 = arith.constant 0 : i32
    %c0_i32_0 = arith.constant 0 : i32
    %c0_i32_1 = arith.constant 0 : i32
    return %c0_i32, %c0_i32_0, %arg0 : i32, i32, i32
  }
  func.func @transform_2(%arg0: i32, %arg1: i32) -> (i32, i32) {
    %c0_i32 = arith.constant 0 : i32
    %c0_i32_0 = arith.constant 0 : i32
    return %c0_i32, %arg0 : i32, i32
  }
  func.func @transform_3(%arg0: i32, %arg1: i32) -> (i32, i32, i32) {
    %c0_i32 = arith.constant 0 : i32
    %c0_i32_0 = arith.constant 0 : i32
    return %arg1, %c0_i32, %arg0 : i32, i32, i32
  }
}

module attributes {stable_mosaic.version = 11 : i64} {
  func.func @_conv_s1_kernel(%arg0: i32, %arg1: i32, %arg2: memref<1x30x64xbf16, #tpu.memory_space<vmem>>, %arg3: memref<16x64x128xbf16, #tpu.memory_space<vmem>>, %arg4: memref<1x128xf32, #tpu.memory_space<vmem>>, %arg5: memref<1x10x128xf32, #tpu.memory_space<vmem>>) attributes {dimension_semantics = [#tpu.dimension_semantics<parallel>, #tpu.dimension_semantics<parallel>], iteration_bounds = array<i64: 1, 2>, scalar_prefetch = 0 : i64, scratch_operands = 0 : i64, tpu.core_type = #tpu.core_type<tc>, window_params = [{transform_indices = @transform_0, window_bounds = array<i64: 1, 30, 64>}, {transform_indices = @transform_1, window_bounds = array<i64: 16, 64, 128>}, {transform_indices = @transform_2, window_bounds = array<i64: 1, 128>}, {transform_indices = @transform_3, window_bounds = array<i64: 1, 10, 128>}]} {
    %cst = arith.constant 0.000000e+00 : f32
    %0 = vector.broadcast %cst : f32 to vector<10x128xf32>
    %c0 = arith.constant 0 : index
    %c0_0 = arith.constant 0 : index
    %c0_1 = arith.constant 0 : index
    %1 = vector.load %arg2[%c0, %c0_0, %c0_1] : memref<1x30x64xbf16, #tpu.memory_space<vmem>>, vector<1x10x64xbf16>
    %2 = vector.shape_cast %1 : vector<1x10x64xbf16> to vector<10x64xbf16>
    %c0_2 = arith.constant 0 : index
    %c0_3 = arith.constant 0 : index
    %c0_4 = arith.constant 0 : index
    %3 = vector.load %arg3[%c0_2, %c0_3, %c0_4] : memref<16x64x128xbf16, #tpu.memory_space<vmem>>, vector<1x64x128xbf16>
    %4 = vector.shape_cast %3 : vector<1x64x128xbf16> to vector<64x128xbf16>
    %cst_5 = arith.constant dense<0.000000e+00> : vector<10x128xf32>
    %5 = tpu.matmul %2, %4, %cst_5 {dimension_numbers = #tpu.dot_dimension_numbers<[1], [0], [0], [1], [0, 0, 1, 1], [], []>} : vector<10x64xbf16>, vector<64x128xbf16>, vector<10x128xf32> -> vector<10x128xf32>
    %6 = arith.addf %0, %5 : vector<10x128xf32>
    %c0_6 = arith.constant 0 : index
    %c1 = arith.constant 1 : index
    %c0_7 = arith.constant 0 : index
    %7 = vector.load %arg2[%c0_6, %c1, %c0_7] : memref<1x30x64xbf16, #tpu.memory_space<vmem>>, vector<1x10x64xbf16>
    %8 = vector.shape_cast %7 : vector<1x10x64xbf16> to vector<10x64xbf16>
    %c1_8 = arith.constant 1 : index
    %c0_9 = arith.constant 0 : index
    %c0_10 = arith.constant 0 : index
    %9 = vector.load %arg3[%c1_8, %c0_9, %c0_10] : memref<16x64x128xbf16, #tpu.memory_space<vmem>>, vector<1x64x128xbf16>
    %10 = vector.shape_cast %9 : vector<1x64x128xbf16> to vector<64x128xbf16>
    %cst_11 = arith.constant dense<0.000000e+00> : vector<10x128xf32>
    %11 = tpu.matmul %8, %10, %cst_11 {dimension_numbers = #tpu.dot_dimension_numbers<[1], [0], [0], [1], [0, 0, 1, 1], [], []>} : vector<10x64xbf16>, vector<64x128xbf16>, vector<10x128xf32> -> vector<10x128xf32>
    %12 = arith.addf %6, %11 : vector<10x128xf32>
    %c0_12 = arith.constant 0 : index
    %c2 = arith.constant 2 : index
    %c0_13 = arith.constant 0 : index
    %13 = vector.load %arg2[%c0_12, %c2, %c0_13] : memref<1x30x64xbf16, #tpu.memory_space<vmem>>, vector<1x10x64xbf16>
    %14 = vector.shape_cast %13 : vector<1x10x64xbf16> to vector<10x64xbf16>
    %c2_14 = arith.constant 2 : index
    %c0_15 = arith.constant 0 : index
    %c0_16 = arith.constant 0 : index
    %15 = vector.load %arg3[%c2_14, %c0_15, %c0_16] : memref<16x64x128xbf16, #tpu.memory_space<vmem>>, vector<1x64x128xbf16>
    %16 = vector.shape_cast %15 : vector<1x64x128xbf16> to vector<64x128xbf16>
    %cst_17 = arith.constant dense<0.000000e+00> : vector<10x128xf32>
    %17 = tpu.matmul %14, %16, %cst_17 {dimension_numbers = #tpu.dot_dimension_numbers<[1], [0], [0], [1], [0, 0, 1, 1], [], []>} : vector<10x64xbf16>, vector<64x128xbf16>, vector<10x128xf32> -> vector<10x128xf32>
    %18 = arith.addf %12, %17 : vector<10x128xf32>
    %c0_18 = arith.constant 0 : index
    %c3 = arith.constant 3 : index
    %c0_19 = arith.constant 0 : index
    %19 = vector.load %arg2[%c0_18, %c3, %c0_19] : memref<1x30x64xbf16, #tpu.memory_space<vmem>>, vector<1x10x64xbf16>
    %20 = vector.shape_cast %19 : vector<1x10x64xbf16> to vector<10x64xbf16>
    %c3_20 = arith.constant 3 : index
    %c0_21 = arith.constant 0 : index
    %c0_22 = arith.constant 0 : index
    %21 = vector.load %arg3[%c3_20, %c0_21, %c0_22] : memref<16x64x128xbf16, #tpu.memory_space<vmem>>, vector<1x64x128xbf16>
    %22 = vector.shape_cast %21 : vector<1x64x128xbf16> to vector<64x128xbf16>
    %cst_23 = arith.constant dense<0.000000e+00> : vector<10x128xf32>
    %23 = tpu.matmul %20, %22, %cst_23 {dimension_numbers = #tpu.dot_dimension_numbers<[1], [0], [0], [1], [0, 0, 1, 1], [], []>} : vector<10x64xbf16>, vector<64x128xbf16>, vector<10x128xf32> -> vector<10x128xf32>
    %24 = arith.addf %18, %23 : vector<10x128xf32>
    %c0_24 = arith.constant 0 : index
    %c5 = arith.constant 5 : index
    %c0_25 = arith.constant 0 : index
    %25 = vector.load %arg2[%c0_24, %c5, %c0_25] : memref<1x30x64xbf16, #tpu.memory_space<vmem>>, vector<1x10x64xbf16>
    %26 = vector.shape_cast %25 : vector<1x10x64xbf16> to vector<10x64xbf16>
    %c4 = arith.constant 4 : index
    %c0_26 = arith.constant 0 : index
    %c0_27 = arith.constant 0 : index
    %27 = vector.load %arg3[%c4, %c0_26, %c0_27] : memref<16x64x128xbf16, #tpu.memory_space<vmem>>, vector<1x64x128xbf16>
    %28 = vector.shape_cast %27 : vector<1x64x128xbf16> to vector<64x128xbf16>
    %cst_28 = arith.constant dense<0.000000e+00> : vector<10x128xf32>
    %29 = tpu.matmul %26, %28, %cst_28 {dimension_numbers = #tpu.dot_dimension_numbers<[1], [0], [0], [1], [0, 0, 1, 1], [], []>} : vector<10x64xbf16>, vector<64x128xbf16>, vector<10x128xf32> -> vector<10x128xf32>
    %30 = arith.addf %24, %29 : vector<10x128xf32>
    %c0_29 = arith.constant 0 : index
    %c6 = arith.constant 6 : index
    %c0_30 = arith.constant 0 : index
    %31 = vector.load %arg2[%c0_29, %c6, %c0_30] : memref<1x30x64xbf16, #tpu.memory_space<vmem>>, vector<1x10x64xbf16>
    %32 = vector.shape_cast %31 : vector<1x10x64xbf16> to vector<10x64xbf16>
    %c5_31 = arith.constant 5 : index
    %c0_32 = arith.constant 0 : index
    %c0_33 = arith.constant 0 : index
    %33 = vector.load %arg3[%c5_31, %c0_32, %c0_33] : memref<16x64x128xbf16, #tpu.memory_space<vmem>>, vector<1x64x128xbf16>
    %34 = vector.shape_cast %33 : vector<1x64x128xbf16> to vector<64x128xbf16>
    %cst_34 = arith.constant dense<0.000000e+00> : vector<10x128xf32>
    %35 = tpu.matmul %32, %34, %cst_34 {dimension_numbers = #tpu.dot_dimension_numbers<[1], [0], [0], [1], [0, 0, 1, 1], [], []>} : vector<10x64xbf16>, vector<64x128xbf16>, vector<10x128xf32> -> vector<10x128xf32>
    %36 = arith.addf %30, %35 : vector<10x128xf32>
    %c0_35 = arith.constant 0 : index
    %c7 = arith.constant 7 : index
    %c0_36 = arith.constant 0 : index
    %37 = vector.load %arg2[%c0_35, %c7, %c0_36] : memref<1x30x64xbf16, #tpu.memory_space<vmem>>, vector<1x10x64xbf16>
    %38 = vector.shape_cast %37 : vector<1x10x64xbf16> to vector<10x64xbf16>
    %c6_37 = arith.constant 6 : index
    %c0_38 = arith.constant 0 : index
    %c0_39 = arith.constant 0 : index
    %39 = vector.load %arg3[%c6_37, %c0_38, %c0_39] : memref<16x64x128xbf16, #tpu.memory_space<vmem>>, vector<1x64x128xbf16>
    %40 = vector.shape_cast %39 : vector<1x64x128xbf16> to vector<64x128xbf16>
    %cst_40 = arith.constant dense<0.000000e+00> : vector<10x128xf32>
    %41 = tpu.matmul %38, %40, %cst_40 {dimension_numbers = #tpu.dot_dimension_numbers<[1], [0], [0], [1], [0, 0, 1, 1], [], []>} : vector<10x64xbf16>, vector<64x128xbf16>, vector<10x128xf32> -> vector<10x128xf32>
    %42 = arith.addf %36, %41 : vector<10x128xf32>
    %c0_41 = arith.constant 0 : index
    %c8 = arith.constant 8 : index
    %c0_42 = arith.constant 0 : index
    %43 = vector.load %arg2[%c0_41, %c8, %c0_42] : memref<1x30x64xbf16, #tpu.memory_space<vmem>>, vector<1x10x64xbf16>
    %44 = vector.shape_cast %43 : vector<1x10x64xbf16> to vector<10x64xbf16>
    %c7_43 = arith.constant 7 : index
    %c0_44 = arith.constant 0 : index
    %c0_45 = arith.constant 0 : index
    %45 = vector.load %arg3[%c7_43, %c0_44, %c0_45] : memref<16x64x128xbf16, #tpu.memory_space<vmem>>, vector<1x64x128xbf16>
    %46 = vector.shape_cast %45 : vector<1x64x128xbf16> to vector<64x128xbf16>
    %cst_46 = arith.constant dense<0.000000e+00> : vector<10x128xf32>
    %47 = tpu.matmul %44, %46, %cst_46 {dimension_numbers = #tpu.dot_dimension_numbers<[1], [0], [0], [1], [0, 0, 1, 1], [], []>} : vector<10x64xbf16>, vector<64x128xbf16>, vector<10x128xf32> -> vector<10x128xf32>
    %48 = arith.addf %42, %47 : vector<10x128xf32>
    %c0_47 = arith.constant 0 : index
    %c10 = arith.constant 10 : index
    %c0_48 = arith.constant 0 : index
    %49 = vector.load %arg2[%c0_47, %c10, %c0_48] : memref<1x30x64xbf16, #tpu.memory_space<vmem>>, vector<1x10x64xbf16>
    %50 = vector.shape_cast %49 : vector<1x10x64xbf16> to vector<10x64xbf16>
    %c8_49 = arith.constant 8 : index
    %c0_50 = arith.constant 0 : index
    %c0_51 = arith.constant 0 : index
    %51 = vector.load %arg3[%c8_49, %c0_50, %c0_51] : memref<16x64x128xbf16, #tpu.memory_space<vmem>>, vector<1x64x128xbf16>
    %52 = vector.shape_cast %51 : vector<1x64x128xbf16> to vector<64x128xbf16>
    %cst_52 = arith.constant dense<0.000000e+00> : vector<10x128xf32>
    %53 = tpu.matmul %50, %52, %cst_52 {dimension_numbers = #tpu.dot_dimension_numbers<[1], [0], [0], [1], [0, 0, 1, 1], [], []>} : vector<10x64xbf16>, vector<64x128xbf16>, vector<10x128xf32> -> vector<10x128xf32>
    %54 = arith.addf %48, %53 : vector<10x128xf32>
    %c0_53 = arith.constant 0 : index
    %c11 = arith.constant 11 : index
    %c0_54 = arith.constant 0 : index
    %55 = vector.load %arg2[%c0_53, %c11, %c0_54] : memref<1x30x64xbf16, #tpu.memory_space<vmem>>, vector<1x10x64xbf16>
    %56 = vector.shape_cast %55 : vector<1x10x64xbf16> to vector<10x64xbf16>
    %c9 = arith.constant 9 : index
    %c0_55 = arith.constant 0 : index
    %c0_56 = arith.constant 0 : index
    %57 = vector.load %arg3[%c9, %c0_55, %c0_56] : memref<16x64x128xbf16, #tpu.memory_space<vmem>>, vector<1x64x128xbf16>
    %58 = vector.shape_cast %57 : vector<1x64x128xbf16> to vector<64x128xbf16>
    %cst_57 = arith.constant dense<0.000000e+00> : vector<10x128xf32>
    %59 = tpu.matmul %56, %58, %cst_57 {dimension_numbers = #tpu.dot_dimension_numbers<[1], [0], [0], [1], [0, 0, 1, 1], [], []>} : vector<10x64xbf16>, vector<64x128xbf16>, vector<10x128xf32> -> vector<10x128xf32>
    %60 = arith.addf %54, %59 : vector<10x128xf32>
    %c0_58 = arith.constant 0 : index
    %c12 = arith.constant 12 : index
    %c0_59 = arith.constant 0 : index
    %61 = vector.load %arg2[%c0_58, %c12, %c0_59] : memref<1x30x64xbf16, #tpu.memory_space<vmem>>, vector<1x10x64xbf16>
    %62 = vector.shape_cast %61 : vector<1x10x64xbf16> to vector<10x64xbf16>
    %c10_60 = arith.constant 10 : index
    %c0_61 = arith.constant 0 : index
    %c0_62 = arith.constant 0 : index
    %63 = vector.load %arg3[%c10_60, %c0_61, %c0_62] : memref<16x64x128xbf16, #tpu.memory_space<vmem>>, vector<1x64x128xbf16>
    %64 = vector.shape_cast %63 : vector<1x64x128xbf16> to vector<64x128xbf16>
    %cst_63 = arith.constant dense<0.000000e+00> : vector<10x128xf32>
    %65 = tpu.matmul %62, %64, %cst_63 {dimension_numbers = #tpu.dot_dimension_numbers<[1], [0], [0], [1], [0, 0, 1, 1], [], []>} : vector<10x64xbf16>, vector<64x128xbf16>, vector<10x128xf32> -> vector<10x128xf32>
    %66 = arith.addf %60, %65 : vector<10x128xf32>
    %c0_64 = arith.constant 0 : index
    %c13 = arith.constant 13 : index
    %c0_65 = arith.constant 0 : index
    %67 = vector.load %arg2[%c0_64, %c13, %c0_65] : memref<1x30x64xbf16, #tpu.memory_space<vmem>>, vector<1x10x64xbf16>
    %68 = vector.shape_cast %67 : vector<1x10x64xbf16> to vector<10x64xbf16>
    %c11_66 = arith.constant 11 : index
    %c0_67 = arith.constant 0 : index
    %c0_68 = arith.constant 0 : index
    %69 = vector.load %arg3[%c11_66, %c0_67, %c0_68] : memref<16x64x128xbf16, #tpu.memory_space<vmem>>, vector<1x64x128xbf16>
    %70 = vector.shape_cast %69 : vector<1x64x128xbf16> to vector<64x128xbf16>
    %cst_69 = arith.constant dense<0.000000e+00> : vector<10x128xf32>
    %71 = tpu.matmul %68, %70, %cst_69 {dimension_numbers = #tpu.dot_dimension_numbers<[1], [0], [0], [1], [0, 0, 1, 1], [], []>} : vector<10x64xbf16>, vector<64x128xbf16>, vector<10x128xf32> -> vector<10x128xf32>
    %72 = arith.addf %66, %71 : vector<10x128xf32>
    %c0_70 = arith.constant 0 : index
    %c15 = arith.constant 15 : index
    %c0_71 = arith.constant 0 : index
    %73 = vector.load %arg2[%c0_70, %c15, %c0_71] : memref<1x30x64xbf16, #tpu.memory_space<vmem>>, vector<1x10x64xbf16>
    %74 = vector.shape_cast %73 : vector<1x10x64xbf16> to vector<10x64xbf16>
    %c12_72 = arith.constant 12 : index
    %c0_73 = arith.constant 0 : index
    %c0_74 = arith.constant 0 : index
    %75 = vector.load %arg3[%c12_72, %c0_73, %c0_74] : memref<16x64x128xbf16, #tpu.memory_space<vmem>>, vector<1x64x128xbf16>
    %76 = vector.shape_cast %75 : vector<1x64x128xbf16> to vector<64x128xbf16>
    %cst_75 = arith.constant dense<0.000000e+00> : vector<10x128xf32>
    %77 = tpu.matmul %74, %76, %cst_75 {dimension_numbers = #tpu.dot_dimension_numbers<[1], [0], [0], [1], [0, 0, 1, 1], [], []>} : vector<10x64xbf16>, vector<64x128xbf16>, vector<10x128xf32> -> vector<10x128xf32>
    %78 = arith.addf %72, %77 : vector<10x128xf32>
    %c0_76 = arith.constant 0 : index
    %c16 = arith.constant 16 : index
    %c0_77 = arith.constant 0 : index
    %79 = vector.load %arg2[%c0_76, %c16, %c0_77] : memref<1x30x64xbf16, #tpu.memory_space<vmem>>, vector<1x10x64xbf16>
    %80 = vector.shape_cast %79 : vector<1x10x64xbf16> to vector<10x64xbf16>
    %c13_78 = arith.constant 13 : index
    %c0_79 = arith.constant 0 : index
    %c0_80 = arith.constant 0 : index
    %81 = vector.load %arg3[%c13_78, %c0_79, %c0_80] : memref<16x64x128xbf16, #tpu.memory_space<vmem>>, vector<1x64x128xbf16>
    %82 = vector.shape_cast %81 : vector<1x64x128xbf16> to vector<64x128xbf16>
    %cst_81 = arith.constant dense<0.000000e+00> : vector<10x128xf32>
    %83 = tpu.matmul %80, %82, %cst_81 {dimension_numbers = #tpu.dot_dimension_numbers<[1], [0], [0], [1], [0, 0, 1, 1], [], []>} : vector<10x64xbf16>, vector<64x128xbf16>, vector<10x128xf32> -> vector<10x128xf32>
    %84 = arith.addf %78, %83 : vector<10x128xf32>
    %c0_82 = arith.constant 0 : index
    %c17 = arith.constant 17 : index
    %c0_83 = arith.constant 0 : index
    %85 = vector.load %arg2[%c0_82, %c17, %c0_83] : memref<1x30x64xbf16, #tpu.memory_space<vmem>>, vector<1x10x64xbf16>
    %86 = vector.shape_cast %85 : vector<1x10x64xbf16> to vector<10x64xbf16>
    %c14 = arith.constant 14 : index
    %c0_84 = arith.constant 0 : index
    %c0_85 = arith.constant 0 : index
    %87 = vector.load %arg3[%c14, %c0_84, %c0_85] : memref<16x64x128xbf16, #tpu.memory_space<vmem>>, vector<1x64x128xbf16>
    %88 = vector.shape_cast %87 : vector<1x64x128xbf16> to vector<64x128xbf16>
    %cst_86 = arith.constant dense<0.000000e+00> : vector<10x128xf32>
    %89 = tpu.matmul %86, %88, %cst_86 {dimension_numbers = #tpu.dot_dimension_numbers<[1], [0], [0], [1], [0, 0, 1, 1], [], []>} : vector<10x64xbf16>, vector<64x128xbf16>, vector<10x128xf32> -> vector<10x128xf32>
    %90 = arith.addf %84, %89 : vector<10x128xf32>
    %c0_87 = arith.constant 0 : index
    %c18 = arith.constant 18 : index
    %c0_88 = arith.constant 0 : index
    %91 = vector.load %arg2[%c0_87, %c18, %c0_88] : memref<1x30x64xbf16, #tpu.memory_space<vmem>>, vector<1x10x64xbf16>
    %92 = vector.shape_cast %91 : vector<1x10x64xbf16> to vector<10x64xbf16>
    %c15_89 = arith.constant 15 : index
    %c0_90 = arith.constant 0 : index
    %c0_91 = arith.constant 0 : index
    %93 = vector.load %arg3[%c15_89, %c0_90, %c0_91] : memref<16x64x128xbf16, #tpu.memory_space<vmem>>, vector<1x64x128xbf16>
    %94 = vector.shape_cast %93 : vector<1x64x128xbf16> to vector<64x128xbf16>
    %cst_92 = arith.constant dense<0.000000e+00> : vector<10x128xf32>
    %95 = tpu.matmul %92, %94, %cst_92 {dimension_numbers = #tpu.dot_dimension_numbers<[1], [0], [0], [1], [0, 0, 1, 1], [], []>} : vector<10x64xbf16>, vector<64x128xbf16>, vector<10x128xf32> -> vector<10x128xf32>
    %96 = arith.addf %90, %95 : vector<10x128xf32>
    %c0_93 = arith.constant 0 : index
    %c0_94 = arith.constant 0 : index
    %97 = vector.load %arg4[%c0_93, %c0_94] : memref<1x128xf32, #tpu.memory_space<vmem>>, vector<1x128xf32>
    %98 = vector.broadcast %97 : vector<1x128xf32> to vector<10x128xf32>
    %99 = arith.addf %96, %98 : vector<10x128xf32>
    %c0_95 = arith.constant 0 : index
    %c0_96 = arith.constant 0 : index
    %c0_97 = arith.constant 0 : index
    %100 = vector.load %arg5[%c0_95, %c0_96, %c0_97] : memref<1x10x128xf32, #tpu.memory_space<vmem>>, vector<1x10x128xf32>
    %101 = vector.shape_cast %100 : vector<1x10x128xf32> to vector<10x128xf32>
    %102 = vector.shape_cast %99 : vector<10x128xf32> to vector<1x10x128xf32>
    tpu.vector_store %arg5[%c0_95, %c0_96, %c0_97], %102 {strides = array<i32>} : memref<1x10x128xf32, #tpu.memory_space<vmem>>, vector<1x10x128xf32>,
    return
  }
  func.func @transform_0(%arg0: i32, %arg1: i32) -> (i32, i32, i32) {
    %c0_i32 = arith.constant 0 : i32
    %c0_i32_0 = arith.constant 0 : i32
    %c0_i32_1 = arith.constant 0 : i32
    return %arg1, %c0_i32, %c0_i32_0 : i32, i32, i32
  }
  func.func @transform_1(%arg0: i32, %arg1: i32) -> (i32, i32, i32) {
    %c0_i32 = arith.constant 0 : i32
    %c0_i32_0 = arith.constant 0 : i32
    %c0_i32_1 = arith.constant 0 : i32
    return %c0_i32, %c0_i32_0, %arg0 : i32, i32, i32
  }
  func.func @transform_2(%arg0: i32, %arg1: i32) -> (i32, i32) {
    %c0_i32 = arith.constant 0 : i32
    %c0_i32_0 = arith.constant 0 : i32
    return %c0_i32, %arg0 : i32, i32
  }
  func.func @transform_3(%arg0: i32, %arg1: i32) -> (i32, i32, i32) {
    %c0_i32 = arith.constant 0 : i32
    %c0_i32_0 = arith.constant 0 : i32
    return %arg1, %c0_i32, %arg0 : i32, i32, i32
  }
}

</mosaic_0001>

<llo_original>
// kernel: nlayer_discriminator_forward.8
$region0: #{nlayer_discriminator_forward.8}
  #allocation0 [shape = 'u32[]', space=smem, size = 0x4, offset = 0x4, fixed_abs, tag = 'smem constant byte address 0x4 - core index']
  #allocation1 [shape = 'u32[144,128]{1,0:T(1,128)}', space=vmem, size = 0x12000, scoped, tag = 'internal scratch']
  #allocation2 [shape = 'f32[256,128]{1,0:T(8,128)}', space=vmem, size = 0x20000, scoped, tag = 'scratch operand']
  %s0 = inlined_call_operand.vmem [shape: bf16[512,128], index: 0, kind: input, shape index: {}]
  %s1 = inlined_call_operand.vmem [shape: bf16[128,128], index: 1, kind: input, shape index: {}]
  %s2 = inlined_call_operand.vmem [shape: f32[1,128], index: 2, kind: input, shape index: {}]
  %s3 = inlined_call_operand.vmem [shape: bf16[512,128], index: 3, kind: output, shape index: {}]
  %s4 = sld [smem:[#allocation0]]
  $region53: #{nlayer_discriminator_forward.8} parent=0
    _
  %s6 = ssub.s32 1, %s4
  %s7 = scalar_select 0, %s6, %s4
  loop: start=0, step=1, limit=4
  $region2: #{nlayer_discriminator_forward.8} parent=0 // loop_pre_header
    _
  $region3: #{nlayer_discriminator_forward.8} parent=0 // loop_header
    %s9 = sphi 0, %s13
    %p10 = scmp.ge.s32.totalorder %s9, 4
    %s16 = sphi 0, %s35
    %s17 = sphi 0, %s31
    %s18 = sphi 0, %s27
    %s19 = sphi 0, %s16
    %s20 = sphi 0, %s17
    %s21 = sphi 0, %s18
    %s22 = sphi 0, %s19
    %s23 = sphi 0, %s20
    %s24 = sphi 0, %s21
    %s40 = sphi 0, %s42
    %s43 = sphi 0, %s40
    %s44 = sphi 0, %s43
    %s60 = sphi 0, %s44
    %s68 = sphi 0, %s70
    %s71 = sphi 0, %s68
    %s72 = sphi 0, %s71
    %s88 = sphi 0, %s72
    %s94 = sphi 0, %s96
    %s97 = sphi 0, %s94
    %s98 = sphi 0, %s97
    %s114 = sphi 0, %s98
    %s122 = sphi 0, %s124
    %s125 = sphi 0, %s122
    %s126 = sphi 0, %s125
    %s142 = sphi 0, %s126
  $region4: #{nlayer_discriminator_forward.8} parent=0 // loop_header_branch
    %12 = sbr.rel (%p10) target = $region8
  $region5: #{nlayer_discriminator_forward.8} parent=0 // loop_body
    %s14 = ssub.s32 %s9, 1
    %s15 = ssub.s32 %s9, 2
    %s25 = sadd.s32 1, %s18
    %p26 = scmp.ge.s32.totalorder %s25, 1
    %s27 = scalar_select %p26, 0, %s25
    %s28 = sadd.s32 1, %s17
    %s29 = scalar_select %p26, %s28, %s17
    %p30 = scmp.ge.s32.totalorder %s29, 1
    %s31 = scalar_select %p30, 0, %s29
    %s32 = sadd.s32 1, %s16
    %s33 = scalar_select %p30, %s32, %s16
    %p34 = scmp.ge.s32.totalorder %s33, 2
    %s35 = scalar_select %p34, 0, %s33
    %s36 = ssub.s32 %s16, %s35
    %s37 = ssub.s32 %s18, %s27
    %s38 = sor.u32 %s36, %s37
    %p39 = scmp.eq.s32.totalorder %s38, 0
    %s41 = sadd.s32 %s40, 1
    %s42 = scalar_select %p39, %s40, %s41
    %p45 = pneg %p39
    %p46 = scmp.eq.s32.totalorder %s9, 1
    %p47 = por %p45, %p46
    %p48 = scmp.ne.s32.totalorder %s40, %s43
    %p49 = scmp.eq.s32.totalorder %s9, 0
    %p50 = por %p48, %p49
    %p51 = scmp.ne.s32.totalorder %s40, %s43
    %p52 = scmp.eq.s32.totalorder %s14, 1
    %p53 = por %p51, %p52
    %p54 = scmp.ne.s32.totalorder %s43, %s44
    %p55 = scmp.eq.s32.totalorder %s14, 0
    %p56 = por %p54, %p55
    %p57 = scmp.ne.s32.totalorder %s43, %s44
    %p58 = scmp.eq.s32.totalorder %s15, 1
    %p59 = por %p57, %p58
    %p61 = scmp.ne.s32.totalorder %s44, %s60
    %p62 = scmp.eq.s32.totalorder %s15, 0
    %p63 = por %p61, %p62
    %s64 = ssub.s32 %s18, %s27
    %s65 = ssub.s32 %s17, %s31
    %s66 = sor.u32 %s64, %s65
    %p67 = scmp.eq.s32.totalorder %s66, 0
    %s69 = sadd.s32 %s68, 1
    %s70 = scalar_select %p67, %s68, %s69
    %p73 = pneg %p67
    %p74 = scmp.eq.s32.totalorder %s9, 1
    %p75 = por %p73, %p74
    %p76 = scmp.ne.s32.totalorder %s68, %s71
    %p77 = scmp.eq.s32.totalorder %s9, 0
    %p78 = por %p76, %p77
    %p79 = scmp.ne.s32.totalorder %s68, %s71
    %p80 = scmp.eq.s32.totalorder %s14, 1
    %p81 = por %p79, %p80
    %p82 = scmp.ne.s32.totalorder %s71, %s72
    %p83 = scmp.eq.s32.totalorder %s14, 0
    %p84 = por %p82, %p83
    %p85 = scmp.ne.s32.totalorder %s71, %s72
    %p86 = scmp.eq.s32.totalorder %s15, 1
    %p87 = por %p85, %p86
    %p89 = scmp.ne.s32.totalorder %s72, %s88
    %p90 = scmp.eq.s32.totalorder %s15, 0
    %p91 = por %p89, %p90
    %s92 = ssub.s32 %s17, %s31
    %p93 = scmp.eq.s32.totalorder %s92, 0
    %s95 = sadd.s32 %s94, 1
    %s96 = scalar_select %p93, %s94, %s95
    %p99 = pneg %p93
    %p100 = scmp.eq.s32.totalorder %s9, 1
    %p101 = por %p99, %p100
    %p102 = scmp.ne.s32.totalorder %s94, %s97
    %p103 = scmp.eq.s32.totalorder %s9, 0
    %p104 = por %p102, %p103
    %p105 = scmp.ne.s32.totalorder %s94, %s97
    %p106 = scmp.eq.s32.totalorder %s14, 1
    %p107 = por %p105, %p106
    %p108 = scmp.ne.s32.totalorder %s97, %s98
    %p109 = scmp.eq.s32.totalorder %s14, 0
    %p110 = por %p108, %p109
    %p111 = scmp.ne.s32.totalorder %s97, %s98
    %p112 = scmp.eq.s32.totalorder %s15, 1
    %p113 = por %p111, %p112
    %p115 = scmp.ne.s32.totalorder %s98, %s114
    %p116 = scmp.eq.s32.totalorder %s15, 0
    %p117 = por %p115, %p116
    %s118 = ssub.s32 %s16, %s35
    %s119 = ssub.s32 %s17, %s31
    %s120 = sor.u32 %s118, %s119
    %p121 = scmp.eq.s32.totalorder %s120, 0
    %s123 = sadd.s32 %s122, 1
    %s124 = scalar_select %p121, %s122, %s123
    %p127 = pneg %p121
    %p128 = scmp.eq.s32.totalorder %s9, 1
    %p129 = por %p127, %p128
    %p130 = scmp.ne.s32.totalorder %s122, %s125
    %p131 = scmp.eq.s32.totalorder %s9, 0
    %p132 = por %p130, %p131
    %p133 = scmp.ne.s32.totalorder %s122, %s125
    %p134 = scmp.eq.s32.totalorder %s14, 1
    %p135 = por %p133, %p134
    %p136 = scmp.ne.s32.totalorder %s125, %s126
    %p137 = scmp.eq.s32.totalorder %s14, 0
    %p138 = por %p136, %p137
    %p139 = scmp.ne.s32.totalorder %s125, %s126
    %p140 = scmp.eq.s32.totalorder %s15, 1
    %p141 = por %p139, %p140
    %p143 = scmp.ne.s32.totalorder %s126, %s142
    %p144 = scmp.eq.s32.totalorder %s15, 0
    %p145 = por %p143, %p144
    %p146 = scmp.le.s32.totalorder 1, %s9
    %p147 = scmp.lt.s32.totalorder %s9, 3
    %p148 = pnand %p146, %p147
    %p149 = pneg %p148
    // Predicated region
    $region9: #{nlayer_discriminator_forward.8} parent=5 // pred_check
      _
    $region10: #{nlayer_discriminator_forward.8} parent=5 // pred_check_branch
      %151 = sbr.rel (%p148) target = $region12
    $region11: #{nlayer_discriminator_forward.8} parent=5 // pred_region
      %s152 = ssub.s32 %s9, 1
      // Predicated region
      $region13: #{nlayer_discriminator_forward.8} parent=11 // pred_check
        %p153 = pneg %p84
      $region14: #{nlayer_discriminator_forward.8} parent=11 // pred_check_branch
        %155 = sbr.rel (%p153) target = $region16
      $region15: #{nlayer_discriminator_forward.8} parent=11 // pred_region
        %s156 = smul.u32 16, %s21
        %p157 = scmp.lt.s32.totalorder %s156, 15
        %s158 = scalar_select %p157, %s156, 15
        %p159 = scmp.lt.s32.totalorder %s20, 0
        %s160 = scalar_select %p159, %s20, 0
        %s161 = sadd.s32 %s160, %s158
        %s162 = smul.addr %s161, 4
        %s163 = scalar_lea.vmem %s1, %s162
        %s164 = smul.u32 16, %s21
      $region16: #{nlayer_discriminator_forward.8} parent=11 // pred_fallthru
        _
      // Predicated region
      $region17: #{nlayer_discriminator_forward.8} parent=11 // pred_check
        %p165 = pneg %p110
      $region18: #{nlayer_discriminator_forward.8} parent=11 // pred_check_branch
        %167 = sbr.rel (%p165) target = $region20
      $region19: #{nlayer_discriminator_forward.8} parent=11 // pred_region
        %p168 = scmp.lt.s32.totalorder %s20, 0
        %s169 = scalar_select %p168, %s20, 0
        %s170 = scalar_lea.vmem %s2, %s169
      $region20: #{nlayer_discriminator_forward.8} parent=11 // pred_fallthru
        _
    $region12: #{nlayer_discriminator_forward.8} parent=5 // pred_fallthru
      _
    %p171 = scmp.lt.s32.totalorder %s9, 2
    // Predicated region
    $region21: #{nlayer_discriminator_forward.8} parent=5 // pred_check
      %p172 = pneg %p171
    $region22: #{nlayer_discriminator_forward.8} parent=5 // pred_check_branch
      %174 = sbr.rel (%p172) target = $region24
    $region23: #{nlayer_discriminator_forward.8} parent=5 // pred_region
      // Predicated region
      $region25: #{nlayer_discriminator_forward.8} parent=23 // pred_check
        %p175 = pneg %p50
      $region26: #{nlayer_discriminator_forward.8} parent=23 // pred_check_branch
        %177 = sbr.rel (%p175) target = $region28
      $region27: #{nlayer_discriminator_forward.8} parent=23 // pred_region
        %s178 = smul.u32 32, %s16
        %p179 = scmp.lt.s32.totalorder %s178, 63
        %s180 = scalar_select %p179, %s178, 63
        %p181 = scmp.lt.s32.totalorder %s18, 0
        %s182 = scalar_select %p181, %s18, 0
        %s183 = sadd.s32 %s182, %s180
        %s184 = smul.addr %s183, 4
        %s185 = scalar_lea.vmem %s0, %s184
        %s186 = smul.u32 32, %s16
      $region28: #{nlayer_discriminator_forward.8} parent=23 // pred_fallthru
        _
    $region24: #{nlayer_discriminator_forward.8} parent=5 // pred_fallthru
      _
    %p187 = scmp.le.s32.totalorder 1, %s9
    %p188 = scmp.lt.s32.totalorder %s9, 3
    %p189 = pnand %p187, %p188
    %p190 = pneg %p189
    // Predicated region
    $region29: #{nlayer_discriminator_forward.8} parent=5 // pred_check
      _
    $region30: #{nlayer_discriminator_forward.8} parent=5 // pred_check_branch
      %192 = sbr.rel (%p189) target = $region32
    $region31: #{nlayer_discriminator_forward.8} parent=5 // pred_region
      %s193 = ssub.s32 %s9, 1
      %s194 = smul.u32 32, %s19
      %p195 = scmp.lt.s32.totalorder %s194, 63
      %s196 = scalar_select %p195, %s194, 63
      %p197 = scmp.lt.s32.totalorder %s21, 0
      %s198 = scalar_select %p197, %s21, 0
      %s199 = sadd.s32 %s198, %s196
      %s200 = smul.addr %s199, 4
      %s201 = scalar_lea.vmem %s0, %s200
      %p202 = pneg %p56
      %p203 = pneg %p53
      %s204 = smul.u32 16, %s21
      %p205 = scmp.lt.s32.totalorder %s204, 15
      %s206 = scalar_select %p205, %s204, 15
      %p207 = scmp.lt.s32.totalorder %s20, 0
      %s208 = scalar_select %p207, %s20, 0
      %s209 = sadd.s32 %s208, %s206
      %s210 = smul.addr %s209, 4
      %s211 = scalar_lea.vmem %s1, %s210
      %p212 = pneg %p84
      %p213 = pneg %p81
      %p214 = scmp.lt.s32.totalorder %s20, 0
      %s215 = scalar_select %p214, %s20, 0
      %s216 = scalar_lea.vmem %s2, %s215
      %p217 = pneg %p110
      %p218 = pneg %p107
      %p219 = pneg %p138
      %p220 = pneg %p135
      %s221 = smul.u32 32, %s19
      %p222 = scmp.lt.s32.totalorder %s221, 63
      %s223 = scalar_select %p222, %s221, 63
      %p224 = scmp.lt.s32.totalorder %s20, 0
      %s225 = scalar_select %p224, %s20, 0
      %s226 = sadd.s32 %s225, %s223
      %s227 = smul.addr %s226, 4
      %s228 = scalar_lea.vmem %s3, %s227
      %s229 = smul.u32 32, %s19
      %p230 = scmp.lt.s32.totalorder %s229, 63
      %s231 = scalar_select %p230, %s229, 63
      %p232 = scmp.lt.s32.totalorder %s21, 0
      %s233 = scalar_select %p232, %s21, 0
      %s234 = sadd.s32 %s233, %s231
      %s235 = smul.addr %s234, 4
      %s236 = scalar_lea.vmem %s0, %s235
      %s237 = smul.u32 32, %s19
      %s238 = smul.u32 16, %s21
      %p239 = scmp.lt.s32.totalorder %s238, 15
      %s240 = scalar_select %p239, %s238, 15
      %p241 = scmp.lt.s32.totalorder %s20, 0
      %s242 = scalar_select %p241, %s20, 0
      %s243 = sadd.s32 %s242, %s240
      %s244 = smul.addr %s243, 4
      %s245 = scalar_lea.vmem %s1, %s244
      %s246 = smul.u32 16, %s21
      %p247 = scmp.lt.s32.totalorder %s20, 0
      %s248 = scalar_select %p247, %s20, 0
      %s249 = scalar_lea.vmem %s2, %s248
      %s250 = smul.u32 32, %s19
      %p251 = scmp.lt.s32.totalorder %s250, 63
      %s252 = scalar_select %p251, %s250, 63
      %p253 = scmp.lt.s32.totalorder %s20, 0
      %s254 = scalar_select %p253, %s20, 0
      %s255 = sadd.s32 %s254, %s252
      %s256 = smul.addr %s255, 4
      %s257 = scalar_lea.vmem %s3, %s256
      %s258 = smul.u32 32, %s19
      %p260 = scmp.eq.s32.totalorder %s21, 0
      // Predicated region
      $region33: #{nlayer_discriminator_forward.8} parent=31 // pred_check
        %p261 = pneg %p260
      $region34: #{nlayer_discriminator_forward.8} parent=31 // pred_check_branch
        %263 = sbr.rel (%p261) target = $region36
      $region35: #{nlayer_discriminator_forward.8} parent=31 // pred_region
        %264 = vst [vmem:[#allocation2] sm:$0xff] 0.0
        %265 = vst [vmem:[#allocation2 + $0x8] sm:$0xff] 0.0
        %266 = vst [vmem:[#allocation2 + $0x10] sm:$0xff] 0.0
        %267 = vst [vmem:[#allocation2 + $0x18] sm:$0xff] 0.0
        %268 = vst [vmem:[#allocation2 + $0x20] sm:$0xff] 0.0
        %269 = vst [vmem:[#allocation2 + $0x28] sm:$0xff] 0.0
        %270 = vst [vmem:[#allocation2 + $0x30] sm:$0xff] 0.0
        %271 = vst [vmem:[#allocation2 + $0x38] sm:$0xff] 0.0
        %272 = vst [vmem:[#allocation2 + $0x40] sm:$0xff] 0.0
        %273 = vst [vmem:[#allocation2 + $0x48] sm:$0xff] 0.0
        %274 = vst [vmem:[#allocation2 + $0x50] sm:$0xff] 0.0
        %275 = vst [vmem:[#allocation2 + $0x58] sm:$0xff] 0.0
        %276 = vst [vmem:[#allocation2 + $0x60] sm:$0xff] 0.0
        %277 = vst [vmem:[#allocation2 + $0x68] sm:$0xff] 0.0
        %278 = vst [vmem:[#allocation2 + $0x70] sm:$0xff] 0.0
        %279 = vst [vmem:[#allocation2 + $0x78] sm:$0xff] 0.0
        %280 = vst [vmem:[#allocation2 + $0x80] sm:$0xff] 0.0
        %281 = vst [vmem:[#allocation2 + $0x88] sm:$0xff] 0.0
        %282 = vst [vmem:[#allocation2 + $0x90] sm:$0xff] 0.0
        %283 = vst [vmem:[#allocation2 + $0x98] sm:$0xff] 0.0
        %284 = vst [vmem:[#allocation2 + $0xa0] sm:$0xff] 0.0
        %285 = vst [vmem:[#allocation2 + $0xa8] sm:$0xff] 0.0
        %286 = vst [vmem:[#allocation2 + $0xb0] sm:$0xff] 0.0
        %287 = vst [vmem:[#allocation2 + $0xb8] sm:$0xff] 0.0
        %288 = vst [vmem:[#allocation2 + $0xc0] sm:$0xff] 0.0
        %289 = vst [vmem:[#allocation2 + $0xc8] sm:$0xff] 0.0
        %290 = vst [vmem:[#allocation2 + $0xd0] sm:$0xff] 0.0
        %291 = vst [vmem:[#allocation2 + $0xd8] sm:$0xff] 0.0
        %292 = vst [vmem:[#allocation2 + $0xe0] sm:$0xff] 0.0
        %293 = vst [vmem:[#allocation2 + $0xe8] sm:$0xff] 0.0
        %294 = vst [vmem:[#allocation2 + $0xf0] sm:$0xff] 0.0
        %295 = vst [vmem:[#allocation2 + $0xf8] sm:$0xff] 0.0
      $region36: #{nlayer_discriminator_forward.8} parent=31 // pred_fallthru
        _
      %v296 = vld [vmem:[#allocation2] sm:$0xff]
      %v297 = vld [vmem:[#allocation2 + $0x8] sm:$0xff]
      %v298 = vld [vmem:[#allocation2 + $0x10] sm:$0xff]
      %v299 = vld [vmem:[#allocation2 + $0x18] sm:$0xff]
      %v300 = vld [vmem:[#allocation2 + $0x20] sm:$0xff]
      %v301 = vld [vmem:[#allocation2 + $0x28] sm:$0xff]
      %v302 = vld [vmem:[#allocation2 + $0x30] sm:$0xff]
      %v303 = vld [vmem:[#allocation2 + $0x38] sm:$0xff]
      %v304 = vld [vmem:[#allocation2 + $0x40] sm:$0xff]
      %v305 = vld [vmem:[#allocation2 + $0x48] sm:$0xff]
      %v306 = vld [vmem:[#allocation2 + $0x50] sm:$0xff]
      %v307 = vld [vmem:[#allocation2 + $0x58] sm:$0xff]
      %v308 = vld [vmem:[#allocation2 + $0x60] sm:$0xff]
      %v309 = vld [vmem:[#allocation2 + $0x68] sm:$0xff]
      %v310 = vld [vmem:[#allocation2 + $0x70] sm:$0xff]
      %v311 = vld [vmem:[#allocation2 + $0x78] sm:$0xff]
      %v312 = vld [vmem:[#allocation2 + $0x80] sm:$0xff]
      %v313 = vld [vmem:[#allocation2 + $0x88] sm:$0xff]
      %v314 = vld [vmem:[#allocation2 + $0x90] sm:$0xff]
      %v315 = vld [vmem:[#allocation2 + $0x98] sm:$0xff]
      %v316 = vld [vmem:[#allocation2 + $0xa0] sm:$0xff]
      %v317 = vld [vmem:[#allocation2 + $0xa8] sm:$0xff]
      %v318 = vld [vmem:[#allocation2 + $0xb0] sm:$0xff]
      %v319 = vld [vmem:[#allocation2 + $0xb8] sm:$0xff]
      %v320 = vld [vmem:[#allocation2 + $0xc0] sm:$0xff]
      %v321 = vld [vmem:[#allocation2 + $0xc8] sm:$0xff]
      %v322 = vld [vmem:[#allocation2 + $0xd0] sm:$0xff]
      %v323 = vld [vmem:[#allocation2 + $0xd8] sm:$0xff]
      %v324 = vld [vmem:[#allocation2 + $0xe0] sm:$0xff]
      %v325 = vld [vmem:[#allocation2 + $0xe8] sm:$0xff]
      %v326 = vld [vmem:[#allocation2 + $0xf0] sm:$0xff]
      %v327 = vld [vmem:[#allocation2 + $0xf8] sm:$0xff]
      %v328 = vld [vmem:[%s236] sm:$0xf]
      %v329 = vld [vmem:[%s236 + $0x4] sm:$0xf]
      %v330 = vld [vmem:[%s236 + $0x8] sm:$0xf]
      %v331 = vld [vmem:[%s236 + $0xc] sm:$0xf]
      %v332 = vld [vmem:[%s236 + $0x10] sm:$0xf]
      %v333 = vld [vmem:[%s236 + $0x14] sm:$0xf]
      %v334 = vld [vmem:[%s236 + $0x18] sm:$0xf]
      %v335 = vld [vmem:[%s236 + $0x1c] sm:$0xf]
      %v336 = vld [vmem:[%s236 + $0x20] sm:$0xf]
      %v337 = vld [vmem:[%s236 + $0x24] sm:$0xf]
      %v338 = vld [vmem:[%s236 + $0x28] sm:$0xf]
      %v339 = vld [vmem:[%s236 + $0x2c] sm:$0xf]
      %v340 = vld [vmem:[%s236 + $0x30] sm:$0xf]
      %v341 = vld [vmem:[%s236 + $0x34] sm:$0xf]
      %v342 = vld [vmem:[%s236 + $0x38] sm:$0xf]
      %v343 = vld [vmem:[%s236 + $0x3c] sm:$0xf]
      %v344 = vld [vmem:[%s236 + $0x40] sm:$0xf]
      %v345 = vld [vmem:[%s236 + $0x44] sm:$0xf]
      %v346 = vld [vmem:[%s236 + $0x48] sm:$0xf]
      %v347 = vld [vmem:[%s236 + $0x4c] sm:$0xf]
      %v348 = vld [vmem:[%s236 + $0x50] sm:$0xf]
      %v349 = vld [vmem:[%s236 + $0x54] sm:$0xf]
      %v350 = vld [vmem:[%s236 + $0x58] sm:$0xf]
      %v351 = vld [vmem:[%s236 + $0x5c] sm:$0xf]
      %v352 = vld [vmem:[%s236 + $0x60] sm:$0xf]
      %v353 = vld [vmem:[%s236 + $0x64] sm:$0xf]
      %v354 = vld [vmem:[%s236 + $0x68] sm:$0xf]
      %v355 = vld [vmem:[%s236 + $0x6c] sm:$0xf]
      %v356 = vld [vmem:[%s236 + $0x70] sm:$0xf]
      %v357 = vld [vmem:[%s236 + $0x74] sm:$0xf]
      %v358 = vld [vmem:[%s236 + $0x78] sm:$0xf]
      %v359 = vld [vmem:[%s236 + $0x7c] sm:$0xf]
      %v360 = vld [vmem:[%s245] sm:$0xf]
      %v361 = vld [vmem:[%s245 + $0x4] sm:$0xf]
      %v362 = vld [vmem:[%s245 + $0x8] sm:$0xf]
      %v363 = vld [vmem:[%s245 + $0xc] sm:$0xf]
      %v364 = vld [vmem:[%s245 + $0x10] sm:$0xf]
      %v365 = vld [vmem:[%s245 + $0x14] sm:$0xf]
      %v366 = vld [vmem:[%s245 + $0x18] sm:$0xf]
      %v367 = vld [vmem:[%s245 + $0x1c] sm:$0xf]
      %v368 = vld [vmem:[%s245 + $0x20] sm:$0xf]
      %v369 = vld [vmem:[%s245 + $0x24] sm:$0xf]
      %v370 = vld [vmem:[%s245 + $0x28] sm:$0xf]
      %v371 = vld [vmem:[%s245 + $0x2c] sm:$0xf]
      %v372 = vld [vmem:[%s245 + $0x30] sm:$0xf]
      %v373 = vld [vmem:[%s245 + $0x34] sm:$0xf]
      %v374 = vld [vmem:[%s245 + $0x38] sm:$0xf]
      %v375 = vld [vmem:[%s245 + $0x3c] sm:$0xf]
      %v408 = vunpack.c.l.b16 %v328
      %v409 = vunpack.c.l.b16 %v329
      %v410 = vunpack.c.l.b16 %v330
      %v411 = vunpack.c.l.b16 %v331
      %v412 = vunpack.c.l.b16 %v332
      %v413 = vunpack.c.l.b16 %v333
      %v414 = vunpack.c.l.b16 %v334
      %v415 = vunpack.c.l.b16 %v335
      %v416 = vunpack.c.l.b16 %v336
      %v417 = vunpack.c.l.b16 %v337
      %v418 = vunpack.c.l.b16 %v338
      %v419 = vunpack.c.l.b16 %v339
      %v420 = vunpack.c.l.b16 %v340
      %v421 = vunpack.c.l.b16 %v341
      %v422 = vunpack.c.l.b16 %v342
      %v423 = vunpack.c.l.b16 %v343
      %v424 = vunpack.c.l.b16 %v344
      %v425 = vunpack.c.l.b16 %v345
      %v426 = vunpack.c.l.b16 %v346
      %v427 = vunpack.c.l.b16 %v347
      %v428 = vunpack.c.l.b16 %v348
      %v429 = vunpack.c.l.b16 %v349
      %v430 = vunpack.c.l.b16 %v350
      %v431 = vunpack.c.l.b16 %v351
      %v432 = vunpack.c.l.b16 %v352
      %v433 = vunpack.c.l.b16 %v353
      %v434 = vunpack.c.l.b16 %v354
      %v435 = vunpack.c.l.b16 %v355
      %v436 = vunpack.c.l.b16 %v356
      %v437 = vunpack.c.l.b16 %v357
      %v438 = vunpack.c.l.b16 %v358
      %v439 = vunpack.c.l.b16 %v359
      %v440 = vpack.c.b16 %v409, %v408
      %v441 = vpack.c.b16 %v411, %v410
      %v442 = vpack.c.b16 %v413, %v412
      %v443 = vpack.c.b16 %v415, %v414
      %v444 = vpack.c.b16 %v417, %v416
      %v445 = vpack.c.b16 %v419, %v418
      %v446 = vpack.c.b16 %v421, %v420
      %v447 = vpack.c.b16 %v423, %v422
      %v448 = vpack.c.b16 %v425, %v424
      %v449 = vpack.c.b16 %v427, %v426
      %v450 = vpack.c.b16 %v429, %v428
      %v451 = vpack.c.b16 %v431, %v430
      %v452 = vpack.c.b16 %v433, %v432
      %v453 = vpack.c.b16 %v435, %v434
      %v454 = vpack.c.b16 %v437, %v436
      %v455 = vpack.c.b16 %v439, %v438
      %v488 = vunpack.c.l.b16 %v360
      %v489 = vunpack.c.l.b16 %v361
      %v490 = vunpack.c.l.b16 %v362
      %v491 = vunpack.c.l.b16 %v363
      %v492 = vunpack.c.l.b16 %v364
      %v493 = vunpack.c.l.b16 %v365
      %v494 = vunpack.c.l.b16 %v366
      %v495 = vunpack.c.l.b16 %v367
      %v496 = vunpack.c.l.b16 %v368
      %v497 = vunpack.c.l.b16 %v369
      %v498 = vunpack.c.l.b16 %v370
      %v499 = vunpack.c.l.b16 %v371
      %v500 = vunpack.c.l.b16 %v372
      %v501 = vunpack.c.l.b16 %v373
      %v502 = vunpack.c.l.b16 %v374
      %v503 = vunpack.c.l.b16 %v375
      %v504 = vpack.c.b16 %v489, %v488
      %v505 = vpack.c.b16 %v491, %v490
      %v506 = vpack.c.b16 %v493, %v492
      %v507 = vpack.c.b16 %v495, %v494
      %v508 = vpack.c.b16 %v497, %v496
      %v509 = vpack.c.b16 %v499, %v498
      %v510 = vpack.c.b16 %v501, %v500
      %v511 = vpack.c.b16 %v503, %v502
      %520 = vmatprep.subr.bf16.mxu0 0
      %521 = vmatpush1.bf16.msra.mxu0 %v504
      %522 = vmatprep.subr.bf16.mxu0 0
      %523 = vmatpush1.bf16.msra.mxu0 %v505
      %524 = vmatprep.subr.bf16.mxu0 0
      %525 = vmatpush1.bf16.msra.mxu0 %v506
      %526 = vmatprep.subr.bf16.mxu0 0
      %527 = vmatpush1.bf16.msra.mxu0 %v507
      %528 = vmatprep.subr.bf16.mxu0 0
      %529 = vmatpush1.bf16.msra.mxu0 %v508
      %530 = vmatprep.subr.bf16.mxu0 0
      %531 = vmatpush1.bf16.msra.mxu0 %v509
      %532 = vmatprep.subr.bf16.mxu0 0
      %533 = vmatpush1.bf16.msra.mxu0 %v510
      %534 = vmatprep.subr.bf16.mxu0 0
      %535 = vmatpush1.bf16.msra.mxu0 %v511
      %536 = vmatprep.subr.bf16.mxu0 0
      %537 = vmatpush1.bf16.msra.mxu0 0
      %538 = vmatprep.subr.bf16.mxu0 0
      %539 = vmatpush1.bf16.msra.mxu0 0
      %540 = vmatprep.subr.bf16.mxu0 0
      %541 = vmatpush1.bf16.msra.mxu0 0
      %542 = vmatprep.subr.bf16.mxu0 0
      %543 = vmatpush1.bf16.msra.mxu0 0
      %544 = vmatprep.subr.bf16.mxu0 0
      %545 = vmatpush1.bf16.msra.mxu0 0
      %546 = vmatprep.subr.bf16.mxu0 0
      %547 = vmatpush1.bf16.msra.mxu0 0
      %548 = vmatprep.subr.bf16.mxu0 0
      %549 = vmatpush1.bf16.msra.mxu0 0
      %550 = vmatprep.subr.bf16.mxu0 0
      %551 = vmatpush1.bf16.msra.mxu0 0
      %552 = vmatprep.mubr.bf16.mxu0 0
      %553 = vmatmul.mubr.bf16.gmra.mrb[0].mxu0 %v440
      %v554 = vpop.f32.mrb[0].mxu0
      %v555 = vadd.f32 0.0, %v554
      %v556 = vpop.f32.mrb[0].mxu0
      %v557 = vpop.f32.mrb[0].mxu0
      %v558 = vadd.f32 0.0, %v557
      %v559 = vpop.f32.mrb[0].mxu0
      %560 = vmatprep.mubr.bf16.mxu0 0
      %561 = vmatmul.mubr.bf16.gmra.mrb[0].mxu0 %v441
      %v562 = vpop.f32.mrb[0].mxu0
      %v563 = vadd.f32 0.0, %v562
      %v564 = vpop.f32.mrb[0].mxu0
      %v565 = vpop.f32.mrb[0].mxu0
      %v566 = vadd.f32 0.0, %v565
      %v567 = vpop.f32.mrb[0].mxu0
      %568 = vmatprep.mubr.bf16.mxu0 0
      %569 = vmatmul.mubr.bf16.gmra.mrb[0].mxu0 %v442
      %v570 = vpop.f32.mrb[0].mxu0
      %v571 = vadd.f32 0.0, %v570
      %v572 = vpop.f32.mrb[0].mxu0
      %v573 = vpop.f32.mrb[0].mxu0
      %v574 = vadd.f32 0.0, %v573
      %v575 = vpop.f32.mrb[0].mxu0
      %576 = vmatprep.mubr.bf16.mxu0 0
      %577 = vmatmul.mubr.bf16.gmra.mrb[0].mxu0 %v443
      %v578 = vpop.f32.mrb[0].mxu0
      %v579 = vadd.f32 0.0, %v578
      %v580 = vpop.f32.mrb[0].mxu0
      %v581 = vpop.f32.mrb[0].mxu0
      %v582 = vadd.f32 0.0, %v581
      %v583 = vpop.f32.mrb[0].mxu0
      %584 = vmatprep.mubr.bf16.mxu0 0
      %585 = vmatmul.mubr.bf16.gmra.mrb[0].mxu0 %v444
      %v586 = vpop.f32.mrb[0].mxu0
      %v587 = vadd.f32 0.0, %v586
      %v588 = vpop.f32.mrb[0].mxu0
      %v589 = vpop.f32.mrb[0].mxu0
      %v590 = vadd.f32 0.0, %v589
      %v591 = vpop.f32.mrb[0].mxu0
      %592 = vmatprep.mubr.bf16.mxu0 0
      %593 = vmatmul.mubr.bf16.gmra.mrb[0].mxu0 %v445
      %v594 = vpop.f32.mrb[0].mxu0
      %v595 = vadd.f32 0.0, %v594
      %v596 = vpop.f32.mrb[0].mxu0
      %v597 = vpop.f32.mrb[0].mxu0
      %v598 = vadd.f32 0.0, %v597
      %v599 = vpop.f32.mrb[0].mxu0
      %600 = vmatprep.mubr.bf16.mxu0 0
      %601 = vmatmul.mubr.bf16.gmra.mrb[0].mxu0 %v446
      %v602 = vpop.f32.mrb[0].mxu0
      %v603 = vadd.f32 0.0, %v602
      %v604 = vpop.f32.mrb[0].mxu0
      %v605 = vpop.f32.mrb[0].mxu0
      %v606 = vadd.f32 0.0, %v605
      %v607 = vpop.f32.mrb[0].mxu0
      %608 = vmatprep.mubr.bf16.mxu0 0
      %609 = vmatmul.mubr.bf16.gmra.mrb[0].mxu0 %v447
      %v610 = vpop.f32.mrb[0].mxu0
      %v611 = vadd.f32 0.0, %v610
      %v612 = vpop.f32.mrb[0].mxu0
      %v613 = vpop.f32.mrb[0].mxu0
      %v614 = vadd.f32 0.0, %v613
      %v615 = vpop.f32.mrb[0].mxu0
      %616 = vmatprep.mubr.bf16.mxu0 0
      %617 = vmatmul.mubr.bf16.gmra.mrb[0].mxu0 %v448
      %v618 = vpop.f32.mrb[0].mxu0
      %v619 = vadd.f32 0.0, %v618
      %v620 = vpop.f32.mrb[0].mxu0
      %v621 = vpop.f32.mrb[0].mxu0
      %v622 = vadd.f32 0.0, %v621
      %v623 = vpop.f32.mrb[0].mxu0
      %624 = vmatprep.mubr.bf16.mxu0 0
      %625 = vmatmul.mubr.bf16.gmra.mrb[0].mxu0 %v449
      %v626 = vpop.f32.mrb[0].mxu0
      %v627 = vadd.f32 0.0, %v626
      %v628 = vpop.f32.mrb[0].mxu0
      %v629 = vpop.f32.mrb[0].mxu0
      %v630 = vadd.f32 0.0, %v629
      %v631 = vpop.f32.mrb[0].mxu0
      %632 = vmatprep.mubr.bf16.mxu0 0
      %633 = vmatmul.mubr.bf16.gmra.mrb[0].mxu0 %v450
      %v634 = vpop.f32.mrb[0].mxu0
      %v635 = vadd.f32 0.0, %v634
      %v636 = vpop.f32.mrb[0].mxu0
      %v637 = vpop.f32.mrb[0].mxu0
      %v638 = vadd.f32 0.0, %v637
      %v639 = vpop.f32.mrb[0].mxu0
      %640 = vmatprep.mubr.bf16.mxu0 0
      %641 = vmatmul.mubr.bf16.gmra.mrb[0].mxu0 %v451
      %v642 = vpop.f32.mrb[0].mxu0
      %v643 = vadd.f32 0.0, %v642
      %v644 = vpop.f32.mrb[0].mxu0
      %v645 = vpop.f32.mrb[0].mxu0
      %v646 = vadd.f32 0.0, %v645
      %v647 = vpop.f32.mrb[0].mxu0
      %648 = vmatprep.mubr.bf16.mxu0 0
      %649 = vmatmul.mubr.bf16.gmra.mrb[0].mxu0 %v452
      %v650 = vpop.f32.mrb[0].mxu0
      %v651 = vadd.f32 0.0, %v650
      %v652 = vpop.f32.mrb[0].mxu0
      %v653 = vpop.f32.mrb[0].mxu0
      %v654 = vadd.f32 0.0, %v653
      %v655 = vpop.f32.mrb[0].mxu0
      %656 = vmatprep.mubr.bf16.mxu0 0
      %657 = vmatmul.mubr.bf16.gmra.mrb[0].mxu0 %v453
      %v658 = vpop.f32.mrb[0].mxu0
      %v659 = vadd.f32 0.0, %v658
      %v660 = vpop.f32.mrb[0].mxu0
      %v661 = vpop.f32.mrb[0].mxu0
      %v662 = vadd.f32 0.0, %v661
      %v663 = vpop.f32.mrb[0].mxu0
      %664 = vmatprep.mubr.bf16.mxu0 0
      %665 = vmatmul.mubr.bf16.gmra.mrb[0].mxu0 %v454
      %v666 = vpop.f32.mrb[0].mxu0
      %v667 = vadd.f32 0.0, %v666
      %v668 = vpop.f32.mrb[0].mxu0
      %v669 = vpop.f32.mrb[0].mxu0
      %v670 = vadd.f32 0.0, %v669
      %v671 = vpop.f32.mrb[0].mxu0
      %672 = vmatprep.mubr.bf16.mxu0 0
      %673 = vmatmul.mubr.bf16.gmra.mrb[0].mxu0 %v455
      %v674 = vpop.f32.mrb[0].mxu0
      %v675 = vadd.f32 0.0, %v674
      %v676 = vpop.f32.mrb[0].mxu0
      %v677 = vpop.f32.mrb[0].mxu0
      %v678 = vadd.f32 0.0, %v677
      %v679 = vpop.f32.mrb[0].mxu0
      %680 = vdwg.mxu0
      %v681 = vadd.f32 %v296, %v555
      %v682 = vadd.f32 %v297, %v558
      %v683 = vadd.f32 %v298, %v563
      %v684 = vadd.f32 %v299, %v566
      %v685 = vadd.f32 %v300, %v571
      %v686 = vadd.f32 %v301, %v574
      %v687 = vadd.f32 %v302, %v579
      %v688 = vadd.f32 %v303, %v582
      %v689 = vadd.f32 %v304, %v587
      %v690 = vadd.f32 %v305, %v590
      %v691 = vadd.f32 %v306, %v595
      %v692 = vadd.f32 %v307, %v598
      %v693 = vadd.f32 %v308, %v603
      %v694 = vadd.f32 %v309, %v606
      %v695 = vadd.f32 %v310, %v611
      %v696 = vadd.f32 %v311, %v614
      %v697 = vadd.f32 %v312, %v619
      %v698 = vadd.f32 %v313, %v622
      %v699 = vadd.f32 %v314, %v627
      %v700 = vadd.f32 %v315, %v630
      %v701 = vadd.f32 %v316, %v635
      %v702 = vadd.f32 %v317, %v638
      %v703 = vadd.f32 %v318, %v643
      %v704 = vadd.f32 %v319, %v646
      %v705 = vadd.f32 %v320, %v651
      %v706 = vadd.f32 %v321, %v654
      %v707 = vadd.f32 %v322, %v659
      %v708 = vadd.f32 %v323, %v662
      %v709 = vadd.f32 %v324, %v667
      %v710 = vadd.f32 %v325, %v670
      %v711 = vadd.f32 %v326, %v675
      %v712 = vadd.f32 %v327, %v678
      %713 = vst [vmem:[#allocation2] sm:$0xff] %v681
      %714 = vst [vmem:[#allocation2 + $0x8] sm:$0xff] %v682
      %715 = vst [vmem:[#allocation2 + $0x10] sm:$0xff] %v683
      %716 = vst [vmem:[#allocation2 + $0x18] sm:$0xff] %v684
      %717 = vst [vmem:[#allocation2 + $0x20] sm:$0xff] %v685
      %718 = vst [vmem:[#allocation2 + $0x28] sm:$0xff] %v686
      %719 = vst [vmem:[#allocation2 + $0x30] sm:$0xff] %v687
      %720 = vst [vmem:[#allocation2 + $0x38] sm:$0xff] %v688
      %721 = vst [vmem:[#allocation2 + $0x40] sm:$0xff] %v689
      %722 = vst [vmem:[#allocation2 + $0x48] sm:$0xff] %v690
      %723 = vst [vmem:[#allocation2 + $0x50] sm:$0xff] %v691
      %724 = vst [vmem:[#allocation2 + $0x58] sm:$0xff] %v692
      %725 = vst [vmem:[#allocation2 + $0x60] sm:$0xff] %v693
      %726 = vst [vmem:[#allocation2 + $0x68] sm:$0xff] %v694
      %727 = vst [vmem:[#allocation2 + $0x70] sm:$0xff] %v695
      %728 = vst [vmem:[#allocation2 + $0x78] sm:$0xff] %v696
      %729 = vst [vmem:[#allocation2 + $0x80] sm:$0xff] %v697
      %730 = vst [vmem:[#allocation2 + $0x88] sm:$0xff] %v698
      %731 = vst [vmem:[#allocation2 + $0x90] sm:$0xff] %v699
      %732 = vst [vmem:[#allocation2 + $0x98] sm:$0xff] %v700
      %733 = vst [vmem:[#allocation2 + $0xa0] sm:$0xff] %v701
      %734 = vst [vmem:[#allocation2 + $0xa8] sm:$0xff] %v702
      %735 = vst [vmem:[#allocation2 + $0xb0] sm:$0xff] %v703
      %736 = vst [vmem:[#allocation2 + $0xb8] sm:$0xff] %v704
      %737 = vst [vmem:[#allocation2 + $0xc0] sm:$0xff] %v705
      %738 = vst [vmem:[#allocation2 + $0xc8] sm:$0xff] %v706
      %739 = vst [vmem:[#allocation2 + $0xd0] sm:$0xff] %v707
      %740 = vst [vmem:[#allocation2 + $0xd8] sm:$0xff] %v708
      %741 = vst [vmem:[#allocation2 + $0xe0] sm:$0xff] %v709
      %742 = vst [vmem:[#allocation2 + $0xe8] sm:$0xff] %v710
      %743 = vst [vmem:[#allocation2 + $0xf0] sm:$0xff] %v711
      %744 = vst [vmem:[#allocation2 + $0xf8] sm:$0xff] %v712
      // Predicated region
      $region37: #{nlayer_discriminator_forward.8} parent=31 // pred_check
        %p745 = pneg %p260
      $region38: #{nlayer_discriminator_forward.8} parent=31 // pred_check_branch
        %747 = sbr.rel (%p745) target = $region40
      $region39: #{nlayer_discriminator_forward.8} parent=31 // pred_region
        %v748 = vld [vmem:[#allocation2] sm:$0xff]
        %v749 = vld [vmem:[#allocation2 + $0x8] sm:$0xff]
        %v750 = vld [vmem:[#allocation2 + $0x10] sm:$0xff]
        %v751 = vld [vmem:[#allocation2 + $0x18] sm:$0xff]
        %v752 = vld [vmem:[#allocation2 + $0x20] sm:$0xff]
        %v753 = vld [vmem:[#allocation2 + $0x28] sm:$0xff]
        %v754 = vld [vmem:[#allocation2 + $0x30] sm:$0xff]
        %v755 = vld [vmem:[#allocation2 + $0x38] sm:$0xff]
        %v756 = vld [vmem:[#allocation2 + $0x40] sm:$0xff]
        %v757 = vld [vmem:[#allocation2 + $0x48] sm:$0xff]
        %v758 = vld [vmem:[#allocation2 + $0x50] sm:$0xff]
        %v759 = vld [vmem:[#allocation2 + $0x58] sm:$0xff]
        %v760 = vld [vmem:[#allocation2 + $0x60] sm:$0xff]
        %v761 = vld [vmem:[#allocation2 + $0x68] sm:$0xff]
        %v762 = vld [vmem:[#allocation2 + $0x70] sm:$0xff]
        %v763 = vld [vmem:[#allocation2 + $0x78] sm:$0xff]
        %v764 = vld [vmem:[#allocation2 + $0x80] sm:$0xff]
        %v765 = vld [vmem:[#allocation2 + $0x88] sm:$0xff]
        %v766 = vld [vmem:[#allocation2 + $0x90] sm:$0xff]
        %v767 = vld [vmem:[#allocation2 + $0x98] sm:$0xff]
        %v768 = vld [vmem:[#allocation2 + $0xa0] sm:$0xff]
        %v769 = vld [vmem:[#allocation2 + $0xa8] sm:$0xff]
        %v770 = vld [vmem:[#allocation2 + $0xb0] sm:$0xff]
        %v771 = vld [vmem:[#allocation2 + $0xb8] sm:$0xff]
        %v772 = vld [vmem:[#allocation2 + $0xc0] sm:$0xff]
        %v773 = vld [vmem:[#allocation2 + $0xc8] sm:$0xff]
        %v774 = vld [vmem:[#allocation2 + $0xd0] sm:$0xff]
        %v775 = vld [vmem:[#allocation2 + $0xd8] sm:$0xff]
        %v776 = vld [vmem:[#allocation2 + $0xe0] sm:$0xff]
        %v777 = vld [vmem:[#allocation2 + $0xe8] sm:$0xff]
        %v778 = vld [vmem:[#allocation2 + $0xf0] sm:$0xff]
        %v779 = vld [vmem:[#allocation2 + $0xf8] sm:$0xff]
        %v780 = vld [vmem:[%s249] sm:$0x1]
        %v782 = vlaneseq
        %v783 = vshrl.u32 %v782, 7
        %v784 = vsub.s32 0, %v783
        %v785 = vrot.slane %v780, %v784
        %v787 = vadd.f32 %v748, %v785
        %v788 = vadd.f32 %v749, %v785
        %v789 = vadd.f32 %v750, %v785
        %v790 = vadd.f32 %v751, %v785
        %v791 = vadd.f32 %v752, %v785
        %v792 = vadd.f32 %v753, %v785
        %v793 = vadd.f32 %v754, %v785
        %v794 = vadd.f32 %v755, %v785
        %v795 = vadd.f32 %v756, %v785
        %v796 = vadd.f32 %v757, %v785
        %v797 = vadd.f32 %v758, %v785
        %v798 = vadd.f32 %v759, %v785
        %v799 = vadd.f32 %v760, %v785
        %v800 = vadd.f32 %v761, %v785
        %v801 = vadd.f32 %v762, %v785
        %v802 = vadd.f32 %v763, %v785
        %v803 = vadd.f32 %v764, %v785
        %v804 = vadd.f32 %v765, %v785
        %v805 = vadd.f32 %v766, %v785
        %v806 = vadd.f32 %v767, %v785
        %v807 = vadd.f32 %v768, %v785
        %v808 = vadd.f32 %v769, %v785
        %v809 = vadd.f32 %v770, %v785
        %v810 = vadd.f32 %v771, %v785
        %v811 = vadd.f32 %v772, %v785
        %v812 = vadd.f32 %v773, %v785
        %v813 = vadd.f32 %v774, %v785
        %v814 = vadd.f32 %v775, %v785
        %v815 = vadd.f32 %v776, %v785
        %v816 = vadd.f32 %v777, %v785
        %v817 = vadd.f32 %v778, %v785
        %v818 = vadd.f32 %v779, %v785
        %v819 = vmul.f32 %v787, 0.2
        %v820 = vmul.f32 %v788, 0.2
        %v821 = vmul.f32 %v789, 0.2
        %v822 = vmul.f32 %v790, 0.2
        %v823 = vmul.f32 %v791, 0.2
        %v824 = vmul.f32 %v792, 0.2
        %v825 = vmul.f32 %v793, 0.2
        %v826 = vmul.f32 %v794, 0.2
        %v827 = vmul.f32 %v795, 0.2
        %v828 = vmul.f32 %v796, 0.2
        %v829 = vmul.f32 %v797, 0.2
        %v830 = vmul.f32 %v798, 0.2
        %v831 = vmul.f32 %v799, 0.2
        %v832 = vmul.f32 %v800, 0.2
        %v833 = vmul.f32 %v801, 0.2
        %v834 = vmul.f32 %v802, 0.2
        %v835 = vmul.f32 %v803, 0.2
        %v836 = vmul.f32 %v804, 0.2
        %v837 = vmul.f32 %v805, 0.2
        %v838 = vmul.f32 %v806, 0.2
        %v839 = vmul.f32 %v807, 0.2
        %v840 = vmul.f32 %v808, 0.2
        %v841 = vmul.f32 %v809, 0.2
        %v842 = vmul.f32 %v810, 0.2
        %v843 = vmul.f32 %v811, 0.2
        %v844 = vmul.f32 %v812, 0.2
        %v845 = vmul.f32 %v813, 0.2
        %v846 = vmul.f32 %v814, 0.2
        %v847 = vmul.f32 %v815, 0.2
        %v848 = vmul.f32 %v816, 0.2
        %v849 = vmul.f32 %v817, 0.2
        %v850 = vmul.f32 %v818, 0.2
        %v851 = vmax.f32 %v787, %v819
        %v852 = vmax.f32 %v788, %v820
        %v853 = vmax.f32 %v789, %v821
        %v854 = vmax.f32 %v790, %v822
        %v855 = vmax.f32 %v791, %v823
        %v856 = vmax.f32 %v792, %v824
        %v857 = vmax.f32 %v793, %v825
        %v858 = vmax.f32 %v794, %v826
        %v859 = vmax.f32 %v795, %v827
        %v860 = vmax.f32 %v796, %v828
        %v861 = vmax.f32 %v797, %v829
        %v862 = vmax.f32 %v798, %v830
        %v863 = vmax.f32 %v799, %v831
        %v864 = vmax.f32 %v800, %v832
        %v865 = vmax.f32 %v801, %v833
        %v866 = vmax.f32 %v802, %v834
        %v867 = vmax.f32 %v803, %v835
        %v868 = vmax.f32 %v804, %v836
        %v869 = vmax.f32 %v805, %v837
        %v870 = vmax.f32 %v806, %v838
        %v871 = vmax.f32 %v807, %v839
        %v872 = vmax.f32 %v808, %v840
        %v873 = vmax.f32 %v809, %v841
        %v874 = vmax.f32 %v810, %v842
        %v875 = vmax.f32 %v811, %v843
        %v876 = vmax.f32 %v812, %v844
        %v877 = vmax.f32 %v813, %v845
        %v878 = vmax.f32 %v814, %v846
        %v879 = vmax.f32 %v815, %v847
        %v880 = vmax.f32 %v816, %v848
        %v881 = vmax.f32 %v817, %v849
        %v882 = vmax.f32 %v818, %v850
        %v883 = vpack.c.bf16 %v852, %v851
        %v884 = vpack.c.bf16 %v854, %v853
        %v885 = vpack.c.bf16 %v856, %v855
        %v886 = vpack.c.bf16 %v858, %v857
        %v887 = vpack.c.bf16 %v860, %v859
        %v888 = vpack.c.bf16 %v862, %v861
        %v889 = vpack.c.bf16 %v864, %v863
        %v890 = vpack.c.bf16 %v866, %v865
        %v891 = vpack.c.bf16 %v868, %v867
        %v892 = vpack.c.bf16 %v870, %v869
        %v893 = vpack.c.bf16 %v872, %v871
        %v894 = vpack.c.bf16 %v874, %v873
        %v895 = vpack.c.bf16 %v876, %v875
        %v896 = vpack.c.bf16 %v878, %v877
        %v897 = vpack.c.bf16 %v880, %v879
        %v898 = vpack.c.bf16 %v882, %v881
        %v915 = vunpack.c.l.b16 %v883
        %v916 = vunpack.c.h.b16 %v883
        %v917 = vunpack.c.l.b16 %v884
        %v918 = vunpack.c.h.b16 %v884
        %v919 = vunpack.c.l.b16 %v885
        %v920 = vunpack.c.h.b16 %v885
        %v921 = vunpack.c.l.b16 %v886
        %v922 = vunpack.c.h.b16 %v886
        %v923 = vunpack.c.l.b16 %v887
        %v924 = vunpack.c.h.b16 %v887
        %v925 = vunpack.c.l.b16 %v888
        %v926 = vunpack.c.h.b16 %v888
        %v927 = vunpack.c.l.b16 %v889
        %v928 = vunpack.c.h.b16 %v889
        %v929 = vunpack.c.l.b16 %v890
        %v930 = vunpack.c.h.b16 %v890
        %v931 = vunpack.c.l.b16 %v891
        %v932 = vunpack.c.h.b16 %v891
        %v933 = vunpack.c.l.b16 %v892
        %v934 = vunpack.c.h.b16 %v892
        %v935 = vunpack.c.l.b16 %v893
        %v936 = vunpack.c.h.b16 %v893
        %v937 = vunpack.c.l.b16 %v894
        %v938 = vunpack.c.h.b16 %v894
        %v939 = vunpack.c.l.b16 %v895
        %v940 = vunpack.c.h.b16 %v895
        %v941 = vunpack.c.l.b16 %v896
        %v942 = vunpack.c.h.b16 %v896
        %v943 = vunpack.c.l.b16 %v897
        %v944 = vunpack.c.h.b16 %v897
        %v945 = vunpack.c.l.b16 %v898
        %v946 = vunpack.c.h.b16 %v898
        %v947 = vpack.c.b16 %v915, %v915
        %v948 = vpack.c.b16 %v916, %v916
        %v949 = vpack.c.b16 %v917, %v917
        %v950 = vpack.c.b16 %v918, %v918
        %v951 = vpack.c.b16 %v919, %v919
        %v952 = vpack.c.b16 %v920, %v920
        %v953 = vpack.c.b16 %v921, %v921
        %v954 = vpack.c.b16 %v922, %v922
        %v955 = vpack.c.b16 %v923, %v923
        %v956 = vpack.c.b16 %v924, %v924
        %v957 = vpack.c.b16 %v925, %v925
        %v958 = vpack.c.b16 %v926, %v926
        %v959 = vpack.c.b16 %v927, %v927
        %v960 = vpack.c.b16 %v928, %v928
        %v961 = vpack.c.b16 %v929, %v929
        %v962 = vpack.c.b16 %v930, %v930
        %v963 = vpack.c.b16 %v931, %v931
        %v964 = vpack.c.b16 %v932, %v932
        %v965 = vpack.c.b16 %v933, %v933
        %v966 = vpack.c.b16 %v934, %v934
        %v967 = vpack.c.b16 %v935, %v935
        %v968 = vpack.c.b16 %v936, %v936
        %v969 = vpack.c.b16 %v937, %v937
        %v970 = vpack.c.b16 %v938, %v938
        %v971 = vpack.c.b16 %v939, %v939
        %v972 = vpack.c.b16 %v940, %v940
        %v973 = vpack.c.b16 %v941, %v941
        %v974 = vpack.c.b16 %v942, %v942
        %v975 = vpack.c.b16 %v943, %v943
        %v976 = vpack.c.b16 %v944, %v944
        %v977 = vpack.c.b16 %v945, %v945
        %v978 = vpack.c.b16 %v946, %v946
        %1011 = vst [vmem:[%s257] sm:$0xf] %v947
        %1012 = vst [vmem:[%s257 + $0x4] sm:$0xf] %v948
        %1013 = vst [vmem:[%s257 + $0x8] sm:$0xf] %v949
        %1014 = vst [vmem:[%s257 + $0xc] sm:$0xf] %v950
        %1015 = vst [vmem:[%s257 + $0x10] sm:$0xf] %v951
        %1016 = vst [vmem:[%s257 + $0x14] sm:$0xf] %v952
        %1017 = vst [vmem:[%s257 + $0x18] sm:$0xf] %v953
        %1018 = vst [vmem:[%s257 + $0x1c] sm:$0xf] %v954
        %1019 = vst [vmem:[%s257 + $0x20] sm:$0xf] %v955
        %1020 = vst [vmem:[%s257 + $0x24] sm:$0xf] %v956
        %1021 = vst [vmem:[%s257 + $0x28] sm:$0xf] %v957
        %1022 = vst [vmem:[%s257 + $0x2c] sm:$0xf] %v958
        %1023 = vst [vmem:[%s257 + $0x30] sm:$0xf] %v959
        %1024 = vst [vmem:[%s257 + $0x34] sm:$0xf] %v960
        %1025 = vst [vmem:[%s257 + $0x38] sm:$0xf] %v961
        %1026 = vst [vmem:[%s257 + $0x3c] sm:$0xf] %v962
        %1027 = vst [vmem:[%s257 + $0x40] sm:$0xf] %v963
        %1028 = vst [vmem:[%s257 + $0x44] sm:$0xf] %v964
        %1029 = vst [vmem:[%s257 + $0x48] sm:$0xf] %v965
        %1030 = vst [vmem:[%s257 + $0x4c] sm:$0xf] %v966
        %1031 = vst [vmem:[%s257 + $0x50] sm:$0xf] %v967
        %1032 = vst [vmem:[%s257 + $0x54] sm:$0xf] %v968
        %1033 = vst [vmem:[%s257 + $0x58] sm:$0xf] %v969
        %1034 = vst [vmem:[%s257 + $0x5c] sm:$0xf] %v970
        %1035 = vst [vmem:[%s257 + $0x60] sm:$0xf] %v971
        %1036 = vst [vmem:[%s257 + $0x64] sm:$0xf] %v972
        %1037 = vst [vmem:[%s257 + $0x68] sm:$0xf] %v973
        %1038 = vst [vmem:[%s257 + $0x6c] sm:$0xf] %v974
        %1039 = vst [vmem:[%s257 + $0x70] sm:$0xf] %v975
        %1040 = vst [vmem:[%s257 + $0x74] sm:$0xf] %v976
        %1041 = vst [vmem:[%s257 + $0x78] sm:$0xf] %v977
        %1042 = vst [vmem:[%s257 + $0x7c] sm:$0xf] %v978
      $region40: #{nlayer_discriminator_forward.8} parent=31 // pred_fallthru
        _
      %s1043 = smul.u32 32, %s19
      %p1044 = scmp.lt.s32.totalorder %s1043, 63
      %s1045 = scalar_select %p1044, %s1043, 63
      %p1046 = scmp.lt.s32.totalorder %s20, 0
      %s1047 = scalar_select %p1046, %s20, 0
      %s1048 = sadd.s32 %s1047, %s1045
      %s1049 = smul.addr %s1048, 4
      %s1050 = scalar_lea.vmem %s3, %s1049
      // Predicated region
      $region41: #{nlayer_discriminator_forward.8} parent=31 // pred_check
        %p1051 = pneg %p135
      $region42: #{nlayer_discriminator_forward.8} parent=31 // pred_check_branch
        %1053 = sbr.rel (%p1051) target = $region44
      $region43: #{nlayer_discriminator_forward.8} parent=31 // pred_region
        %s1054 = smul.u32 32, %s19
      $region44: #{nlayer_discriminator_forward.8} parent=31 // pred_fallthru
        _
    $region32: #{nlayer_discriminator_forward.8} parent=5 // pred_fallthru
      _
    %p1055 = scmp.le.s32.totalorder 2, %s9
    // Predicated region
    $region45: #{nlayer_discriminator_forward.8} parent=5 // pred_check
      %p1056 = pneg %p1055
    $region46: #{nlayer_discriminator_forward.8} parent=5 // pred_check_branch
      %1058 = sbr.rel (%p1056) target = $region48
    $region47: #{nlayer_discriminator_forward.8} parent=5 // pred_region
      %s1059 = ssub.s32 %s9, 2
      // Predicated region
      $region49: #{nlayer_discriminator_forward.8} parent=47 // pred_check
        %p1060 = pneg %p141
      $region50: #{nlayer_discriminator_forward.8} parent=47 // pred_check_branch
        %1062 = sbr.rel (%p1060) target = $region52
      $region51: #{nlayer_discriminator_forward.8} parent=47 // pred_region
        %s1063 = smul.u32 32, %s22
        %p1064 = scmp.lt.s32.totalorder %s1063, 63
        %s1065 = scalar_select %p1064, %s1063, 63
        %p1066 = scmp.lt.s32.totalorder %s23, 0
        %s1067 = scalar_select %p1066, %s23, 0
        %s1068 = sadd.s32 %s1067, %s1065
        %s1069 = smul.addr %s1068, 4
        %s1070 = scalar_lea.vmem %s3, %s1069
      $region52: #{nlayer_discriminator_forward.8} parent=47 // pred_fallthru
        _
    $region48: #{nlayer_discriminator_forward.8} parent=5 // pred_fallthru
      _
  $region6: #{nlayer_discriminator_forward.8} parent=0 // loop_footer
    %s13 = sadd.s32 1, %s9
  $region7: #{nlayer_discriminator_forward.8} parent=0 // loop_footer_branch
    %8 = sbr.rel target = $region3
  $region8: #{nlayer_discriminator_forward.8} parent=0 // loop_exit
    _

// kernel: nlayer_discriminator_forward.9
$region0: #{nlayer_discriminator_forward.9}
  #allocation0 [shape = 'u32[]', space=smem, size = 0x4, offset = 0x4, fixed_abs, tag = 'smem constant byte address 0x4 - core index']
  #allocation1 [shape = 'u32[144,128]{1,0:T(1,128)}', space=vmem, size = 0x12000, scoped, tag = 'internal scratch']
  #allocation2 [shape = 'f32[128,128]{1,0:T(8,128)}', space=vmem, size = 0x10000, scoped, tag = 'scratch operand']
  %s0 = inlined_call_operand.vmem [shape: bf16[128,128], index: 0, kind: input, shape index: {}]
  %s1 = inlined_call_operand.vmem [shape: bf16[128,128], index: 1, kind: input, shape index: {}]
  %s2 = inlined_call_operand.vmem [shape: f32[1,128], index: 2, kind: input, shape index: {}]
  %s3 = inlined_call_operand.vmem [shape: bf16[128,128], index: 3, kind: output, shape index: {}]
  %s4 = sld [smem:[#allocation0]]
  $region30: #{nlayer_discriminator_forward.9} parent=0
    _
  %s6 = ssub.s32 1, %s4
  %s7 = scalar_select 0, %s6, %s4
  // Predicated region
  $region2: #{nlayer_discriminator_forward.9} parent=0 // pred_check
    _
  $region3: #{nlayer_discriminator_forward.9} parent=0 // pred_check_branch
    %9 = sbr.rel (0) target = $region5
  $region4: #{nlayer_discriminator_forward.9} parent=0 // pred_region
    _
  $region5: #{nlayer_discriminator_forward.9} parent=0 // pred_fallthru
    _
  // Predicated region
  $region6: #{nlayer_discriminator_forward.9} parent=0 // pred_check
    _
  $region7: #{nlayer_discriminator_forward.9} parent=0 // pred_check_branch
    %11 = sbr.rel (0) target = $region9
  $region8: #{nlayer_discriminator_forward.9} parent=0 // pred_region
    _
  $region9: #{nlayer_discriminator_forward.9} parent=0 // pred_fallthru
    _
  // Predicated region
  $region10: #{nlayer_discriminator_forward.9} parent=0 // pred_check
    _
  $region11: #{nlayer_discriminator_forward.9} parent=0 // pred_check_branch
    %13 = sbr.rel (0) target = $region13
  $region12: #{nlayer_discriminator_forward.9} parent=0 // pred_region
    _
  $region13: #{nlayer_discriminator_forward.9} parent=0 // pred_fallthru
    _
  %p15 = scmp.eq.s32.totalorder 0, 0
  // Predicated region
  $region14: #{nlayer_discriminator_forward.9} parent=0 // pred_check
    %p16 = pneg %p15
  $region15: #{nlayer_discriminator_forward.9} parent=0 // pred_check_branch
    %18 = sbr.rel (%p16) target = $region17
  $region16: #{nlayer_discriminator_forward.9} parent=0 // pred_region
    %19 = vst [vmem:[#allocation2] sm:$0xff] 0.0
    %20 = vst [vmem:[#allocation2 + $0x8] sm:$0xff] 0.0
    %21 = vst [vmem:[#allocation2 + $0x10] sm:$0xff] 0.0
    %22 = vst [vmem:[#allocation2 + $0x18] sm:$0xff] 0.0
    %23 = vst [vmem:[#allocation2 + $0x20] sm:$0xff] 0.0
    %24 = vst [vmem:[#allocation2 + $0x28] sm:$0xff] 0.0
    %25 = vst [vmem:[#allocation2 + $0x30] sm:$0xff] 0.0
    %26 = vst [vmem:[#allocation2 + $0x38] sm:$0xff] 0.0
    %27 = vst [vmem:[#allocation2 + $0x40] sm:$0xff] 0.0
    %28 = vst [vmem:[#allocation2 + $0x48] sm:$0xff] 0.0
    %29 = vst [vmem:[#allocation2 + $0x50] sm:$0xff] 0.0
    %30 = vst [vmem:[#allocation2 + $0x58] sm:$0xff] 0.0
    %31 = vst [vmem:[#allocation2 + $0x60] sm:$0xff] 0.0
    %32 = vst [vmem:[#allocation2 + $0x68] sm:$0xff] 0.0
    %33 = vst [vmem:[#allocation2 + $0x70] sm:$0xff] 0.0
    %34 = vst [vmem:[#allocation2 + $0x78] sm:$0xff] 0.0
  $region17: #{nlayer_discriminator_forward.9} parent=0 // pred_fallthru
    _
  %v35 = vld [vmem:[#allocation2] sm:$0xff]
  %v36 = vld [vmem:[#allocation2 + $0x8] sm:$0xff]
  %v37 = vld [vmem:[#allocation2 + $0x10] sm:$0xff]
  %v38 = vld [vmem:[#allocation2 + $0x18] sm:$0xff]
  %v39 = vld [vmem:[#allocation2 + $0x20] sm:$0xff]
  %v40 = vld [vmem:[#allocation2 + $0x28] sm:$0xff]
  %v41 = vld [vmem:[#allocation2 + $0x30] sm:$0xff]
  %v42 = vld [vmem:[#allocation2 + $0x38] sm:$0xff]
  %v43 = vld [vmem:[#allocation2 + $0x40] sm:$0xff]
  %v44 = vld [vmem:[#allocation2 + $0x48] sm:$0xff]
  %v45 = vld [vmem:[#allocation2 + $0x50] sm:$0xff]
  %v46 = vld [vmem:[#allocation2 + $0x58] sm:$0xff]
  %v47 = vld [vmem:[#allocation2 + $0x60] sm:$0xff]
  %v48 = vld [vmem:[#allocation2 + $0x68] sm:$0xff]
  %v49 = vld [vmem:[#allocation2 + $0x70] sm:$0xff]
  %v50 = vld [vmem:[#allocation2 + $0x78] sm:$0xff]
  %v51 = vld [vmem:[%s0] sm:$0xf]
  %v52 = vld [vmem:[%s0 + $0x4] sm:$0xf]
  %v53 = vld [vmem:[%s0 + $0x8] sm:$0xf]
  %v54 = vld [vmem:[%s0 + $0xc] sm:$0xf]
  %v55 = vld [vmem:[%s0 + $0x10] sm:$0xf]
  %v56 = vld [vmem:[%s0 + $0x14] sm:$0xf]
  %v57 = vld [vmem:[%s0 + $0x18] sm:$0xf]
  %v58 = vld [vmem:[%s0 + $0x1c] sm:$0xf]
  %v59 = vld [vmem:[%s0 + $0x20] sm:$0xf]
  %v60 = vld [vmem:[%s0 + $0x24] sm:$0xf]
  %v61 = vld [vmem:[%s0 + $0x28] sm:$0xf]
  %v62 = vld [vmem:[%s0 + $0x2c] sm:$0xf]
  %v63 = vld [vmem:[%s0 + $0x30] sm:$0xf]
  %v64 = vld [vmem:[%s0 + $0x34] sm:$0xf]
  %v65 = vld [vmem:[%s0 + $0x38] sm:$0xf]
  %v66 = vld [vmem:[%s0 + $0x3c] sm:$0xf]
  %v67 = vld [vmem:[%s1] sm:$0xf]
  %v68 = vld [vmem:[%s1 + $0x4] sm:$0xf]
  %v69 = vld [vmem:[%s1 + $0x8] sm:$0xf]
  %v70 = vld [vmem:[%s1 + $0xc] sm:$0xf]
  %v71 = vld [vmem:[%s1 + $0x10] sm:$0xf]
  %v72 = vld [vmem:[%s1 + $0x14] sm:$0xf]
  %v73 = vld [vmem:[%s1 + $0x18] sm:$0xf]
  %v74 = vld [vmem:[%s1 + $0x1c] sm:$0xf]
  %v75 = vld [vmem:[%s1 + $0x20] sm:$0xf]
  %v76 = vld [vmem:[%s1 + $0x24] sm:$0xf]
  %v77 = vld [vmem:[%s1 + $0x28] sm:$0xf]
  %v78 = vld [vmem:[%s1 + $0x2c] sm:$0xf]
  %v79 = vld [vmem:[%s1 + $0x30] sm:$0xf]
  %v80 = vld [vmem:[%s1 + $0x34] sm:$0xf]
  %v81 = vld [vmem:[%s1 + $0x38] sm:$0xf]
  %v82 = vld [vmem:[%s1 + $0x3c] sm:$0xf]
  %v99 = vunpack.c.l.b16 %v51
  %v100 = vunpack.c.l.b16 %v52
  %v101 = vunpack.c.l.b16 %v53
  %v102 = vunpack.c.l.b16 %v54
  %v103 = vunpack.c.l.b16 %v55
  %v104 = vunpack.c.l.b16 %v56
  %v105 = vunpack.c.l.b16 %v57
  %v106 = vunpack.c.l.b16 %v58
  %v107 = vunpack.c.l.b16 %v59
  %v108 = vunpack.c.l.b16 %v60
  %v109 = vunpack.c.l.b16 %v61
  %v110 = vunpack.c.l.b16 %v62
  %v111 = vunpack.c.l.b16 %v63
  %v112 = vunpack.c.l.b16 %v64
  %v113 = vunpack.c.l.b16 %v65
  %v114 = vunpack.c.l.b16 %v66
  %v115 = vpack.c.b16 %v100, %v99
  %v116 = vpack.c.b16 %v102, %v101
  %v117 = vpack.c.b16 %v104, %v103
  %v118 = vpack.c.b16 %v106, %v105
  %v119 = vpack.c.b16 %v108, %v107
  %v120 = vpack.c.b16 %v110, %v109
  %v121 = vpack.c.b16 %v112, %v111
  %v122 = vpack.c.b16 %v114, %v113
  %v147 = vunpack.c.l.b16 %v67
  %v148 = vunpack.c.l.b16 %v68
  %v149 = vunpack.c.l.b16 %v69
  %v150 = vunpack.c.l.b16 %v70
  %v151 = vunpack.c.l.b16 %v71
  %v152 = vunpack.c.l.b16 %v72
  %v153 = vunpack.c.l.b16 %v73
  %v154 = vunpack.c.l.b16 %v74
  %v155 = vunpack.c.l.b16 %v75
  %v156 = vunpack.c.l.b16 %v76
  %v157 = vunpack.c.l.b16 %v77
  %v158 = vunpack.c.l.b16 %v78
  %v159 = vunpack.c.l.b16 %v79
  %v160 = vunpack.c.l.b16 %v80
  %v161 = vunpack.c.l.b16 %v81
  %v162 = vunpack.c.l.b16 %v82
  %v163 = vpack.c.b16 %v148, %v147
  %v164 = vpack.c.b16 %v150, %v149
  %v165 = vpack.c.b16 %v152, %v151
  %v166 = vpack.c.b16 %v154, %v153
  %v167 = vpack.c.b16 %v156, %v155
  %v168 = vpack.c.b16 %v158, %v157
  %v169 = vpack.c.b16 %v160, %v159
  %v170 = vpack.c.b16 %v162, %v161
  %179 = vmatprep.subr.bf16.mxu0 0
  %180 = vmatpush1.bf16.msra.mxu0 %v163
  %181 = vmatprep.subr.bf16.mxu0 0
  %182 = vmatpush1.bf16.msra.mxu0 %v164
  %183 = vmatprep.subr.bf16.mxu0 0
  %184 = vmatpush1.bf16.msra.mxu0 %v165
  %185 = vmatprep.subr.bf16.mxu0 0
  %186 = vmatpush1.bf16.msra.mxu0 %v166
  %187 = vmatprep.subr.bf16.mxu0 0
  %188 = vmatpush1.bf16.msra.mxu0 %v167
  %189 = vmatprep.subr.bf16.mxu0 0
  %190 = vmatpush1.bf16.msra.mxu0 %v168
  %191 = vmatprep.subr.bf16.mxu0 0
  %192 = vmatpush1.bf16.msra.mxu0 %v169
  %193 = vmatprep.subr.bf16.mxu0 0
  %194 = vmatpush1.bf16.msra.mxu0 %v170
  %195 = vmatprep.subr.bf16.mxu0 0
  %196 = vmatpush1.bf16.msra.mxu0 0
  %197 = vmatprep.subr.bf16.mxu0 0
  %198 = vmatpush1.bf16.msra.mxu0 0
  %199 = vmatprep.subr.bf16.mxu0 0
  %200 = vmatpush1.bf16.msra.mxu0 0
  %201 = vmatprep.subr.bf16.mxu0 0
  %202 = vmatpush1.bf16.msra.mxu0 0
  %203 = vmatprep.subr.bf16.mxu0 0
  %204 = vmatpush1.bf16.msra.mxu0 0
  %205 = vmatprep.subr.bf16.mxu0 0
  %206 = vmatpush1.bf16.msra.mxu0 0
  %207 = vmatprep.subr.bf16.mxu0 0
  %208 = vmatpush1.bf16.msra.mxu0 0
  %209 = vmatprep.subr.bf16.mxu0 0
  %210 = vmatpush1.bf16.msra.mxu0 0
  %211 = vmatprep.mubr.bf16.mxu0 0
  %212 = vmatmul.mubr.bf16.gmra.mrb[0].mxu0 %v115
  %v213 = vpop.f32.mrb[0].mxu0
  %v214 = vadd.f32 0.0, %v213
  %v215 = vpop.f32.mrb[0].mxu0
  %v216 = vpop.f32.mrb[0].mxu0
  %v217 = vadd.f32 0.0, %v216
  %v218 = vpop.f32.mrb[0].mxu0
  %219 = vmatprep.mubr.bf16.mxu0 0
  %220 = vmatmul.mubr.bf16.gmra.mrb[0].mxu0 %v116
  %v221 = vpop.f32.mrb[0].mxu0
  %v222 = vadd.f32 0.0, %v221
  %v223 = vpop.f32.mrb[0].mxu0
  %v224 = vpop.f32.mrb[0].mxu0
  %v225 = vadd.f32 0.0, %v224
  %v226 = vpop.f32.mrb[0].mxu0
  %227 = vmatprep.mubr.bf16.mxu0 0
  %228 = vmatmul.mubr.bf16.gmra.mrb[0].mxu0 %v117
  %v229 = vpop.f32.mrb[0].mxu0
  %v230 = vadd.f32 0.0, %v229
  %v231 = vpop.f32.mrb[0].mxu0
  %v232 = vpop.f32.mrb[0].mxu0
  %v233 = vadd.f32 0.0, %v232
  %v234 = vpop.f32.mrb[0].mxu0
  %235 = vmatprep.mubr.bf16.mxu0 0
  %236 = vmatmul.mubr.bf16.gmra.mrb[0].mxu0 %v118
  %v237 = vpop.f32.mrb[0].mxu0
  %v238 = vadd.f32 0.0, %v237
  %v239 = vpop.f32.mrb[0].mxu0
  %v240 = vpop.f32.mrb[0].mxu0
  %v241 = vadd.f32 0.0, %v240
  %v242 = vpop.f32.mrb[0].mxu0
  %243 = vmatprep.mubr.bf16.mxu0 0
  %244 = vmatmul.mubr.bf16.gmra.mrb[0].mxu0 %v119
  %v245 = vpop.f32.mrb[0].mxu0
  %v246 = vadd.f32 0.0, %v245
  %v247 = vpop.f32.mrb[0].mxu0
  %v248 = vpop.f32.mrb[0].mxu0
  %v249 = vadd.f32 0.0, %v248
  %v250 = vpop.f32.mrb[0].mxu0
  %251 = vmatprep.mubr.bf16.mxu0 0
  %252 = vmatmul.mubr.bf16.gmra.mrb[0].mxu0 %v120
  %v253 = vpop.f32.mrb[0].mxu0
  %v254 = vadd.f32 0.0, %v253
  %v255 = vpop.f32.mrb[0].mxu0
  %v256 = vpop.f32.mrb[0].mxu0
  %v257 = vadd.f32 0.0, %v256
  %v258 = vpop.f32.mrb[0].mxu0
  %259 = vmatprep.mubr.bf16.mxu0 0
  %260 = vmatmul.mubr.bf16.gmra.mrb[0].mxu0 %v121
  %v261 = vpop.f32.mrb[0].mxu0
  %v262 = vadd.f32 0.0, %v261
  %v263 = vpop.f32.mrb[0].mxu0
  %v264 = vpop.f32.mrb[0].mxu0
  %v265 = vadd.f32 0.0, %v264
  %v266 = vpop.f32.mrb[0].mxu0
  %267 = vmatprep.mubr.bf16.mxu0 0
  %268 = vmatmul.mubr.bf16.gmra.mrb[0].mxu0 %v122
  %v269 = vpop.f32.mrb[0].mxu0
  %v270 = vadd.f32 0.0, %v269
  %v271 = vpop.f32.mrb[0].mxu0
  %v272 = vpop.f32.mrb[0].mxu0
  %v273 = vadd.f32 0.0, %v272
  %v274 = vpop.f32.mrb[0].mxu0
  %275 = vdwg.mxu0
  %v276 = vadd.f32 %v35, %v214
  %v277 = vadd.f32 %v36, %v217
  %v278 = vadd.f32 %v37, %v222
  %v279 = vadd.f32 %v38, %v225
  %v280 = vadd.f32 %v39, %v230
  %v281 = vadd.f32 %v40, %v233
  %v282 = vadd.f32 %v41, %v238
  %v283 = vadd.f32 %v42, %v241
  %v284 = vadd.f32 %v43, %v246
  %v285 = vadd.f32 %v44, %v249
  %v286 = vadd.f32 %v45, %v254
  %v287 = vadd.f32 %v46, %v257
  %v288 = vadd.f32 %v47, %v262
  %v289 = vadd.f32 %v48, %v265
  %v290 = vadd.f32 %v49, %v270
  %v291 = vadd.f32 %v50, %v273
  %292 = vst [vmem:[#allocation2] sm:$0xff] %v276
  %293 = vst [vmem:[#allocation2 + $0x8] sm:$0xff] %v277
  %294 = vst [vmem:[#allocation2 + $0x10] sm:$0xff] %v278
  %295 = vst [vmem:[#allocation2 + $0x18] sm:$0xff] %v279
  %296 = vst [vmem:[#allocation2 + $0x20] sm:$0xff] %v280
  %297 = vst [vmem:[#allocation2 + $0x28] sm:$0xff] %v281
  %298 = vst [vmem:[#allocation2 + $0x30] sm:$0xff] %v282
  %299 = vst [vmem:[#allocation2 + $0x38] sm:$0xff] %v283
  %300 = vst [vmem:[#allocation2 + $0x40] sm:$0xff] %v284
  %301 = vst [vmem:[#allocation2 + $0x48] sm:$0xff] %v285
  %302 = vst [vmem:[#allocation2 + $0x50] sm:$0xff] %v286
  %303 = vst [vmem:[#allocation2 + $0x58] sm:$0xff] %v287
  %304 = vst [vmem:[#allocation2 + $0x60] sm:$0xff] %v288
  %305 = vst [vmem:[#allocation2 + $0x68] sm:$0xff] %v289
  %306 = vst [vmem:[#allocation2 + $0x70] sm:$0xff] %v290
  %307 = vst [vmem:[#allocation2 + $0x78] sm:$0xff] %v291
  // Predicated region
  $region18: #{nlayer_discriminator_forward.9} parent=0 // pred_check
    %p308 = pneg %p15
  $region19: #{nlayer_discriminator_forward.9} parent=0 // pred_check_branch
    %310 = sbr.rel (%p308) target = $region21
  $region20: #{nlayer_discriminator_forward.9} parent=0 // pred_region
    %v311 = vld [vmem:[#allocation2] sm:$0xff]
    %v312 = vld [vmem:[#allocation2 + $0x8] sm:$0xff]
    %v313 = vld [vmem:[#allocation2 + $0x10] sm:$0xff]
    %v314 = vld [vmem:[#allocation2 + $0x18] sm:$0xff]
    %v315 = vld [vmem:[#allocation2 + $0x20] sm:$0xff]
    %v316 = vld [vmem:[#allocation2 + $0x28] sm:$0xff]
    %v317 = vld [vmem:[#allocation2 + $0x30] sm:$0xff]
    %v318 = vld [vmem:[#allocation2 + $0x38] sm:$0xff]
    %v319 = vld [vmem:[#allocation2 + $0x40] sm:$0xff]
    %v320 = vld [vmem:[#allocation2 + $0x48] sm:$0xff]
    %v321 = vld [vmem:[#allocation2 + $0x50] sm:$0xff]
    %v322 = vld [vmem:[#allocation2 + $0x58] sm:$0xff]
    %v323 = vld [vmem:[#allocation2 + $0x60] sm:$0xff]
    %v324 = vld [vmem:[#allocation2 + $0x68] sm:$0xff]
    %v325 = vld [vmem:[#allocation2 + $0x70] sm:$0xff]
    %v326 = vld [vmem:[#allocation2 + $0x78] sm:$0xff]
    %v327 = vld [vmem:[%s2] sm:$0x1]
    %v329 = vlaneseq
    %v330 = vshrl.u32 %v329, 7
    %v331 = vsub.s32 0, %v330
    %v332 = vrot.slane %v327, %v331
    %v334 = vadd.f32 %v311, %v332
    %v335 = vadd.f32 %v312, %v332
    %v336 = vadd.f32 %v313, %v332
    %v337 = vadd.f32 %v314, %v332
    %v338 = vadd.f32 %v315, %v332
    %v339 = vadd.f32 %v316, %v332
    %v340 = vadd.f32 %v317, %v332
    %v341 = vadd.f32 %v318, %v332
    %v342 = vadd.f32 %v319, %v332
    %v343 = vadd.f32 %v320, %v332
    %v344 = vadd.f32 %v321, %v332
    %v345 = vadd.f32 %v322, %v332
    %v346 = vadd.f32 %v323, %v332
    %v347 = vadd.f32 %v324, %v332
    %v348 = vadd.f32 %v325, %v332
    %v349 = vadd.f32 %v326, %v332
    %v350 = vpack.c.bf16 %v335, %v334
    %v351 = vpack.c.bf16 %v337, %v336
    %v352 = vpack.c.bf16 %v339, %v338
    %v353 = vpack.c.bf16 %v341, %v340
    %v354 = vpack.c.bf16 %v343, %v342
    %v355 = vpack.c.bf16 %v345, %v344
    %v356 = vpack.c.bf16 %v347, %v346
    %v357 = vpack.c.bf16 %v349, %v348
    %v366 = vunpack.c.l.b16 %v350
    %v367 = vunpack.c.h.b16 %v350
    %v368 = vunpack.c.l.b16 %v351
    %v369 = vunpack.c.h.b16 %v351
    %v370 = vunpack.c.l.b16 %v352
    %v371 = vunpack.c.h.b16 %v352
    %v372 = vunpack.c.l.b16 %v353
    %v373 = vunpack.c.h.b16 %v353
    %v374 = vunpack.c.l.b16 %v354
    %v375 = vunpack.c.h.b16 %v354
    %v376 = vunpack.c.l.b16 %v355
    %v377 = vunpack.c.h.b16 %v355
    %v378 = vunpack.c.l.b16 %v356
    %v379 = vunpack.c.h.b16 %v356
    %v380 = vunpack.c.l.b16 %v357
    %v381 = vunpack.c.h.b16 %v357
    %v382 = vpack.c.b16 %v366, %v366
    %v383 = vpack.c.b16 %v367, %v367
    %v384 = vpack.c.b16 %v368, %v368
    %v385 = vpack.c.b16 %v369, %v369
    %v386 = vpack.c.b16 %v370, %v370
    %v387 = vpack.c.b16 %v371, %v371
    %v388 = vpack.c.b16 %v372, %v372
    %v389 = vpack.c.b16 %v373, %v373
    %v390 = vpack.c.b16 %v374, %v374
    %v391 = vpack.c.b16 %v375, %v375
    %v392 = vpack.c.b16 %v376, %v376
    %v393 = vpack.c.b16 %v377, %v377
    %v394 = vpack.c.b16 %v378, %v378
    %v395 = vpack.c.b16 %v379, %v379
    %v396 = vpack.c.b16 %v380, %v380
    %v397 = vpack.c.b16 %v381, %v381
    %414 = vst [vmem:[%s3] sm:$0xf] %v382
    %415 = vst [vmem:[%s3 + $0x4] sm:$0xf] %v383
    %416 = vst [vmem:[%s3 + $0x8] sm:$0xf] %v384
    %417 = vst [vmem:[%s3 + $0xc] sm:$0xf] %v385
    %418 = vst [vmem:[%s3 + $0x10] sm:$0xf] %v386
    %419 = vst [vmem:[%s3 + $0x14] sm:$0xf] %v387
    %420 = vst [vmem:[%s3 + $0x18] sm:$0xf] %v388
    %421 = vst [vmem:[%s3 + $0x1c] sm:$0xf] %v389
    %422 = vst [vmem:[%s3 + $0x20] sm:$0xf] %v390
    %423 = vst [vmem:[%s3 + $0x24] sm:$0xf] %v391
    %424 = vst [vmem:[%s3 + $0x28] sm:$0xf] %v392
    %425 = vst [vmem:[%s3 + $0x2c] sm:$0xf] %v393
    %426 = vst [vmem:[%s3 + $0x30] sm:$0xf] %v394
    %427 = vst [vmem:[%s3 + $0x34] sm:$0xf] %v395
    %428 = vst [vmem:[%s3 + $0x38] sm:$0xf] %v396
    %429 = vst [vmem:[%s3 + $0x3c] sm:$0xf] %v397
  $region21: #{nlayer_discriminator_forward.9} parent=0 // pred_fallthru
    _
  // Predicated region
  $region22: #{nlayer_discriminator_forward.9} parent=0 // pred_check
    _
  $region23: #{nlayer_discriminator_forward.9} parent=0 // pred_check_branch
    %431 = sbr.rel (0) target = $region25
  $region24: #{nlayer_discriminator_forward.9} parent=0 // pred_region
    _
  $region25: #{nlayer_discriminator_forward.9} parent=0 // pred_fallthru
    _
  // Predicated region
  $region26: #{nlayer_discriminator_forward.9} parent=0 // pred_check
    _
  $region27: #{nlayer_discriminator_forward.9} parent=0 // pred_check_branch
    %433 = sbr.rel (0) target = $region29
  $region28: #{nlayer_discriminator_forward.9} parent=0 // pred_region
    _
  $region29: #{nlayer_discriminator_forward.9} parent=0 // pred_fallthru
    _

// kernel: nlayer_discriminator_forward.10
$region0: #{nlayer_discriminator_forward.10}
  #allocation0 [shape = 'u32[]', space=smem, size = 0x4, offset = 0x4, fixed_abs, tag = 'smem constant byte address 0x4 - core index']
  #allocation1 [shape = 'u32[144,128]{1,0:T(1,128)}', space=vmem, size = 0x12000, scoped, tag = 'internal scratch']
  %s0 = inlined_call_operand.vmem [shape: bf16[2,64,16], index: 0, kind: input, shape index: {}]
  %s1 = inlined_call_operand.vmem [shape: bf16[2,64,16], index: 1, kind: output, shape index: {}]
  %s2 = sld [smem:[#allocation0]]
  $region37: #{nlayer_discriminator_forward.10} parent=0
    _
  %s4 = ssub.s32 1, %s2
  %s5 = scalar_select 0, %s4, %s2
  loop: start=0, step=1, limit=4
  $region2: #{nlayer_discriminator_forward.10} parent=0 // loop_pre_header
    _
  $region3: #{nlayer_discriminator_forward.10} parent=0 // loop_header
    %s7 = sphi 0, %s11
    %p8 = scmp.ge.s32.totalorder %s7, 4
    %s14 = sphi 0, %s26
    %s15 = sphi 0, %s22
    %s16 = sphi 0, %s14
    %s17 = sphi 0, %s15
    %s18 = sphi 0, %s16
    %s19 = sphi 0, %s17
    %s31 = sphi 0, %s33
    %s34 = sphi 0, %s31
    %s35 = sphi 0, %s34
    %s51 = sphi 0, %s35
    %s59 = sphi 0, %s61
    %s62 = sphi 0, %s59
    %s63 = sphi 0, %s62
    %s79 = sphi 0, %s63
  $region4: #{nlayer_discriminator_forward.10} parent=0 // loop_header_branch
    %10 = sbr.rel (%p8) target = $region8
  $region5: #{nlayer_discriminator_forward.10} parent=0 // loop_body
    %s12 = ssub.s32 %s7, 1
    %s13 = ssub.s32 %s7, 2
    %s20 = sadd.s32 1, %s15
    %p21 = scmp.ge.s32.totalorder %s20, 1
    %s22 = scalar_select %p21, 0, %s20
    %s23 = sadd.s32 1, %s14
    %s24 = scalar_select %p21, %s23, %s14
    %p25 = scmp.ge.s32.totalorder %s24, 2
    %s26 = scalar_select %p25, 0, %s24
    %s27 = ssub.s32 %s14, %s26
    %s28 = ssub.s32 %s15, %s22
    %s29 = sor.u32 %s27, %s28
    %p30 = scmp.eq.s32.totalorder %s29, 0
    %s32 = sadd.s32 %s31, 1
    %s33 = scalar_select %p30, %s31, %s32
    %p36 = pneg %p30
    %p37 = scmp.eq.s32.totalorder %s7, 1
    %p38 = por %p36, %p37
    %p39 = scmp.ne.s32.totalorder %s31, %s34
    %p40 = scmp.eq.s32.totalorder %s7, 0
    %p41 = por %p39, %p40
    %p42 = scmp.ne.s32.totalorder %s31, %s34
    %p43 = scmp.eq.s32.totalorder %s12, 1
    %p44 = por %p42, %p43
    %p45 = scmp.ne.s32.totalorder %s34, %s35
    %p46 = scmp.eq.s32.totalorder %s12, 0
    %p47 = por %p45, %p46
    %p48 = scmp.ne.s32.totalorder %s34, %s35
    %p49 = scmp.eq.s32.totalorder %s13, 1
    %p50 = por %p48, %p49
    %p52 = scmp.ne.s32.totalorder %s35, %s51
    %p53 = scmp.eq.s32.totalorder %s13, 0
    %p54 = por %p52, %p53
    %s55 = ssub.s32 %s14, %s26
    %s56 = ssub.s32 %s15, %s22
    %s57 = sor.u32 %s55, %s56
    %p58 = scmp.eq.s32.totalorder %s57, 0
    %s60 = sadd.s32 %s59, 1
    %s61 = scalar_select %p58, %s59, %s60
    %p64 = pneg %p58
    %p65 = scmp.eq.s32.totalorder %s7, 1
    %p66 = por %p64, %p65
    %p67 = scmp.ne.s32.totalorder %s59, %s62
    %p68 = scmp.eq.s32.totalorder %s7, 0
    %p69 = por %p67, %p68
    %p70 = scmp.ne.s32.totalorder %s59, %s62
    %p71 = scmp.eq.s32.totalorder %s12, 1
    %p72 = por %p70, %p71
    %p73 = scmp.ne.s32.totalorder %s62, %s63
    %p74 = scmp.eq.s32.totalorder %s12, 0
    %p75 = por %p73, %p74
    %p76 = scmp.ne.s32.totalorder %s62, %s63
    %p77 = scmp.eq.s32.totalorder %s13, 1
    %p78 = por %p76, %p77
    %p80 = scmp.ne.s32.totalorder %s63, %s79
    %p81 = scmp.eq.s32.totalorder %s13, 0
    %p82 = por %p80, %p81
    %p83 = scmp.le.s32.totalorder 1, %s7
    %p84 = scmp.lt.s32.totalorder %s7, 3
    %p85 = pnand %p83, %p84
    %p86 = pneg %p85
    // Predicated region
    $region9: #{nlayer_discriminator_forward.10} parent=5 // pred_check
      _
    $region10: #{nlayer_discriminator_forward.10} parent=5 // pred_check_branch
      %88 = sbr.rel (%p85) target = $region12
    $region11: #{nlayer_discriminator_forward.10} parent=5 // pred_region
      %s89 = ssub.s32 %s7, 1
    $region12: #{nlayer_discriminator_forward.10} parent=5 // pred_fallthru
      _
    %p90 = scmp.lt.s32.totalorder %s7, 2
    // Predicated region
    $region13: #{nlayer_discriminator_forward.10} parent=5 // pred_check
      %p91 = pneg %p90
    $region14: #{nlayer_discriminator_forward.10} parent=5 // pred_check_branch
      %93 = sbr.rel (%p91) target = $region16
    $region15: #{nlayer_discriminator_forward.10} parent=5 // pred_region
      // Predicated region
      $region17: #{nlayer_discriminator_forward.10} parent=15 // pred_check
        %p94 = pneg %p41
      $region18: #{nlayer_discriminator_forward.10} parent=15 // pred_check_branch
        %96 = sbr.rel (%p94) target = $region20
      $region19: #{nlayer_discriminator_forward.10} parent=15 // pred_region
        %p97 = scmp.lt.s32.totalorder %s14, 1
        %s98 = scalar_select %p97, %s14, 1
        %p99 = scmp.lt.s32.totalorder %s15, 0
        %s100 = scalar_select %p99, %s15, 0
        %s101 = smul.addr %s98, 8
        %s102 = sadd.s32 %s100, %s101
        %s103 = smul.addr %s102, 4
        %s104 = scalar_lea.vmem %s0, %s103
      $region20: #{nlayer_discriminator_forward.10} parent=15 // pred_fallthru
        _
    $region16: #{nlayer_discriminator_forward.10} parent=5 // pred_fallthru
      _
    %p105 = scmp.le.s32.totalorder 1, %s7
    %p106 = scmp.lt.s32.totalorder %s7, 3
    %p107 = pnand %p105, %p106
    %p108 = pneg %p107
    // Predicated region
    $region21: #{nlayer_discriminator_forward.10} parent=5 // pred_check
      _
    $region22: #{nlayer_discriminator_forward.10} parent=5 // pred_check_branch
      %110 = sbr.rel (%p107) target = $region24
    $region23: #{nlayer_discriminator_forward.10} parent=5 // pred_region
      %s111 = ssub.s32 %s7, 1
      %p112 = scmp.lt.s32.totalorder %s16, 1
      %s113 = scalar_select %p112, %s16, 1
      %p114 = scmp.lt.s32.totalorder %s17, 0
      %s115 = scalar_select %p114, %s17, 0
      %s116 = smul.addr %s113, 8
      %s117 = sadd.s32 %s115, %s116
      %s118 = smul.addr %s117, 4
      %s119 = scalar_lea.vmem %s0, %s118
      %p120 = pneg %p47
      %p121 = pneg %p44
      %p122 = pneg %p75
      %p123 = pneg %p72
      %p124 = scmp.lt.s32.totalorder %s16, 1
      %s125 = scalar_select %p124, %s16, 1
      %p126 = scmp.lt.s32.totalorder %s17, 0
      %s127 = scalar_select %p126, %s17, 0
      %s128 = smul.addr %s125, 8
      %s129 = sadd.s32 %s127, %s128
      %s130 = smul.addr %s129, 4
      %s131 = scalar_lea.vmem %s1, %s130
      %p132 = scmp.lt.s32.totalorder %s16, 1
      %s133 = scalar_select %p132, %s16, 1
      %p134 = scmp.lt.s32.totalorder %s17, 0
      %s135 = scalar_select %p134, %s17, 0
      %s136 = smul.addr %s133, 8
      %s137 = sadd.s32 %s135, %s136
      %s138 = smul.addr %s137, 4
      %s139 = scalar_lea.vmem %s0, %s138
      %p140 = scmp.lt.s32.totalorder %s16, 1
      %s141 = scalar_select %p140, %s16, 1
      %p142 = scmp.lt.s32.totalorder %s17, 0
      %s143 = scalar_select %p142, %s17, 0
      %s144 = smul.addr %s141, 8
      %s145 = sadd.s32 %s143, %s144
      %s146 = smul.addr %s145, 4
      %s147 = scalar_lea.vmem %s1, %s146
      %v148 = vld [vmem:[%s139] sm:$0xf]
      %v149 = vld [vmem:[%s139 + $0x4] sm:$0xf]
      %v150 = vld [vmem:[%s139 + $0x8] sm:$0xf]
      %v151 = vld [vmem:[%s139 + $0xc] sm:$0xf]
      %v152 = vld [vmem:[%s139 + $0x10] sm:$0xf]
      %v153 = vld [vmem:[%s139 + $0x14] sm:$0xf]
      %v154 = vld [vmem:[%s139 + $0x18] sm:$0xf]
      %v155 = vld [vmem:[%s139 + $0x1c] sm:$0xf]
      %v156 = vunpack.c.l.bf16 %v148
      %v157 = vunpack.c.l.bf16 %v149
      %v158 = vunpack.c.l.bf16 %v150
      %v159 = vunpack.c.l.bf16 %v151
      %v160 = vunpack.c.l.bf16 %v152
      %v161 = vunpack.c.l.bf16 %v153
      %v162 = vunpack.c.l.bf16 %v154
      %v163 = vunpack.c.l.bf16 %v155
      %vm164 = vcmask 130048
      %v165 = vsel %vm164, %v156, 0.0
      %v166 = vsel %vm164, %v157, 0.0
      %v167 = vadd.f32 %v165, %v166
      %v168 = vsel %vm164, %v158, 0.0
      %v169 = vadd.f32 %v167, %v168
      %v170 = vsel %vm164, %v159, 0.0
      %v171 = vadd.f32 %v169, %v170
      %v172 = vsel %vm164, %v160, 0.0
      %v173 = vadd.f32 %v171, %v172
      %v174 = vsel %vm164, %v161, 0.0
      %v175 = vadd.f32 %v173, %v174
      %v176 = vsel %vm164, %v162, 0.0
      %v177 = vadd.f32 %v175, %v176
      %v178 = vsel %vm164, %v163, 0.0
      %v179 = vadd.f32 %v177, %v178
      %v180 = vrot.slane %v179, 4
      %v181 = vadd.f32 %v179, %v180
      %v182 = vrot.slane %v181, 2
      %v183 = vadd.f32 %v181, %v182
      %v184 = vrot.slane %v183, 1
      %v185 = vadd.f32 %v183, %v184
      %v186 = vmul.f32 %v185, 0.015625
      %v187 = vmul.f32 %v156, %v156
      %v188 = vmul.f32 %v157, %v157
      %v189 = vmul.f32 %v158, %v158
      %v190 = vmul.f32 %v159, %v159
      %v191 = vmul.f32 %v160, %v160
      %v192 = vmul.f32 %v161, %v161
      %v193 = vmul.f32 %v162, %v162
      %v194 = vmul.f32 %v163, %v163
      %v195 = vsel %vm164, %v187, 0.0
      %v196 = vsel %vm164, %v188, 0.0
      %v197 = vadd.f32 %v195, %v196
      %v198 = vsel %vm164, %v189, 0.0
      %v199 = vadd.f32 %v197, %v198
      %v200 = vsel %vm164, %v190, 0.0
      %v201 = vadd.f32 %v199, %v200
      %v202 = vsel %vm164, %v191, 0.0
      %v203 = vadd.f32 %v201, %v202
      %v204 = vsel %vm164, %v192, 0.0
      %v205 = vadd.f32 %v203, %v204
      %v206 = vsel %vm164, %v193, 0.0
      %v207 = vadd.f32 %v205, %v206
      %v208 = vsel %vm164, %v194, 0.0
      %v209 = vadd.f32 %v207, %v208
      %v210 = vrot.slane %v209, 4
      %v211 = vadd.f32 %v209, %v210
      %v212 = vrot.slane %v211, 2
      %v213 = vadd.f32 %v211, %v212
      %v214 = vrot.slane %v213, 1
      %v215 = vadd.f32 %v213, %v214
      %v216 = vmul.f32 %v215, 0.015625
      %v217 = vmul.f32 %v186, %v186
      %v218 = vsub.f32 %v216, %v217
      %v219 = vmax.f32 %v218, 0.0
      %v220 = vsub.f32 %v156, %v186
      %v221 = vsub.f32 %v157, %v186
      %v222 = vsub.f32 %v158, %v186
      %v223 = vsub.f32 %v159, %v186
      %v224 = vsub.f32 %v160, %v186
      %v225 = vsub.f32 %v161, %v186
      %v226 = vsub.f32 %v162, %v186
      %v227 = vsub.f32 %v163, %v186
      %v228 = vadd.f32 %v219, 1e-05
      %v229 = vrsqrt.pop %v228
      %v230 = vmul.f32 %v220, %v229
      %v231 = vmul.f32 %v221, %v229
      %v232 = vmul.f32 %v222, %v229
      %v233 = vmul.f32 %v223, %v229
      %v234 = vmul.f32 %v224, %v229
      %v235 = vmul.f32 %v225, %v229
      %v236 = vmul.f32 %v226, %v229
      %v237 = vmul.f32 %v227, %v229
      %v238 = vmul.f32 %v230, 0.2
      %v239 = vmul.f32 %v231, 0.2
      %v240 = vmul.f32 %v232, 0.2
      %v241 = vmul.f32 %v233, 0.2
      %v242 = vmul.f32 %v234, 0.2
      %v243 = vmul.f32 %v235, 0.2
      %v244 = vmul.f32 %v236, 0.2
      %v245 = vmul.f32 %v237, 0.2
      %v246 = vmax.f32 %v230, %v238
      %v247 = vmax.f32 %v231, %v239
      %v248 = vmax.f32 %v232, %v240
      %v249 = vmax.f32 %v233, %v241
      %v250 = vmax.f32 %v234, %v242
      %v251 = vmax.f32 %v235, %v243
      %v252 = vmax.f32 %v236, %v244
      %v253 = vmax.f32 %v237, %v245
      %v254 = vpack.c.bf16 %v247, %v246
      %v255 = vpack.c.bf16 %v249, %v248
      %v256 = vpack.c.bf16 %v251, %v250
      %v257 = vpack.c.bf16 %v253, %v252
      %v262 = vunpack.c.l.b16 %v254
      %v263 = vunpack.c.h.b16 %v254
      %v264 = vunpack.c.l.b16 %v255
      %v265 = vunpack.c.h.b16 %v255
      %v266 = vunpack.c.l.b16 %v256
      %v267 = vunpack.c.h.b16 %v256
      %v268 = vunpack.c.l.b16 %v257
      %v269 = vunpack.c.h.b16 %v257
      %v270 = vpack.c.b16 %v262, %v262
      %v271 = vpack.c.b16 %v263, %v263
      %v272 = vpack.c.b16 %v264, %v264
      %v273 = vpack.c.b16 %v265, %v265
      %v274 = vpack.c.b16 %v266, %v266
      %v275 = vpack.c.b16 %v267, %v267
      %v276 = vpack.c.b16 %v268, %v268
      %v277 = vpack.c.b16 %v269, %v269
      %vm286 = vcmask 125952
      %287 = vst.msk [vmem:[%s147] sm:$0xf] %vm286, %v270
      %288 = vst.msk [vmem:[%s147 + $0x4] sm:$0xf] %vm286, %v271
      %289 = vst.msk [vmem:[%s147 + $0x8] sm:$0xf] %vm286, %v272
      %290 = vst.msk [vmem:[%s147 + $0xc] sm:$0xf] %vm286, %v273
      %291 = vst.msk [vmem:[%s147 + $0x10] sm:$0xf] %vm286, %v274
      %292 = vst.msk [vmem:[%s147 + $0x14] sm:$0xf] %vm286, %v275
      %293 = vst.msk [vmem:[%s147 + $0x18] sm:$0xf] %vm286, %v276
      %294 = vst.msk [vmem:[%s147 + $0x1c] sm:$0xf] %vm286, %v277
      %p295 = scmp.lt.s32.totalorder %s16, 1
      %s296 = scalar_select %p295, %s16, 1
      %p297 = scmp.lt.s32.totalorder %s17, 0
      %s298 = scalar_select %p297, %s17, 0
      %s299 = smul.addr %s296, 8
      %s300 = sadd.s32 %s298, %s299
      %s301 = smul.addr %s300, 4
      %s302 = scalar_lea.vmem %s1, %s301
      // Predicated region
      $region25: #{nlayer_discriminator_forward.10} parent=23 // pred_check
        %p303 = pneg %p72
      $region26: #{nlayer_discriminator_forward.10} parent=23 // pred_check_branch
        %305 = sbr.rel (%p303) target = $region28
      $region27: #{nlayer_discriminator_forward.10} parent=23 // pred_region
        _
      $region28: #{nlayer_discriminator_forward.10} parent=23 // pred_fallthru
        _
    $region24: #{nlayer_discriminator_forward.10} parent=5 // pred_fallthru
      _
    %p306 = scmp.le.s32.totalorder 2, %s7
    // Predicated region
    $region29: #{nlayer_discriminator_forward.10} parent=5 // pred_check
      %p307 = pneg %p306
    $region30: #{nlayer_discriminator_forward.10} parent=5 // pred_check_branch
      %309 = sbr.rel (%p307) target = $region32
    $region31: #{nlayer_discriminator_forward.10} parent=5 // pred_region
      %s310 = ssub.s32 %s7, 2
      // Predicated region
      $region33: #{nlayer_discriminator_forward.10} parent=31 // pred_check
        %p311 = pneg %p78
      $region34: #{nlayer_discriminator_forward.10} parent=31 // pred_check_branch
        %313 = sbr.rel (%p311) target = $region36
      $region35: #{nlayer_discriminator_forward.10} parent=31 // pred_region
        %p314 = scmp.lt.s32.totalorder %s18, 1
        %s315 = scalar_select %p314, %s18, 1
        %p316 = scmp.lt.s32.totalorder %s19, 0
        %s317 = scalar_select %p316, %s19, 0
        %s318 = smul.addr %s315, 8
        %s319 = sadd.s32 %s317, %s318
        %s320 = smul.addr %s319, 4
        %s321 = scalar_lea.vmem %s1, %s320
      $region36: #{nlayer_discriminator_forward.10} parent=31 // pred_fallthru
        _
    $region32: #{nlayer_discriminator_forward.10} parent=5 // pred_fallthru
      _
  $region6: #{nlayer_discriminator_forward.10} parent=0 // loop_footer
    %s11 = sadd.s32 1, %s7
  $region7: #{nlayer_discriminator_forward.10} parent=0 // loop_footer_branch
    %6 = sbr.rel target = $region3
  $region8: #{nlayer_discriminator_forward.10} parent=0 // loop_exit
    _

// kernel: nlayer_discriminator_forward.11
$region0: #{nlayer_discriminator_forward.11}
  #allocation0 [shape = 'u32[]', space=smem, size = 0x4, offset = 0x4, fixed_abs, tag = 'smem constant byte address 0x4 - core index']
  #allocation1 [shape = 'u32[144,128]{1,0:T(1,128)}', space=vmem, size = 0x12000, scoped, tag = 'internal scratch']
  #allocation2 [shape = 'f32[32,128]{1,0:T(8,128)}', space=vmem, size = 0x4000, scoped, tag = 'scratch operand']
  %s0 = inlined_call_operand.vmem [shape: bf16[32,256], index: 0, kind: input, shape index: {}]
  %s1 = inlined_call_operand.vmem [shape: bf16[256,128], index: 1, kind: input, shape index: {}]
  %s2 = inlined_call_operand.vmem [shape: f32[1,128], index: 2, kind: input, shape index: {}]
  %s3 = inlined_call_operand.vmem [shape: bf16[32,128], index: 3, kind: output, shape index: {}]
  %s4 = sld [smem:[#allocation0]]
  $region30: #{nlayer_discriminator_forward.11} parent=0
    _
  %s6 = ssub.s32 1, %s4
  %s7 = scalar_select 0, %s6, %s4
  // Predicated region
  $region2: #{nlayer_discriminator_forward.11} parent=0 // pred_check
    _
  $region3: #{nlayer_discriminator_forward.11} parent=0 // pred_check_branch
    %9 = sbr.rel (0) target = $region5
  $region4: #{nlayer_discriminator_forward.11} parent=0 // pred_region
    _
  $region5: #{nlayer_discriminator_forward.11} parent=0 // pred_fallthru
    _
  // Predicated region
  $region6: #{nlayer_discriminator_forward.11} parent=0 // pred_check
    _
  $region7: #{nlayer_discriminator_forward.11} parent=0 // pred_check_branch
    %11 = sbr.rel (0) target = $region9
  $region8: #{nlayer_discriminator_forward.11} parent=0 // pred_region
    _
  $region9: #{nlayer_discriminator_forward.11} parent=0 // pred_fallthru
    _
  // Predicated region
  $region10: #{nlayer_discriminator_forward.11} parent=0 // pred_check
    _
  $region11: #{nlayer_discriminator_forward.11} parent=0 // pred_check_branch
    %13 = sbr.rel (0) target = $region13
  $region12: #{nlayer_discriminator_forward.11} parent=0 // pred_region
    _
  $region13: #{nlayer_discriminator_forward.11} parent=0 // pred_fallthru
    _
  %p15 = scmp.eq.s32.totalorder 0, 0
  // Predicated region
  $region14: #{nlayer_discriminator_forward.11} parent=0 // pred_check
    %p16 = pneg %p15
  $region15: #{nlayer_discriminator_forward.11} parent=0 // pred_check_branch
    %18 = sbr.rel (%p16) target = $region17
  $region16: #{nlayer_discriminator_forward.11} parent=0 // pred_region
    %19 = vst [vmem:[#allocation2] sm:$0xff] 0.0
    %20 = vst [vmem:[#allocation2 + $0x8] sm:$0xff] 0.0
    %21 = vst [vmem:[#allocation2 + $0x10] sm:$0xff] 0.0
    %22 = vst [vmem:[#allocation2 + $0x18] sm:$0xff] 0.0
  $region17: #{nlayer_discriminator_forward.11} parent=0 // pred_fallthru
    _
  %v23 = vld [vmem:[#allocation2] sm:$0xff]
  %v24 = vld [vmem:[#allocation2 + $0x8] sm:$0xff]
  %v25 = vld [vmem:[#allocation2 + $0x10] sm:$0xff]
  %v26 = vld [vmem:[#allocation2 + $0x18] sm:$0xff]
  %v27 = vld [vmem:[%s0] sm:$0xff]
  %v28 = vld [vmem:[%s0 + $0x8] sm:$0xff]
  %v29 = vld [vmem:[%s0 + $0x10] sm:$0xff]
  %v30 = vld [vmem:[%s0 + $0x18] sm:$0xff]
  %v31 = vld [vmem:[%s1] sm:$0xf]
  %v32 = vld [vmem:[%s1 + $0x4] sm:$0xf]
  %v33 = vld [vmem:[%s1 + $0x8] sm:$0xf]
  %v34 = vld [vmem:[%s1 + $0xc] sm:$0xf]
  %v35 = vld [vmem:[%s1 + $0x10] sm:$0xf]
  %v36 = vld [vmem:[%s1 + $0x14] sm:$0xf]
  %v37 = vld [vmem:[%s1 + $0x18] sm:$0xf]
  %v38 = vld [vmem:[%s1 + $0x1c] sm:$0xf]
  %v39 = vld [vmem:[%s1 + $0x20] sm:$0xf]
  %v40 = vld [vmem:[%s1 + $0x24] sm:$0xf]
  %v41 = vld [vmem:[%s1 + $0x28] sm:$0xf]
  %v42 = vld [vmem:[%s1 + $0x2c] sm:$0xf]
  %v43 = vld [vmem:[%s1 + $0x30] sm:$0xf]
  %v44 = vld [vmem:[%s1 + $0x34] sm:$0xf]
  %v45 = vld [vmem:[%s1 + $0x38] sm:$0xf]
  %v46 = vld [vmem:[%s1 + $0x3c] sm:$0xf]
  %v47 = vld [vmem:[%s1 + $0x40] sm:$0xf]
  %v48 = vld [vmem:[%s1 + $0x44] sm:$0xf]
  %v49 = vld [vmem:[%s1 + $0x48] sm:$0xf]
  %v50 = vld [vmem:[%s1 + $0x4c] sm:$0xf]
  %v51 = vld [vmem:[%s1 + $0x50] sm:$0xf]
  %v52 = vld [vmem:[%s1 + $0x54] sm:$0xf]
  %v53 = vld [vmem:[%s1 + $0x58] sm:$0xf]
  %v54 = vld [vmem:[%s1 + $0x5c] sm:$0xf]
  %v55 = vld [vmem:[%s1 + $0x60] sm:$0xf]
  %v56 = vld [vmem:[%s1 + $0x64] sm:$0xf]
  %v57 = vld [vmem:[%s1 + $0x68] sm:$0xf]
  %v58 = vld [vmem:[%s1 + $0x6c] sm:$0xf]
  %v59 = vld [vmem:[%s1 + $0x70] sm:$0xf]
  %v60 = vld [vmem:[%s1 + $0x74] sm:$0xf]
  %v61 = vld [vmem:[%s1 + $0x78] sm:$0xf]
  %v62 = vld [vmem:[%s1 + $0x7c] sm:$0xf]
  %v67 = vunpack.c.l.b16 %v27
  %v68 = vunpack.c.h.b16 %v27
  %v69 = vunpack.c.l.b16 %v28
  %v70 = vunpack.c.h.b16 %v28
  %v71 = vunpack.c.l.b16 %v29
  %v72 = vunpack.c.h.b16 %v29
  %v73 = vunpack.c.l.b16 %v30
  %v74 = vunpack.c.h.b16 %v30
  %v75 = vpack.c.b16 %v69, %v67
  %v76 = vpack.c.b16 %v70, %v68
  %v77 = vpack.c.b16 %v73, %v71
  %v78 = vpack.c.b16 %v74, %v72
  %v115 = vunpack.c.l.b16 %v31
  %v116 = vunpack.c.l.b16 %v32
  %v117 = vunpack.c.l.b16 %v33
  %v118 = vunpack.c.l.b16 %v34
  %v119 = vunpack.c.l.b16 %v35
  %v120 = vunpack.c.l.b16 %v36
  %v121 = vunpack.c.l.b16 %v37
  %v122 = vunpack.c.l.b16 %v38
  %v123 = vunpack.c.l.b16 %v39
  %v124 = vunpack.c.l.b16 %v40
  %v125 = vunpack.c.l.b16 %v41
  %v126 = vunpack.c.l.b16 %v42
  %v127 = vunpack.c.l.b16 %v43
  %v128 = vunpack.c.l.b16 %v44
  %v129 = vunpack.c.l.b16 %v45
  %v130 = vunpack.c.l.b16 %v46
  %v131 = vunpack.c.l.b16 %v47
  %v132 = vunpack.c.l.b16 %v48
  %v133 = vunpack.c.l.b16 %v49
  %v134 = vunpack.c.l.b16 %v50
  %v135 = vunpack.c.l.b16 %v51
  %v136 = vunpack.c.l.b16 %v52
  %v137 = vunpack.c.l.b16 %v53
  %v138 = vunpack.c.l.b16 %v54
  %v139 = vunpack.c.l.b16 %v55
  %v140 = vunpack.c.l.b16 %v56
  %v141 = vunpack.c.l.b16 %v57
  %v142 = vunpack.c.l.b16 %v58
  %v143 = vunpack.c.l.b16 %v59
  %v144 = vunpack.c.l.b16 %v60
  %v145 = vunpack.c.l.b16 %v61
  %v146 = vunpack.c.l.b16 %v62
  %v147 = vpack.c.b16 %v116, %v115
  %v148 = vpack.c.b16 %v118, %v117
  %v149 = vpack.c.b16 %v120, %v119
  %v150 = vpack.c.b16 %v122, %v121
  %v151 = vpack.c.b16 %v124, %v123
  %v152 = vpack.c.b16 %v126, %v125
  %v153 = vpack.c.b16 %v128, %v127
  %v154 = vpack.c.b16 %v130, %v129
  %v155 = vpack.c.b16 %v132, %v131
  %v156 = vpack.c.b16 %v134, %v133
  %v157 = vpack.c.b16 %v136, %v135
  %v158 = vpack.c.b16 %v138, %v137
  %v159 = vpack.c.b16 %v140, %v139
  %v160 = vpack.c.b16 %v142, %v141
  %v161 = vpack.c.b16 %v144, %v143
  %v162 = vpack.c.b16 %v146, %v145
  %179 = vmatprep.subr.bf16.mxu0 0
  %180 = vmatpush1.bf16.msra.mxu0 %v147
  %181 = vmatprep.subr.bf16.mxu0 0
  %182 = vmatpush1.bf16.msra.mxu0 %v148
  %183 = vmatprep.subr.bf16.mxu0 0
  %184 = vmatpush1.bf16.msra.mxu0 %v149
  %185 = vmatprep.subr.bf16.mxu0 0
  %186 = vmatpush1.bf16.msra.mxu0 %v150
  %187 = vmatprep.subr.bf16.mxu0 0
  %188 = vmatpush1.bf16.msra.mxu0 %v151
  %189 = vmatprep.subr.bf16.mxu0 0
  %190 = vmatpush1.bf16.msra.mxu0 %v152
  %191 = vmatprep.subr.bf16.mxu0 0
  %192 = vmatpush1.bf16.msra.mxu0 %v153
  %193 = vmatprep.subr.bf16.mxu0 0
  %194 = vmatpush1.bf16.msra.mxu0 %v154
  %195 = vmatprep.subr.bf16.mxu0 0
  %196 = vmatpush1.bf16.msra.mxu0 %v155
  %197 = vmatprep.subr.bf16.mxu0 0
  %198 = vmatpush1.bf16.msra.mxu0 %v156
  %199 = vmatprep.subr.bf16.mxu0 0
  %200 = vmatpush1.bf16.msra.mxu0 %v157
  %201 = vmatprep.subr.bf16.mxu0 0
  %202 = vmatpush1.bf16.msra.mxu0 %v158
  %203 = vmatprep.subr.bf16.mxu0 0
  %204 = vmatpush1.bf16.msra.mxu0 %v159
  %205 = vmatprep.subr.bf16.mxu0 0
  %206 = vmatpush1.bf16.msra.mxu0 %v160
  %207 = vmatprep.subr.bf16.mxu0 0
  %208 = vmatpush1.bf16.msra.mxu0 %v161
  %209 = vmatprep.subr.bf16.mxu0 0
  %210 = vmatpush1.bf16.msra.mxu0 %v162
  %211 = vmatprep.mubr.bf16.mxu0 %v76
  %212 = vmatmul.mubr.bf16.gmra.mrb[0].mxu0 %v75
  %v213 = vpop.f32.mrb[0].mxu0
  %v214 = vadd.f32 0.0, %v213
  %v215 = vpop.f32.mrb[0].mxu0
  %v216 = vpop.f32.mrb[0].mxu0
  %v217 = vadd.f32 0.0, %v216
  %v218 = vpop.f32.mrb[0].mxu0
  %219 = vmatprep.mubr.bf16.mxu0 %v78
  %220 = vmatmul.mubr.bf16.gmra.mrb[0].mxu0 %v77
  %v221 = vpop.f32.mrb[0].mxu0
  %v222 = vadd.f32 0.0, %v221
  %v223 = vpop.f32.mrb[0].mxu0
  %v224 = vpop.f32.mrb[0].mxu0
  %v225 = vadd.f32 0.0, %v224
  %v226 = vpop.f32.mrb[0].mxu0
  %227 = vdwg.mxu0
  %v228 = vadd.f32 %v23, %v214
  %v229 = vadd.f32 %v24, %v217
  %v230 = vadd.f32 %v25, %v222
  %v231 = vadd.f32 %v26, %v225
  %232 = vst [vmem:[#allocation2] sm:$0xff] %v228
  %233 = vst [vmem:[#allocation2 + $0x8] sm:$0xff] %v229
  %234 = vst [vmem:[#allocation2 + $0x10] sm:$0xff] %v230
  %235 = vst [vmem:[#allocation2 + $0x18] sm:$0xff] %v231
  // Predicated region
  $region18: #{nlayer_discriminator_forward.11} parent=0 // pred_check
    %p236 = pneg %p15
  $region19: #{nlayer_discriminator_forward.11} parent=0 // pred_check_branch
    %238 = sbr.rel (%p236) target = $region21
  $region20: #{nlayer_discriminator_forward.11} parent=0 // pred_region
    %v239 = vld [vmem:[#allocation2] sm:$0xff]
    %v240 = vld [vmem:[#allocation2 + $0x8] sm:$0xff]
    %v241 = vld [vmem:[#allocation2 + $0x10] sm:$0xff]
    %v242 = vld [vmem:[#allocation2 + $0x18] sm:$0xff]
    %v243 = vld [vmem:[%s2] sm:$0x1]
    %v245 = vlaneseq
    %v246 = vshrl.u32 %v245, 7
    %v247 = vsub.s32 0, %v246
    %v248 = vrot.slane %v243, %v247
    %v250 = vadd.f32 %v239, %v248
    %v251 = vadd.f32 %v240, %v248
    %v252 = vadd.f32 %v241, %v248
    %v253 = vadd.f32 %v242, %v248
    %v254 = vpack.c.bf16 %v251, %v250
    %v255 = vpack.c.bf16 %v253, %v252
    %v258 = vunpack.c.l.b16 %v254
    %v259 = vunpack.c.h.b16 %v254
    %v260 = vunpack.c.l.b16 %v255
    %v261 = vunpack.c.h.b16 %v255
    %v262 = vpack.c.b16 %v258, %v258
    %v263 = vpack.c.b16 %v259, %v259
    %v264 = vpack.c.b16 %v260, %v260
    %v265 = vpack.c.b16 %v261, %v261
    %270 = vst [vmem:[%s3] sm:$0xf] %v262
    %271 = vst [vmem:[%s3 + $0x4] sm:$0xf] %v263
    %272 = vst [vmem:[%s3 + $0x8] sm:$0xf] %v264
    %273 = vst [vmem:[%s3 + $0xc] sm:$0xf] %v265
  $region21: #{nlayer_discriminator_forward.11} parent=0 // pred_fallthru
    _
  // Predicated region
  $region22: #{nlayer_discriminator_forward.11} parent=0 // pred_check
    _
  $region23: #{nlayer_discriminator_forward.11} parent=0 // pred_check_branch
    %275 = sbr.rel (0) target = $region25
  $region24: #{nlayer_discriminator_forward.11} parent=0 // pred_region
    _
  $region25: #{nlayer_discriminator_forward.11} parent=0 // pred_fallthru
    _
  // Predicated region
  $region26: #{nlayer_discriminator_forward.11} parent=0 // pred_check
    _
  $region27: #{nlayer_discriminator_forward.11} parent=0 // pred_check_branch
    %277 = sbr.rel (0) target = $region29
  $region28: #{nlayer_discriminator_forward.11} parent=0 // pred_region
    _
  $region29: #{nlayer_discriminator_forward.11} parent=0 // pred_fallthru
    _

// kernel: nlayer_discriminator_forward.12
$region0: #{nlayer_discriminator_forward.12}
  #allocation0 [shape = 'u32[]', space=smem, size = 0x4, offset = 0x4, fixed_abs, tag = 'smem constant byte address 0x4 - core index']
  #allocation1 [shape = 'u32[144,128]{1,0:T(1,128)}', space=vmem, size = 0x12000, scoped, tag = 'internal scratch']
  %s0 = inlined_call_operand.vmem [shape: bf16[2,16,32], index: 0, kind: input, shape index: {}]
  %s1 = inlined_call_operand.vmem [shape: bf16[2,16,32], index: 1, kind: output, shape index: {}]
  %s2 = sld [smem:[#allocation0]]
  $region37: #{nlayer_discriminator_forward.12} parent=0
    _
  %s4 = ssub.s32 1, %s2
  %s5 = scalar_select 0, %s4, %s2
  loop: start=0, step=1, limit=4
  $region2: #{nlayer_discriminator_forward.12} parent=0 // loop_pre_header
    _
  $region3: #{nlayer_discriminator_forward.12} parent=0 // loop_header
    %s7 = sphi 0, %s11
    %p8 = scmp.ge.s32.totalorder %s7, 4
    %s14 = sphi 0, %s26
    %s15 = sphi 0, %s22
    %s16 = sphi 0, %s14
    %s17 = sphi 0, %s15
    %s18 = sphi 0, %s16
    %s19 = sphi 0, %s17
    %s31 = sphi 0, %s33
    %s34 = sphi 0, %s31
    %s35 = sphi 0, %s34
    %s51 = sphi 0, %s35
    %s59 = sphi 0, %s61
    %s62 = sphi 0, %s59
    %s63 = sphi 0, %s62
    %s79 = sphi 0, %s63
  $region4: #{nlayer_discriminator_forward.12} parent=0 // loop_header_branch
    %10 = sbr.rel (%p8) target = $region8
  $region5: #{nlayer_discriminator_forward.12} parent=0 // loop_body
    %s12 = ssub.s32 %s7, 1
    %s13 = ssub.s32 %s7, 2
    %s20 = sadd.s32 1, %s15
    %p21 = scmp.ge.s32.totalorder %s20, 1
    %s22 = scalar_select %p21, 0, %s20
    %s23 = sadd.s32 1, %s14
    %s24 = scalar_select %p21, %s23, %s14
    %p25 = scmp.ge.s32.totalorder %s24, 2
    %s26 = scalar_select %p25, 0, %s24
    %s27 = ssub.s32 %s14, %s26
    %s28 = ssub.s32 %s15, %s22
    %s29 = sor.u32 %s27, %s28
    %p30 = scmp.eq.s32.totalorder %s29, 0
    %s32 = sadd.s32 %s31, 1
    %s33 = scalar_select %p30, %s31, %s32
    %p36 = pneg %p30
    %p37 = scmp.eq.s32.totalorder %s7, 1
    %p38 = por %p36, %p37
    %p39 = scmp.ne.s32.totalorder %s31, %s34
    %p40 = scmp.eq.s32.totalorder %s7, 0
    %p41 = por %p39, %p40
    %p42 = scmp.ne.s32.totalorder %s31, %s34
    %p43 = scmp.eq.s32.totalorder %s12, 1
    %p44 = por %p42, %p43
    %p45 = scmp.ne.s32.totalorder %s34, %s35
    %p46 = scmp.eq.s32.totalorder %s12, 0
    %p47 = por %p45, %p46
    %p48 = scmp.ne.s32.totalorder %s34, %s35
    %p49 = scmp.eq.s32.totalorder %s13, 1
    %p50 = por %p48, %p49
    %p52 = scmp.ne.s32.totalorder %s35, %s51
    %p53 = scmp.eq.s32.totalorder %s13, 0
    %p54 = por %p52, %p53
    %s55 = ssub.s32 %s14, %s26
    %s56 = ssub.s32 %s15, %s22
    %s57 = sor.u32 %s55, %s56
    %p58 = scmp.eq.s32.totalorder %s57, 0
    %s60 = sadd.s32 %s59, 1
    %s61 = scalar_select %p58, %s59, %s60
    %p64 = pneg %p58
    %p65 = scmp.eq.s32.totalorder %s7, 1
    %p66 = por %p64, %p65
    %p67 = scmp.ne.s32.totalorder %s59, %s62
    %p68 = scmp.eq.s32.totalorder %s7, 0
    %p69 = por %p67, %p68
    %p70 = scmp.ne.s32.totalorder %s59, %s62
    %p71 = scmp.eq.s32.totalorder %s12, 1
    %p72 = por %p70, %p71
    %p73 = scmp.ne.s32.totalorder %s62, %s63
    %p74 = scmp.eq.s32.totalorder %s12, 0
    %p75 = por %p73, %p74
    %p76 = scmp.ne.s32.totalorder %s62, %s63
    %p77 = scmp.eq.s32.totalorder %s13, 1
    %p78 = por %p76, %p77
    %p80 = scmp.ne.s32.totalorder %s63, %s79
    %p81 = scmp.eq.s32.totalorder %s13, 0
    %p82 = por %p80, %p81
    %p83 = scmp.le.s32.totalorder 1, %s7
    %p84 = scmp.lt.s32.totalorder %s7, 3
    %p85 = pnand %p83, %p84
    %p86 = pneg %p85
    // Predicated region
    $region9: #{nlayer_discriminator_forward.12} parent=5 // pred_check
      _
    $region10: #{nlayer_discriminator_forward.12} parent=5 // pred_check_branch
      %88 = sbr.rel (%p85) target = $region12
    $region11: #{nlayer_discriminator_forward.12} parent=5 // pred_region
      %s89 = ssub.s32 %s7, 1
    $region12: #{nlayer_discriminator_forward.12} parent=5 // pred_fallthru
      _
    %p90 = scmp.lt.s32.totalorder %s7, 2
    // Predicated region
    $region13: #{nlayer_discriminator_forward.12} parent=5 // pred_check
      %p91 = pneg %p90
    $region14: #{nlayer_discriminator_forward.12} parent=5 // pred_check_branch
      %93 = sbr.rel (%p91) target = $region16
    $region15: #{nlayer_discriminator_forward.12} parent=5 // pred_region
      // Predicated region
      $region17: #{nlayer_discriminator_forward.12} parent=15 // pred_check
        %p94 = pneg %p41
      $region18: #{nlayer_discriminator_forward.12} parent=15 // pred_check_branch
        %96 = sbr.rel (%p94) target = $region20
      $region19: #{nlayer_discriminator_forward.12} parent=15 // pred_region
        %p97 = scmp.lt.s32.totalorder %s14, 1
        %s98 = scalar_select %p97, %s14, 1
        %p99 = scmp.lt.s32.totalorder %s15, 0
        %s100 = scalar_select %p99, %s15, 0
        %s101 = smul.addr %s98, 2
        %s102 = sadd.s32 %s100, %s101
        %s103 = smul.addr %s102, 4
        %s104 = scalar_lea.vmem %s0, %s103
      $region20: #{nlayer_discriminator_forward.12} parent=15 // pred_fallthru
        _
    $region16: #{nlayer_discriminator_forward.12} parent=5 // pred_fallthru
      _
    %p105 = scmp.le.s32.totalorder 1, %s7
    %p106 = scmp.lt.s32.totalorder %s7, 3
    %p107 = pnand %p105, %p106
    %p108 = pneg %p107
    // Predicated region
    $region21: #{nlayer_discriminator_forward.12} parent=5 // pred_check
      _
    $region22: #{nlayer_discriminator_forward.12} parent=5 // pred_check_branch
      %110 = sbr.rel (%p107) target = $region24
    $region23: #{nlayer_discriminator_forward.12} parent=5 // pred_region
      %s111 = ssub.s32 %s7, 1
      %p112 = scmp.lt.s32.totalorder %s16, 1
      %s113 = scalar_select %p112, %s16, 1
      %p114 = scmp.lt.s32.totalorder %s17, 0
      %s115 = scalar_select %p114, %s17, 0
      %s116 = smul.addr %s113, 2
      %s117 = sadd.s32 %s115, %s116
      %s118 = smul.addr %s117, 4
      %s119 = scalar_lea.vmem %s0, %s118
      %p120 = pneg %p47
      %p121 = pneg %p44
      %p122 = pneg %p75
      %p123 = pneg %p72
      %p124 = scmp.lt.s32.totalorder %s16, 1
      %s125 = scalar_select %p124, %s16, 1
      %p126 = scmp.lt.s32.totalorder %s17, 0
      %s127 = scalar_select %p126, %s17, 0
      %s128 = smul.addr %s125, 2
      %s129 = sadd.s32 %s127, %s128
      %s130 = smul.addr %s129, 4
      %s131 = scalar_lea.vmem %s1, %s130
      %p132 = scmp.lt.s32.totalorder %s16, 1
      %s133 = scalar_select %p132, %s16, 1
      %p134 = scmp.lt.s32.totalorder %s17, 0
      %s135 = scalar_select %p134, %s17, 0
      %s136 = smul.addr %s133, 2
      %s137 = sadd.s32 %s135, %s136
      %s138 = smul.addr %s137, 4
      %s139 = scalar_lea.vmem %s0, %s138
      %p140 = scmp.lt.s32.totalorder %s16, 1
      %s141 = scalar_select %p140, %s16, 1
      %p142 = scmp.lt.s32.totalorder %s17, 0
      %s143 = scalar_select %p142, %s17, 0
      %s144 = smul.addr %s141, 2
      %s145 = sadd.s32 %s143, %s144
      %s146 = smul.addr %s145, 4
      %s147 = scalar_lea.vmem %s1, %s146
      %v148 = vld [vmem:[%s139] sm:$0xf]
      %v149 = vld [vmem:[%s139 + $0x4] sm:$0xf]
      %v150 = vunpack.c.l.bf16 %v148
      %v151 = vunpack.c.l.bf16 %v149
      %vm152 = vcmask 261120
      %v153 = vsel %vm152, %v150, 0.0
      %v154 = vsel %vm152, %v151, 0.0
      %v155 = vadd.f32 %v153, %v154
      %v156 = vrot.slane %v155, 4
      %v157 = vadd.f32 %v155, %v156
      %v158 = vrot.slane %v157, 2
      %v159 = vadd.f32 %v157, %v158
      %v160 = vrot.slane %v159, 1
      %v161 = vadd.f32 %v159, %v160
      %v162 = vmul.f32 %v161, 0.0625
      %v163 = vmul.f32 %v150, %v150
      %v164 = vmul.f32 %v151, %v151
      %v165 = vsel %vm152, %v163, 0.0
      %v166 = vsel %vm152, %v164, 0.0
      %v167 = vadd.f32 %v165, %v166
      %v168 = vrot.slane %v167, 4
      %v169 = vadd.f32 %v167, %v168
      %v170 = vrot.slane %v169, 2
      %v171 = vadd.f32 %v169, %v170
      %v172 = vrot.slane %v171, 1
      %v173 = vadd.f32 %v171, %v172
      %v174 = vmul.f32 %v173, 0.0625
      %v175 = vmul.f32 %v162, %v162
      %v176 = vsub.f32 %v174, %v175
      %v177 = vmax.f32 %v176, 0.0
      %v178 = vsub.f32 %v150, %v162
      %v179 = vsub.f32 %v151, %v162
      %v180 = vadd.f32 %v177, 1e-05
      %v181 = vrsqrt.pop %v180
      %v182 = vmul.f32 %v178, %v181
      %v183 = vmul.f32 %v179, %v181
      %v184 = vmul.f32 %v182, 0.2
      %v185 = vmul.f32 %v183, 0.2
      %v186 = vmax.f32 %v182, %v184
      %v187 = vmax.f32 %v183, %v185
      %v188 = vpack.c.bf16 %v187, %v186
      %v190 = vunpack.c.l.b16 %v188
      %v191 = vunpack.c.h.b16 %v188
      %v192 = vpack.c.b16 %v190, %v190
      %v193 = vpack.c.b16 %v191, %v191
      %vm196 = vcmask 257024
      %197 = vst.msk [vmem:[%s147] sm:$0xf] %vm196, %v192
      %198 = vst.msk [vmem:[%s147 + $0x4] sm:$0xf] %vm196, %v193
      %p199 = scmp.lt.s32.totalorder %s16, 1
      %s200 = scalar_select %p199, %s16, 1
      %p201 = scmp.lt.s32.totalorder %s17, 0
      %s202 = scalar_select %p201, %s17, 0
      %s203 = smul.addr %s200, 2
      %s204 = sadd.s32 %s202, %s203
      %s205 = smul.addr %s204, 4
      %s206 = scalar_lea.vmem %s1, %s205
      // Predicated region
      $region25: #{nlayer_discriminator_forward.12} parent=23 // pred_check
        %p207 = pneg %p72
      $region26: #{nlayer_discriminator_forward.12} parent=23 // pred_check_branch
        %209 = sbr.rel (%p207) target = $region28
      $region27: #{nlayer_discriminator_forward.12} parent=23 // pred_region
        _
      $region28: #{nlayer_discriminator_forward.12} parent=23 // pred_fallthru
        _
    $region24: #{nlayer_discriminator_forward.12} parent=5 // pred_fallthru
      _
    %p210 = scmp.le.s32.totalorder 2, %s7
    // Predicated region
    $region29: #{nlayer_discriminator_forward.12} parent=5 // pred_check
      %p211 = pneg %p210
    $region30: #{nlayer_discriminator_forward.12} parent=5 // pred_check_branch
      %213 = sbr.rel (%p211) target = $region32
    $region31: #{nlayer_discriminator_forward.12} parent=5 // pred_region
      %s214 = ssub.s32 %s7, 2
      // Predicated region
      $region33: #{nlayer_discriminator_forward.12} parent=31 // pred_check
        %p215 = pneg %p78
      $region34: #{nlayer_discriminator_forward.12} parent=31 // pred_check_branch
        %217 = sbr.rel (%p215) target = $region36
      $region35: #{nlayer_discriminator_forward.12} parent=31 // pred_region
        %p218 = scmp.lt.s32.totalorder %s18, 1
        %s219 = scalar_select %p218, %s18, 1
        %p220 = scmp.lt.s32.totalorder %s19, 0
        %s221 = scalar_select %p220, %s19, 0
        %s222 = smul.addr %s219, 2
        %s223 = sadd.s32 %s221, %s222
        %s224 = smul.addr %s223, 4
        %s225 = scalar_lea.vmem %s1, %s224
      $region36: #{nlayer_discriminator_forward.12} parent=31 // pred_fallthru
        _
    $region32: #{nlayer_discriminator_forward.12} parent=5 // pred_fallthru
      _
  $region6: #{nlayer_discriminator_forward.12} parent=0 // loop_footer
    %s11 = sadd.s32 1, %s7
  $region7: #{nlayer_discriminator_forward.12} parent=0 // loop_footer_branch
    %6 = sbr.rel target = $region3
  $region8: #{nlayer_discriminator_forward.12} parent=0 // loop_exit
    _

// kernel: nlayer_discriminator_forward.14
$region0: #{nlayer_discriminator_forward.14}
  #allocation0 [shape = 'u32[]', space=smem, size = 0x4, offset = 0x4, fixed_abs, tag = 'smem constant byte address 0x4 - core index']
  #allocation1 [shape = 'u32[144,128]{1,0:T(1,128)}', space=vmem, size = 0x12000, scoped, tag = 'internal scratch']
  %s0 = inlined_call_operand.vmem [shape: bf16[2,9,64], index: 0, kind: input, shape index: {}]
  %s1 = inlined_call_operand.vmem [shape: bf16[2,9,64], index: 1, kind: output, shape index: {}]
  %s2 = sld [smem:[#allocation0]]
  $region37: #{nlayer_discriminator_forward.14} parent=0
    _
  %s4 = ssub.s32 1, %s2
  %s5 = scalar_select 0, %s4, %s2
  loop: start=0, step=1, limit=4
  $region2: #{nlayer_discriminator_forward.14} parent=0 // loop_pre_header
    _
  $region3: #{nlayer_discriminator_forward.14} parent=0 // loop_header
    %s7 = sphi 0, %s11
    %p8 = scmp.ge.s32.totalorder %s7, 4
    %s14 = sphi 0, %s26
    %s15 = sphi 0, %s22
    %s16 = sphi 0, %s14
    %s17 = sphi 0, %s15
    %s18 = sphi 0, %s16
    %s19 = sphi 0, %s17
    %s31 = sphi 0, %s33
    %s34 = sphi 0, %s31
    %s35 = sphi 0, %s34
    %s51 = sphi 0, %s35
    %s59 = sphi 0, %s61
    %s62 = sphi 0, %s59
    %s63 = sphi 0, %s62
    %s79 = sphi 0, %s63
  $region4: #{nlayer_discriminator_forward.14} parent=0 // loop_header_branch
    %10 = sbr.rel (%p8) target = $region8
  $region5: #{nlayer_discriminator_forward.14} parent=0 // loop_body
    %s12 = ssub.s32 %s7, 1
    %s13 = ssub.s32 %s7, 2
    %s20 = sadd.s32 1, %s15
    %p21 = scmp.ge.s32.totalorder %s20, 1
    %s22 = scalar_select %p21, 0, %s20
    %s23 = sadd.s32 1, %s14
    %s24 = scalar_select %p21, %s23, %s14
    %p25 = scmp.ge.s32.totalorder %s24, 2
    %s26 = scalar_select %p25, 0, %s24
    %s27 = ssub.s32 %s14, %s26
    %s28 = ssub.s32 %s15, %s22
    %s29 = sor.u32 %s27, %s28
    %p30 = scmp.eq.s32.totalorder %s29, 0
    %s32 = sadd.s32 %s31, 1
    %s33 = scalar_select %p30, %s31, %s32
    %p36 = pneg %p30
    %p37 = scmp.eq.s32.totalorder %s7, 1
    %p38 = por %p36, %p37
    %p39 = scmp.ne.s32.totalorder %s31, %s34
    %p40 = scmp.eq.s32.totalorder %s7, 0
    %p41 = por %p39, %p40
    %p42 = scmp.ne.s32.totalorder %s31, %s34
    %p43 = scmp.eq.s32.totalorder %s12, 1
    %p44 = por %p42, %p43
    %p45 = scmp.ne.s32.totalorder %s34, %s35
    %p46 = scmp.eq.s32.totalorder %s12, 0
    %p47 = por %p45, %p46
    %p48 = scmp.ne.s32.totalorder %s34, %s35
    %p49 = scmp.eq.s32.totalorder %s13, 1
    %p50 = por %p48, %p49
    %p52 = scmp.ne.s32.totalorder %s35, %s51
    %p53 = scmp.eq.s32.totalorder %s13, 0
    %p54 = por %p52, %p53
    %s55 = ssub.s32 %s14, %s26
    %s56 = ssub.s32 %s15, %s22
    %s57 = sor.u32 %s55, %s56
    %p58 = scmp.eq.s32.totalorder %s57, 0
    %s60 = sadd.s32 %s59, 1
    %s61 = scalar_select %p58, %s59, %s60
    %p64 = pneg %p58
    %p65 = scmp.eq.s32.totalorder %s7, 1
    %p66 = por %p64, %p65
    %p67 = scmp.ne.s32.totalorder %s59, %s62
    %p68 = scmp.eq.s32.totalorder %s7, 0
    %p69 = por %p67, %p68
    %p70 = scmp.ne.s32.totalorder %s59, %s62
    %p71 = scmp.eq.s32.totalorder %s12, 1
    %p72 = por %p70, %p71
    %p73 = scmp.ne.s32.totalorder %s62, %s63
    %p74 = scmp.eq.s32.totalorder %s12, 0
    %p75 = por %p73, %p74
    %p76 = scmp.ne.s32.totalorder %s62, %s63
    %p77 = scmp.eq.s32.totalorder %s13, 1
    %p78 = por %p76, %p77
    %p80 = scmp.ne.s32.totalorder %s63, %s79
    %p81 = scmp.eq.s32.totalorder %s13, 0
    %p82 = por %p80, %p81
    %p83 = scmp.le.s32.totalorder 1, %s7
    %p84 = scmp.lt.s32.totalorder %s7, 3
    %p85 = pnand %p83, %p84
    %p86 = pneg %p85
    // Predicated region
    $region9: #{nlayer_discriminator_forward.14} parent=5 // pred_check
      _
    $region10: #{nlayer_discriminator_forward.14} parent=5 // pred_check_branch
      %88 = sbr.rel (%p85) target = $region12
    $region11: #{nlayer_discriminator_forward.14} parent=5 // pred_region
      %s89 = ssub.s32 %s7, 1
    $region12: #{nlayer_discriminator_forward.14} parent=5 // pred_fallthru
      _
    %p90 = scmp.lt.s32.totalorder %s7, 2
    // Predicated region
    $region13: #{nlayer_discriminator_forward.14} parent=5 // pred_check
      %p91 = pneg %p90
    $region14: #{nlayer_discriminator_forward.14} parent=5 // pred_check_branch
      %93 = sbr.rel (%p91) target = $region16
    $region15: #{nlayer_discriminator_forward.14} parent=5 // pred_region
      // Predicated region
      $region17: #{nlayer_discriminator_forward.14} parent=15 // pred_check
        %p94 = pneg %p41
      $region18: #{nlayer_discriminator_forward.14} parent=15 // pred_check_branch
        %96 = sbr.rel (%p94) target = $region20
      $region19: #{nlayer_discriminator_forward.14} parent=15 // pred_region
        %p97 = scmp.lt.s32.totalorder %s14, 1
        %s98 = scalar_select %p97, %s14, 1
        %p99 = scmp.lt.s32.totalorder %s15, 0
        %s100 = scalar_select %p99, %s15, 0
        %s101 = smul.addr %s98, 2
        %s102 = sadd.s32 %s100, %s101
        %s103 = smul.addr %s102, 4
        %s104 = scalar_lea.vmem %s0, %s103
      $region20: #{nlayer_discriminator_forward.14} parent=15 // pred_fallthru
        _
    $region16: #{nlayer_discriminator_forward.14} parent=5 // pred_fallthru
      _
    %p105 = scmp.le.s32.totalorder 1, %s7
    %p106 = scmp.lt.s32.totalorder %s7, 3
    %p107 = pnand %p105, %p106
    %p108 = pneg %p107
    // Predicated region
    $region21: #{nlayer_discriminator_forward.14} parent=5 // pred_check
      _
    $region22: #{nlayer_discriminator_forward.14} parent=5 // pred_check_branch
      %110 = sbr.rel (%p107) target = $region24
    $region23: #{nlayer_discriminator_forward.14} parent=5 // pred_region
      %s111 = ssub.s32 %s7, 1
      %p112 = scmp.lt.s32.totalorder %s16, 1
      %s113 = scalar_select %p112, %s16, 1
      %p114 = scmp.lt.s32.totalorder %s17, 0
      %s115 = scalar_select %p114, %s17, 0
      %s116 = smul.addr %s113, 2
      %s117 = sadd.s32 %s115, %s116
      %s118 = smul.addr %s117, 4
      %s119 = scalar_lea.vmem %s0, %s118
      %p120 = pneg %p47
      %p121 = pneg %p44
      %p122 = pneg %p75
      %p123 = pneg %p72
      %p124 = scmp.lt.s32.totalorder %s16, 1
      %s125 = scalar_select %p124, %s16, 1
      %p126 = scmp.lt.s32.totalorder %s17, 0
      %s127 = scalar_select %p126, %s17, 0
      %s128 = smul.addr %s125, 2
      %s129 = sadd.s32 %s127, %s128
      %s130 = smul.addr %s129, 4
      %s131 = scalar_lea.vmem %s1, %s130
      %p132 = scmp.lt.s32.totalorder %s16, 1
      %s133 = scalar_select %p132, %s16, 1
      %p134 = scmp.lt.s32.totalorder %s17, 0
      %s135 = scalar_select %p134, %s17, 0
      %s136 = smul.addr %s133, 2
      %s137 = sadd.s32 %s135, %s136
      %s138 = smul.addr %s137, 4
      %s139 = scalar_lea.vmem %s0, %s138
      %p140 = scmp.lt.s32.totalorder %s16, 1
      %s141 = scalar_select %p140, %s16, 1
      %p142 = scmp.lt.s32.totalorder %s17, 0
      %s143 = scalar_select %p142, %s17, 0
      %s144 = smul.addr %s141, 2
      %s145 = sadd.s32 %s143, %s144
      %s146 = smul.addr %s145, 4
      %s147 = scalar_lea.vmem %s1, %s146
      %v148 = vld [vmem:[%s139] sm:$0xf]
      %v149 = vld [vmem:[%s139 + $0x4] sm:$0x1]
      %v150 = vunpack.c.l.bf16 %v148
      %v151 = vunpack.c.l.bf16 %v149
      %vm152 = vcmask 523264
      %v153 = vsel %vm152, %v150, 0.0
      %vm154 = vcmask 516096
      %v155 = vsel %vm154, %v151, 0.0
      %v156 = vadd.f32 %v153, %v155
      %v157 = vrot.slane %v156, 4
      %v158 = vadd.f32 %v156, %v157
      %v159 = vrot.slane %v158, 2
      %v160 = vadd.f32 %v158, %v159
      %v161 = vrot.slane %v160, 1
      %v162 = vadd.f32 %v160, %v161
      %v163 = vmul.f32 %v162, 0.11111111
      %v164 = vmul.f32 %v150, %v150
      %v165 = vmul.f32 %v151, %v151
      %v166 = vsel %vm152, %v164, 0.0
      %v167 = vsel %vm154, %v165, 0.0
      %v168 = vadd.f32 %v166, %v167
      %v169 = vrot.slane %v168, 4
      %v170 = vadd.f32 %v168, %v169
      %v171 = vrot.slane %v170, 2
      %v172 = vadd.f32 %v170, %v171
      %v173 = vrot.slane %v172, 1
      %v174 = vadd.f32 %v172, %v173
      %v175 = vmul.f32 %v174, 0.11111111
      %v176 = vmul.f32 %v163, %v163
      %v177 = vsub.f32 %v175, %v176
      %v178 = vmax.f32 %v177, 0.0
      %v179 = vsub.f32 %v150, %v163
      %v180 = vsub.f32 %v151, %v163
      %v181 = vadd.f32 %v178, 1e-05
      %v182 = vrsqrt.pop %v181
      %v183 = vmul.f32 %v179, %v182
      %v184 = vmul.f32 %v180, %v182
      %v185 = vmul.f32 %v183, 0.2
      %v186 = vmul.f32 %v184, 0.2
      %v187 = vmax.f32 %v183, %v185
      %v188 = vmax.f32 %v184, %v186
      %v189 = vpack.c.bf16 %v188, %v187
      %v191 = vunpack.c.l.b16 %v189
      %v192 = vunpack.c.h.b16 %v189
      %v193 = vpack.c.b16 %v191, %v191
      %v194 = vpack.c.b16 %v192, %v192
      %vm197 = vcmask 519168
      %198 = vst.msk [vmem:[%s147] sm:$0xf] %vm197, %v193
      %vm199 = vcmask 516096
      %vm200 = vsmask.f32 256
      %vm201 = vmand %vm199, %vm200
      %v202 = vld [vmem:[%s147 + $0x4] sm:$0x1]
      %v203 = vsel %vm201, %v194, %v202
      %204 = vst [vmem:[%s147 + $0x4] sm:$0x1] %v203
      %p205 = scmp.lt.s32.totalorder %s16, 1
      %s206 = scalar_select %p205, %s16, 1
      %p207 = scmp.lt.s32.totalorder %s17, 0
      %s208 = scalar_select %p207, %s17, 0
      %s209 = smul.addr %s206, 2
      %s210 = sadd.s32 %s208, %s209
      %s211 = smul.addr %s210, 4
      %s212 = scalar_lea.vmem %s1, %s211
      // Predicated region
      $region25: #{nlayer_discriminator_forward.14} parent=23 // pred_check
        %p213 = pneg %p72
      $region26: #{nlayer_discriminator_forward.14} parent=23 // pred_check_branch
        %215 = sbr.rel (%p213) target = $region28
      $region27: #{nlayer_discriminator_forward.14} parent=23 // pred_region
        _
      $region28: #{nlayer_discriminator_forward.14} parent=23 // pred_fallthru
        _
    $region24: #{nlayer_discriminator_forward.14} parent=5 // pred_fallthru
      _
    %p216 = scmp.le.s32.totalorder 2, %s7
    // Predicated region
    $region29: #{nlayer_discriminator_forward.14} parent=5 // pred_check
      %p217 = pneg %p216
    $region30: #{nlayer_discriminator_forward.14} parent=5 // pred_check_branch
      %219 = sbr.rel (%p217) target = $region32
    $region31: #{nlayer_discriminator_forward.14} parent=5 // pred_region
      %s220 = ssub.s32 %s7, 2
      // Predicated region
      $region33: #{nlayer_discriminator_forward.14} parent=31 // pred_check
        %p221 = pneg %p78
      $region34: #{nlayer_discriminator_forward.14} parent=31 // pred_check_branch
        %223 = sbr.rel (%p221) target = $region36
      $region35: #{nlayer_discriminator_forward.14} parent=31 // pred_region
        %p224 = scmp.lt.s32.totalorder %s18, 1
        %s225 = scalar_select %p224, %s18, 1
        %p226 = scmp.lt.s32.totalorder %s19, 0
        %s227 = scalar_select %p226, %s19, 0
        %s228 = smul.addr %s225, 2
        %s229 = sadd.s32 %s227, %s228
        %s230 = smul.addr %s229, 4
        %s231 = scalar_lea.vmem %s1, %s230
      $region36: #{nlayer_discriminator_forward.14} parent=31 // pred_fallthru
        _
    $region32: #{nlayer_discriminator_forward.14} parent=5 // pred_fallthru
      _
  $region6: #{nlayer_discriminator_forward.14} parent=0 // loop_footer
    %s11 = sadd.s32 1, %s7
  $region7: #{nlayer_discriminator_forward.14} parent=0 // loop_footer_branch
    %6 = sbr.rel target = $region3
  $region8: #{nlayer_discriminator_forward.14} parent=0 // loop_exit
    _

// kernel: nlayer_discriminator_forward.13
$region0: #{nlayer_discriminator_forward.13}
  #allocation0 [shape = 'u32[]', space=smem, size = 0x4, offset = 0x4, fixed_abs, tag = 'smem constant byte address 0x4 - core index']
  #allocation1 [shape = 'u32[144,128]{1,0:T(1,128)}', space=vmem, size = 0x12000, scoped, tag = 'internal scratch']
  %s0 = inlined_call_operand.vmem [shape: bf16[2,42,32], index: 0, kind: input, shape index: {}]
  %s1 = inlined_call_operand.vmem [shape: bf16[16,32,128], index: 1, kind: input, shape index: {}]
  %s2 = inlined_call_operand.vmem [shape: f32[1,128], index: 2, kind: input, shape index: {}]
  %s3 = inlined_call_operand.vmem [shape: bf16[2,18,128], index: 3, kind: output, shape index: {}]
  %s4 = sld [smem:[#allocation0]]
  $region45: #{nlayer_discriminator_forward.13} parent=0
    _
  %s6 = ssub.s32 1, %s4
  %s7 = scalar_select 0, %s6, %s4
  loop: start=0, step=1, limit=4
  $region2: #{nlayer_discriminator_forward.13} parent=0 // loop_pre_header
    _
  $region3: #{nlayer_discriminator_forward.13} parent=0 // loop_header
    %s9 = sphi 0, %s13
    %p10 = scmp.ge.s32.totalorder %s9, 4
    %s16 = sphi 0, %s28
    %s17 = sphi 0, %s24
    %s18 = sphi 0, %s16
    %s19 = sphi 0, %s17
    %s20 = sphi 0, %s18
    %s21 = sphi 0, %s19
    %s31 = sphi 0, %s33
    %s34 = sphi 0, %s31
    %s35 = sphi 0, %s34
    %s51 = sphi 0, %s35
    %s57 = sphi 0, %s59
    %s60 = sphi 0, %s57
    %s61 = sphi 0, %s60
    %s77 = sphi 0, %s61
    %s83 = sphi 0, %s85
    %s86 = sphi 0, %s83
    %s87 = sphi 0, %s86
    %s103 = sphi 0, %s87
    %s111 = sphi 0, %s113
    %s114 = sphi 0, %s111
    %s115 = sphi 0, %s114
    %s131 = sphi 0, %s115
  $region4: #{nlayer_discriminator_forward.13} parent=0 // loop_header_branch
    %12 = sbr.rel (%p10) target = $region8
  $region5: #{nlayer_discriminator_forward.13} parent=0 // loop_body
    %s14 = ssub.s32 %s9, 1
    %s15 = ssub.s32 %s9, 2
    %s22 = sadd.s32 1, %s17
    %p23 = scmp.ge.s32.totalorder %s22, 2
    %s24 = scalar_select %p23, 0, %s22
    %s25 = sadd.s32 1, %s16
    %s26 = scalar_select %p23, %s25, %s16
    %p27 = scmp.ge.s32.totalorder %s26, 1
    %s28 = scalar_select %p27, 0, %s26
    %s29 = ssub.s32 %s17, %s24
    %p30 = scmp.eq.s32.totalorder %s29, 0
    %s32 = sadd.s32 %s31, 1
    %s33 = scalar_select %p30, %s31, %s32
    %p36 = pneg %p30
    %p37 = scmp.eq.s32.totalorder %s9, 1
    %p38 = por %p36, %p37
    %p39 = scmp.ne.s32.totalorder %s31, %s34
    %p40 = scmp.eq.s32.totalorder %s9, 0
    %p41 = por %p39, %p40
    %p42 = scmp.ne.s32.totalorder %s31, %s34
    %p43 = scmp.eq.s32.totalorder %s14, 1
    %p44 = por %p42, %p43
    %p45 = scmp.ne.s32.totalorder %s34, %s35
    %p46 = scmp.eq.s32.totalorder %s14, 0
    %p47 = por %p45, %p46
    %p48 = scmp.ne.s32.totalorder %s34, %s35
    %p49 = scmp.eq.s32.totalorder %s15, 1
    %p50 = por %p48, %p49
    %p52 = scmp.ne.s32.totalorder %s35, %s51
    %p53 = scmp.eq.s32.totalorder %s15, 0
    %p54 = por %p52, %p53
    %s55 = ssub.s32 %s16, %s28
    %p56 = scmp.eq.s32.totalorder %s55, 0
    %s58 = sadd.s32 %s57, 1
    %s59 = scalar_select %p56, %s57, %s58
    %p62 = pneg %p56
    %p63 = scmp.eq.s32.totalorder %s9, 1
    %p64 = por %p62, %p63
    %p65 = scmp.ne.s32.totalorder %s57, %s60
    %p66 = scmp.eq.s32.totalorder %s9, 0
    %p67 = por %p65, %p66
    %p68 = scmp.ne.s32.totalorder %s57, %s60
    %p69 = scmp.eq.s32.totalorder %s14, 1
    %p70 = por %p68, %p69
    %p71 = scmp.ne.s32.totalorder %s60, %s61
    %p72 = scmp.eq.s32.totalorder %s14, 0
    %p73 = por %p71, %p72
    %p74 = scmp.ne.s32.totalorder %s60, %s61
    %p75 = scmp.eq.s32.totalorder %s15, 1
    %p76 = por %p74, %p75
    %p78 = scmp.ne.s32.totalorder %s61, %s77
    %p79 = scmp.eq.s32.totalorder %s15, 0
    %p80 = por %p78, %p79
    %s81 = ssub.s32 %s16, %s28
    %p82 = scmp.eq.s32.totalorder %s81, 0
    %s84 = sadd.s32 %s83, 1
    %s85 = scalar_select %p82, %s83, %s84
    %p88 = pneg %p82
    %p89 = scmp.eq.s32.totalorder %s9, 1
    %p90 = por %p88, %p89
    %p91 = scmp.ne.s32.totalorder %s83, %s86
    %p92 = scmp.eq.s32.totalorder %s9, 0
    %p93 = por %p91, %p92
    %p94 = scmp.ne.s32.totalorder %s83, %s86
    %p95 = scmp.eq.s32.totalorder %s14, 1
    %p96 = por %p94, %p95
    %p97 = scmp.ne.s32.totalorder %s86, %s87
    %p98 = scmp.eq.s32.totalorder %s14, 0
    %p99 = por %p97, %p98
    %p100 = scmp.ne.s32.totalorder %s86, %s87
    %p101 = scmp.eq.s32.totalorder %s15, 1
    %p102 = por %p100, %p101
    %p104 = scmp.ne.s32.totalorder %s87, %s103
    %p105 = scmp.eq.s32.totalorder %s15, 0
    %p106 = por %p104, %p105
    %s107 = ssub.s32 %s17, %s24
    %s108 = ssub.s32 %s16, %s28
    %s109 = sor.u32 %s107, %s108
    %p110 = scmp.eq.s32.totalorder %s109, 0
    %s112 = sadd.s32 %s111, 1
    %s113 = scalar_select %p110, %s111, %s112
    %p116 = pneg %p110
    %p117 = scmp.eq.s32.totalorder %s9, 1
    %p118 = por %p116, %p117
    %p119 = scmp.ne.s32.totalorder %s111, %s114
    %p120 = scmp.eq.s32.totalorder %s9, 0
    %p121 = por %p119, %p120
    %p122 = scmp.ne.s32.totalorder %s111, %s114
    %p123 = scmp.eq.s32.totalorder %s14, 1
    %p124 = por %p122, %p123
    %p125 = scmp.ne.s32.totalorder %s114, %s115
    %p126 = scmp.eq.s32.totalorder %s14, 0
    %p127 = por %p125, %p126
    %p128 = scmp.ne.s32.totalorder %s114, %s115
    %p129 = scmp.eq.s32.totalorder %s15, 1
    %p130 = por %p128, %p129
    %p132 = scmp.ne.s32.totalorder %s115, %s131
    %p133 = scmp.eq.s32.totalorder %s15, 0
    %p134 = por %p132, %p133
    %p135 = scmp.le.s32.totalorder 1, %s9
    %p136 = scmp.lt.s32.totalorder %s9, 3
    %p137 = pnand %p135, %p136
    %p138 = pneg %p137
    // Predicated region
    $region9: #{nlayer_discriminator_forward.13} parent=5 // pred_check
      _
    $region10: #{nlayer_discriminator_forward.13} parent=5 // pred_check_branch
      %140 = sbr.rel (%p137) target = $region12
    $region11: #{nlayer_discriminator_forward.13} parent=5 // pred_region
      %s141 = ssub.s32 %s9, 1
      // Predicated region
      $region13: #{nlayer_discriminator_forward.13} parent=11 // pred_check
        %p142 = pneg %p73
      $region14: #{nlayer_discriminator_forward.13} parent=11 // pred_check_branch
        %144 = sbr.rel (%p142) target = $region16
      $region15: #{nlayer_discriminator_forward.13} parent=11 // pred_region
        %p145 = scmp.lt.s32.totalorder %s18, 0
        %s146 = scalar_select %p145, %s18, 0
        %s147 = smul.addr %s146, 4
        %s148 = scalar_lea.vmem %s1, %s147
      $region16: #{nlayer_discriminator_forward.13} parent=11 // pred_fallthru
        _
      // Predicated region
      $region17: #{nlayer_discriminator_forward.13} parent=11 // pred_check
        %p149 = pneg %p99
      $region18: #{nlayer_discriminator_forward.13} parent=11 // pred_check_branch
        %151 = sbr.rel (%p149) target = $region20
      $region19: #{nlayer_discriminator_forward.13} parent=11 // pred_region
        %p152 = scmp.lt.s32.totalorder %s18, 0
        %s153 = scalar_select %p152, %s18, 0
        %s154 = scalar_lea.vmem %s2, %s153
      $region20: #{nlayer_discriminator_forward.13} parent=11 // pred_fallthru
        _
    $region12: #{nlayer_discriminator_forward.13} parent=5 // pred_fallthru
      _
    %p155 = scmp.lt.s32.totalorder %s9, 2
    // Predicated region
    $region21: #{nlayer_discriminator_forward.13} parent=5 // pred_check
      %p156 = pneg %p155
    $region22: #{nlayer_discriminator_forward.13} parent=5 // pred_check_branch
      %158 = sbr.rel (%p156) target = $region24
    $region23: #{nlayer_discriminator_forward.13} parent=5 // pred_region
      // Predicated region
      $region25: #{nlayer_discriminator_forward.13} parent=23 // pred_check
        %p159 = pneg %p41
      $region26: #{nlayer_discriminator_forward.13} parent=23 // pred_check_branch
        %161 = sbr.rel (%p159) target = $region28
      $region27: #{nlayer_discriminator_forward.13} parent=23 // pred_region
        %p162 = scmp.lt.s32.totalorder %s17, 1
        %s163 = scalar_select %p162, %s17, 1
        %s164 = smul.addr %s163, 6
        %s165 = smul.addr %s164, 4
        %s166 = scalar_lea.vmem %s0, %s165
      $region28: #{nlayer_discriminator_forward.13} parent=23 // pred_fallthru
        _
    $region24: #{nlayer_discriminator_forward.13} parent=5 // pred_fallthru
      _
    %p167 = scmp.le.s32.totalorder 1, %s9
    %p168 = scmp.lt.s32.totalorder %s9, 3
    %p169 = pnand %p167, %p168
    %p170 = pneg %p169
    // Predicated region
    $region29: #{nlayer_discriminator_forward.13} parent=5 // pred_check
      _
    $region30: #{nlayer_discriminator_forward.13} parent=5 // pred_check_branch
      %172 = sbr.rel (%p169) target = $region32
    $region31: #{nlayer_discriminator_forward.13} parent=5 // pred_region
      %s173 = ssub.s32 %s9, 1
      %p174 = scmp.lt.s32.totalorder %s19, 1
      %s175 = scalar_select %p174, %s19, 1
      %s176 = smul.addr %s175, 6
      %s177 = smul.addr %s176, 4
      %s178 = scalar_lea.vmem %s0, %s177
      %p179 = pneg %p47
      %p180 = pneg %p44
      %p181 = scmp.lt.s32.totalorder %s18, 0
      %s182 = scalar_select %p181, %s18, 0
      %s183 = smul.addr %s182, 4
      %s184 = scalar_lea.vmem %s1, %s183
      %p185 = pneg %p73
      %p186 = pneg %p70
      %p187 = scmp.lt.s32.totalorder %s18, 0
      %s188 = scalar_select %p187, %s18, 0
      %s189 = scalar_lea.vmem %s2, %s188
      %p190 = pneg %p99
      %p191 = pneg %p96
      %p192 = pneg %p127
      %p193 = pneg %p124
      %p194 = scmp.lt.s32.totalorder %s19, 1
      %s195 = scalar_select %p194, %s19, 1
      %p196 = scmp.lt.s32.totalorder %s18, 0
      %s197 = scalar_select %p196, %s18, 0
      %s198 = smul.addr %s195, 3
      %s199 = sadd.s32 %s197, %s198
      %s200 = smul.addr %s199, 4
      %s201 = scalar_lea.vmem %s3, %s200
      %p202 = scmp.lt.s32.totalorder %s19, 1
      %s203 = scalar_select %p202, %s19, 1
      %s204 = smul.addr %s203, 6
      %s205 = smul.addr %s204, 4
      %s206 = scalar_lea.vmem %s0, %s205
      %p207 = scmp.lt.s32.totalorder %s18, 0
      %s208 = scalar_select %p207, %s18, 0
      %s209 = smul.addr %s208, 4
      %s210 = scalar_lea.vmem %s1, %s209
      %p211 = scmp.lt.s32.totalorder %s18, 0
      %s212 = scalar_select %p211, %s18, 0
      %s213 = scalar_lea.vmem %s2, %s212
      %p214 = scmp.lt.s32.totalorder %s19, 1
      %s215 = scalar_select %p214, %s19, 1
      %p216 = scmp.lt.s32.totalorder %s18, 0
      %s217 = scalar_select %p216, %s18, 0
      %s218 = smul.addr %s215, 3
      %s219 = sadd.s32 %s217, %s218
      %s220 = smul.addr %s219, 4
      %s221 = scalar_lea.vmem %s3, %s220
      %v223 = vld [vmem:[%s206] sm:$0xf]
      %v224 = vld [vmem:[%s206 + $0x4] sm:$0xf]
      %v225 = vld [vmem:[%s206 + $0x8] sm:$0x1]
      %v226 = vld [vmem:[%s210] sm:$0xf]
      %v227 = vld [vmem:[%s210 + $0x4] sm:$0xf]
      %v228 = vld [vmem:[%s210 + $0x8] sm:$0xf]
      %v229 = vld [vmem:[%s210 + $0xc] sm:$0xf]
      %v230 = vld [vmem:[%s206 + $0x8] sm:$0x3]
      %s231 = scalar_lea.vmem %s210, 16
      %v232 = vld [vmem:[%s231] sm:$0xf]
      %v233 = vld [vmem:[%s231 + $0x4] sm:$0xf]
      %v234 = vld [vmem:[%s231 + $0x8] sm:$0xf]
      %v235 = vld [vmem:[%s231 + $0xc] sm:$0xf]
      %v239 = vunpack.c.l.b16 %v223
      %v240 = vunpack.c.l.b16 %v224
      %v241 = vunpack.c.l.b16 %v230
      %v242 = vpack.c.b16 %v240, %v239
      %v243 = vpack.c.b16 %v241, %v241
      %vm244 = vsmask.f32 7424
      %v246 = vshrl.u32 %v242, 16
      %v248 = vshll.u32 %v242, 16
      %v250 = vrot.slane %v248, 1
      %v251 = vor.u32 %v246, %v250
      %v253 = vshll.u32 %v243, 16
      %v255 = vrot.slane %v253, 1
      %v256 = vsel %vm244, %v251, %v255
      %v257 = vshrl.u32 %v243, 16
      %v259 = vor.u32 %v257, %v255
      %v264 = vunpack.c.l.b16 %v232
      %v265 = vunpack.c.l.b16 %v233
      %v266 = vunpack.c.l.b16 %v234
      %v267 = vunpack.c.l.b16 %v235
      %v268 = vpack.c.b16 %v265, %v264
      %v269 = vpack.c.b16 %v267, %v266
      %vm272 = vcmask 261120
      %v274 = vsel %vm272, %v256, 0
      %v277 = vsel %vm272, %v259, 0
      %279 = vmatprep.subr.bf16.mxu0 0
      %280 = vmatpush1.bf16.msra.mxu0 %v268
      %281 = vmatprep.subr.bf16.mxu0 0
      %282 = vmatpush1.bf16.msra.mxu0 %v269
      %283 = vmatprep.subr.bf16.mxu0 0
      %284 = vmatpush1.bf16.msra.mxu0 0
      %285 = vmatprep.subr.bf16.mxu0 0
      %286 = vmatpush1.bf16.msra.mxu0 0
      %287 = vmatprep.subr.bf16.mxu0 0
      %288 = vmatpush1.bf16.msra.mxu0 0
      %289 = vmatprep.subr.bf16.mxu0 0
      %290 = vmatpush1.bf16.msra.mxu0 0
      %291 = vmatprep.subr.bf16.mxu0 0
      %292 = vmatpush1.bf16.msra.mxu0 0
      %293 = vmatprep.subr.bf16.mxu0 0
      %294 = vmatpush1.bf16.msra.mxu0 0
      %295 = vmatprep.subr.bf16.mxu0 0
      %296 = vmatpush1.bf16.msra.mxu0 0
      %297 = vmatprep.subr.bf16.mxu0 0
      %298 = vmatpush1.bf16.msra.mxu0 0
      %299 = vmatprep.subr.bf16.mxu0 0
      %300 = vmatpush1.bf16.msra.mxu0 0
      %301 = vmatprep.subr.bf16.mxu0 0
      %302 = vmatpush1.bf16.msra.mxu0 0
      %303 = vmatprep.subr.bf16.mxu0 0
      %304 = vmatpush1.bf16.msra.mxu0 0
      %305 = vmatprep.subr.bf16.mxu0 0
      %306 = vmatpush1.bf16.msra.mxu0 0
      %307 = vmatprep.subr.bf16.mxu0 0
      %308 = vmatpush1.bf16.msra.mxu0 0
      %309 = vmatprep.subr.bf16.mxu0 0
      %310 = vmatpush1.bf16.msra.mxu0 0
      %311 = vmatprep.mubr.bf16.mxu0 0
      %312 = vmatmul.mubr.bf16.gmra.mrb[0].mxu0 %v274
      %v313 = vpop.f32.mrb[0].mxu0
      %v314 = vadd.f32 0.0, %v313
      %v315 = vpop.f32.mrb[0].mxu0
      %v316 = vpop.f32.mrb[0].mxu0
      %v317 = vadd.f32 0.0, %v316
      %v318 = vpop.f32.mrb[0].mxu0
      %319 = vmatprep.mubr.bf16.mxu0 0
      %320 = vmatmul.mubr.bf16.gmra.mrb[0].mxu0 %v277
      %v321 = vpop.f32.mrb[0].mxu0
      %v322 = vadd.f32 0.0, %v321
      %v323 = vpop.f32.mrb[0].mxu0
      %v324 = vpop.f32.mrb[0].mxu0
      %v325 = vpop.f32.mrb[0].mxu0
      %326 = vdwg.mxu0
      %v328 = vunpack.c.l.b16 %v225
      %v329 = vpack.c.b16 %v328, %v328
      %v334 = vunpack.c.l.b16 %v226
      %v335 = vunpack.c.l.b16 %v227
      %v336 = vunpack.c.l.b16 %v228
      %v337 = vunpack.c.l.b16 %v229
      %v338 = vpack.c.b16 %v335, %v334
      %v339 = vpack.c.b16 %v337, %v336
      %v342 = vsel %vm272, %v242, 0
      %v345 = vsel %vm272, %v329, 0
      %347 = vmatprep.subr.bf16.mxu0 0
      %348 = vmatpush1.bf16.msra.mxu0 %v338
      %349 = vmatprep.subr.bf16.mxu0 0
      %350 = vmatpush1.bf16.msra.mxu0 %v339
      %351 = vmatprep.subr.bf16.mxu0 0
      %352 = vmatpush1.bf16.msra.mxu0 0
      %353 = vmatprep.subr.bf16.mxu0 0
      %354 = vmatpush1.bf16.msra.mxu0 0
      %355 = vmatprep.subr.bf16.mxu0 0
      %356 = vmatpush1.bf16.msra.mxu0 0
      %357 = vmatprep.subr.bf16.mxu0 0
      %358 = vmatpush1.bf16.msra.mxu0 0
      %359 = vmatprep.subr.bf16.mxu0 0
      %360 = vmatpush1.bf16.msra.mxu0 0
      %361 = vmatprep.subr.bf16.mxu0 0
      %362 = vmatpush1.bf16.msra.mxu0 0
      %363 = vmatprep.subr.bf16.mxu0 0
      %364 = vmatpush1.bf16.msra.mxu0 0
      %365 = vmatprep.subr.bf16.mxu0 0
      %366 = vmatpush1.bf16.msra.mxu0 0
      %367 = vmatprep.subr.bf16.mxu0 0
      %368 = vmatpush1.bf16.msra.mxu0 0
      %369 = vmatprep.subr.bf16.mxu0 0
      %370 = vmatpush1.bf16.msra.mxu0 0
      %371 = vmatprep.subr.bf16.mxu0 0
      %372 = vmatpush1.bf16.msra.mxu0 0
      %373 = vmatprep.subr.bf16.mxu0 0
      %374 = vmatpush1.bf16.msra.mxu0 0
      %375 = vmatprep.subr.bf16.mxu0 0
      %376 = vmatpush1.bf16.msra.mxu0 0
      %377 = vmatprep.subr.bf16.mxu0 0
      %378 = vmatpush1.bf16.msra.mxu0 0
      %379 = vmatprep.mubr.bf16.mxu0 0
      %380 = vmatmul.mubr.bf16.gmra.mrb[0].mxu0 %v342
      %v381 = vpop.f32.mrb[0].mxu0
      %v382 = vadd.f32 %v314, %v381
      %v383 = vpop.f32.mrb[0].mxu0
      %v384 = vpop.f32.mrb[0].mxu0
      %v385 = vadd.f32 %v317, %v384
      %v386 = vpop.f32.mrb[0].mxu0
      %387 = vmatprep.mubr.bf16.mxu0 0
      %388 = vmatmul.mubr.bf16.gmra.mrb[0].mxu0 %v345
      %v389 = vpop.f32.mrb[0].mxu0
      %v390 = vadd.f32 %v322, %v389
      %v391 = vpop.f32.mrb[0].mxu0
      %v392 = vpop.f32.mrb[0].mxu0
      %v393 = vpop.f32.mrb[0].mxu0
      %394 = vdwg.mxu0
      %v395 = vld [vmem:[%s206] sm:$0xe]
      %s396 = scalar_lea.vmem %s210, 32
      %v397 = vld [vmem:[%s396] sm:$0xf]
      %v398 = vld [vmem:[%s396 + $0x4] sm:$0xf]
      %v399 = vld [vmem:[%s396 + $0x8] sm:$0xf]
      %v400 = vld [vmem:[%s396 + $0xc] sm:$0xf]
      %v402 = vunpack.c.l.b16 %v395
      %v403 = vpack.c.b16 %v240, %v402
      %vm404 = vcmask 1046528
      %v405 = vrot.slane %v403, 1
      %v406 = vrot.slane %v243, 1
      %v407 = vsel %vm404, %v405, %v406
      %v412 = vunpack.c.l.b16 %v397
      %v413 = vunpack.c.l.b16 %v398
      %v414 = vunpack.c.l.b16 %v399
      %v415 = vunpack.c.l.b16 %v400
      %v416 = vpack.c.b16 %v413, %v412
      %v417 = vpack.c.b16 %v415, %v414
      %v421 = vsel %vm272, %v407, 0
      %v424 = vsel %vm272, %v406, 0
      %426 = vmatprep.subr.bf16.mxu0 0
      %427 = vmatpush1.bf16.msra.mxu0 %v416
      %428 = vmatprep.subr.bf16.mxu0 0
      %429 = vmatpush1.bf16.msra.mxu0 %v417
      %430 = vmatprep.subr.bf16.mxu0 0
      %431 = vmatpush1.bf16.msra.mxu0 0
      %432 = vmatprep.subr.bf16.mxu0 0
      %433 = vmatpush1.bf16.msra.mxu0 0
      %434 = vmatprep.subr.bf16.mxu0 0
      %435 = vmatpush1.bf16.msra.mxu0 0
      %436 = vmatprep.subr.bf16.mxu0 0
      %437 = vmatpush1.bf16.msra.mxu0 0
      %438 = vmatprep.subr.bf16.mxu0 0
      %439 = vmatpush1.bf16.msra.mxu0 0
      %440 = vmatprep.subr.bf16.mxu0 0
      %441 = vmatpush1.bf16.msra.mxu0 0
      %442 = vmatprep.subr.bf16.mxu0 0
      %443 = vmatpush1.bf16.msra.mxu0 0
      %444 = vmatprep.subr.bf16.mxu0 0
      %445 = vmatpush1.bf16.msra.mxu0 0
      %446 = vmatprep.subr.bf16.mxu0 0
      %447 = vmatpush1.bf16.msra.mxu0 0
      %448 = vmatprep.subr.bf16.mxu0 0
      %449 = vmatpush1.bf16.msra.mxu0 0
      %450 = vmatprep.subr.bf16.mxu0 0
      %451 = vmatpush1.bf16.msra.mxu0 0
      %452 = vmatprep.subr.bf16.mxu0 0
      %453 = vmatpush1.bf16.msra.mxu0 0
      %454 = vmatprep.subr.bf16.mxu0 0
      %455 = vmatpush1.bf16.msra.mxu0 0
      %456 = vmatprep.subr.bf16.mxu0 0
      %457 = vmatpush1.bf16.msra.mxu0 0
      %458 = vmatprep.mubr.bf16.mxu0 0
      %459 = vmatmul.mubr.bf16.gmra.mrb[0].mxu0 %v421
      %v460 = vpop.f32.mrb[0].mxu0
      %v461 = vadd.f32 0.0, %v460
      %v462 = vpop.f32.mrb[0].mxu0
      %v463 = vpop.f32.mrb[0].mxu0
      %v464 = vadd.f32 0.0, %v463
      %v465 = vpop.f32.mrb[0].mxu0
      %466 = vmatprep.mubr.bf16.mxu0 0
      %467 = vmatmul.mubr.bf16.gmra.mrb[0].mxu0 %v424
      %v468 = vpop.f32.mrb[0].mxu0
      %v469 = vadd.f32 0.0, %v468
      %v470 = vpop.f32.mrb[0].mxu0
      %v471 = vpop.f32.mrb[0].mxu0
      %v472 = vpop.f32.mrb[0].mxu0
      %473 = vdwg.mxu0
      %v474 = vadd.f32 %v382, %v461
      %v475 = vadd.f32 %v385, %v464
      %v476 = vadd.f32 %v390, %v469
      %v477 = vld [vmem:[%s206 + $0x8] sm:$0x7]
      %s478 = scalar_lea.vmem %s210, 48
      %v479 = vld [vmem:[%s478] sm:$0xf]
      %v480 = vld [vmem:[%s478 + $0x4] sm:$0xf]
      %v481 = vld [vmem:[%s478 + $0x8] sm:$0xf]
      %v482 = vld [vmem:[%s478 + $0xc] sm:$0xf]
      %v484 = vunpack.c.l.b16 %v477
      %v485 = vpack.c.b16 %v484, %v484
      %vm486 = vsmask.f32 6400
      %v488 = vshrl.u32 %v403, 16
      %v490 = vrot.slane %v488, 1
      %v491 = vshll.u32 %v403, 16
      %v493 = vrot.slane %v491, 2
      %v494 = vor.u32 %v490, %v493
      %v496 = vshrl.u32 %v485, 16
      %v498 = vrot.slane %v496, 1
      %v499 = vshll.u32 %v485, 16
      %v501 = vrot.slane %v499, 2
      %v502 = vor.u32 %v498, %v501
      %v503 = vsel %vm486, %v494, %v502
      %v508 = vunpack.c.l.b16 %v479
      %v509 = vunpack.c.l.b16 %v480
      %v510 = vunpack.c.l.b16 %v481
      %v511 = vunpack.c.l.b16 %v482
      %v512 = vpack.c.b16 %v509, %v508
      %v513 = vpack.c.b16 %v511, %v510
      %v517 = vsel %vm272, %v503, 0
      %v520 = vsel %vm272, %v502, 0
      %522 = vmatprep.subr.bf16.mxu0 0
      %523 = vmatpush1.bf16.msra.mxu0 %v512
      %524 = vmatprep.subr.bf16.mxu0 0
      %525 = vmatpush1.bf16.msra.mxu0 %v513
      %526 = vmatprep.subr.bf16.mxu0 0
      %527 = vmatpush1.bf16.msra.mxu0 0
      %528 = vmatprep.subr.bf16.mxu0 0
      %529 = vmatpush1.bf16.msra.mxu0 0
      %530 = vmatprep.subr.bf16.mxu0 0
      %531 = vmatpush1.bf16.msra.mxu0 0
      %532 = vmatprep.subr.bf16.mxu0 0
      %533 = vmatpush1.bf16.msra.mxu0 0
      %534 = vmatprep.subr.bf16.mxu0 0
      %535 = vmatpush1.bf16.msra.mxu0 0
      %536 = vmatprep.subr.bf16.mxu0 0
      %537 = vmatpush1.bf16.msra.mxu0 0
      %538 = vmatprep.subr.bf16.mxu0 0
      %539 = vmatpush1.bf16.msra.mxu0 0
      %540 = vmatprep.subr.bf16.mxu0 0
      %541 = vmatpush1.bf16.msra.mxu0 0
      %542 = vmatprep.subr.bf16.mxu0 0
      %543 = vmatpush1.bf16.msra.mxu0 0
      %544 = vmatprep.subr.bf16.mxu0 0
      %545 = vmatpush1.bf16.msra.mxu0 0
      %546 = vmatprep.subr.bf16.mxu0 0
      %547 = vmatpush1.bf16.msra.mxu0 0
      %548 = vmatprep.subr.bf16.mxu0 0
      %549 = vmatpush1.bf16.msra.mxu0 0
      %550 = vmatprep.subr.bf16.mxu0 0
      %551 = vmatpush1.bf16.msra.mxu0 0
      %552 = vmatprep.subr.bf16.mxu0 0
      %553 = vmatpush1.bf16.msra.mxu0 0
      %554 = vmatprep.mubr.bf16.mxu0 0
      %555 = vmatmul.mubr.bf16.gmra.mrb[0].mxu0 %v517
      %v556 = vpop.f32.mrb[0].mxu0
      %v557 = vadd.f32 0.0, %v556
      %v558 = vpop.f32.mrb[0].mxu0
      %v559 = vpop.f32.mrb[0].mxu0
      %v560 = vadd.f32 0.0, %v559
      %v561 = vpop.f32.mrb[0].mxu0
      %562 = vmatprep.mubr.bf16.mxu0 0
      %563 = vmatmul.mubr.bf16.gmra.mrb[0].mxu0 %v520
      %v564 = vpop.f32.mrb[0].mxu0
      %v565 = vadd.f32 0.0, %v564
      %v566 = vpop.f32.mrb[0].mxu0
      %v567 = vpop.f32.mrb[0].mxu0
      %v568 = vpop.f32.mrb[0].mxu0
      %569 = vdwg.mxu0
      %v570 = vadd.f32 %v474, %v557
      %v571 = vadd.f32 %v475, %v560
      %v572 = vadd.f32 %v476, %v565
      %v573 = vld [vmem:[%s206] sm:$0x8]
      %v574 = vld [vmem:[%s206 + $0x8] sm:$0xf]
      %s575 = scalar_lea.vmem %s210, 64
      %v576 = vld [vmem:[%s575] sm:$0xf]
      %v577 = vld [vmem:[%s575 + $0x4] sm:$0xf]
      %v578 = vld [vmem:[%s575 + $0x8] sm:$0xf]
      %v579 = vld [vmem:[%s575 + $0xc] sm:$0xf]
      %v582 = vunpack.c.l.b16 %v573
      %v583 = vunpack.c.l.b16 %v574
      %v584 = vpack.c.b16 %v240, %v582
      %v585 = vpack.c.b16 %v583, %v583
      %vm586 = vcmask 1044480
      %v587 = vrot.slane %v584, 3
      %v588 = vrot.slane %v585, 3
      %v589 = vsel %vm586, %v587, %v588
      %v594 = vunpack.c.l.b16 %v576
      %v595 = vunpack.c.l.b16 %v577
      %v596 = vunpack.c.l.b16 %v578
      %v597 = vunpack.c.l.b16 %v579
      %v598 = vpack.c.b16 %v595, %v594
      %v599 = vpack.c.b16 %v597, %v596
      %v603 = vsel %vm272, %v589, 0
      %v606 = vsel %vm272, %v588, 0
      %608 = vmatprep.subr.bf16.mxu0 0
      %609 = vmatpush1.bf16.msra.mxu0 %v598
      %610 = vmatprep.subr.bf16.mxu0 0
      %611 = vmatpush1.bf16.msra.mxu0 %v599
      %612 = vmatprep.subr.bf16.mxu0 0
      %613 = vmatpush1.bf16.msra.mxu0 0
      %614 = vmatprep.subr.bf16.mxu0 0
      %615 = vmatpush1.bf16.msra.mxu0 0
      %616 = vmatprep.subr.bf16.mxu0 0
      %617 = vmatpush1.bf16.msra.mxu0 0
      %618 = vmatprep.subr.bf16.mxu0 0
      %619 = vmatpush1.bf16.msra.mxu0 0
      %620 = vmatprep.subr.bf16.mxu0 0
      %621 = vmatpush1.bf16.msra.mxu0 0
      %622 = vmatprep.subr.bf16.mxu0 0
      %623 = vmatpush1.bf16.msra.mxu0 0
      %624 = vmatprep.subr.bf16.mxu0 0
      %625 = vmatpush1.bf16.msra.mxu0 0
      %626 = vmatprep.subr.bf16.mxu0 0
      %627 = vmatpush1.bf16.msra.mxu0 0
      %628 = vmatprep.subr.bf16.mxu0 0
      %629 = vmatpush1.bf16.msra.mxu0 0
      %630 = vmatprep.subr.bf16.mxu0 0
      %631 = vmatpush1.bf16.msra.mxu0 0
      %632 = vmatprep.subr.bf16.mxu0 0
      %633 = vmatpush1.bf16.msra.mxu0 0
      %634 = vmatprep.subr.bf16.mxu0 0
      %635 = vmatpush1.bf16.msra.mxu0 0
      %636 = vmatprep.subr.bf16.mxu0 0
      %637 = vmatpush1.bf16.msra.mxu0 0
      %638 = vmatprep.subr.bf16.mxu0 0
      %639 = vmatpush1.bf16.msra.mxu0 0
      %640 = vmatprep.mubr.bf16.mxu0 0
      %641 = vmatmul.mubr.bf16.gmra.mrb[0].mxu0 %v603
      %v642 = vpop.f32.mrb[0].mxu0
      %v643 = vadd.f32 0.0, %v642
      %v644 = vpop.f32.mrb[0].mxu0
      %v645 = vpop.f32.mrb[0].mxu0
      %v646 = vadd.f32 0.0, %v645
      %v647 = vpop.f32.mrb[0].mxu0
      %648 = vmatprep.mubr.bf16.mxu0 0
      %649 = vmatmul.mubr.bf16.gmra.mrb[0].mxu0 %v606
      %v650 = vpop.f32.mrb[0].mxu0
      %v651 = vadd.f32 0.0, %v650
      %v652 = vpop.f32.mrb[0].mxu0
      %v653 = vpop.f32.mrb[0].mxu0
      %v654 = vpop.f32.mrb[0].mxu0
      %655 = vdwg.mxu0
      %v656 = vadd.f32 %v570, %v643
      %v657 = vadd.f32 %v571, %v646
      %v658 = vadd.f32 %v572, %v651
      %v659 = vld [vmem:[%s206] sm:$0x8]
      %v660 = vld [vmem:[%s206 + $0x4] sm:$0xf]
      %v661 = vld [vmem:[%s206 + $0x8] sm:$0xf]
      %v662 = vld [vmem:[%s206 + $0xc] sm:$0x1]
      %s663 = scalar_lea.vmem %s210, 80
      %v664 = vld [vmem:[%s663] sm:$0xf]
      %v665 = vld [vmem:[%s663 + $0x4] sm:$0xf]
      %v666 = vld [vmem:[%s663 + $0x8] sm:$0xf]
      %v667 = vld [vmem:[%s663 + $0xc] sm:$0xf]
      %v672 = vunpack.c.l.b16 %v659
      %v673 = vunpack.c.l.b16 %v660
      %v674 = vunpack.c.l.b16 %v661
      %v675 = vunpack.c.l.b16 %v662
      %v676 = vpack.c.b16 %v673, %v672
      %v677 = vpack.c.b16 %v675, %v674
      %vm678 = vsmask.f32 4352
      %v680 = vshrl.u32 %v676, 16
      %v682 = vrot.slane %v680, 3
      %v683 = vshll.u32 %v676, 16
      %v685 = vrot.slane %v683, 4
      %v686 = vor.u32 %v682, %v685
      %v688 = vshrl.u32 %v677, 16
      %v690 = vrot.slane %v688, 3
      %v691 = vshll.u32 %v677, 16
      %v693 = vrot.slane %v691, 4
      %v694 = vor.u32 %v690, %v693
      %v695 = vsel %vm678, %v686, %v694
      %v700 = vunpack.c.l.b16 %v664
      %v701 = vunpack.c.l.b16 %v665
      %v702 = vunpack.c.l.b16 %v666
      %v703 = vunpack.c.l.b16 %v667
      %v704 = vpack.c.b16 %v701, %v700
      %v705 = vpack.c.b16 %v703, %v702
      %v709 = vsel %vm272, %v695, 0
      %v712 = vsel %vm272, %v694, 0
      %714 = vmatprep.subr.bf16.mxu0 0
      %715 = vmatpush1.bf16.msra.mxu0 %v704
      %716 = vmatprep.subr.bf16.mxu0 0
      %717 = vmatpush1.bf16.msra.mxu0 %v705
      %718 = vmatprep.subr.bf16.mxu0 0
      %719 = vmatpush1.bf16.msra.mxu0 0
      %720 = vmatprep.subr.bf16.mxu0 0
      %721 = vmatpush1.bf16.msra.mxu0 0
      %722 = vmatprep.subr.bf16.mxu0 0
      %723 = vmatpush1.bf16.msra.mxu0 0
      %724 = vmatprep.subr.bf16.mxu0 0
      %725 = vmatpush1.bf16.msra.mxu0 0
      %726 = vmatprep.subr.bf16.mxu0 0
      %727 = vmatpush1.bf16.msra.mxu0 0
      %728 = vmatprep.subr.bf16.mxu0 0
      %729 = vmatpush1.bf16.msra.mxu0 0
      %730 = vmatprep.subr.bf16.mxu0 0
      %731 = vmatpush1.bf16.msra.mxu0 0
      %732 = vmatprep.subr.bf16.mxu0 0
      %733 = vmatpush1.bf16.msra.mxu0 0
      %734 = vmatprep.subr.bf16.mxu0 0
      %735 = vmatpush1.bf16.msra.mxu0 0
      %736 = vmatprep.subr.bf16.mxu0 0
      %737 = vmatpush1.bf16.msra.mxu0 0
      %738 = vmatprep.subr.bf16.mxu0 0
      %739 = vmatpush1.bf16.msra.mxu0 0
      %740 = vmatprep.subr.bf16.mxu0 0
      %741 = vmatpush1.bf16.msra.mxu0 0
      %742 = vmatprep.subr.bf16.mxu0 0
      %743 = vmatpush1.bf16.msra.mxu0 0
      %744 = vmatprep.subr.bf16.mxu0 0
      %745 = vmatpush1.bf16.msra.mxu0 0
      %746 = vmatprep.mubr.bf16.mxu0 0
      %747 = vmatmul.mubr.bf16.gmra.mrb[0].mxu0 %v709
      %v748 = vpop.f32.mrb[0].mxu0
      %v749 = vadd.f32 0.0, %v748
      %v750 = vpop.f32.mrb[0].mxu0
      %v751 = vpop.f32.mrb[0].mxu0
      %v752 = vadd.f32 0.0, %v751
      %v753 = vpop.f32.mrb[0].mxu0
      %754 = vmatprep.mubr.bf16.mxu0 0
      %755 = vmatmul.mubr.bf16.gmra.mrb[0].mxu0 %v712
      %v756 = vpop.f32.mrb[0].mxu0
      %v757 = vadd.f32 0.0, %v756
      %v758 = vpop.f32.mrb[0].mxu0
      %v759 = vpop.f32.mrb[0].mxu0
      %v760 = vpop.f32.mrb[0].mxu0
      %761 = vdwg.mxu0
      %v762 = vadd.f32 %v656, %v749
      %v763 = vadd.f32 %v657, %v752
      %v764 = vadd.f32 %v658, %v757
      %s765 = scalar_lea.vmem %s210, 96
      %v766 = vld [vmem:[%s765] sm:$0xf]
      %v767 = vld [vmem:[%s765 + $0x4] sm:$0xf]
      %v768 = vld [vmem:[%s765 + $0x8] sm:$0xf]
      %v769 = vld [vmem:[%s765 + $0xc] sm:$0xf]
      %v770 = vpack.c.b16 %v674, %v673
      %v771 = vpack.c.b16 %v675, %v675
      %v776 = vunpack.c.l.b16 %v766
      %v777 = vunpack.c.l.b16 %v767
      %v778 = vunpack.c.l.b16 %v768
      %v779 = vunpack.c.l.b16 %v769
      %v780 = vpack.c.b16 %v777, %v776
      %v781 = vpack.c.b16 %v779, %v778
      %v785 = vsel %vm272, %v770, 0
      %v788 = vsel %vm272, %v771, 0
      %790 = vmatprep.subr.bf16.mxu0 0
      %791 = vmatpush1.bf16.msra.mxu0 %v780
      %792 = vmatprep.subr.bf16.mxu0 0
      %793 = vmatpush1.bf16.msra.mxu0 %v781
      %794 = vmatprep.subr.bf16.mxu0 0
      %795 = vmatpush1.bf16.msra.mxu0 0
      %796 = vmatprep.subr.bf16.mxu0 0
      %797 = vmatpush1.bf16.msra.mxu0 0
      %798 = vmatprep.subr.bf16.mxu0 0
      %799 = vmatpush1.bf16.msra.mxu0 0
      %800 = vmatprep.subr.bf16.mxu0 0
      %801 = vmatpush1.bf16.msra.mxu0 0
      %802 = vmatprep.subr.bf16.mxu0 0
      %803 = vmatpush1.bf16.msra.mxu0 0
      %804 = vmatprep.subr.bf16.mxu0 0
      %805 = vmatpush1.bf16.msra.mxu0 0
      %806 = vmatprep.subr.bf16.mxu0 0
      %807 = vmatpush1.bf16.msra.mxu0 0
      %808 = vmatprep.subr.bf16.mxu0 0
      %809 = vmatpush1.bf16.msra.mxu0 0
      %810 = vmatprep.subr.bf16.mxu0 0
      %811 = vmatpush1.bf16.msra.mxu0 0
      %812 = vmatprep.subr.bf16.mxu0 0
      %813 = vmatpush1.bf16.msra.mxu0 0
      %814 = vmatprep.subr.bf16.mxu0 0
      %815 = vmatpush1.bf16.msra.mxu0 0
      %816 = vmatprep.subr.bf16.mxu0 0
      %817 = vmatpush1.bf16.msra.mxu0 0
      %818 = vmatprep.subr.bf16.mxu0 0
      %819 = vmatpush1.bf16.msra.mxu0 0
      %820 = vmatprep.subr.bf16.mxu0 0
      %821 = vmatpush1.bf16.msra.mxu0 0
      %822 = vmatprep.mubr.bf16.mxu0 0
      %823 = vmatmul.mubr.bf16.gmra.mrb[0].mxu0 %v785
      %v824 = vpop.f32.mrb[0].mxu0
      %v825 = vadd.f32 0.0, %v824
      %v826 = vpop.f32.mrb[0].mxu0
      %v827 = vpop.f32.mrb[0].mxu0
      %v828 = vadd.f32 0.0, %v827
      %v829 = vpop.f32.mrb[0].mxu0
      %830 = vmatprep.mubr.bf16.mxu0 0
      %831 = vmatmul.mubr.bf16.gmra.mrb[0].mxu0 %v788
      %v832 = vpop.f32.mrb[0].mxu0
      %v833 = vadd.f32 0.0, %v832
      %v834 = vpop.f32.mrb[0].mxu0
      %v835 = vpop.f32.mrb[0].mxu0
      %v836 = vpop.f32.mrb[0].mxu0
      %837 = vdwg.mxu0
      %v838 = vadd.f32 %v762, %v825
      %v839 = vadd.f32 %v763, %v828
      %v840 = vadd.f32 %v764, %v833
      %v841 = vld [vmem:[%s206 + $0xc] sm:$0x3]
      %s842 = scalar_lea.vmem %s210, 112
      %v843 = vld [vmem:[%s842] sm:$0xf]
      %v844 = vld [vmem:[%s842 + $0x4] sm:$0xf]
      %v845 = vld [vmem:[%s842 + $0x8] sm:$0xf]
      %v846 = vld [vmem:[%s842 + $0xc] sm:$0xf]
      %v848 = vunpack.c.l.b16 %v841
      %v849 = vpack.c.b16 %v848, %v848
      %v850 = vshrl.u32 %v770, 16
      %v852 = vshll.u32 %v770, 16
      %v854 = vrot.slane %v852, 1
      %v855 = vor.u32 %v850, %v854
      %v857 = vshll.u32 %v849, 16
      %v859 = vrot.slane %v857, 1
      %v860 = vsel %vm244, %v855, %v859
      %v861 = vshrl.u32 %v849, 16
      %v863 = vor.u32 %v861, %v859
      %v868 = vunpack.c.l.b16 %v843
      %v869 = vunpack.c.l.b16 %v844
      %v870 = vunpack.c.l.b16 %v845
      %v871 = vunpack.c.l.b16 %v846
      %v872 = vpack.c.b16 %v869, %v868
      %v873 = vpack.c.b16 %v871, %v870
      %v877 = vsel %vm272, %v860, 0
      %v880 = vsel %vm272, %v863, 0
      %882 = vmatprep.subr.bf16.mxu0 0
      %883 = vmatpush1.bf16.msra.mxu0 %v872
      %884 = vmatprep.subr.bf16.mxu0 0
      %885 = vmatpush1.bf16.msra.mxu0 %v873
      %886 = vmatprep.subr.bf16.mxu0 0
      %887 = vmatpush1.bf16.msra.mxu0 0
      %888 = vmatprep.subr.bf16.mxu0 0
      %889 = vmatpush1.bf16.msra.mxu0 0
      %890 = vmatprep.subr.bf16.mxu0 0
      %891 = vmatpush1.bf16.msra.mxu0 0
      %892 = vmatprep.subr.bf16.mxu0 0
      %893 = vmatpush1.bf16.msra.mxu0 0
      %894 = vmatprep.subr.bf16.mxu0 0
      %895 = vmatpush1.bf16.msra.mxu0 0
      %896 = vmatprep.subr.bf16.mxu0 0
      %897 = vmatpush1.bf16.msra.mxu0 0
      %898 = vmatprep.subr.bf16.mxu0 0
      %899 = vmatpush1.bf16.msra.mxu0 0
      %900 = vmatprep.subr.bf16.mxu0 0
      %901 = vmatpush1.bf16.msra.mxu0 0
      %902 = vmatprep.subr.bf16.mxu0 0
      %903 = vmatpush1.bf16.msra.mxu0 0
      %904 = vmatprep.subr.bf16.mxu0 0
      %905 = vmatpush1.bf16.msra.mxu0 0
      %906 = vmatprep.subr.bf16.mxu0 0
      %907 = vmatpush1.bf16.msra.mxu0 0
      %908 = vmatprep.subr.bf16.mxu0 0
      %909 = vmatpush1.bf16.msra.mxu0 0
      %910 = vmatprep.subr.bf16.mxu0 0
      %911 = vmatpush1.bf16.msra.mxu0 0
      %912 = vmatprep.subr.bf16.mxu0 0
      %913 = vmatpush1.bf16.msra.mxu0 0
      %914 = vmatprep.mubr.bf16.mxu0 0
      %915 = vmatmul.mubr.bf16.gmra.mrb[0].mxu0 %v877
      %v916 = vpop.f32.mrb[0].mxu0
      %v917 = vadd.f32 0.0, %v916
      %v918 = vpop.f32.mrb[0].mxu0
      %v919 = vpop.f32.mrb[0].mxu0
      %v920 = vadd.f32 0.0, %v919
      %v921 = vpop.f32.mrb[0].mxu0
      %922 = vmatprep.mubr.bf16.mxu0 0
      %923 = vmatmul.mubr.bf16.gmra.mrb[0].mxu0 %v880
      %v924 = vpop.f32.mrb[0].mxu0
      %v925 = vadd.f32 0.0, %v924
      %v926 = vpop.f32.mrb[0].mxu0
      %v927 = vpop.f32.mrb[0].mxu0
      %v928 = vpop.f32.mrb[0].mxu0
      %929 = vdwg.mxu0
      %v930 = vadd.f32 %v838, %v917
      %v931 = vadd.f32 %v839, %v920
      %v932 = vadd.f32 %v840, %v925
      %v933 = vld [vmem:[%s206 + $0x4] sm:$0xc]
      %v934 = vld [vmem:[%s206 + $0xc] sm:$0x7]
      %s935 = scalar_lea.vmem %s210, 128
      %v936 = vld [vmem:[%s935] sm:$0xf]
      %v937 = vld [vmem:[%s935 + $0x4] sm:$0xf]
      %v938 = vld [vmem:[%s935 + $0x8] sm:$0xf]
      %v939 = vld [vmem:[%s935 + $0xc] sm:$0xf]
      %v942 = vunpack.c.l.b16 %v933
      %v943 = vunpack.c.l.b16 %v934
      %v944 = vpack.c.b16 %v674, %v942
      %v945 = vpack.c.b16 %v943, %v943
      %vm946 = vcmask 1045504
      %v947 = vrot.slane %v944, 2
      %v948 = vrot.slane %v945, 2
      %v949 = vsel %vm946, %v947, %v948
      %v954 = vunpack.c.l.b16 %v936
      %v955 = vunpack.c.l.b16 %v937
      %v956 = vunpack.c.l.b16 %v938
      %v957 = vunpack.c.l.b16 %v939
      %v958 = vpack.c.b16 %v955, %v954
      %v959 = vpack.c.b16 %v957, %v956
      %v963 = vsel %vm272, %v949, 0
      %v966 = vsel %vm272, %v948, 0
      %968 = vmatprep.subr.bf16.mxu0 0
      %969 = vmatpush1.bf16.msra.mxu0 %v958
      %970 = vmatprep.subr.bf16.mxu0 0
      %971 = vmatpush1.bf16.msra.mxu0 %v959
      %972 = vmatprep.subr.bf16.mxu0 0
      %973 = vmatpush1.bf16.msra.mxu0 0
      %974 = vmatprep.subr.bf16.mxu0 0
      %975 = vmatpush1.bf16.msra.mxu0 0
      %976 = vmatprep.subr.bf16.mxu0 0
      %977 = vmatpush1.bf16.msra.mxu0 0
      %978 = vmatprep.subr.bf16.mxu0 0
      %979 = vmatpush1.bf16.msra.mxu0 0
      %980 = vmatprep.subr.bf16.mxu0 0
      %981 = vmatpush1.bf16.msra.mxu0 0
      %982 = vmatprep.subr.bf16.mxu0 0
      %983 = vmatpush1.bf16.msra.mxu0 0
      %984 = vmatprep.subr.bf16.mxu0 0
      %985 = vmatpush1.bf16.msra.mxu0 0
      %986 = vmatprep.subr.bf16.mxu0 0
      %987 = vmatpush1.bf16.msra.mxu0 0
      %988 = vmatprep.subr.bf16.mxu0 0
      %989 = vmatpush1.bf16.msra.mxu0 0
      %990 = vmatprep.subr.bf16.mxu0 0
      %991 = vmatpush1.bf16.msra.mxu0 0
      %992 = vmatprep.subr.bf16.mxu0 0
      %993 = vmatpush1.bf16.msra.mxu0 0
      %994 = vmatprep.subr.bf16.mxu0 0
      %995 = vmatpush1.bf16.msra.mxu0 0
      %996 = vmatprep.subr.bf16.mxu0 0
      %997 = vmatpush1.bf16.msra.mxu0 0
      %998 = vmatprep.subr.bf16.mxu0 0
      %999 = vmatpush1.bf16.msra.mxu0 0
      %1000 = vmatprep.mubr.bf16.mxu0 0
      %1001 = vmatmul.mubr.bf16.gmra.mrb[0].mxu0 %v963
      %v1002 = vpop.f32.mrb[0].mxu0
      %v1003 = vadd.f32 0.0, %v1002
      %v1004 = vpop.f32.mrb[0].mxu0
      %v1005 = vpop.f32.mrb[0].mxu0
      %v1006 = vadd.f32 0.0, %v1005
      %v1007 = vpop.f32.mrb[0].mxu0
      %1008 = vmatprep.mubr.bf16.mxu0 0
      %1009 = vmatmul.mubr.bf16.gmra.mrb[0].mxu0 %v966
      %v1010 = vpop.f32.mrb[0].mxu0
      %v1011 = vadd.f32 0.0, %v1010
      %v1012 = vpop.f32.mrb[0].mxu0
      %v1013 = vpop.f32.mrb[0].mxu0
      %v1014 = vpop.f32.mrb[0].mxu0
      %1015 = vdwg.mxu0
      %v1016 = vadd.f32 %v930, %v1003
      %v1017 = vadd.f32 %v931, %v1006
      %v1018 = vadd.f32 %v932, %v1011
      %v1019 = vld [vmem:[%s206 + $0xc] sm:$0xf]
      %s1020 = scalar_lea.vmem %s210, 144
      %v1021 = vld [vmem:[%s1020] sm:$0xf]
      %v1022 = vld [vmem:[%s1020 + $0x4] sm:$0xf]
      %v1023 = vld [vmem:[%s1020 + $0x8] sm:$0xf]
      %v1024 = vld [vmem:[%s1020 + $0xc] sm:$0xf]
      %v1026 = vunpack.c.l.b16 %v1019
      %v1027 = vpack.c.b16 %v1026, %v1026
      %vm1028 = vsmask.f32 5376
      %v1030 = vshrl.u32 %v944, 16
      %v1032 = vrot.slane %v1030, 2
      %v1033 = vshll.u32 %v944, 16
      %v1035 = vrot.slane %v1033, 3
      %v1036 = vor.u32 %v1032, %v1035
      %v1038 = vshrl.u32 %v1027, 16
      %v1040 = vrot.slane %v1038, 2
      %v1041 = vshll.u32 %v1027, 16
      %v1043 = vrot.slane %v1041, 3
      %v1044 = vor.u32 %v1040, %v1043
      %v1045 = vsel %vm1028, %v1036, %v1044
      %v1050 = vunpack.c.l.b16 %v1021
      %v1051 = vunpack.c.l.b16 %v1022
      %v1052 = vunpack.c.l.b16 %v1023
      %v1053 = vunpack.c.l.b16 %v1024
      %v1054 = vpack.c.b16 %v1051, %v1050
      %v1055 = vpack.c.b16 %v1053, %v1052
      %v1059 = vsel %vm272, %v1045, 0
      %v1062 = vsel %vm272, %v1044, 0
      %1064 = vmatprep.subr.bf16.mxu0 0
      %1065 = vmatpush1.bf16.msra.mxu0 %v1054
      %1066 = vmatprep.subr.bf16.mxu0 0
      %1067 = vmatpush1.bf16.msra.mxu0 %v1055
      %1068 = vmatprep.subr.bf16.mxu0 0
      %1069 = vmatpush1.bf16.msra.mxu0 0
      %1070 = vmatprep.subr.bf16.mxu0 0
      %1071 = vmatpush1.bf16.msra.mxu0 0
      %1072 = vmatprep.subr.bf16.mxu0 0
      %1073 = vmatpush1.bf16.msra.mxu0 0
      %1074 = vmatprep.subr.bf16.mxu0 0
      %1075 = vmatpush1.bf16.msra.mxu0 0
      %1076 = vmatprep.subr.bf16.mxu0 0
      %1077 = vmatpush1.bf16.msra.mxu0 0
      %1078 = vmatprep.subr.bf16.mxu0 0
      %1079 = vmatpush1.bf16.msra.mxu0 0
      %1080 = vmatprep.subr.bf16.mxu0 0
      %1081 = vmatpush1.bf16.msra.mxu0 0
      %1082 = vmatprep.subr.bf16.mxu0 0
      %1083 = vmatpush1.bf16.msra.mxu0 0
      %1084 = vmatprep.subr.bf16.mxu0 0
      %1085 = vmatpush1.bf16.msra.mxu0 0
      %1086 = vmatprep.subr.bf16.mxu0 0
      %1087 = vmatpush1.bf16.msra.mxu0 0
      %1088 = vmatprep.subr.bf16.mxu0 0
      %1089 = vmatpush1.bf16.msra.mxu0 0
      %1090 = vmatprep.subr.bf16.mxu0 0
      %1091 = vmatpush1.bf16.msra.mxu0 0
      %1092 = vmatprep.subr.bf16.mxu0 0
      %1093 = vmatpush1.bf16.msra.mxu0 0
      %1094 = vmatprep.subr.bf16.mxu0 0
      %1095 = vmatpush1.bf16.msra.mxu0 0
      %1096 = vmatprep.mubr.bf16.mxu0 0
      %1097 = vmatmul.mubr.bf16.gmra.mrb[0].mxu0 %v1059
      %v1098 = vpop.f32.mrb[0].mxu0
      %v1099 = vadd.f32 0.0, %v1098
      %v1100 = vpop.f32.mrb[0].mxu0
      %v1101 = vpop.f32.mrb[0].mxu0
      %v1102 = vadd.f32 0.0, %v1101
      %v1103 = vpop.f32.mrb[0].mxu0
      %1104 = vmatprep.mubr.bf16.mxu0 0
      %1105 = vmatmul.mubr.bf16.gmra.mrb[0].mxu0 %v1062
      %v1106 = vpop.f32.mrb[0].mxu0
      %v1107 = vadd.f32 0.0, %v1106
      %v1108 = vpop.f32.mrb[0].mxu0
      %v1109 = vpop.f32.mrb[0].mxu0
      %v1110 = vpop.f32.mrb[0].mxu0
      %1111 = vdwg.mxu0
      %v1112 = vadd.f32 %v1016, %v1099
      %v1113 = vadd.f32 %v1017, %v1102
      %v1114 = vadd.f32 %v1018, %v1107
      %v1115 = vld [vmem:[%s206 + $0x4] sm:$0x8]
      %s1116 = scalar_lea.vmem %s210, 160
      %v1117 = vld [vmem:[%s1116] sm:$0xf]
      %v1118 = vld [vmem:[%s1116 + $0x4] sm:$0xf]
      %v1119 = vld [vmem:[%s1116 + $0x8] sm:$0xf]
      %v1120 = vld [vmem:[%s1116 + $0xc] sm:$0xf]
      %v1122 = vunpack.c.l.b16 %v1115
      %v1123 = vpack.c.b16 %v674, %v1122
      %v1124 = vrot.slane %v1123, 3
      %v1125 = vrot.slane %v1027, 3
      %v1126 = vsel %vm586, %v1124, %v1125
      %v1131 = vunpack.c.l.b16 %v1117
      %v1132 = vunpack.c.l.b16 %v1118
      %v1133 = vunpack.c.l.b16 %v1119
      %v1134 = vunpack.c.l.b16 %v1120
      %v1135 = vpack.c.b16 %v1132, %v1131
      %v1136 = vpack.c.b16 %v1134, %v1133
      %v1140 = vsel %vm272, %v1126, 0
      %v1143 = vsel %vm272, %v1125, 0
      %1145 = vmatprep.subr.bf16.mxu0 0
      %1146 = vmatpush1.bf16.msra.mxu0 %v1135
      %1147 = vmatprep.subr.bf16.mxu0 0
      %1148 = vmatpush1.bf16.msra.mxu0 %v1136
      %1149 = vmatprep.subr.bf16.mxu0 0
      %1150 = vmatpush1.bf16.msra.mxu0 0
      %1151 = vmatprep.subr.bf16.mxu0 0
      %1152 = vmatpush1.bf16.msra.mxu0 0
      %1153 = vmatprep.subr.bf16.mxu0 0
      %1154 = vmatpush1.bf16.msra.mxu0 0
      %1155 = vmatprep.subr.bf16.mxu0 0
      %1156 = vmatpush1.bf16.msra.mxu0 0
      %1157 = vmatprep.subr.bf16.mxu0 0
      %1158 = vmatpush1.bf16.msra.mxu0 0
      %1159 = vmatprep.subr.bf16.mxu0 0
      %1160 = vmatpush1.bf16.msra.mxu0 0
      %1161 = vmatprep.subr.bf16.mxu0 0
      %1162 = vmatpush1.bf16.msra.mxu0 0
      %1163 = vmatprep.subr.bf16.mxu0 0
      %1164 = vmatpush1.bf16.msra.mxu0 0
      %1165 = vmatprep.subr.bf16.mxu0 0
      %1166 = vmatpush1.bf16.msra.mxu0 0
      %1167 = vmatprep.subr.bf16.mxu0 0
      %1168 = vmatpush1.bf16.msra.mxu0 0
      %1169 = vmatprep.subr.bf16.mxu0 0
      %1170 = vmatpush1.bf16.msra.mxu0 0
      %1171 = vmatprep.subr.bf16.mxu0 0
      %1172 = vmatpush1.bf16.msra.mxu0 0
      %1173 = vmatprep.subr.bf16.mxu0 0
      %1174 = vmatpush1.bf16.msra.mxu0 0
      %1175 = vmatprep.subr.bf16.mxu0 0
      %1176 = vmatpush1.bf16.msra.mxu0 0
      %1177 = vmatprep.mubr.bf16.mxu0 0
      %1178 = vmatmul.mubr.bf16.gmra.mrb[0].mxu0 %v1140
      %v1179 = vpop.f32.mrb[0].mxu0
      %v1180 = vadd.f32 0.0, %v1179
      %v1181 = vpop.f32.mrb[0].mxu0
      %v1182 = vpop.f32.mrb[0].mxu0
      %v1183 = vadd.f32 0.0, %v1182
      %v1184 = vpop.f32.mrb[0].mxu0
      %1185 = vmatprep.mubr.bf16.mxu0 0
      %1186 = vmatmul.mubr.bf16.gmra.mrb[0].mxu0 %v1143
      %v1187 = vpop.f32.mrb[0].mxu0
      %v1188 = vadd.f32 0.0, %v1187
      %v1189 = vpop.f32.mrb[0].mxu0
      %v1190 = vpop.f32.mrb[0].mxu0
      %v1191 = vpop.f32.mrb[0].mxu0
      %1192 = vdwg.mxu0
      %v1193 = vadd.f32 %v1112, %v1180
      %v1194 = vadd.f32 %v1113, %v1183
      %v1195 = vadd.f32 %v1114, %v1188
      %v1196 = vld [vmem:[%s206 + $0x4] sm:$0x8]
      %v1197 = vld [vmem:[%s206 + $0x8] sm:$0xf]
      %v1198 = vld [vmem:[%s206 + $0xc] sm:$0xf]
      %v1199 = vld [vmem:[%s206 + $0x10] sm:$0x1]
      %s1200 = scalar_lea.vmem %s210, 176
      %v1201 = vld [vmem:[%s1200] sm:$0xf]
      %v1202 = vld [vmem:[%s1200 + $0x4] sm:$0xf]
      %v1203 = vld [vmem:[%s1200 + $0x8] sm:$0xf]
      %v1204 = vld [vmem:[%s1200 + $0xc] sm:$0xf]
      %v1209 = vunpack.c.l.b16 %v1196
      %v1210 = vunpack.c.l.b16 %v1197
      %v1211 = vunpack.c.l.b16 %v1198
      %v1212 = vunpack.c.l.b16 %v1199
      %v1213 = vpack.c.b16 %v1210, %v1209
      %v1214 = vpack.c.b16 %v1212, %v1211
      %v1216 = vshrl.u32 %v1213, 16
      %v1218 = vrot.slane %v1216, 3
      %v1219 = vshll.u32 %v1213, 16
      %v1221 = vrot.slane %v1219, 4
      %v1222 = vor.u32 %v1218, %v1221
      %v1224 = vshrl.u32 %v1214, 16
      %v1226 = vrot.slane %v1224, 3
      %v1227 = vshll.u32 %v1214, 16
      %v1229 = vrot.slane %v1227, 4
      %v1230 = vor.u32 %v1226, %v1229
      %v1231 = vsel %vm678, %v1222, %v1230
      %v1236 = vunpack.c.l.b16 %v1201
      %v1237 = vunpack.c.l.b16 %v1202
      %v1238 = vunpack.c.l.b16 %v1203
      %v1239 = vunpack.c.l.b16 %v1204
      %v1240 = vpack.c.b16 %v1237, %v1236
      %v1241 = vpack.c.b16 %v1239, %v1238
      %v1245 = vsel %vm272, %v1231, 0
      %v1248 = vsel %vm272, %v1230, 0
      %1250 = vmatprep.subr.bf16.mxu0 0
      %1251 = vmatpush1.bf16.msra.mxu0 %v1240
      %1252 = vmatprep.subr.bf16.mxu0 0
      %1253 = vmatpush1.bf16.msra.mxu0 %v1241
      %1254 = vmatprep.subr.bf16.mxu0 0
      %1255 = vmatpush1.bf16.msra.mxu0 0
      %1256 = vmatprep.subr.bf16.mxu0 0
      %1257 = vmatpush1.bf16.msra.mxu0 0
      %1258 = vmatprep.subr.bf16.mxu0 0
      %1259 = vmatpush1.bf16.msra.mxu0 0
      %1260 = vmatprep.subr.bf16.mxu0 0
      %1261 = vmatpush1.bf16.msra.mxu0 0
      %1262 = vmatprep.subr.bf16.mxu0 0
      %1263 = vmatpush1.bf16.msra.mxu0 0
      %1264 = vmatprep.subr.bf16.mxu0 0
      %1265 = vmatpush1.bf16.msra.mxu0 0
      %1266 = vmatprep.subr.bf16.mxu0 0
      %1267 = vmatpush1.bf16.msra.mxu0 0
      %1268 = vmatprep.subr.bf16.mxu0 0
      %1269 = vmatpush1.bf16.msra.mxu0 0
      %1270 = vmatprep.subr.bf16.mxu0 0
      %1271 = vmatpush1.bf16.msra.mxu0 0
      %1272 = vmatprep.subr.bf16.mxu0 0
      %1273 = vmatpush1.bf16.msra.mxu0 0
      %1274 = vmatprep.subr.bf16.mxu0 0
      %1275 = vmatpush1.bf16.msra.mxu0 0
      %1276 = vmatprep.subr.bf16.mxu0 0
      %1277 = vmatpush1.bf16.msra.mxu0 0
      %1278 = vmatprep.subr.bf16.mxu0 0
      %1279 = vmatpush1.bf16.msra.mxu0 0
      %1280 = vmatprep.subr.bf16.mxu0 0
      %1281 = vmatpush1.bf16.msra.mxu0 0
      %1282 = vmatprep.mubr.bf16.mxu0 0
      %1283 = vmatmul.mubr.bf16.gmra.mrb[0].mxu0 %v1245
      %v1284 = vpop.f32.mrb[0].mxu0
      %v1285 = vadd.f32 0.0, %v1284
      %v1286 = vpop.f32.mrb[0].mxu0
      %v1287 = vpop.f32.mrb[0].mxu0
      %v1288 = vadd.f32 0.0, %v1287
      %v1289 = vpop.f32.mrb[0].mxu0
      %1290 = vmatprep.mubr.bf16.mxu0 0
      %1291 = vmatmul.mubr.bf16.gmra.mrb[0].mxu0 %v1248
      %v1292 = vpop.f32.mrb[0].mxu0
      %v1293 = vadd.f32 0.0, %v1292
      %v1294 = vpop.f32.mrb[0].mxu0
      %v1295 = vpop.f32.mrb[0].mxu0
      %v1296 = vpop.f32.mrb[0].mxu0
      %1297 = vdwg.mxu0
      %v1298 = vadd.f32 %v1193, %v1285
      %v1299 = vadd.f32 %v1194, %v1288
      %v1300 = vadd.f32 %v1195, %v1293
      %v1301 = vld [vmem:[%s206 + $0x8] sm:$0xe]
      %v1302 = vld [vmem:[%s206 + $0x10] sm:$0x3]
      %s1303 = scalar_lea.vmem %s210, 192
      %v1304 = vld [vmem:[%s1303] sm:$0xf]
      %v1305 = vld [vmem:[%s1303 + $0x4] sm:$0xf]
      %v1306 = vld [vmem:[%s1303 + $0x8] sm:$0xf]
      %v1307 = vld [vmem:[%s1303 + $0xc] sm:$0xf]
      %v1310 = vunpack.c.l.b16 %v1301
      %v1311 = vunpack.c.l.b16 %v1302
      %v1312 = vpack.c.b16 %v1211, %v1310
      %v1313 = vpack.c.b16 %v1311, %v1311
      %v1314 = vrot.slane %v1312, 1
      %v1315 = vrot.slane %v1313, 1
      %v1316 = vsel %vm404, %v1314, %v1315
      %v1321 = vunpack.c.l.b16 %v1304
      %v1322 = vunpack.c.l.b16 %v1305
      %v1323 = vunpack.c.l.b16 %v1306
      %v1324 = vunpack.c.l.b16 %v1307
      %v1325 = vpack.c.b16 %v1322, %v1321
      %v1326 = vpack.c.b16 %v1324, %v1323
      %v1330 = vsel %vm272, %v1316, 0
      %v1333 = vsel %vm272, %v1315, 0
      %1335 = vmatprep.subr.bf16.mxu0 0
      %1336 = vmatpush1.bf16.msra.mxu0 %v1325
      %1337 = vmatprep.subr.bf16.mxu0 0
      %1338 = vmatpush1.bf16.msra.mxu0 %v1326
      %1339 = vmatprep.subr.bf16.mxu0 0
      %1340 = vmatpush1.bf16.msra.mxu0 0
      %1341 = vmatprep.subr.bf16.mxu0 0
      %1342 = vmatpush1.bf16.msra.mxu0 0
      %1343 = vmatprep.subr.bf16.mxu0 0
      %1344 = vmatpush1.bf16.msra.mxu0 0
      %1345 = vmatprep.subr.bf16.mxu0 0
      %1346 = vmatpush1.bf16.msra.mxu0 0
      %1347 = vmatprep.subr.bf16.mxu0 0
      %1348 = vmatpush1.bf16.msra.mxu0 0
      %1349 = vmatprep.subr.bf16.mxu0 0
      %1350 = vmatpush1.bf16.msra.mxu0 0
      %1351 = vmatprep.subr.bf16.mxu0 0
      %1352 = vmatpush1.bf16.msra.mxu0 0
      %1353 = vmatprep.subr.bf16.mxu0 0
      %1354 = vmatpush1.bf16.msra.mxu0 0
      %1355 = vmatprep.subr.bf16.mxu0 0
      %1356 = vmatpush1.bf16.msra.mxu0 0
      %1357 = vmatprep.subr.bf16.mxu0 0
      %1358 = vmatpush1.bf16.msra.mxu0 0
      %1359 = vmatprep.subr.bf16.mxu0 0
      %1360 = vmatpush1.bf16.msra.mxu0 0
      %1361 = vmatprep.subr.bf16.mxu0 0
      %1362 = vmatpush1.bf16.msra.mxu0 0
      %1363 = vmatprep.subr.bf16.mxu0 0
      %1364 = vmatpush1.bf16.msra.mxu0 0
      %1365 = vmatprep.subr.bf16.mxu0 0
      %1366 = vmatpush1.bf16.msra.mxu0 0
      %1367 = vmatprep.mubr.bf16.mxu0 0
      %1368 = vmatmul.mubr.bf16.gmra.mrb[0].mxu0 %v1330
      %v1369 = vpop.f32.mrb[0].mxu0
      %v1370 = vadd.f32 0.0, %v1369
      %v1371 = vpop.f32.mrb[0].mxu0
      %v1372 = vpop.f32.mrb[0].mxu0
      %v1373 = vadd.f32 0.0, %v1372
      %v1374 = vpop.f32.mrb[0].mxu0
      %1375 = vmatprep.mubr.bf16.mxu0 0
      %1376 = vmatmul.mubr.bf16.gmra.mrb[0].mxu0 %v1333
      %v1377 = vpop.f32.mrb[0].mxu0
      %v1378 = vadd.f32 0.0, %v1377
      %v1379 = vpop.f32.mrb[0].mxu0
      %v1380 = vpop.f32.mrb[0].mxu0
      %v1381 = vpop.f32.mrb[0].mxu0
      %1382 = vdwg.mxu0
      %v1383 = vadd.f32 %v1298, %v1370
      %v1384 = vadd.f32 %v1299, %v1373
      %v1385 = vadd.f32 %v1300, %v1378
      %v1386 = vld [vmem:[%s206 + $0x10] sm:$0x7]
      %s1387 = scalar_lea.vmem %s210, 208
      %v1388 = vld [vmem:[%s1387] sm:$0xf]
      %v1389 = vld [vmem:[%s1387 + $0x4] sm:$0xf]
      %v1390 = vld [vmem:[%s1387 + $0x8] sm:$0xf]
      %v1391 = vld [vmem:[%s1387 + $0xc] sm:$0xf]
      %v1393 = vunpack.c.l.b16 %v1386
      %v1394 = vpack.c.b16 %v1393, %v1393
      %v1396 = vshrl.u32 %v1312, 16
      %v1398 = vrot.slane %v1396, 1
      %v1399 = vshll.u32 %v1312, 16
      %v1401 = vrot.slane %v1399, 2
      %v1402 = vor.u32 %v1398, %v1401
      %v1404 = vshrl.u32 %v1394, 16
      %v1406 = vrot.slane %v1404, 1
      %v1407 = vshll.u32 %v1394, 16
      %v1409 = vrot.slane %v1407, 2
      %v1410 = vor.u32 %v1406, %v1409
      %v1411 = vsel %vm486, %v1402, %v1410
      %v1416 = vunpack.c.l.b16 %v1388
      %v1417 = vunpack.c.l.b16 %v1389
      %v1418 = vunpack.c.l.b16 %v1390
      %v1419 = vunpack.c.l.b16 %v1391
      %v1420 = vpack.c.b16 %v1417, %v1416
      %v1421 = vpack.c.b16 %v1419, %v1418
      %v1425 = vsel %vm272, %v1411, 0
      %v1428 = vsel %vm272, %v1410, 0
      %1430 = vmatprep.subr.bf16.mxu0 0
      %1431 = vmatpush1.bf16.msra.mxu0 %v1420
      %1432 = vmatprep.subr.bf16.mxu0 0
      %1433 = vmatpush1.bf16.msra.mxu0 %v1421
      %1434 = vmatprep.subr.bf16.mxu0 0
      %1435 = vmatpush1.bf16.msra.mxu0 0
      %1436 = vmatprep.subr.bf16.mxu0 0
      %1437 = vmatpush1.bf16.msra.mxu0 0
      %1438 = vmatprep.subr.bf16.mxu0 0
      %1439 = vmatpush1.bf16.msra.mxu0 0
      %1440 = vmatprep.subr.bf16.mxu0 0
      %1441 = vmatpush1.bf16.msra.mxu0 0
      %1442 = vmatprep.subr.bf16.mxu0 0
      %1443 = vmatpush1.bf16.msra.mxu0 0
      %1444 = vmatprep.subr.bf16.mxu0 0
      %1445 = vmatpush1.bf16.msra.mxu0 0
      %1446 = vmatprep.subr.bf16.mxu0 0
      %1447 = vmatpush1.bf16.msra.mxu0 0
      %1448 = vmatprep.subr.bf16.mxu0 0
      %1449 = vmatpush1.bf16.msra.mxu0 0
      %1450 = vmatprep.subr.bf16.mxu0 0
      %1451 = vmatpush1.bf16.msra.mxu0 0
      %1452 = vmatprep.subr.bf16.mxu0 0
      %1453 = vmatpush1.bf16.msra.mxu0 0
      %1454 = vmatprep.subr.bf16.mxu0 0
      %1455 = vmatpush1.bf16.msra.mxu0 0
      %1456 = vmatprep.subr.bf16.mxu0 0
      %1457 = vmatpush1.bf16.msra.mxu0 0
      %1458 = vmatprep.subr.bf16.mxu0 0
      %1459 = vmatpush1.bf16.msra.mxu0 0
      %1460 = vmatprep.subr.bf16.mxu0 0
      %1461 = vmatpush1.bf16.msra.mxu0 0
      %1462 = vmatprep.mubr.bf16.mxu0 0
      %1463 = vmatmul.mubr.bf16.gmra.mrb[0].mxu0 %v1425
      %v1464 = vpop.f32.mrb[0].mxu0
      %v1465 = vadd.f32 0.0, %v1464
      %v1466 = vpop.f32.mrb[0].mxu0
      %v1467 = vpop.f32.mrb[0].mxu0
      %v1468 = vadd.f32 0.0, %v1467
      %v1469 = vpop.f32.mrb[0].mxu0
      %1470 = vmatprep.mubr.bf16.mxu0 0
      %1471 = vmatmul.mubr.bf16.gmra.mrb[0].mxu0 %v1428
      %v1472 = vpop.f32.mrb[0].mxu0
      %v1473 = vadd.f32 0.0, %v1472
      %v1474 = vpop.f32.mrb[0].mxu0
      %v1475 = vpop.f32.mrb[0].mxu0
      %v1476 = vpop.f32.mrb[0].mxu0
      %1477 = vdwg.mxu0
      %v1478 = vadd.f32 %v1383, %v1465
      %v1479 = vadd.f32 %v1384, %v1468
      %v1480 = vadd.f32 %v1385, %v1473
      %v1481 = vld [vmem:[%s206 + $0x8] sm:$0xc]
      %s1482 = scalar_lea.vmem %s210, 224
      %v1483 = vld [vmem:[%s1482] sm:$0xf]
      %v1484 = vld [vmem:[%s1482 + $0x4] sm:$0xf]
      %v1485 = vld [vmem:[%s1482 + $0x8] sm:$0xf]
      %v1486 = vld [vmem:[%s1482 + $0xc] sm:$0xf]
      %v1488 = vunpack.c.l.b16 %v1481
      %v1489 = vpack.c.b16 %v1211, %v1488
      %v1490 = vrot.slane %v1489, 2
      %v1491 = vrot.slane %v1394, 2
      %v1492 = vsel %vm946, %v1490, %v1491
      %v1497 = vunpack.c.l.b16 %v1483
      %v1498 = vunpack.c.l.b16 %v1484
      %v1499 = vunpack.c.l.b16 %v1485
      %v1500 = vunpack.c.l.b16 %v1486
      %v1501 = vpack.c.b16 %v1498, %v1497
      %v1502 = vpack.c.b16 %v1500, %v1499
      %v1506 = vsel %vm272, %v1492, 0
      %v1509 = vsel %vm272, %v1491, 0
      %1511 = vmatprep.subr.bf16.mxu0 0
      %1512 = vmatpush1.bf16.msra.mxu0 %v1501
      %1513 = vmatprep.subr.bf16.mxu0 0
      %1514 = vmatpush1.bf16.msra.mxu0 %v1502
      %1515 = vmatprep.subr.bf16.mxu0 0
      %1516 = vmatpush1.bf16.msra.mxu0 0
      %1517 = vmatprep.subr.bf16.mxu0 0
      %1518 = vmatpush1.bf16.msra.mxu0 0
      %1519 = vmatprep.subr.bf16.mxu0 0
      %1520 = vmatpush1.bf16.msra.mxu0 0
      %1521 = vmatprep.subr.bf16.mxu0 0
      %1522 = vmatpush1.bf16.msra.mxu0 0
      %1523 = vmatprep.subr.bf16.mxu0 0
      %1524 = vmatpush1.bf16.msra.mxu0 0
      %1525 = vmatprep.subr.bf16.mxu0 0
      %1526 = vmatpush1.bf16.msra.mxu0 0
      %1527 = vmatprep.subr.bf16.mxu0 0
      %1528 = vmatpush1.bf16.msra.mxu0 0
      %1529 = vmatprep.subr.bf16.mxu0 0
      %1530 = vmatpush1.bf16.msra.mxu0 0
      %1531 = vmatprep.subr.bf16.mxu0 0
      %1532 = vmatpush1.bf16.msra.mxu0 0
      %1533 = vmatprep.subr.bf16.mxu0 0
      %1534 = vmatpush1.bf16.msra.mxu0 0
      %1535 = vmatprep.subr.bf16.mxu0 0
      %1536 = vmatpush1.bf16.msra.mxu0 0
      %1537 = vmatprep.subr.bf16.mxu0 0
      %1538 = vmatpush1.bf16.msra.mxu0 0
      %1539 = vmatprep.subr.bf16.mxu0 0
      %1540 = vmatpush1.bf16.msra.mxu0 0
      %1541 = vmatprep.subr.bf16.mxu0 0
      %1542 = vmatpush1.bf16.msra.mxu0 0
      %1543 = vmatprep.mubr.bf16.mxu0 0
      %1544 = vmatmul.mubr.bf16.gmra.mrb[0].mxu0 %v1506
      %v1545 = vpop.f32.mrb[0].mxu0
      %v1546 = vadd.f32 0.0, %v1545
      %v1547 = vpop.f32.mrb[0].mxu0
      %v1548 = vpop.f32.mrb[0].mxu0
      %v1549 = vadd.f32 0.0, %v1548
      %v1550 = vpop.f32.mrb[0].mxu0
      %1551 = vmatprep.mubr.bf16.mxu0 0
      %1552 = vmatmul.mubr.bf16.gmra.mrb[0].mxu0 %v1509
      %v1553 = vpop.f32.mrb[0].mxu0
      %v1554 = vadd.f32 0.0, %v1553
      %v1555 = vpop.f32.mrb[0].mxu0
      %v1556 = vpop.f32.mrb[0].mxu0
      %v1557 = vpop.f32.mrb[0].mxu0
      %1558 = vdwg.mxu0
      %v1559 = vadd.f32 %v1478, %v1546
      %v1560 = vadd.f32 %v1479, %v1549
      %v1561 = vadd.f32 %v1480, %v1554
      %v1562 = vld [vmem:[%s206 + $0x10] sm:$0xf]
      %s1563 = scalar_lea.vmem %s210, 240
      %v1564 = vld [vmem:[%s1563] sm:$0xf]
      %v1565 = vld [vmem:[%s1563 + $0x4] sm:$0xf]
      %v1566 = vld [vmem:[%s1563 + $0x8] sm:$0xf]
      %v1567 = vld [vmem:[%s1563 + $0xc] sm:$0xf]
      %v1569 = vunpack.c.l.b16 %v1562
      %v1570 = vpack.c.b16 %v1569, %v1569
      %v1572 = vshrl.u32 %v1489, 16
      %v1574 = vrot.slane %v1572, 2
      %v1575 = vshll.u32 %v1489, 16
      %v1577 = vrot.slane %v1575, 3
      %v1578 = vor.u32 %v1574, %v1577
      %v1580 = vshrl.u32 %v1570, 16
      %v1582 = vrot.slane %v1580, 2
      %v1583 = vshll.u32 %v1570, 16
      %v1585 = vrot.slane %v1583, 3
      %v1586 = vor.u32 %v1582, %v1585
      %v1587 = vsel %vm1028, %v1578, %v1586
      %v1592 = vunpack.c.l.b16 %v1564
      %v1593 = vunpack.c.l.b16 %v1565
      %v1594 = vunpack.c.l.b16 %v1566
      %v1595 = vunpack.c.l.b16 %v1567
      %v1596 = vpack.c.b16 %v1593, %v1592
      %v1597 = vpack.c.b16 %v1595, %v1594
      %v1601 = vsel %vm272, %v1587, 0
      %v1604 = vsel %vm272, %v1586, 0
      %1606 = vmatprep.subr.bf16.mxu0 0
      %1607 = vmatpush1.bf16.msra.mxu0 %v1596
      %1608 = vmatprep.subr.bf16.mxu0 0
      %1609 = vmatpush1.bf16.msra.mxu0 %v1597
      %1610 = vmatprep.subr.bf16.mxu0 0
      %1611 = vmatpush1.bf16.msra.mxu0 0
      %1612 = vmatprep.subr.bf16.mxu0 0
      %1613 = vmatpush1.bf16.msra.mxu0 0
      %1614 = vmatprep.subr.bf16.mxu0 0
      %1615 = vmatpush1.bf16.msra.mxu0 0
      %1616 = vmatprep.subr.bf16.mxu0 0
      %1617 = vmatpush1.bf16.msra.mxu0 0
      %1618 = vmatprep.subr.bf16.mxu0 0
      %1619 = vmatpush1.bf16.msra.mxu0 0
      %1620 = vmatprep.subr.bf16.mxu0 0
      %1621 = vmatpush1.bf16.msra.mxu0 0
      %1622 = vmatprep.subr.bf16.mxu0 0
      %1623 = vmatpush1.bf16.msra.mxu0 0
      %1624 = vmatprep.subr.bf16.mxu0 0
      %1625 = vmatpush1.bf16.msra.mxu0 0
      %1626 = vmatprep.subr.bf16.mxu0 0
      %1627 = vmatpush1.bf16.msra.mxu0 0
      %1628 = vmatprep.subr.bf16.mxu0 0
      %1629 = vmatpush1.bf16.msra.mxu0 0
      %1630 = vmatprep.subr.bf16.mxu0 0
      %1631 = vmatpush1.bf16.msra.mxu0 0
      %1632 = vmatprep.subr.bf16.mxu0 0
      %1633 = vmatpush1.bf16.msra.mxu0 0
      %1634 = vmatprep.subr.bf16.mxu0 0
      %1635 = vmatpush1.bf16.msra.mxu0 0
      %1636 = vmatprep.subr.bf16.mxu0 0
      %1637 = vmatpush1.bf16.msra.mxu0 0
      %1638 = vmatprep.mubr.bf16.mxu0 0
      %1639 = vmatmul.mubr.bf16.gmra.mrb[0].mxu0 %v1601
      %v1640 = vpop.f32.mrb[0].mxu0
      %v1641 = vadd.f32 0.0, %v1640
      %v1642 = vpop.f32.mrb[0].mxu0
      %v1643 = vpop.f32.mrb[0].mxu0
      %v1644 = vadd.f32 0.0, %v1643
      %v1645 = vpop.f32.mrb[0].mxu0
      %1646 = vmatprep.mubr.bf16.mxu0 0
      %1647 = vmatmul.mubr.bf16.gmra.mrb[0].mxu0 %v1604
      %v1648 = vpop.f32.mrb[0].mxu0
      %v1649 = vadd.f32 0.0, %v1648
      %v1650 = vpop.f32.mrb[0].mxu0
      %v1651 = vpop.f32.mrb[0].mxu0
      %v1652 = vpop.f32.mrb[0].mxu0
      %1653 = vdwg.mxu0
      %v1654 = vadd.f32 %v1559, %v1641
      %v1655 = vadd.f32 %v1560, %v1644
      %v1656 = vadd.f32 %v1561, %v1649
      %v1657 = vld [vmem:[%s213] sm:$0x1]
      %v1659 = vlaneseq
      %v1660 = vshrl.u32 %v1659, 7
      %v1661 = vsub.s32 0, %v1660
      %v1662 = vrot.slane %v1657, %v1661
      %v1664 = vadd.f32 %v1654, %v1662
      %v1665 = vadd.f32 %v1655, %v1662
      %v1666 = vadd.f32 %v1656, %v1662
      %v1667 = vpack.c.bf16 %v1665, %v1664
      %v1668 = vpack.c.bf16 %v1666, %v1666
      %v1671 = vunpack.c.l.b16 %v1667
      %v1672 = vunpack.c.h.b16 %v1667
      %v1673 = vunpack.c.l.b16 %v1668
      %v1674 = vpack.c.b16 %v1671, %v1671
      %v1675 = vpack.c.b16 %v1672, %v1672
      %v1676 = vpack.c.b16 %v1673, %v1673
      %1680 = vst [vmem:[%s221] sm:$0xf] %v1674
      %1681 = vst [vmem:[%s221 + $0x4] sm:$0xf] %v1675
      %1682 = vst [vmem:[%s221 + $0x8] sm:$0x1] %v1676
      %p1683 = scmp.lt.s32.totalorder %s19, 1
      %s1684 = scalar_select %p1683, %s19, 1
      %p1685 = scmp.lt.s32.totalorder %s18, 0
      %s1686 = scalar_select %p1685, %s18, 0
      %s1687 = smul.addr %s1684, 3
      %s1688 = sadd.s32 %s1686, %s1687
      %s1689 = smul.addr %s1688, 4
      %s1690 = scalar_lea.vmem %s3, %s1689
      // Predicated region
      $region33: #{nlayer_discriminator_forward.13} parent=31 // pred_check
        %p1691 = pneg %p124
      $region34: #{nlayer_discriminator_forward.13} parent=31 // pred_check_branch
        %1693 = sbr.rel (%p1691) target = $region36
      $region35: #{nlayer_discriminator_forward.13} parent=31 // pred_region
        _
      $region36: #{nlayer_discriminator_forward.13} parent=31 // pred_fallthru
        _
    $region32: #{nlayer_discriminator_forward.13} parent=5 // pred_fallthru
      _
    %p1694 = scmp.le.s32.totalorder 2, %s9
    // Predicated region
    $region37: #{nlayer_discriminator_forward.13} parent=5 // pred_check
      %p1695 = pneg %p1694
    $region38: #{nlayer_discriminator_forward.13} parent=5 // pred_check_branch
      %1697 = sbr.rel (%p1695) target = $region40
    $region39: #{nlayer_discriminator_forward.13} parent=5 // pred_region
      %s1698 = ssub.s32 %s9, 2
      // Predicated region
      $region41: #{nlayer_discriminator_forward.13} parent=39 // pred_check
        %p1699 = pneg %p130
      $region42: #{nlayer_discriminator_forward.13} parent=39 // pred_check_branch
        %1701 = sbr.rel (%p1699) target = $region44
      $region43: #{nlayer_discriminator_forward.13} parent=39 // pred_region
        %p1702 = scmp.lt.s32.totalorder %s21, 1
        %s1703 = scalar_select %p1702, %s21, 1
        %p1704 = scmp.lt.s32.totalorder %s20, 0
        %s1705 = scalar_select %p1704, %s20, 0
        %s1706 = smul.addr %s1703, 3
        %s1707 = sadd.s32 %s1705, %s1706
        %s1708 = smul.addr %s1707, 4
        %s1709 = scalar_lea.vmem %s3, %s1708
      $region44: #{nlayer_discriminator_forward.13} parent=39 // pred_fallthru
        _
    $region40: #{nlayer_discriminator_forward.13} parent=5 // pred_fallthru
      _
  $region6: #{nlayer_discriminator_forward.13} parent=0 // loop_footer
    %s13 = sadd.s32 1, %s9
  $region7: #{nlayer_discriminator_forward.13} parent=0 // loop_footer_branch
    %8 = sbr.rel target = $region3
  $region8: #{nlayer_discriminator_forward.13} parent=0 // loop_exit
    _

// kernel: nlayer_discriminator_forward.15
$region0: #{nlayer_discriminator_forward.15}
  #allocation0 [shape = 'u32[]', space=smem, size = 0x4, offset = 0x4, fixed_abs, tag = 'smem constant byte address 0x4 - core index']
  #allocation1 [shape = 'u32[144,128]{1,0:T(1,128)}', space=vmem, size = 0x12000, scoped, tag = 'internal scratch']
  %s0 = inlined_call_operand.vmem [shape: bf16[2,30,64], index: 0, kind: input, shape index: {}]
  %s1 = inlined_call_operand.vmem [shape: bf16[16,64,128], index: 1, kind: input, shape index: {}]
  %s2 = inlined_call_operand.vmem [shape: f32[1,128], index: 2, kind: input, shape index: {}]
  %s3 = inlined_call_operand.vmem [shape: f32[2,10,128], index: 3, kind: output, shape index: {}]
  %s4 = sld [smem:[#allocation0]]
  $region45: #{nlayer_discriminator_forward.15} parent=0
    _
  %s6 = ssub.s32 1, %s4
  %s7 = scalar_select 0, %s6, %s4
  loop: start=0, step=1, limit=4
  $region2: #{nlayer_discriminator_forward.15} parent=0 // loop_pre_header
    _
  $region3: #{nlayer_discriminator_forward.15} parent=0 // loop_header
    %s9 = sphi 0, %s13
    %p10 = scmp.ge.s32.totalorder %s9, 4
    %s16 = sphi 0, %s28
    %s17 = sphi 0, %s24
    %s18 = sphi 0, %s16
    %s19 = sphi 0, %s17
    %s20 = sphi 0, %s18
    %s21 = sphi 0, %s19
    %s31 = sphi 0, %s33
    %s34 = sphi 0, %s31
    %s35 = sphi 0, %s34
    %s51 = sphi 0, %s35
    %s57 = sphi 0, %s59
    %s60 = sphi 0, %s57
    %s61 = sphi 0, %s60
    %s77 = sphi 0, %s61
    %s83 = sphi 0, %s85
    %s86 = sphi 0, %s83
    %s87 = sphi 0, %s86
    %s103 = sphi 0, %s87
    %s111 = sphi 0, %s113
    %s114 = sphi 0, %s111
    %s115 = sphi 0, %s114
    %s131 = sphi 0, %s115
  $region4: #{nlayer_discriminator_forward.15} parent=0 // loop_header_branch
    %12 = sbr.rel (%p10) target = $region8
  $region5: #{nlayer_discriminator_forward.15} parent=0 // loop_body
    %s14 = ssub.s32 %s9, 1
    %s15 = ssub.s32 %s9, 2
    %s22 = sadd.s32 1, %s17
    %p23 = scmp.ge.s32.totalorder %s22, 2
    %s24 = scalar_select %p23, 0, %s22
    %s25 = sadd.s32 1, %s16
    %s26 = scalar_select %p23, %s25, %s16
    %p27 = scmp.ge.s32.totalorder %s26, 1
    %s28 = scalar_select %p27, 0, %s26
    %s29 = ssub.s32 %s17, %s24
    %p30 = scmp.eq.s32.totalorder %s29, 0
    %s32 = sadd.s32 %s31, 1
    %s33 = scalar_select %p30, %s31, %s32
    %p36 = pneg %p30
    %p37 = scmp.eq.s32.totalorder %s9, 1
    %p38 = por %p36, %p37
    %p39 = scmp.ne.s32.totalorder %s31, %s34
    %p40 = scmp.eq.s32.totalorder %s9, 0
    %p41 = por %p39, %p40
    %p42 = scmp.ne.s32.totalorder %s31, %s34
    %p43 = scmp.eq.s32.totalorder %s14, 1
    %p44 = por %p42, %p43
    %p45 = scmp.ne.s32.totalorder %s34, %s35
    %p46 = scmp.eq.s32.totalorder %s14, 0
    %p47 = por %p45, %p46
    %p48 = scmp.ne.s32.totalorder %s34, %s35
    %p49 = scmp.eq.s32.totalorder %s15, 1
    %p50 = por %p48, %p49
    %p52 = scmp.ne.s32.totalorder %s35, %s51
    %p53 = scmp.eq.s32.totalorder %s15, 0
    %p54 = por %p52, %p53
    %s55 = ssub.s32 %s16, %s28
    %p56 = scmp.eq.s32.totalorder %s55, 0
    %s58 = sadd.s32 %s57, 1
    %s59 = scalar_select %p56, %s57, %s58
    %p62 = pneg %p56
    %p63 = scmp.eq.s32.totalorder %s9, 1
    %p64 = por %p62, %p63
    %p65 = scmp.ne.s32.totalorder %s57, %s60
    %p66 = scmp.eq.s32.totalorder %s9, 0
    %p67 = por %p65, %p66
    %p68 = scmp.ne.s32.totalorder %s57, %s60
    %p69 = scmp.eq.s32.totalorder %s14, 1
    %p70 = por %p68, %p69
    %p71 = scmp.ne.s32.totalorder %s60, %s61
    %p72 = scmp.eq.s32.totalorder %s14, 0
    %p73 = por %p71, %p72
    %p74 = scmp.ne.s32.totalorder %s60, %s61
    %p75 = scmp.eq.s32.totalorder %s15, 1
    %p76 = por %p74, %p75
    %p78 = scmp.ne.s32.totalorder %s61, %s77
    %p79 = scmp.eq.s32.totalorder %s15, 0
    %p80 = por %p78, %p79
    %s81 = ssub.s32 %s16, %s28
    %p82 = scmp.eq.s32.totalorder %s81, 0
    %s84 = sadd.s32 %s83, 1
    %s85 = scalar_select %p82, %s83, %s84
    %p88 = pneg %p82
    %p89 = scmp.eq.s32.totalorder %s9, 1
    %p90 = por %p88, %p89
    %p91 = scmp.ne.s32.totalorder %s83, %s86
    %p92 = scmp.eq.s32.totalorder %s9, 0
    %p93 = por %p91, %p92
    %p94 = scmp.ne.s32.totalorder %s83, %s86
    %p95 = scmp.eq.s32.totalorder %s14, 1
    %p96 = por %p94, %p95
    %p97 = scmp.ne.s32.totalorder %s86, %s87
    %p98 = scmp.eq.s32.totalorder %s14, 0
    %p99 = por %p97, %p98
    %p100 = scmp.ne.s32.totalorder %s86, %s87
    %p101 = scmp.eq.s32.totalorder %s15, 1
    %p102 = por %p100, %p101
    %p104 = scmp.ne.s32.totalorder %s87, %s103
    %p105 = scmp.eq.s32.totalorder %s15, 0
    %p106 = por %p104, %p105
    %s107 = ssub.s32 %s17, %s24
    %s108 = ssub.s32 %s16, %s28
    %s109 = sor.u32 %s107, %s108
    %p110 = scmp.eq.s32.totalorder %s109, 0
    %s112 = sadd.s32 %s111, 1
    %s113 = scalar_select %p110, %s111, %s112
    %p116 = pneg %p110
    %p117 = scmp.eq.s32.totalorder %s9, 1
    %p118 = por %p116, %p117
    %p119 = scmp.ne.s32.totalorder %s111, %s114
    %p120 = scmp.eq.s32.totalorder %s9, 0
    %p121 = por %p119, %p120
    %p122 = scmp.ne.s32.totalorder %s111, %s114
    %p123 = scmp.eq.s32.totalorder %s14, 1
    %p124 = por %p122, %p123
    %p125 = scmp.ne.s32.totalorder %s114, %s115
    %p126 = scmp.eq.s32.totalorder %s14, 0
    %p127 = por %p125, %p126
    %p128 = scmp.ne.s32.totalorder %s114, %s115
    %p129 = scmp.eq.s32.totalorder %s15, 1
    %p130 = por %p128, %p129
    %p132 = scmp.ne.s32.totalorder %s115, %s131
    %p133 = scmp.eq.s32.totalorder %s15, 0
    %p134 = por %p132, %p133
    %p135 = scmp.le.s32.totalorder 1, %s9
    %p136 = scmp.lt.s32.totalorder %s9, 3
    %p137 = pnand %p135, %p136
    %p138 = pneg %p137
    // Predicated region
    $region9: #{nlayer_discriminator_forward.15} parent=5 // pred_check
      _
    $region10: #{nlayer_discriminator_forward.15} parent=5 // pred_check_branch
      %140 = sbr.rel (%p137) target = $region12
    $region11: #{nlayer_discriminator_forward.15} parent=5 // pred_region
      %s141 = ssub.s32 %s9, 1
      // Predicated region
      $region13: #{nlayer_discriminator_forward.15} parent=11 // pred_check
        %p142 = pneg %p73
      $region14: #{nlayer_discriminator_forward.15} parent=11 // pred_check_branch
        %144 = sbr.rel (%p142) target = $region16
      $region15: #{nlayer_discriminator_forward.15} parent=11 // pred_region
        %p145 = scmp.lt.s32.totalorder %s18, 0
        %s146 = scalar_select %p145, %s18, 0
        %s147 = smul.addr %s146, 4
        %s148 = scalar_lea.vmem %s1, %s147
      $region16: #{nlayer_discriminator_forward.15} parent=11 // pred_fallthru
        _
      // Predicated region
      $region17: #{nlayer_discriminator_forward.15} parent=11 // pred_check
        %p149 = pneg %p99
      $region18: #{nlayer_discriminator_forward.15} parent=11 // pred_check_branch
        %151 = sbr.rel (%p149) target = $region20
      $region19: #{nlayer_discriminator_forward.15} parent=11 // pred_region
        %p152 = scmp.lt.s32.totalorder %s18, 0
        %s153 = scalar_select %p152, %s18, 0
        %s154 = scalar_lea.vmem %s2, %s153
      $region20: #{nlayer_discriminator_forward.15} parent=11 // pred_fallthru
        _
    $region12: #{nlayer_discriminator_forward.15} parent=5 // pred_fallthru
      _
    %p155 = scmp.lt.s32.totalorder %s9, 2
    // Predicated region
    $region21: #{nlayer_discriminator_forward.15} parent=5 // pred_check
      %p156 = pneg %p155
    $region22: #{nlayer_discriminator_forward.15} parent=5 // pred_check_branch
      %158 = sbr.rel (%p156) target = $region24
    $region23: #{nlayer_discriminator_forward.15} parent=5 // pred_region
      // Predicated region
      $region25: #{nlayer_discriminator_forward.15} parent=23 // pred_check
        %p159 = pneg %p41
      $region26: #{nlayer_discriminator_forward.15} parent=23 // pred_check_branch
        %161 = sbr.rel (%p159) target = $region28
      $region27: #{nlayer_discriminator_forward.15} parent=23 // pred_region
        %p162 = scmp.lt.s32.totalorder %s17, 1
        %s163 = scalar_select %p162, %s17, 1
        %s164 = smul.addr %s163, 4
        %s165 = smul.addr %s164, 4
        %s166 = scalar_lea.vmem %s0, %s165
      $region28: #{nlayer_discriminator_forward.15} parent=23 // pred_fallthru
        _
    $region24: #{nlayer_discriminator_forward.15} parent=5 // pred_fallthru
      _
    %p167 = scmp.le.s32.totalorder 1, %s9
    %p168 = scmp.lt.s32.totalorder %s9, 3
    %p169 = pnand %p167, %p168
    %p170 = pneg %p169
    // Predicated region
    $region29: #{nlayer_discriminator_forward.15} parent=5 // pred_check
      _
    $region30: #{nlayer_discriminator_forward.15} parent=5 // pred_check_branch
      %172 = sbr.rel (%p169) target = $region32
    $region31: #{nlayer_discriminator_forward.15} parent=5 // pred_region
      %s173 = ssub.s32 %s9, 1
      %p174 = scmp.lt.s32.totalorder %s19, 1
      %s175 = scalar_select %p174, %s19, 1
      %s176 = smul.addr %s175, 4
      %s177 = smul.addr %s176, 4
      %s178 = scalar_lea.vmem %s0, %s177
      %p179 = pneg %p47
      %p180 = pneg %p44
      %p181 = scmp.lt.s32.totalorder %s18, 0
      %s182 = scalar_select %p181, %s18, 0
      %s183 = smul.addr %s182, 4
      %s184 = scalar_lea.vmem %s1, %s183
      %p185 = pneg %p73
      %p186 = pneg %p70
      %p187 = scmp.lt.s32.totalorder %s18, 0
      %s188 = scalar_select %p187, %s18, 0
      %s189 = scalar_lea.vmem %s2, %s188
      %p190 = pneg %p99
      %p191 = pneg %p96
      %p192 = pneg %p127
      %p193 = pneg %p124
      %p194 = scmp.lt.s32.totalorder %s19, 1
      %s195 = scalar_select %p194, %s19, 1
      %p196 = scmp.lt.s32.totalorder %s18, 0
      %s197 = scalar_select %p196, %s18, 0
      %s198 = smul.addr %s195, 2
      %s199 = sadd.s32 %s197, %s198
      %s200 = smul.addr %s199, 8
      %s201 = scalar_lea.vmem %s3, %s200
      %p202 = scmp.lt.s32.totalorder %s19, 1
      %s203 = scalar_select %p202, %s19, 1
      %s204 = smul.addr %s203, 4
      %s205 = smul.addr %s204, 4
      %s206 = scalar_lea.vmem %s0, %s205
      %p207 = scmp.lt.s32.totalorder %s18, 0
      %s208 = scalar_select %p207, %s18, 0
      %s209 = smul.addr %s208, 4
      %s210 = scalar_lea.vmem %s1, %s209
      %p211 = scmp.lt.s32.totalorder %s18, 0
      %s212 = scalar_select %p211, %s18, 0
      %s213 = scalar_lea.vmem %s2, %s212
      %p214 = scmp.lt.s32.totalorder %s19, 1
      %s215 = scalar_select %p214, %s19, 1
      %p216 = scmp.lt.s32.totalorder %s18, 0
      %s217 = scalar_select %p216, %s18, 0
      %s218 = smul.addr %s215, 2
      %s219 = sadd.s32 %s217, %s218
      %s220 = smul.addr %s219, 8
      %s221 = scalar_lea.vmem %s3, %s220
      %v223 = vld [vmem:[%s206] sm:$0xf]
      %v224 = vld [vmem:[%s206 + $0x4] sm:$0x1]
      %v225 = vld [vmem:[%s210] sm:$0xf]
      %v226 = vld [vmem:[%s210 + $0x4] sm:$0xf]
      %v227 = vld [vmem:[%s210 + $0x8] sm:$0xf]
      %v228 = vld [vmem:[%s210 + $0xc] sm:$0xf]
      %v229 = vld [vmem:[%s210 + $0x10] sm:$0xf]
      %v230 = vld [vmem:[%s210 + $0x14] sm:$0xf]
      %v231 = vld [vmem:[%s210 + $0x18] sm:$0xf]
      %v232 = vld [vmem:[%s210 + $0x1c] sm:$0xf]
      %v233 = vld [vmem:[%s206 + $0x4] sm:$0x3]
      %s234 = scalar_lea.vmem %s210, 32
      %v235 = vld [vmem:[%s234] sm:$0xf]
      %v236 = vld [vmem:[%s234 + $0x4] sm:$0xf]
      %v237 = vld [vmem:[%s234 + $0x8] sm:$0xf]
      %v238 = vld [vmem:[%s234 + $0xc] sm:$0xf]
      %v239 = vld [vmem:[%s234 + $0x10] sm:$0xf]
      %v240 = vld [vmem:[%s234 + $0x14] sm:$0xf]
      %v241 = vld [vmem:[%s234 + $0x18] sm:$0xf]
      %v242 = vld [vmem:[%s234 + $0x1c] sm:$0xf]
      %v245 = vunpack.c.l.b16 %v223
      %v246 = vunpack.c.l.b16 %v233
      %v247 = vpack.c.b16 %v246, %v245
      %v249 = vshrl.u32 %v247, 16
      %v251 = vshll.u32 %v247, 16
      %v253 = vrot.slane %v251, 1
      %v254 = vor.u32 %v249, %v253
      %v263 = vunpack.c.l.b16 %v235
      %v264 = vunpack.c.l.b16 %v236
      %v265 = vunpack.c.l.b16 %v237
      %v266 = vunpack.c.l.b16 %v238
      %v267 = vunpack.c.l.b16 %v239
      %v268 = vunpack.c.l.b16 %v240
      %v269 = vunpack.c.l.b16 %v241
      %v270 = vunpack.c.l.b16 %v242
      %v271 = vpack.c.b16 %v264, %v263
      %v272 = vpack.c.b16 %v266, %v265
      %v273 = vpack.c.b16 %v268, %v267
      %v274 = vpack.c.b16 %v270, %v269
      %vm279 = vcmask 523264
      %v281 = vsel %vm279, %v254, 0
      %283 = vmatprep.subr.bf16.mxu0 0
      %284 = vmatpush1.bf16.msra.mxu0 %v271
      %285 = vmatprep.subr.bf16.mxu0 0
      %286 = vmatpush1.bf16.msra.mxu0 %v272
      %287 = vmatprep.subr.bf16.mxu0 0
      %288 = vmatpush1.bf16.msra.mxu0 %v273
      %289 = vmatprep.subr.bf16.mxu0 0
      %290 = vmatpush1.bf16.msra.mxu0 %v274
      %291 = vmatprep.subr.bf16.mxu0 0
      %292 = vmatpush1.bf16.msra.mxu0 0
      %293 = vmatprep.subr.bf16.mxu0 0
      %294 = vmatpush1.bf16.msra.mxu0 0
      %295 = vmatprep.subr.bf16.mxu0 0
      %296 = vmatpush1.bf16.msra.mxu0 0
      %297 = vmatprep.subr.bf16.mxu0 0
      %298 = vmatpush1.bf16.msra.mxu0 0
      %299 = vmatprep.subr.bf16.mxu0 0
      %300 = vmatpush1.bf16.msra.mxu0 0
      %301 = vmatprep.subr.bf16.mxu0 0
      %302 = vmatpush1.bf16.msra.mxu0 0
      %303 = vmatprep.subr.bf16.mxu0 0
      %304 = vmatpush1.bf16.msra.mxu0 0
      %305 = vmatprep.subr.bf16.mxu0 0
      %306 = vmatpush1.bf16.msra.mxu0 0
      %307 = vmatprep.subr.bf16.mxu0 0
      %308 = vmatpush1.bf16.msra.mxu0 0
      %309 = vmatprep.subr.bf16.mxu0 0
      %310 = vmatpush1.bf16.msra.mxu0 0
      %311 = vmatprep.subr.bf16.mxu0 0
      %312 = vmatpush1.bf16.msra.mxu0 0
      %313 = vmatprep.subr.bf16.mxu0 0
      %314 = vmatpush1.bf16.msra.mxu0 0
      %315 = vmatprep.mubr.bf16.mxu0 0
      %316 = vmatmul.mubr.bf16.gmra.mrb[0].mxu0 %v281
      %v317 = vpop.f32.mrb[0].mxu0
      %v318 = vadd.f32 0.0, %v317
      %v319 = vpop.f32.mrb[0].mxu0
      %v320 = vpop.f32.mrb[0].mxu0
      %v321 = vadd.f32 0.0, %v320
      %v322 = vpop.f32.mrb[0].mxu0
      %323 = vdwg.mxu0
      %v325 = vunpack.c.l.b16 %v224
      %v326 = vpack.c.b16 %v325, %v245
      %v335 = vunpack.c.l.b16 %v225
      %v336 = vunpack.c.l.b16 %v226
      %v337 = vunpack.c.l.b16 %v227
      %v338 = vunpack.c.l.b16 %v228
      %v339 = vunpack.c.l.b16 %v229
      %v340 = vunpack.c.l.b16 %v230
      %v341 = vunpack.c.l.b16 %v231
      %v342 = vunpack.c.l.b16 %v232
      %v343 = vpack.c.b16 %v336, %v335
      %v344 = vpack.c.b16 %v338, %v337
      %v345 = vpack.c.b16 %v340, %v339
      %v346 = vpack.c.b16 %v342, %v341
      %v352 = vsel %vm279, %v326, 0
      %354 = vmatprep.subr.bf16.mxu0 0
      %355 = vmatpush1.bf16.msra.mxu0 %v343
      %356 = vmatprep.subr.bf16.mxu0 0
      %357 = vmatpush1.bf16.msra.mxu0 %v344
      %358 = vmatprep.subr.bf16.mxu0 0
      %359 = vmatpush1.bf16.msra.mxu0 %v345
      %360 = vmatprep.subr.bf16.mxu0 0
      %361 = vmatpush1.bf16.msra.mxu0 %v346
      %362 = vmatprep.subr.bf16.mxu0 0
      %363 = vmatpush1.bf16.msra.mxu0 0
      %364 = vmatprep.subr.bf16.mxu0 0
      %365 = vmatpush1.bf16.msra.mxu0 0
      %366 = vmatprep.subr.bf16.mxu0 0
      %367 = vmatpush1.bf16.msra.mxu0 0
      %368 = vmatprep.subr.bf16.mxu0 0
      %369 = vmatpush1.bf16.msra.mxu0 0
      %370 = vmatprep.subr.bf16.mxu0 0
      %371 = vmatpush1.bf16.msra.mxu0 0
      %372 = vmatprep.subr.bf16.mxu0 0
      %373 = vmatpush1.bf16.msra.mxu0 0
      %374 = vmatprep.subr.bf16.mxu0 0
      %375 = vmatpush1.bf16.msra.mxu0 0
      %376 = vmatprep.subr.bf16.mxu0 0
      %377 = vmatpush1.bf16.msra.mxu0 0
      %378 = vmatprep.subr.bf16.mxu0 0
      %379 = vmatpush1.bf16.msra.mxu0 0
      %380 = vmatprep.subr.bf16.mxu0 0
      %381 = vmatpush1.bf16.msra.mxu0 0
      %382 = vmatprep.subr.bf16.mxu0 0
      %383 = vmatpush1.bf16.msra.mxu0 0
      %384 = vmatprep.subr.bf16.mxu0 0
      %385 = vmatpush1.bf16.msra.mxu0 0
      %386 = vmatprep.mubr.bf16.mxu0 0
      %387 = vmatmul.mubr.bf16.gmra.mrb[0].mxu0 %v352
      %v388 = vpop.f32.mrb[0].mxu0
      %v389 = vadd.f32 %v318, %v388
      %v390 = vpop.f32.mrb[0].mxu0
      %v391 = vpop.f32.mrb[0].mxu0
      %v392 = vadd.f32 %v321, %v391
      %v393 = vpop.f32.mrb[0].mxu0
      %394 = vdwg.mxu0
      %v395 = vld [vmem:[%s206] sm:$0xe]
      %s396 = scalar_lea.vmem %s210, 64
      %v397 = vld [vmem:[%s396] sm:$0xf]
      %v398 = vld [vmem:[%s396 + $0x4] sm:$0xf]
      %v399 = vld [vmem:[%s396 + $0x8] sm:$0xf]
      %v400 = vld [vmem:[%s396 + $0xc] sm:$0xf]
      %v401 = vld [vmem:[%s396 + $0x10] sm:$0xf]
      %v402 = vld [vmem:[%s396 + $0x14] sm:$0xf]
      %v403 = vld [vmem:[%s396 + $0x18] sm:$0xf]
      %v404 = vld [vmem:[%s396 + $0x1c] sm:$0xf]
      %v406 = vunpack.c.l.b16 %v395
      %v407 = vpack.c.b16 %v246, %v406
      %v408 = vrot.slane %v407, 1
      %v417 = vunpack.c.l.b16 %v397
      %v418 = vunpack.c.l.b16 %v398
      %v419 = vunpack.c.l.b16 %v399
      %v420 = vunpack.c.l.b16 %v400
      %v421 = vunpack.c.l.b16 %v401
      %v422 = vunpack.c.l.b16 %v402
      %v423 = vunpack.c.l.b16 %v403
      %v424 = vunpack.c.l.b16 %v404
      %v425 = vpack.c.b16 %v418, %v417
      %v426 = vpack.c.b16 %v420, %v419
      %v427 = vpack.c.b16 %v422, %v421
      %v428 = vpack.c.b16 %v424, %v423
      %v434 = vsel %vm279, %v408, 0
      %436 = vmatprep.subr.bf16.mxu0 0
      %437 = vmatpush1.bf16.msra.mxu0 %v425
      %438 = vmatprep.subr.bf16.mxu0 0
      %439 = vmatpush1.bf16.msra.mxu0 %v426
      %440 = vmatprep.subr.bf16.mxu0 0
      %441 = vmatpush1.bf16.msra.mxu0 %v427
      %442 = vmatprep.subr.bf16.mxu0 0
      %443 = vmatpush1.bf16.msra.mxu0 %v428
      %444 = vmatprep.subr.bf16.mxu0 0
      %445 = vmatpush1.bf16.msra.mxu0 0
      %446 = vmatprep.subr.bf16.mxu0 0
      %447 = vmatpush1.bf16.msra.mxu0 0
      %448 = vmatprep.subr.bf16.mxu0 0
      %449 = vmatpush1.bf16.msra.mxu0 0
      %450 = vmatprep.subr.bf16.mxu0 0
      %451 = vmatpush1.bf16.msra.mxu0 0
      %452 = vmatprep.subr.bf16.mxu0 0
      %453 = vmatpush1.bf16.msra.mxu0 0
      %454 = vmatprep.subr.bf16.mxu0 0
      %455 = vmatpush1.bf16.msra.mxu0 0
      %456 = vmatprep.subr.bf16.mxu0 0
      %457 = vmatpush1.bf16.msra.mxu0 0
      %458 = vmatprep.subr.bf16.mxu0 0
      %459 = vmatpush1.bf16.msra.mxu0 0
      %460 = vmatprep.subr.bf16.mxu0 0
      %461 = vmatpush1.bf16.msra.mxu0 0
      %462 = vmatprep.subr.bf16.mxu0 0
      %463 = vmatpush1.bf16.msra.mxu0 0
      %464 = vmatprep.subr.bf16.mxu0 0
      %465 = vmatpush1.bf16.msra.mxu0 0
      %466 = vmatprep.subr.bf16.mxu0 0
      %467 = vmatpush1.bf16.msra.mxu0 0
      %468 = vmatprep.mubr.bf16.mxu0 0
      %469 = vmatmul.mubr.bf16.gmra.mrb[0].mxu0 %v434
      %v470 = vpop.f32.mrb[0].mxu0
      %v471 = vadd.f32 0.0, %v470
      %v472 = vpop.f32.mrb[0].mxu0
      %v473 = vpop.f32.mrb[0].mxu0
      %v474 = vadd.f32 0.0, %v473
      %v475 = vpop.f32.mrb[0].mxu0
      %476 = vdwg.mxu0
      %v477 = vadd.f32 %v389, %v471
      %v478 = vadd.f32 %v392, %v474
      %v479 = vld [vmem:[%s206 + $0x4] sm:$0x7]
      %s480 = scalar_lea.vmem %s210, 96
      %v481 = vld [vmem:[%s480] sm:$0xf]
      %v482 = vld [vmem:[%s480 + $0x4] sm:$0xf]
      %v483 = vld [vmem:[%s480 + $0x8] sm:$0xf]
      %v484 = vld [vmem:[%s480 + $0xc] sm:$0xf]
      %v485 = vld [vmem:[%s480 + $0x10] sm:$0xf]
      %v486 = vld [vmem:[%s480 + $0x14] sm:$0xf]
      %v487 = vld [vmem:[%s480 + $0x18] sm:$0xf]
      %v488 = vld [vmem:[%s480 + $0x1c] sm:$0xf]
      %v490 = vunpack.c.l.b16 %v479
      %v491 = vpack.c.b16 %v490, %v406
      %v493 = vshrl.u32 %v491, 16
      %v495 = vrot.slane %v493, 1
      %v496 = vshll.u32 %v491, 16
      %v498 = vrot.slane %v496, 2
      %v499 = vor.u32 %v495, %v498
      %v508 = vunpack.c.l.b16 %v481
      %v509 = vunpack.c.l.b16 %v482
      %v510 = vunpack.c.l.b16 %v483
      %v511 = vunpack.c.l.b16 %v484
      %v512 = vunpack.c.l.b16 %v485
      %v513 = vunpack.c.l.b16 %v486
      %v514 = vunpack.c.l.b16 %v487
      %v515 = vunpack.c.l.b16 %v488
      %v516 = vpack.c.b16 %v509, %v508
      %v517 = vpack.c.b16 %v511, %v510
      %v518 = vpack.c.b16 %v513, %v512
      %v519 = vpack.c.b16 %v515, %v514
      %v525 = vsel %vm279, %v499, 0
      %527 = vmatprep.subr.bf16.mxu0 0
      %528 = vmatpush1.bf16.msra.mxu0 %v516
      %529 = vmatprep.subr.bf16.mxu0 0
      %530 = vmatpush1.bf16.msra.mxu0 %v517
      %531 = vmatprep.subr.bf16.mxu0 0
      %532 = vmatpush1.bf16.msra.mxu0 %v518
      %533 = vmatprep.subr.bf16.mxu0 0
      %534 = vmatpush1.bf16.msra.mxu0 %v519
      %535 = vmatprep.subr.bf16.mxu0 0
      %536 = vmatpush1.bf16.msra.mxu0 0
      %537 = vmatprep.subr.bf16.mxu0 0
      %538 = vmatpush1.bf16.msra.mxu0 0
      %539 = vmatprep.subr.bf16.mxu0 0
      %540 = vmatpush1.bf16.msra.mxu0 0
      %541 = vmatprep.subr.bf16.mxu0 0
      %542 = vmatpush1.bf16.msra.mxu0 0
      %543 = vmatprep.subr.bf16.mxu0 0
      %544 = vmatpush1.bf16.msra.mxu0 0
      %545 = vmatprep.subr.bf16.mxu0 0
      %546 = vmatpush1.bf16.msra.mxu0 0
      %547 = vmatprep.subr.bf16.mxu0 0
      %548 = vmatpush1.bf16.msra.mxu0 0
      %549 = vmatprep.subr.bf16.mxu0 0
      %550 = vmatpush1.bf16.msra.mxu0 0
      %551 = vmatprep.subr.bf16.mxu0 0
      %552 = vmatpush1.bf16.msra.mxu0 0
      %553 = vmatprep.subr.bf16.mxu0 0
      %554 = vmatpush1.bf16.msra.mxu0 0
      %555 = vmatprep.subr.bf16.mxu0 0
      %556 = vmatpush1.bf16.msra.mxu0 0
      %557 = vmatprep.subr.bf16.mxu0 0
      %558 = vmatpush1.bf16.msra.mxu0 0
      %559 = vmatprep.mubr.bf16.mxu0 0
      %560 = vmatmul.mubr.bf16.gmra.mrb[0].mxu0 %v525
      %v561 = vpop.f32.mrb[0].mxu0
      %v562 = vadd.f32 0.0, %v561
      %v563 = vpop.f32.mrb[0].mxu0
      %v564 = vpop.f32.mrb[0].mxu0
      %v565 = vadd.f32 0.0, %v564
      %v566 = vpop.f32.mrb[0].mxu0
      %567 = vdwg.mxu0
      %v568 = vadd.f32 %v477, %v562
      %v569 = vadd.f32 %v478, %v565
      %v570 = vld [vmem:[%s206] sm:$0xc]
      %v571 = vld [vmem:[%s206 + $0x4] sm:$0xf]
      %s572 = scalar_lea.vmem %s210, 128
      %v573 = vld [vmem:[%s572] sm:$0xf]
      %v574 = vld [vmem:[%s572 + $0x4] sm:$0xf]
      %v575 = vld [vmem:[%s572 + $0x8] sm:$0xf]
      %v576 = vld [vmem:[%s572 + $0xc] sm:$0xf]
      %v577 = vld [vmem:[%s572 + $0x10] sm:$0xf]
      %v578 = vld [vmem:[%s572 + $0x14] sm:$0xf]
      %v579 = vld [vmem:[%s572 + $0x18] sm:$0xf]
      %v580 = vld [vmem:[%s572 + $0x1c] sm:$0xf]
      %v583 = vunpack.c.l.b16 %v570
      %v584 = vunpack.c.l.b16 %v571
      %v585 = vpack.c.b16 %v584, %v583
      %v587 = vshrl.u32 %v585, 16
      %v589 = vrot.slane %v587, 2
      %v590 = vshll.u32 %v585, 16
      %v592 = vrot.slane %v590, 3
      %v593 = vor.u32 %v589, %v592
      %v602 = vunpack.c.l.b16 %v573
      %v603 = vunpack.c.l.b16 %v574
      %v604 = vunpack.c.l.b16 %v575
      %v605 = vunpack.c.l.b16 %v576
      %v606 = vunpack.c.l.b16 %v577
      %v607 = vunpack.c.l.b16 %v578
      %v608 = vunpack.c.l.b16 %v579
      %v609 = vunpack.c.l.b16 %v580
      %v610 = vpack.c.b16 %v603, %v602
      %v611 = vpack.c.b16 %v605, %v604
      %v612 = vpack.c.b16 %v607, %v606
      %v613 = vpack.c.b16 %v609, %v608
      %v619 = vsel %vm279, %v593, 0
      %621 = vmatprep.subr.bf16.mxu0 0
      %622 = vmatpush1.bf16.msra.mxu0 %v610
      %623 = vmatprep.subr.bf16.mxu0 0
      %624 = vmatpush1.bf16.msra.mxu0 %v611
      %625 = vmatprep.subr.bf16.mxu0 0
      %626 = vmatpush1.bf16.msra.mxu0 %v612
      %627 = vmatprep.subr.bf16.mxu0 0
      %628 = vmatpush1.bf16.msra.mxu0 %v613
      %629 = vmatprep.subr.bf16.mxu0 0
      %630 = vmatpush1.bf16.msra.mxu0 0
      %631 = vmatprep.subr.bf16.mxu0 0
      %632 = vmatpush1.bf16.msra.mxu0 0
      %633 = vmatprep.subr.bf16.mxu0 0
      %634 = vmatpush1.bf16.msra.mxu0 0
      %635 = vmatprep.subr.bf16.mxu0 0
      %636 = vmatpush1.bf16.msra.mxu0 0
      %637 = vmatprep.subr.bf16.mxu0 0
      %638 = vmatpush1.bf16.msra.mxu0 0
      %639 = vmatprep.subr.bf16.mxu0 0
      %640 = vmatpush1.bf16.msra.mxu0 0
      %641 = vmatprep.subr.bf16.mxu0 0
      %642 = vmatpush1.bf16.msra.mxu0 0
      %643 = vmatprep.subr.bf16.mxu0 0
      %644 = vmatpush1.bf16.msra.mxu0 0
      %645 = vmatprep.subr.bf16.mxu0 0
      %646 = vmatpush1.bf16.msra.mxu0 0
      %647 = vmatprep.subr.bf16.mxu0 0
      %648 = vmatpush1.bf16.msra.mxu0 0
      %649 = vmatprep.subr.bf16.mxu0 0
      %650 = vmatpush1.bf16.msra.mxu0 0
      %651 = vmatprep.subr.bf16.mxu0 0
      %652 = vmatpush1.bf16.msra.mxu0 0
      %653 = vmatprep.mubr.bf16.mxu0 0
      %654 = vmatmul.mubr.bf16.gmra.mrb[0].mxu0 %v619
      %v655 = vpop.f32.mrb[0].mxu0
      %v656 = vadd.f32 0.0, %v655
      %v657 = vpop.f32.mrb[0].mxu0
      %v658 = vpop.f32.mrb[0].mxu0
      %v659 = vadd.f32 0.0, %v658
      %v660 = vpop.f32.mrb[0].mxu0
      %661 = vdwg.mxu0
      %v662 = vadd.f32 %v568, %v656
      %v663 = vadd.f32 %v569, %v659
      %v664 = vld [vmem:[%s206] sm:$0x8]
      %s665 = scalar_lea.vmem %s210, 160
      %v666 = vld [vmem:[%s665] sm:$0xf]
      %v667 = vld [vmem:[%s665 + $0x4] sm:$0xf]
      %v668 = vld [vmem:[%s665 + $0x8] sm:$0xf]
      %v669 = vld [vmem:[%s665 + $0xc] sm:$0xf]
      %v670 = vld [vmem:[%s665 + $0x10] sm:$0xf]
      %v671 = vld [vmem:[%s665 + $0x14] sm:$0xf]
      %v672 = vld [vmem:[%s665 + $0x18] sm:$0xf]
      %v673 = vld [vmem:[%s665 + $0x1c] sm:$0xf]
      %v675 = vunpack.c.l.b16 %v664
      %v676 = vpack.c.b16 %v584, %v675
      %v677 = vrot.slane %v676, 3
      %v686 = vunpack.c.l.b16 %v666
      %v687 = vunpack.c.l.b16 %v667
      %v688 = vunpack.c.l.b16 %v668
      %v689 = vunpack.c.l.b16 %v669
      %v690 = vunpack.c.l.b16 %v670
      %v691 = vunpack.c.l.b16 %v671
      %v692 = vunpack.c.l.b16 %v672
      %v693 = vunpack.c.l.b16 %v673
      %v694 = vpack.c.b16 %v687, %v686
      %v695 = vpack.c.b16 %v689, %v688
      %v696 = vpack.c.b16 %v691, %v690
      %v697 = vpack.c.b16 %v693, %v692
      %v703 = vsel %vm279, %v677, 0
      %705 = vmatprep.subr.bf16.mxu0 0
      %706 = vmatpush1.bf16.msra.mxu0 %v694
      %707 = vmatprep.subr.bf16.mxu0 0
      %708 = vmatpush1.bf16.msra.mxu0 %v695
      %709 = vmatprep.subr.bf16.mxu0 0
      %710 = vmatpush1.bf16.msra.mxu0 %v696
      %711 = vmatprep.subr.bf16.mxu0 0
      %712 = vmatpush1.bf16.msra.mxu0 %v697
      %713 = vmatprep.subr.bf16.mxu0 0
      %714 = vmatpush1.bf16.msra.mxu0 0
      %715 = vmatprep.subr.bf16.mxu0 0
      %716 = vmatpush1.bf16.msra.mxu0 0
      %717 = vmatprep.subr.bf16.mxu0 0
      %718 = vmatpush1.bf16.msra.mxu0 0
      %719 = vmatprep.subr.bf16.mxu0 0
      %720 = vmatpush1.bf16.msra.mxu0 0
      %721 = vmatprep.subr.bf16.mxu0 0
      %722 = vmatpush1.bf16.msra.mxu0 0
      %723 = vmatprep.subr.bf16.mxu0 0
      %724 = vmatpush1.bf16.msra.mxu0 0
      %725 = vmatprep.subr.bf16.mxu0 0
      %726 = vmatpush1.bf16.msra.mxu0 0
      %727 = vmatprep.subr.bf16.mxu0 0
      %728 = vmatpush1.bf16.msra.mxu0 0
      %729 = vmatprep.subr.bf16.mxu0 0
      %730 = vmatpush1.bf16.msra.mxu0 0
      %731 = vmatprep.subr.bf16.mxu0 0
      %732 = vmatpush1.bf16.msra.mxu0 0
      %733 = vmatprep.subr.bf16.mxu0 0
      %734 = vmatpush1.bf16.msra.mxu0 0
      %735 = vmatprep.subr.bf16.mxu0 0
      %736 = vmatpush1.bf16.msra.mxu0 0
      %737 = vmatprep.mubr.bf16.mxu0 0
      %738 = vmatmul.mubr.bf16.gmra.mrb[0].mxu0 %v703
      %v739 = vpop.f32.mrb[0].mxu0
      %v740 = vadd.f32 0.0, %v739
      %v741 = vpop.f32.mrb[0].mxu0
      %v742 = vpop.f32.mrb[0].mxu0
      %v743 = vadd.f32 0.0, %v742
      %v744 = vpop.f32.mrb[0].mxu0
      %745 = vdwg.mxu0
      %v746 = vadd.f32 %v662, %v740
      %v747 = vadd.f32 %v663, %v743
      %v748 = vld [vmem:[%s206] sm:$0x8]
      %v749 = vld [vmem:[%s206 + $0x4] sm:$0xf]
      %v750 = vld [vmem:[%s206 + $0x8] sm:$0x1]
      %s751 = scalar_lea.vmem %s210, 192
      %v752 = vld [vmem:[%s751] sm:$0xf]
      %v753 = vld [vmem:[%s751 + $0x4] sm:$0xf]
      %v754 = vld [vmem:[%s751 + $0x8] sm:$0xf]
      %v755 = vld [vmem:[%s751 + $0xc] sm:$0xf]
      %v756 = vld [vmem:[%s751 + $0x10] sm:$0xf]
      %v757 = vld [vmem:[%s751 + $0x14] sm:$0xf]
      %v758 = vld [vmem:[%s751 + $0x18] sm:$0xf]
      %v759 = vld [vmem:[%s751 + $0x1c] sm:$0xf]
      %v763 = vunpack.c.l.b16 %v748
      %v764 = vunpack.c.l.b16 %v749
      %v765 = vunpack.c.l.b16 %v750
      %v766 = vpack.c.b16 %v764, %v763
      %v767 = vpack.c.b16 %v765, %v765
      %vm768 = vsmask.f32 4352
      %v770 = vshrl.u32 %v766, 16
      %v772 = vrot.slane %v770, 3
      %v773 = vshll.u32 %v766, 16
      %v775 = vrot.slane %v773, 4
      %v776 = vor.u32 %v772, %v775
      %v778 = vshll.u32 %v767, 16
      %v780 = vrot.slane %v778, 4
      %v781 = vsel %vm768, %v776, %v780
      %v790 = vunpack.c.l.b16 %v752
      %v791 = vunpack.c.l.b16 %v753
      %v792 = vunpack.c.l.b16 %v754
      %v793 = vunpack.c.l.b16 %v755
      %v794 = vunpack.c.l.b16 %v756
      %v795 = vunpack.c.l.b16 %v757
      %v796 = vunpack.c.l.b16 %v758
      %v797 = vunpack.c.l.b16 %v759
      %v798 = vpack.c.b16 %v791, %v790
      %v799 = vpack.c.b16 %v793, %v792
      %v800 = vpack.c.b16 %v795, %v794
      %v801 = vpack.c.b16 %v797, %v796
      %v807 = vsel %vm279, %v781, 0
      %809 = vmatprep.subr.bf16.mxu0 0
      %810 = vmatpush1.bf16.msra.mxu0 %v798
      %811 = vmatprep.subr.bf16.mxu0 0
      %812 = vmatpush1.bf16.msra.mxu0 %v799
      %813 = vmatprep.subr.bf16.mxu0 0
      %814 = vmatpush1.bf16.msra.mxu0 %v800
      %815 = vmatprep.subr.bf16.mxu0 0
      %816 = vmatpush1.bf16.msra.mxu0 %v801
      %817 = vmatprep.subr.bf16.mxu0 0
      %818 = vmatpush1.bf16.msra.mxu0 0
      %819 = vmatprep.subr.bf16.mxu0 0
      %820 = vmatpush1.bf16.msra.mxu0 0
      %821 = vmatprep.subr.bf16.mxu0 0
      %822 = vmatpush1.bf16.msra.mxu0 0
      %823 = vmatprep.subr.bf16.mxu0 0
      %824 = vmatpush1.bf16.msra.mxu0 0
      %825 = vmatprep.subr.bf16.mxu0 0
      %826 = vmatpush1.bf16.msra.mxu0 0
      %827 = vmatprep.subr.bf16.mxu0 0
      %828 = vmatpush1.bf16.msra.mxu0 0
      %829 = vmatprep.subr.bf16.mxu0 0
      %830 = vmatpush1.bf16.msra.mxu0 0
      %831 = vmatprep.subr.bf16.mxu0 0
      %832 = vmatpush1.bf16.msra.mxu0 0
      %833 = vmatprep.subr.bf16.mxu0 0
      %834 = vmatpush1.bf16.msra.mxu0 0
      %835 = vmatprep.subr.bf16.mxu0 0
      %836 = vmatpush1.bf16.msra.mxu0 0
      %837 = vmatprep.subr.bf16.mxu0 0
      %838 = vmatpush1.bf16.msra.mxu0 0
      %839 = vmatprep.subr.bf16.mxu0 0
      %840 = vmatpush1.bf16.msra.mxu0 0
      %841 = vmatprep.mubr.bf16.mxu0 0
      %842 = vmatmul.mubr.bf16.gmra.mrb[0].mxu0 %v807
      %v843 = vpop.f32.mrb[0].mxu0
      %v844 = vadd.f32 0.0, %v843
      %v845 = vpop.f32.mrb[0].mxu0
      %v846 = vpop.f32.mrb[0].mxu0
      %v847 = vadd.f32 0.0, %v846
      %v848 = vpop.f32.mrb[0].mxu0
      %849 = vdwg.mxu0
      %v850 = vadd.f32 %v746, %v844
      %v851 = vadd.f32 %v747, %v847
      %s852 = scalar_lea.vmem %s210, 224
      %v853 = vld [vmem:[%s852] sm:$0xf]
      %v854 = vld [vmem:[%s852 + $0x4] sm:$0xf]
      %v855 = vld [vmem:[%s852 + $0x8] sm:$0xf]
      %v856 = vld [vmem:[%s852 + $0xc] sm:$0xf]
      %v857 = vld [vmem:[%s852 + $0x10] sm:$0xf]
      %v858 = vld [vmem:[%s852 + $0x14] sm:$0xf]
      %v859 = vld [vmem:[%s852 + $0x18] sm:$0xf]
      %v860 = vld [vmem:[%s852 + $0x1c] sm:$0xf]
      %v861 = vpack.c.b16 %v765, %v764
      %v870 = vunpack.c.l.b16 %v853
      %v871 = vunpack.c.l.b16 %v854
      %v872 = vunpack.c.l.b16 %v855
      %v873 = vunpack.c.l.b16 %v856
      %v874 = vunpack.c.l.b16 %v857
      %v875 = vunpack.c.l.b16 %v858
      %v876 = vunpack.c.l.b16 %v859
      %v877 = vunpack.c.l.b16 %v860
      %v878 = vpack.c.b16 %v871, %v870
      %v879 = vpack.c.b16 %v873, %v872
      %v880 = vpack.c.b16 %v875, %v874
      %v881 = vpack.c.b16 %v877, %v876
      %v887 = vsel %vm279, %v861, 0
      %889 = vmatprep.subr.bf16.mxu0 0
      %890 = vmatpush1.bf16.msra.mxu0 %v878
      %891 = vmatprep.subr.bf16.mxu0 0
      %892 = vmatpush1.bf16.msra.mxu0 %v879
      %893 = vmatprep.subr.bf16.mxu0 0
      %894 = vmatpush1.bf16.msra.mxu0 %v880
      %895 = vmatprep.subr.bf16.mxu0 0
      %896 = vmatpush1.bf16.msra.mxu0 %v881
      %897 = vmatprep.subr.bf16.mxu0 0
      %898 = vmatpush1.bf16.msra.mxu0 0
      %899 = vmatprep.subr.bf16.mxu0 0
      %900 = vmatpush1.bf16.msra.mxu0 0
      %901 = vmatprep.subr.bf16.mxu0 0
      %902 = vmatpush1.bf16.msra.mxu0 0
      %903 = vmatprep.subr.bf16.mxu0 0
      %904 = vmatpush1.bf16.msra.mxu0 0
      %905 = vmatprep.subr.bf16.mxu0 0
      %906 = vmatpush1.bf16.msra.mxu0 0
      %907 = vmatprep.subr.bf16.mxu0 0
      %908 = vmatpush1.bf16.msra.mxu0 0
      %909 = vmatprep.subr.bf16.mxu0 0
      %910 = vmatpush1.bf16.msra.mxu0 0
      %911 = vmatprep.subr.bf16.mxu0 0
      %912 = vmatpush1.bf16.msra.mxu0 0
      %913 = vmatprep.subr.bf16.mxu0 0
      %914 = vmatpush1.bf16.msra.mxu0 0
      %915 = vmatprep.subr.bf16.mxu0 0
      %916 = vmatpush1.bf16.msra.mxu0 0
      %917 = vmatprep.subr.bf16.mxu0 0
      %918 = vmatpush1.bf16.msra.mxu0 0
      %919 = vmatprep.subr.bf16.mxu0 0
      %920 = vmatpush1.bf16.msra.mxu0 0
      %921 = vmatprep.mubr.bf16.mxu0 0
      %922 = vmatmul.mubr.bf16.gmra.mrb[0].mxu0 %v887
      %v923 = vpop.f32.mrb[0].mxu0
      %v924 = vadd.f32 0.0, %v923
      %v925 = vpop.f32.mrb[0].mxu0
      %v926 = vpop.f32.mrb[0].mxu0
      %v927 = vadd.f32 0.0, %v926
      %v928 = vpop.f32.mrb[0].mxu0
      %929 = vdwg.mxu0
      %v930 = vadd.f32 %v850, %v924
      %v931 = vadd.f32 %v851, %v927
      %v932 = vld [vmem:[%s206 + $0x4] sm:$0xe]
      %v933 = vld [vmem:[%s206 + $0x8] sm:$0x3]
      %s934 = scalar_lea.vmem %s210, 256
      %v935 = vld [vmem:[%s934] sm:$0xf]
      %v936 = vld [vmem:[%s934 + $0x4] sm:$0xf]
      %v937 = vld [vmem:[%s934 + $0x8] sm:$0xf]
      %v938 = vld [vmem:[%s934 + $0xc] sm:$0xf]
      %v939 = vld [vmem:[%s934 + $0x10] sm:$0xf]
      %v940 = vld [vmem:[%s934 + $0x14] sm:$0xf]
      %v941 = vld [vmem:[%s934 + $0x18] sm:$0xf]
      %v942 = vld [vmem:[%s934 + $0x1c] sm:$0xf]
      %v945 = vunpack.c.l.b16 %v932
      %v946 = vunpack.c.l.b16 %v933
      %v947 = vpack.c.b16 %v946, %v945
      %v948 = vrot.slane %v947, 1
      %v957 = vunpack.c.l.b16 %v935
      %v958 = vunpack.c.l.b16 %v936
      %v959 = vunpack.c.l.b16 %v937
      %v960 = vunpack.c.l.b16 %v938
      %v961 = vunpack.c.l.b16 %v939
      %v962 = vunpack.c.l.b16 %v940
      %v963 = vunpack.c.l.b16 %v941
      %v964 = vunpack.c.l.b16 %v942
      %v965 = vpack.c.b16 %v958, %v957
      %v966 = vpack.c.b16 %v960, %v959
      %v967 = vpack.c.b16 %v962, %v961
      %v968 = vpack.c.b16 %v964, %v963
      %v974 = vsel %vm279, %v948, 0
      %976 = vmatprep.subr.bf16.mxu0 0
      %977 = vmatpush1.bf16.msra.mxu0 %v965
      %978 = vmatprep.subr.bf16.mxu0 0
      %979 = vmatpush1.bf16.msra.mxu0 %v966
      %980 = vmatprep.subr.bf16.mxu0 0
      %981 = vmatpush1.bf16.msra.mxu0 %v967
      %982 = vmatprep.subr.bf16.mxu0 0
      %983 = vmatpush1.bf16.msra.mxu0 %v968
      %984 = vmatprep.subr.bf16.mxu0 0
      %985 = vmatpush1.bf16.msra.mxu0 0
      %986 = vmatprep.subr.bf16.mxu0 0
      %987 = vmatpush1.bf16.msra.mxu0 0
      %988 = vmatprep.subr.bf16.mxu0 0
      %989 = vmatpush1.bf16.msra.mxu0 0
      %990 = vmatprep.subr.bf16.mxu0 0
      %991 = vmatpush1.bf16.msra.mxu0 0
      %992 = vmatprep.subr.bf16.mxu0 0
      %993 = vmatpush1.bf16.msra.mxu0 0
      %994 = vmatprep.subr.bf16.mxu0 0
      %995 = vmatpush1.bf16.msra.mxu0 0
      %996 = vmatprep.subr.bf16.mxu0 0
      %997 = vmatpush1.bf16.msra.mxu0 0
      %998 = vmatprep.subr.bf16.mxu0 0
      %999 = vmatpush1.bf16.msra.mxu0 0
      %1000 = vmatprep.subr.bf16.mxu0 0
      %1001 = vmatpush1.bf16.msra.mxu0 0
      %1002 = vmatprep.subr.bf16.mxu0 0
      %1003 = vmatpush1.bf16.msra.mxu0 0
      %1004 = vmatprep.subr.bf16.mxu0 0
      %1005 = vmatpush1.bf16.msra.mxu0 0
      %1006 = vmatprep.subr.bf16.mxu0 0
      %1007 = vmatpush1.bf16.msra.mxu0 0
      %1008 = vmatprep.mubr.bf16.mxu0 0
      %1009 = vmatmul.mubr.bf16.gmra.mrb[0].mxu0 %v974
      %v1010 = vpop.f32.mrb[0].mxu0
      %v1011 = vadd.f32 0.0, %v1010
      %v1012 = vpop.f32.mrb[0].mxu0
      %v1013 = vpop.f32.mrb[0].mxu0
      %v1014 = vadd.f32 0.0, %v1013
      %v1015 = vpop.f32.mrb[0].mxu0
      %1016 = vdwg.mxu0
      %v1017 = vadd.f32 %v930, %v1011
      %v1018 = vadd.f32 %v931, %v1014
      %v1019 = vld [vmem:[%s206 + $0x8] sm:$0x7]
      %s1020 = scalar_lea.vmem %s210, 288
      %v1021 = vld [vmem:[%s1020] sm:$0xf]
      %v1022 = vld [vmem:[%s1020 + $0x4] sm:$0xf]
      %v1023 = vld [vmem:[%s1020 + $0x8] sm:$0xf]
      %v1024 = vld [vmem:[%s1020 + $0xc] sm:$0xf]
      %v1025 = vld [vmem:[%s1020 + $0x10] sm:$0xf]
      %v1026 = vld [vmem:[%s1020 + $0x14] sm:$0xf]
      %v1027 = vld [vmem:[%s1020 + $0x18] sm:$0xf]
      %v1028 = vld [vmem:[%s1020 + $0x1c] sm:$0xf]
      %v1030 = vunpack.c.l.b16 %v1019
      %v1031 = vpack.c.b16 %v1030, %v945
      %v1033 = vshrl.u32 %v1031, 16
      %v1035 = vrot.slane %v1033, 1
      %v1036 = vshll.u32 %v1031, 16
      %v1038 = vrot.slane %v1036, 2
      %v1039 = vor.u32 %v1035, %v1038
      %v1048 = vunpack.c.l.b16 %v1021
      %v1049 = vunpack.c.l.b16 %v1022
      %v1050 = vunpack.c.l.b16 %v1023
      %v1051 = vunpack.c.l.b16 %v1024
      %v1052 = vunpack.c.l.b16 %v1025
      %v1053 = vunpack.c.l.b16 %v1026
      %v1054 = vunpack.c.l.b16 %v1027
      %v1055 = vunpack.c.l.b16 %v1028
      %v1056 = vpack.c.b16 %v1049, %v1048
      %v1057 = vpack.c.b16 %v1051, %v1050
      %v1058 = vpack.c.b16 %v1053, %v1052
      %v1059 = vpack.c.b16 %v1055, %v1054
      %v1065 = vsel %vm279, %v1039, 0
      %1067 = vmatprep.subr.bf16.mxu0 0
      %1068 = vmatpush1.bf16.msra.mxu0 %v1056
      %1069 = vmatprep.subr.bf16.mxu0 0
      %1070 = vmatpush1.bf16.msra.mxu0 %v1057
      %1071 = vmatprep.subr.bf16.mxu0 0
      %1072 = vmatpush1.bf16.msra.mxu0 %v1058
      %1073 = vmatprep.subr.bf16.mxu0 0
      %1074 = vmatpush1.bf16.msra.mxu0 %v1059
      %1075 = vmatprep.subr.bf16.mxu0 0
      %1076 = vmatpush1.bf16.msra.mxu0 0
      %1077 = vmatprep.subr.bf16.mxu0 0
      %1078 = vmatpush1.bf16.msra.mxu0 0
      %1079 = vmatprep.subr.bf16.mxu0 0
      %1080 = vmatpush1.bf16.msra.mxu0 0
      %1081 = vmatprep.subr.bf16.mxu0 0
      %1082 = vmatpush1.bf16.msra.mxu0 0
      %1083 = vmatprep.subr.bf16.mxu0 0
      %1084 = vmatpush1.bf16.msra.mxu0 0
      %1085 = vmatprep.subr.bf16.mxu0 0
      %1086 = vmatpush1.bf16.msra.mxu0 0
      %1087 = vmatprep.subr.bf16.mxu0 0
      %1088 = vmatpush1.bf16.msra.mxu0 0
      %1089 = vmatprep.subr.bf16.mxu0 0
      %1090 = vmatpush1.bf16.msra.mxu0 0
      %1091 = vmatprep.subr.bf16.mxu0 0
      %1092 = vmatpush1.bf16.msra.mxu0 0
      %1093 = vmatprep.subr.bf16.mxu0 0
      %1094 = vmatpush1.bf16.msra.mxu0 0
      %1095 = vmatprep.subr.bf16.mxu0 0
      %1096 = vmatpush1.bf16.msra.mxu0 0
      %1097 = vmatprep.subr.bf16.mxu0 0
      %1098 = vmatpush1.bf16.msra.mxu0 0
      %1099 = vmatprep.mubr.bf16.mxu0 0
      %1100 = vmatmul.mubr.bf16.gmra.mrb[0].mxu0 %v1065
      %v1101 = vpop.f32.mrb[0].mxu0
      %v1102 = vadd.f32 0.0, %v1101
      %v1103 = vpop.f32.mrb[0].mxu0
      %v1104 = vpop.f32.mrb[0].mxu0
      %v1105 = vadd.f32 0.0, %v1104
      %v1106 = vpop.f32.mrb[0].mxu0
      %1107 = vdwg.mxu0
      %v1108 = vadd.f32 %v1017, %v1102
      %v1109 = vadd.f32 %v1018, %v1105
      %v1110 = vld [vmem:[%s206 + $0x4] sm:$0xc]
      %s1111 = scalar_lea.vmem %s210, 320
      %v1112 = vld [vmem:[%s1111] sm:$0xf]
      %v1113 = vld [vmem:[%s1111 + $0x4] sm:$0xf]
      %v1114 = vld [vmem:[%s1111 + $0x8] sm:$0xf]
      %v1115 = vld [vmem:[%s1111 + $0xc] sm:$0xf]
      %v1116 = vld [vmem:[%s1111 + $0x10] sm:$0xf]
      %v1117 = vld [vmem:[%s1111 + $0x14] sm:$0xf]
      %v1118 = vld [vmem:[%s1111 + $0x18] sm:$0xf]
      %v1119 = vld [vmem:[%s1111 + $0x1c] sm:$0xf]
      %v1121 = vunpack.c.l.b16 %v1110
      %v1122 = vpack.c.b16 %v1030, %v1121
      %v1123 = vrot.slane %v1122, 2
      %v1132 = vunpack.c.l.b16 %v1112
      %v1133 = vunpack.c.l.b16 %v1113
      %v1134 = vunpack.c.l.b16 %v1114
      %v1135 = vunpack.c.l.b16 %v1115
      %v1136 = vunpack.c.l.b16 %v1116
      %v1137 = vunpack.c.l.b16 %v1117
      %v1138 = vunpack.c.l.b16 %v1118
      %v1139 = vunpack.c.l.b16 %v1119
      %v1140 = vpack.c.b16 %v1133, %v1132
      %v1141 = vpack.c.b16 %v1135, %v1134
      %v1142 = vpack.c.b16 %v1137, %v1136
      %v1143 = vpack.c.b16 %v1139, %v1138
      %v1149 = vsel %vm279, %v1123, 0
      %1151 = vmatprep.subr.bf16.mxu0 0
      %1152 = vmatpush1.bf16.msra.mxu0 %v1140
      %1153 = vmatprep.subr.bf16.mxu0 0
      %1154 = vmatpush1.bf16.msra.mxu0 %v1141
      %1155 = vmatprep.subr.bf16.mxu0 0
      %1156 = vmatpush1.bf16.msra.mxu0 %v1142
      %1157 = vmatprep.subr.bf16.mxu0 0
      %1158 = vmatpush1.bf16.msra.mxu0 %v1143
      %1159 = vmatprep.subr.bf16.mxu0 0
      %1160 = vmatpush1.bf16.msra.mxu0 0
      %1161 = vmatprep.subr.bf16.mxu0 0
      %1162 = vmatpush1.bf16.msra.mxu0 0
      %1163 = vmatprep.subr.bf16.mxu0 0
      %1164 = vmatpush1.bf16.msra.mxu0 0
      %1165 = vmatprep.subr.bf16.mxu0 0
      %1166 = vmatpush1.bf16.msra.mxu0 0
      %1167 = vmatprep.subr.bf16.mxu0 0
      %1168 = vmatpush1.bf16.msra.mxu0 0
      %1169 = vmatprep.subr.bf16.mxu0 0
      %1170 = vmatpush1.bf16.msra.mxu0 0
      %1171 = vmatprep.subr.bf16.mxu0 0
      %1172 = vmatpush1.bf16.msra.mxu0 0
      %1173 = vmatprep.subr.bf16.mxu0 0
      %1174 = vmatpush1.bf16.msra.mxu0 0
      %1175 = vmatprep.subr.bf16.mxu0 0
      %1176 = vmatpush1.bf16.msra.mxu0 0
      %1177 = vmatprep.subr.bf16.mxu0 0
      %1178 = vmatpush1.bf16.msra.mxu0 0
      %1179 = vmatprep.subr.bf16.mxu0 0
      %1180 = vmatpush1.bf16.msra.mxu0 0
      %1181 = vmatprep.subr.bf16.mxu0 0
      %1182 = vmatpush1.bf16.msra.mxu0 0
      %1183 = vmatprep.mubr.bf16.mxu0 0
      %1184 = vmatmul.mubr.bf16.gmra.mrb[0].mxu0 %v1149
      %v1185 = vpop.f32.mrb[0].mxu0
      %v1186 = vadd.f32 0.0, %v1185
      %v1187 = vpop.f32.mrb[0].mxu0
      %v1188 = vpop.f32.mrb[0].mxu0
      %v1189 = vadd.f32 0.0, %v1188
      %v1190 = vpop.f32.mrb[0].mxu0
      %1191 = vdwg.mxu0
      %v1192 = vadd.f32 %v1108, %v1186
      %v1193 = vadd.f32 %v1109, %v1189
      %v1194 = vld [vmem:[%s206 + $0x8] sm:$0xf]
      %s1195 = scalar_lea.vmem %s210, 352
      %v1196 = vld [vmem:[%s1195] sm:$0xf]
      %v1197 = vld [vmem:[%s1195 + $0x4] sm:$0xf]
      %v1198 = vld [vmem:[%s1195 + $0x8] sm:$0xf]
      %v1199 = vld [vmem:[%s1195 + $0xc] sm:$0xf]
      %v1200 = vld [vmem:[%s1195 + $0x10] sm:$0xf]
      %v1201 = vld [vmem:[%s1195 + $0x14] sm:$0xf]
      %v1202 = vld [vmem:[%s1195 + $0x18] sm:$0xf]
      %v1203 = vld [vmem:[%s1195 + $0x1c] sm:$0xf]
      %v1205 = vunpack.c.l.b16 %v1194
      %v1206 = vpack.c.b16 %v1205, %v1121
      %v1208 = vshrl.u32 %v1206, 16
      %v1210 = vrot.slane %v1208, 2
      %v1211 = vshll.u32 %v1206, 16
      %v1213 = vrot.slane %v1211, 3
      %v1214 = vor.u32 %v1210, %v1213
      %v1223 = vunpack.c.l.b16 %v1196
      %v1224 = vunpack.c.l.b16 %v1197
      %v1225 = vunpack.c.l.b16 %v1198
      %v1226 = vunpack.c.l.b16 %v1199
      %v1227 = vunpack.c.l.b16 %v1200
      %v1228 = vunpack.c.l.b16 %v1201
      %v1229 = vunpack.c.l.b16 %v1202
      %v1230 = vunpack.c.l.b16 %v1203
      %v1231 = vpack.c.b16 %v1224, %v1223
      %v1232 = vpack.c.b16 %v1226, %v1225
      %v1233 = vpack.c.b16 %v1228, %v1227
      %v1234 = vpack.c.b16 %v1230, %v1229
      %v1240 = vsel %vm279, %v1214, 0
      %1242 = vmatprep.subr.bf16.mxu0 0
      %1243 = vmatpush1.bf16.msra.mxu0 %v1231
      %1244 = vmatprep.subr.bf16.mxu0 0
      %1245 = vmatpush1.bf16.msra.mxu0 %v1232
      %1246 = vmatprep.subr.bf16.mxu0 0
      %1247 = vmatpush1.bf16.msra.mxu0 %v1233
      %1248 = vmatprep.subr.bf16.mxu0 0
      %1249 = vmatpush1.bf16.msra.mxu0 %v1234
      %1250 = vmatprep.subr.bf16.mxu0 0
      %1251 = vmatpush1.bf16.msra.mxu0 0
      %1252 = vmatprep.subr.bf16.mxu0 0
      %1253 = vmatpush1.bf16.msra.mxu0 0
      %1254 = vmatprep.subr.bf16.mxu0 0
      %1255 = vmatpush1.bf16.msra.mxu0 0
      %1256 = vmatprep.subr.bf16.mxu0 0
      %1257 = vmatpush1.bf16.msra.mxu0 0
      %1258 = vmatprep.subr.bf16.mxu0 0
      %1259 = vmatpush1.bf16.msra.mxu0 0
      %1260 = vmatprep.subr.bf16.mxu0 0
      %1261 = vmatpush1.bf16.msra.mxu0 0
      %1262 = vmatprep.subr.bf16.mxu0 0
      %1263 = vmatpush1.bf16.msra.mxu0 0
      %1264 = vmatprep.subr.bf16.mxu0 0
      %1265 = vmatpush1.bf16.msra.mxu0 0
      %1266 = vmatprep.subr.bf16.mxu0 0
      %1267 = vmatpush1.bf16.msra.mxu0 0
      %1268 = vmatprep.subr.bf16.mxu0 0
      %1269 = vmatpush1.bf16.msra.mxu0 0
      %1270 = vmatprep.subr.bf16.mxu0 0
      %1271 = vmatpush1.bf16.msra.mxu0 0
      %1272 = vmatprep.subr.bf16.mxu0 0
      %1273 = vmatpush1.bf16.msra.mxu0 0
      %1274 = vmatprep.mubr.bf16.mxu0 0
      %1275 = vmatmul.mubr.bf16.gmra.mrb[0].mxu0 %v1240
      %v1276 = vpop.f32.mrb[0].mxu0
      %v1277 = vadd.f32 0.0, %v1276
      %v1278 = vpop.f32.mrb[0].mxu0
      %v1279 = vpop.f32.mrb[0].mxu0
      %v1280 = vadd.f32 0.0, %v1279
      %v1281 = vpop.f32.mrb[0].mxu0
      %1282 = vdwg.mxu0
      %v1283 = vadd.f32 %v1192, %v1277
      %v1284 = vadd.f32 %v1193, %v1280
      %v1285 = vld [vmem:[%s206 + $0x4] sm:$0x8]
      %v1286 = vld [vmem:[%s206 + $0x8] sm:$0xf]
      %v1287 = vld [vmem:[%s206 + $0xc] sm:$0x1]
      %s1288 = scalar_lea.vmem %s210, 384
      %v1289 = vld [vmem:[%s1288] sm:$0xf]
      %v1290 = vld [vmem:[%s1288 + $0x4] sm:$0xf]
      %v1291 = vld [vmem:[%s1288 + $0x8] sm:$0xf]
      %v1292 = vld [vmem:[%s1288 + $0xc] sm:$0xf]
      %v1293 = vld [vmem:[%s1288 + $0x10] sm:$0xf]
      %v1294 = vld [vmem:[%s1288 + $0x14] sm:$0xf]
      %v1295 = vld [vmem:[%s1288 + $0x18] sm:$0xf]
      %v1296 = vld [vmem:[%s1288 + $0x1c] sm:$0xf]
      %v1300 = vunpack.c.l.b16 %v1285
      %v1301 = vunpack.c.l.b16 %v1286
      %v1302 = vunpack.c.l.b16 %v1287
      %v1303 = vpack.c.b16 %v1301, %v1300
      %v1304 = vpack.c.b16 %v1302, %v1302
      %v1306 = vshrl.u32 %v1303, 16
      %v1308 = vrot.slane %v1306, 3
      %v1309 = vshll.u32 %v1303, 16
      %v1311 = vrot.slane %v1309, 4
      %v1312 = vor.u32 %v1308, %v1311
      %v1314 = vshll.u32 %v1304, 16
      %v1316 = vrot.slane %v1314, 4
      %v1317 = vsel %vm768, %v1312, %v1316
      %v1326 = vunpack.c.l.b16 %v1289
      %v1327 = vunpack.c.l.b16 %v1290
      %v1328 = vunpack.c.l.b16 %v1291
      %v1329 = vunpack.c.l.b16 %v1292
      %v1330 = vunpack.c.l.b16 %v1293
      %v1331 = vunpack.c.l.b16 %v1294
      %v1332 = vunpack.c.l.b16 %v1295
      %v1333 = vunpack.c.l.b16 %v1296
      %v1334 = vpack.c.b16 %v1327, %v1326
      %v1335 = vpack.c.b16 %v1329, %v1328
      %v1336 = vpack.c.b16 %v1331, %v1330
      %v1337 = vpack.c.b16 %v1333, %v1332
      %v1343 = vsel %vm279, %v1317, 0
      %1345 = vmatprep.subr.bf16.mxu0 0
      %1346 = vmatpush1.bf16.msra.mxu0 %v1334
      %1347 = vmatprep.subr.bf16.mxu0 0
      %1348 = vmatpush1.bf16.msra.mxu0 %v1335
      %1349 = vmatprep.subr.bf16.mxu0 0
      %1350 = vmatpush1.bf16.msra.mxu0 %v1336
      %1351 = vmatprep.subr.bf16.mxu0 0
      %1352 = vmatpush1.bf16.msra.mxu0 %v1337
      %1353 = vmatprep.subr.bf16.mxu0 0
      %1354 = vmatpush1.bf16.msra.mxu0 0
      %1355 = vmatprep.subr.bf16.mxu0 0
      %1356 = vmatpush1.bf16.msra.mxu0 0
      %1357 = vmatprep.subr.bf16.mxu0 0
      %1358 = vmatpush1.bf16.msra.mxu0 0
      %1359 = vmatprep.subr.bf16.mxu0 0
      %1360 = vmatpush1.bf16.msra.mxu0 0
      %1361 = vmatprep.subr.bf16.mxu0 0
      %1362 = vmatpush1.bf16.msra.mxu0 0
      %1363 = vmatprep.subr.bf16.mxu0 0
      %1364 = vmatpush1.bf16.msra.mxu0 0
      %1365 = vmatprep.subr.bf16.mxu0 0
      %1366 = vmatpush1.bf16.msra.mxu0 0
      %1367 = vmatprep.subr.bf16.mxu0 0
      %1368 = vmatpush1.bf16.msra.mxu0 0
      %1369 = vmatprep.subr.bf16.mxu0 0
      %1370 = vmatpush1.bf16.msra.mxu0 0
      %1371 = vmatprep.subr.bf16.mxu0 0
      %1372 = vmatpush1.bf16.msra.mxu0 0
      %1373 = vmatprep.subr.bf16.mxu0 0
      %1374 = vmatpush1.bf16.msra.mxu0 0
      %1375 = vmatprep.subr.bf16.mxu0 0
      %1376 = vmatpush1.bf16.msra.mxu0 0
      %1377 = vmatprep.mubr.bf16.mxu0 0
      %1378 = vmatmul.mubr.bf16.gmra.mrb[0].mxu0 %v1343
      %v1379 = vpop.f32.mrb[0].mxu0
      %v1380 = vadd.f32 0.0, %v1379
      %v1381 = vpop.f32.mrb[0].mxu0
      %v1382 = vpop.f32.mrb[0].mxu0
      %v1383 = vadd.f32 0.0, %v1382
      %v1384 = vpop.f32.mrb[0].mxu0
      %1385 = vdwg.mxu0
      %v1386 = vadd.f32 %v1283, %v1380
      %v1387 = vadd.f32 %v1284, %v1383
      %s1388 = scalar_lea.vmem %s210, 416
      %v1389 = vld [vmem:[%s1388] sm:$0xf]
      %v1390 = vld [vmem:[%s1388 + $0x4] sm:$0xf]
      %v1391 = vld [vmem:[%s1388 + $0x8] sm:$0xf]
      %v1392 = vld [vmem:[%s1388 + $0xc] sm:$0xf]
      %v1393 = vld [vmem:[%s1388 + $0x10] sm:$0xf]
      %v1394 = vld [vmem:[%s1388 + $0x14] sm:$0xf]
      %v1395 = vld [vmem:[%s1388 + $0x18] sm:$0xf]
      %v1396 = vld [vmem:[%s1388 + $0x1c] sm:$0xf]
      %v1397 = vpack.c.b16 %v1302, %v1301
      %v1406 = vunpack.c.l.b16 %v1389
      %v1407 = vunpack.c.l.b16 %v1390
      %v1408 = vunpack.c.l.b16 %v1391
      %v1409 = vunpack.c.l.b16 %v1392
      %v1410 = vunpack.c.l.b16 %v1393
      %v1411 = vunpack.c.l.b16 %v1394
      %v1412 = vunpack.c.l.b16 %v1395
      %v1413 = vunpack.c.l.b16 %v1396
      %v1414 = vpack.c.b16 %v1407, %v1406
      %v1415 = vpack.c.b16 %v1409, %v1408
      %v1416 = vpack.c.b16 %v1411, %v1410
      %v1417 = vpack.c.b16 %v1413, %v1412
      %v1423 = vsel %vm279, %v1397, 0
      %1425 = vmatprep.subr.bf16.mxu0 0
      %1426 = vmatpush1.bf16.msra.mxu0 %v1414
      %1427 = vmatprep.subr.bf16.mxu0 0
      %1428 = vmatpush1.bf16.msra.mxu0 %v1415
      %1429 = vmatprep.subr.bf16.mxu0 0
      %1430 = vmatpush1.bf16.msra.mxu0 %v1416
      %1431 = vmatprep.subr.bf16.mxu0 0
      %1432 = vmatpush1.bf16.msra.mxu0 %v1417
      %1433 = vmatprep.subr.bf16.mxu0 0
      %1434 = vmatpush1.bf16.msra.mxu0 0
      %1435 = vmatprep.subr.bf16.mxu0 0
      %1436 = vmatpush1.bf16.msra.mxu0 0
      %1437 = vmatprep.subr.bf16.mxu0 0
      %1438 = vmatpush1.bf16.msra.mxu0 0
      %1439 = vmatprep.subr.bf16.mxu0 0
      %1440 = vmatpush1.bf16.msra.mxu0 0
      %1441 = vmatprep.subr.bf16.mxu0 0
      %1442 = vmatpush1.bf16.msra.mxu0 0
      %1443 = vmatprep.subr.bf16.mxu0 0
      %1444 = vmatpush1.bf16.msra.mxu0 0
      %1445 = vmatprep.subr.bf16.mxu0 0
      %1446 = vmatpush1.bf16.msra.mxu0 0
      %1447 = vmatprep.subr.bf16.mxu0 0
      %1448 = vmatpush1.bf16.msra.mxu0 0
      %1449 = vmatprep.subr.bf16.mxu0 0
      %1450 = vmatpush1.bf16.msra.mxu0 0
      %1451 = vmatprep.subr.bf16.mxu0 0
      %1452 = vmatpush1.bf16.msra.mxu0 0
      %1453 = vmatprep.subr.bf16.mxu0 0
      %1454 = vmatpush1.bf16.msra.mxu0 0
      %1455 = vmatprep.subr.bf16.mxu0 0
      %1456 = vmatpush1.bf16.msra.mxu0 0
      %1457 = vmatprep.mubr.bf16.mxu0 0
      %1458 = vmatmul.mubr.bf16.gmra.mrb[0].mxu0 %v1423
      %v1459 = vpop.f32.mrb[0].mxu0
      %v1460 = vadd.f32 0.0, %v1459
      %v1461 = vpop.f32.mrb[0].mxu0
      %v1462 = vpop.f32.mrb[0].mxu0
      %v1463 = vadd.f32 0.0, %v1462
      %v1464 = vpop.f32.mrb[0].mxu0
      %1465 = vdwg.mxu0
      %v1466 = vadd.f32 %v1386, %v1460
      %v1467 = vadd.f32 %v1387, %v1463
      %v1468 = vld [vmem:[%s206 + $0xc] sm:$0x3]
      %s1469 = scalar_lea.vmem %s210, 448
      %v1470 = vld [vmem:[%s1469] sm:$0xf]
      %v1471 = vld [vmem:[%s1469 + $0x4] sm:$0xf]
      %v1472 = vld [vmem:[%s1469 + $0x8] sm:$0xf]
      %v1473 = vld [vmem:[%s1469 + $0xc] sm:$0xf]
      %v1474 = vld [vmem:[%s1469 + $0x10] sm:$0xf]
      %v1475 = vld [vmem:[%s1469 + $0x14] sm:$0xf]
      %v1476 = vld [vmem:[%s1469 + $0x18] sm:$0xf]
      %v1477 = vld [vmem:[%s1469 + $0x1c] sm:$0xf]
      %v1479 = vunpack.c.l.b16 %v1468
      %v1480 = vpack.c.b16 %v1479, %v1301
      %v1482 = vshrl.u32 %v1480, 16
      %v1484 = vshll.u32 %v1480, 16
      %v1486 = vrot.slane %v1484, 1
      %v1487 = vor.u32 %v1482, %v1486
      %v1496 = vunpack.c.l.b16 %v1470
      %v1497 = vunpack.c.l.b16 %v1471
      %v1498 = vunpack.c.l.b16 %v1472
      %v1499 = vunpack.c.l.b16 %v1473
      %v1500 = vunpack.c.l.b16 %v1474
      %v1501 = vunpack.c.l.b16 %v1475
      %v1502 = vunpack.c.l.b16 %v1476
      %v1503 = vunpack.c.l.b16 %v1477
      %v1504 = vpack.c.b16 %v1497, %v1496
      %v1505 = vpack.c.b16 %v1499, %v1498
      %v1506 = vpack.c.b16 %v1501, %v1500
      %v1507 = vpack.c.b16 %v1503, %v1502
      %v1513 = vsel %vm279, %v1487, 0
      %1515 = vmatprep.subr.bf16.mxu0 0
      %1516 = vmatpush1.bf16.msra.mxu0 %v1504
      %1517 = vmatprep.subr.bf16.mxu0 0
      %1518 = vmatpush1.bf16.msra.mxu0 %v1505
      %1519 = vmatprep.subr.bf16.mxu0 0
      %1520 = vmatpush1.bf16.msra.mxu0 %v1506
      %1521 = vmatprep.subr.bf16.mxu0 0
      %1522 = vmatpush1.bf16.msra.mxu0 %v1507
      %1523 = vmatprep.subr.bf16.mxu0 0
      %1524 = vmatpush1.bf16.msra.mxu0 0
      %1525 = vmatprep.subr.bf16.mxu0 0
      %1526 = vmatpush1.bf16.msra.mxu0 0
      %1527 = vmatprep.subr.bf16.mxu0 0
      %1528 = vmatpush1.bf16.msra.mxu0 0
      %1529 = vmatprep.subr.bf16.mxu0 0
      %1530 = vmatpush1.bf16.msra.mxu0 0
      %1531 = vmatprep.subr.bf16.mxu0 0
      %1532 = vmatpush1.bf16.msra.mxu0 0
      %1533 = vmatprep.subr.bf16.mxu0 0
      %1534 = vmatpush1.bf16.msra.mxu0 0
      %1535 = vmatprep.subr.bf16.mxu0 0
      %1536 = vmatpush1.bf16.msra.mxu0 0
      %1537 = vmatprep.subr.bf16.mxu0 0
      %1538 = vmatpush1.bf16.msra.mxu0 0
      %1539 = vmatprep.subr.bf16.mxu0 0
      %1540 = vmatpush1.bf16.msra.mxu0 0
      %1541 = vmatprep.subr.bf16.mxu0 0
      %1542 = vmatpush1.bf16.msra.mxu0 0
      %1543 = vmatprep.subr.bf16.mxu0 0
      %1544 = vmatpush1.bf16.msra.mxu0 0
      %1545 = vmatprep.subr.bf16.mxu0 0
      %1546 = vmatpush1.bf16.msra.mxu0 0
      %1547 = vmatprep.mubr.bf16.mxu0 0
      %1548 = vmatmul.mubr.bf16.gmra.mrb[0].mxu0 %v1513
      %v1549 = vpop.f32.mrb[0].mxu0
      %v1550 = vadd.f32 0.0, %v1549
      %v1551 = vpop.f32.mrb[0].mxu0
      %v1552 = vpop.f32.mrb[0].mxu0
      %v1553 = vadd.f32 0.0, %v1552
      %v1554 = vpop.f32.mrb[0].mxu0
      %1555 = vdwg.mxu0
      %v1556 = vadd.f32 %v1466, %v1550
      %v1557 = vadd.f32 %v1467, %v1553
      %v1558 = vld [vmem:[%s206 + $0x8] sm:$0xe]
      %s1559 = scalar_lea.vmem %s210, 480
      %v1560 = vld [vmem:[%s1559] sm:$0xf]
      %v1561 = vld [vmem:[%s1559 + $0x4] sm:$0xf]
      %v1562 = vld [vmem:[%s1559 + $0x8] sm:$0xf]
      %v1563 = vld [vmem:[%s1559 + $0xc] sm:$0xf]
      %v1564 = vld [vmem:[%s1559 + $0x10] sm:$0xf]
      %v1565 = vld [vmem:[%s1559 + $0x14] sm:$0xf]
      %v1566 = vld [vmem:[%s1559 + $0x18] sm:$0xf]
      %v1567 = vld [vmem:[%s1559 + $0x1c] sm:$0xf]
      %v1569 = vunpack.c.l.b16 %v1558
      %v1570 = vpack.c.b16 %v1479, %v1569
      %v1571 = vrot.slane %v1570, 1
      %v1580 = vunpack.c.l.b16 %v1560
      %v1581 = vunpack.c.l.b16 %v1561
      %v1582 = vunpack.c.l.b16 %v1562
      %v1583 = vunpack.c.l.b16 %v1563
      %v1584 = vunpack.c.l.b16 %v1564
      %v1585 = vunpack.c.l.b16 %v1565
      %v1586 = vunpack.c.l.b16 %v1566
      %v1587 = vunpack.c.l.b16 %v1567
      %v1588 = vpack.c.b16 %v1581, %v1580
      %v1589 = vpack.c.b16 %v1583, %v1582
      %v1590 = vpack.c.b16 %v1585, %v1584
      %v1591 = vpack.c.b16 %v1587, %v1586
      %v1597 = vsel %vm279, %v1571, 0
      %1599 = vmatprep.subr.bf16.mxu0 0
      %1600 = vmatpush1.bf16.msra.mxu0 %v1588
      %1601 = vmatprep.subr.bf16.mxu0 0
      %1602 = vmatpush1.bf16.msra.mxu0 %v1589
      %1603 = vmatprep.subr.bf16.mxu0 0
      %1604 = vmatpush1.bf16.msra.mxu0 %v1590
      %1605 = vmatprep.subr.bf16.mxu0 0
      %1606 = vmatpush1.bf16.msra.mxu0 %v1591
      %1607 = vmatprep.subr.bf16.mxu0 0
      %1608 = vmatpush1.bf16.msra.mxu0 0
      %1609 = vmatprep.subr.bf16.mxu0 0
      %1610 = vmatpush1.bf16.msra.mxu0 0
      %1611 = vmatprep.subr.bf16.mxu0 0
      %1612 = vmatpush1.bf16.msra.mxu0 0
      %1613 = vmatprep.subr.bf16.mxu0 0
      %1614 = vmatpush1.bf16.msra.mxu0 0
      %1615 = vmatprep.subr.bf16.mxu0 0
      %1616 = vmatpush1.bf16.msra.mxu0 0
      %1617 = vmatprep.subr.bf16.mxu0 0
      %1618 = vmatpush1.bf16.msra.mxu0 0
      %1619 = vmatprep.subr.bf16.mxu0 0
      %1620 = vmatpush1.bf16.msra.mxu0 0
      %1621 = vmatprep.subr.bf16.mxu0 0
      %1622 = vmatpush1.bf16.msra.mxu0 0
      %1623 = vmatprep.subr.bf16.mxu0 0
      %1624 = vmatpush1.bf16.msra.mxu0 0
      %1625 = vmatprep.subr.bf16.mxu0 0
      %1626 = vmatpush1.bf16.msra.mxu0 0
      %1627 = vmatprep.subr.bf16.mxu0 0
      %1628 = vmatpush1.bf16.msra.mxu0 0
      %1629 = vmatprep.subr.bf16.mxu0 0
      %1630 = vmatpush1.bf16.msra.mxu0 0
      %1631 = vmatprep.mubr.bf16.mxu0 0
      %1632 = vmatmul.mubr.bf16.gmra.mrb[0].mxu0 %v1597
      %v1633 = vpop.f32.mrb[0].mxu0
      %v1634 = vadd.f32 0.0, %v1633
      %v1635 = vpop.f32.mrb[0].mxu0
      %v1636 = vpop.f32.mrb[0].mxu0
      %v1637 = vadd.f32 0.0, %v1636
      %v1638 = vpop.f32.mrb[0].mxu0
      %1639 = vdwg.mxu0
      %v1640 = vadd.f32 %v1556, %v1634
      %v1641 = vadd.f32 %v1557, %v1637
      %v1642 = vld [vmem:[%s213] sm:$0x1]
      %v1644 = vlaneseq
      %v1645 = vshrl.u32 %v1644, 7
      %v1646 = vsub.s32 0, %v1645
      %v1647 = vrot.slane %v1642, %v1646
      %v1649 = vadd.f32 %v1640, %v1647
      %v1650 = vadd.f32 %v1641, %v1647
      %1651 = vst [vmem:[%s221] sm:$0xff] %v1649
      %1652 = vst [vmem:[%s221 + $0x8] sm:$0x3] %v1650
      %p1653 = scmp.lt.s32.totalorder %s19, 1
      %s1654 = scalar_select %p1653, %s19, 1
      %p1655 = scmp.lt.s32.totalorder %s18, 0
      %s1656 = scalar_select %p1655, %s18, 0
      %s1657 = smul.addr %s1654, 2
      %s1658 = sadd.s32 %s1656, %s1657
      %s1659 = smul.addr %s1658, 8
      %s1660 = scalar_lea.vmem %s3, %s1659
      // Predicated region
      $region33: #{nlayer_discriminator_forward.15} parent=31 // pred_check
        %p1661 = pneg %p124
      $region34: #{nlayer_discriminator_forward.15} parent=31 // pred_check_branch
        %1663 = sbr.rel (%p1661) target = $region36
      $region35: #{nlayer_discriminator_forward.15} parent=31 // pred_region
        _
      $region36: #{nlayer_discriminator_forward.15} parent=31 // pred_fallthru
        _
    $region32: #{nlayer_discriminator_forward.15} parent=5 // pred_fallthru
      _
    %p1664 = scmp.le.s32.totalorder 2, %s9
    // Predicated region
    $region37: #{nlayer_discriminator_forward.15} parent=5 // pred_check
      %p1665 = pneg %p1664
    $region38: #{nlayer_discriminator_forward.15} parent=5 // pred_check_branch
      %1667 = sbr.rel (%p1665) target = $region40
    $region39: #{nlayer_discriminator_forward.15} parent=5 // pred_region
      %s1668 = ssub.s32 %s9, 2
      // Predicated region
      $region41: #{nlayer_discriminator_forward.15} parent=39 // pred_check
        %p1669 = pneg %p130
      $region42: #{nlayer_discriminator_forward.15} parent=39 // pred_check_branch
        %1671 = sbr.rel (%p1669) target = $region44
      $region43: #{nlayer_discriminator_forward.15} parent=39 // pred_region
        %p1672 = scmp.lt.s32.totalorder %s21, 1
        %s1673 = scalar_select %p1672, %s21, 1
        %p1674 = scmp.lt.s32.totalorder %s20, 0
        %s1675 = scalar_select %p1674, %s20, 0
        %s1676 = smul.addr %s1673, 2
        %s1677 = sadd.s32 %s1675, %s1676
        %s1678 = smul.addr %s1677, 8
        %s1679 = scalar_lea.vmem %s3, %s1678
      $region44: #{nlayer_discriminator_forward.15} parent=39 // pred_fallthru
        _
    $region40: #{nlayer_discriminator_forward.15} parent=5 // pred_fallthru
      _
  $region6: #{nlayer_discriminator_forward.15} parent=0 // loop_footer
    %s13 = sadd.s32 1, %s9
  $region7: #{nlayer_discriminator_forward.15} parent=0 // loop_footer_branch
    %8 = sbr.rel target = $region3
  $region8: #{nlayer_discriminator_forward.15} parent=0 // loop_exit
    _

</llo_original>
